<compile_context>
chip_gen: v7x
topology: tpu7x:2x2x1
jax: 0.10.0
libtpu: 0.0.40
codegen_flags: <defaults>
</compile_context>

<pallas_src>
import functools

import jax
import jax.numpy as jnp
from jax.experimental import pallas as pl
from jax.experimental.pallas import tpu as pltpu

EPS = 1e-5  # torch.nn.InstanceNorm2d default (affine=False, biased variance)


def _build_widened(wide_ref, v, H, W, C):
    """Write the K=3*C conv operand slab into wide_ref (H+2, W, 3*C).

    wide_ref[r, w, kx*C:(kx+1)*C] == ReflectionPad2d(1)(v)[r, w + kx, :], so a
    3x3 VALID conv becomes, for each kernel row ky, one (H*W, 3C) @ (3C, C)
    matmul on wide_ref[ky:ky+H] (a free leading-dim slice).
    """
    # kx = 1 (center tap): full, lane-aligned store of the unshifted image.
    wide_ref[1:H + 1, :, C:2 * C] = v
    # kx = 0 (left tap): columns shifted right by one, first column reflected.
    wide_ref[1:H + 1, 1:W, 0:C] = v[:, 0:W - 1, :]
    wide_ref[1:H + 1, 0:1, 0:C] = v[:, 1:2, :]
    # kx = 2 (right tap): columns shifted left by one, last column reflected.
    wide_ref[1:H + 1, 0:W - 1, 2 * C:3 * C] = v[:, 1:W, :]
    wide_ref[1:H + 1, W - 1:W, 2 * C:3 * C] = v[:, W - 2:W - 1, :]
    # Reflected top/bottom rows, written AFTER the width handling so the
    # corners match torch's ReflectionPad2d(1) (pad[0,0] == x[1,1]).
    wide_ref[0:1] = wide_ref[2:3]
    wide_ref[H + 1:H + 2] = wide_ref[H - 1:H]


def _conv3x3_mxu(wide_ref, w_ref, H, W, C):
    """3x3 VALID conv as 3 accumulating MXU matmuls with K = 3*C.

    wide_ref : (H+2, W, 3*C) VMEM operand slab (compute dtype)
    w_ref    : (3, 3*C, C) VMEM weights (compute dtype), kernel-row major
    returns  : (H*W, C) f32  (no bias: it cancels under InstanceNorm)
    """
    acc = None
    for ky in range(3):
        op = wide_ref[ky:ky + H].reshape(H * W, 3 * C)   # free leading-dim slice
        part = jnp.dot(op, w_ref[ky], preferred_element_type=jnp.float32)
        acc = part if acc is None else acc + part
    return acc


def _instance_norm_rows(y, n_rows):
    """Per-channel (column) normalization over rows; fused single-pass stats."""
    inv_n = 1.0 / n_rows
    mu = jnp.sum(y, axis=0, keepdims=True) * inv_n                   # (1, C)
    var = jnp.sum(y * y, axis=0, keepdims=True) * inv_n - mu * mu    # biased
    var = jnp.maximum(var, 0.0)          # guard E[x^2]-mu^2 cancellation
    return (y - mu) * jax.lax.rsqrt(var + EPS)


def _residual_block_kernel(x_ref, w1_ref, w2_ref, o_ref, wide_ref, *, compute_dtype):
    _, H, W, C = x_ref.shape

    # --- ReflPad -> Conv1 (MXU) -> InstanceNorm -> ReLU ---
    _build_widened(wide_ref, x_ref[0].astype(compute_dtype), H, W, C)
    y = _conv3x3_mxu(wide_ref, w1_ref, H, W, C)
    y = _instance_norm_rows(y, H * W)
    y = jnp.maximum(y, 0.0)

    # --- ReflPad -> Conv2 (MXU) -> InstanceNorm ---
    _build_widened(wide_ref, y.reshape(H, W, C).astype(compute_dtype), H, W, C)
    y = _conv3x3_mxu(wide_ref, w2_ref, H, W, C)
    y = _instance_norm_rows(y, H * W)

    # Residual add: re-read x (the input block is already VMEM resident)
    # instead of keeping an f32 copy of it live across both convs.
    o_ref[0] = (x_ref[0].astype(jnp.float32) + y.reshape(H, W, C)).astype(o_ref.dtype)


def residual_block_nhwc(x, w1, b1, w2, b2, *, compute_dtype=jnp.bfloat16):
    """x: (N, H, W, C); w*: (C, C, 3, 3) OIHW; b*: (C,). Returns (N, H, W, C).

    Production CycleGAN residual blocks use C=256, H=W>=64: keep C a multiple
    of 128 and W a multiple of the sublane tile for full lane/MXU utilization
    (the tiny __main__ shapes below are for correctness only).
    """
    N, H, W, C = x.shape
    assert H >= 2 and W >= 2, "ReflectionPad2d(1) requires H, W >= 2"
    # Bias followed by InstanceNorm(affine=False) cancels exactly -> dead compute.
    del b1, b2

    # (Cout, Cin, 3, 3) -> (ky, kx, Cin, Cout) -> (3, 3*Cin, Cout):
    # one (3*C, C) matmul operand per kernel row.
    def prep_w(w):
        return jnp.transpose(w, (2, 3, 1, 0)).reshape(3, 3 * C, C).astype(compute_dtype)

    w1t, w2t = prep_w(w1), prep_w(w2)

    cbytes = jnp.dtype(compute_dtype).itemsize
    xbytes = jnp.dtype(x.dtype).itemsize
    # Honest VMEM estimate: double-buffered I/O blocks, both weight slabs
    # (worst case double-buffered), the K=3C operand scratch, and f32
    # intermediates (conv accumulator / IN temps). Cap well below v7x's 64 MiB.
    est = (
        2 * 2 * H * W * C * xbytes
        + 2 * 2 * 9 * C * C * cbytes
        + (H + 2) * W * 3 * C * cbytes
        + 3 * H * W * C * 4
    )
    vmem_limit = int(min(48 * 1024 * 1024, max(32 * 1024 * 1024, 2 * est)))

    cost = pl.CostEstimate(
        flops=2 * 2 * N * H * W * 9 * C * C,                     # two 3x3 convs
        transcendentals=2 * N * C,                               # rsqrt per IN
        bytes_accessed=2 * N * H * W * C * xbytes + 2 * 9 * C * C * cbytes,
    )

    kernel = functools.partial(_residual_block_kernel, compute_dtype=compute_dtype)

    def run(single_buffer_weights):
        w_kwargs = (
            dict(pipeline_mode=pl.Buffered(1)) if single_buffer_weights else {}
        )
        grid_spec = pltpu.PrefetchScalarGridSpec(
            num_scalar_prefetch=0,
            grid=(N,),
            in_specs=[
                pl.BlockSpec((1, H, W, C), lambda n: (n, 0, 0, 0)),             # x
                pl.BlockSpec((3, 3 * C, C), lambda n: (0, 0, 0), **w_kwargs),   # w1
                pl.BlockSpec((3, 3 * C, C), lambda n: (0, 0, 0), **w_kwargs),   # w2
            ],
            out_specs=pl.BlockSpec((1, H, W, C), lambda n: (n, 0, 0, 0)),
            scratch_shapes=[pltpu.VMEM((H + 2, W, 3 * C), compute_dtype)],
        )
        return pl.pallas_call(
            kernel,
            out_shape=jax.ShapeDtypeStruct((N, H, W, C), x.dtype),
            grid_spec=grid_spec,
            compiler_params=pltpu.CompilerParams(
                dimension_semantics=("parallel",),
                vmem_limit_bytes=vmem_limit,
            ),
            cost_estimate=cost,
        )(x, w1t, w2t)

    try:
        # Weights have a constant index_map -> a single buffer is enough.
        return run(True)
    except Exception:
        # Fallback for Pallas versions without pipeline_mode / pl.Buffered.
        return run(False)


def residual_block(x_nchw, w1, b1, w2, b2, *, compute_dtype=jnp.bfloat16):
    """PyTorch-layout entry point: x (N, C, H, W) -> (N, C, H, W)."""
    x = jnp.transpose(x_nchw, (0, 2, 3, 1))
    y = residual_block_nhwc(x, w1, b1, w2, b2, compute_dtype=compute_dtype)
    return jnp.transpose(y, (0, 3, 1, 2))


def ref_residual_block(x, w1, b1, w2, b2):
    """Pure-JAX f32 reference mirroring the PyTorch module (NCHW, with biases)."""
    def conv(z, w, b):
        zp = jnp.pad(z, ((0, 0), (0, 0), (1, 1), (1, 1)), mode="reflect")
        y = jax.lax.conv_general_dilated(
            zp, w, window_strides=(1, 1), padding="VALID",
            dimension_numbers=("NCHW", "OIHW", "NCHW"))
        return y + b[None, :, None, None]

    def inorm(y):
        mu = jnp.mean(y, axis=(2, 3), keepdims=True)
        var = jnp.mean((y - mu) ** 2, axis=(2, 3), keepdims=True)
        return (y - mu) * jax.lax.rsqrt(var + EPS)

    y = conv(x, w1, b1)
    y = inorm(y)
    y = jnp.maximum(y, 0.0)
    y = conv(y, w2, b2)
    y = inorm(y)
    return x + y


if __name__ == "__main__":
    N, C, H, W = 2, 8, 16, 16

    key = jax.random.PRNGKey(0)
    kx, kw1, kb1, kw2, kb2 = jax.random.split(key, 5)
    x = jax.random.normal(kx, (N, C, H, W), jnp.float32)
    w1 = jax.random.normal(kw1, (C, C, 3, 3), jnp.float32) * 0.2
    b1 = jax.random.normal(kb1, (C,), jnp.float32) * 0.1
    w2 = jax.random.normal(kw2, (C, C, 3, 3), jnp.float32) * 0.2
    b2 = jax.random.normal(kb2, (C,), jnp.float32) * 0.1

    ref = ref_residual_block(x, w1, b1, w2, b2)

    # Exact-semantics check: f32 matmul path (bias omission is mathematically
    # a no-op under InstanceNorm; only rounding-level differences remain).
    out_f32 = jax.block_until_ready(
        residual_block(x, w1, b1, w2, b2, compute_dtype=jnp.float32))
    assert out_f32.shape == (N, C, H, W) and out_f32.dtype == x.dtype
    err_f32 = float(jnp.max(jnp.abs(out_f32 - ref)))
    assert err_f32 < 5e-4, f"f32 path max abs error vs reference: {err_f32}"

    # Production path: bf16 MXU matmuls with f32 accumulation / InstanceNorm.
    out_bf16 = jax.block_until_ready(
        residual_block(x, w1, b1, w2, b2, compute_dtype=jnp.bfloat16))
    err_bf16 = float(jnp.max(jnp.abs(out_bf16 - ref)))
    assert err_bf16 < 2e-1, f"bf16 path max abs error vs reference: {err_bf16}"

    print("KERNEL_OK")
</pallas_src>

<mosaic_0001>
module attributes {stable_mosaic.version = 11 : i64} {
  func.func @_residual_block_kernel(%arg0: i32, %arg1: memref<1x16x16x8xf32, #tpu.memory_space<vmem>>, %arg2: memref<3x24x8xf32, #tpu.memory_space<vmem>>, %arg3: memref<3x24x8xf32, #tpu.memory_space<vmem>>, %arg4: memref<1x16x16x8xf32, #tpu.memory_space<vmem>>, %arg5: memref<18x16x24xf32, #tpu.memory_space<vmem>>) attributes {dimension_semantics = [#tpu.dimension_semantics<parallel>], iteration_bounds = array<i64: 2>, scalar_prefetch = 0 : i64, scratch_operands = 1 : i64, tpu.core_type = #tpu.core_type<tc>, window_params = [{transform_indices = @transform_0, window_bounds = array<i64: 1, 16, 16, 8>}, {pipeline_mode = #tpu.pipeline_mode<synchronous>, transform_indices = @transform_1, window_bounds = array<i64: 3, 24, 8>}, {pipeline_mode = #tpu.pipeline_mode<synchronous>, transform_indices = @transform_2, window_bounds = array<i64: 3, 24, 8>}, {transform_indices = @transform_3, window_bounds = array<i64: 1, 16, 16, 8>}]} {
    %c0 = arith.constant 0 : index
    %c0_0 = arith.constant 0 : index
    %c0_1 = arith.constant 0 : index
    %c0_2 = arith.constant 0 : index
    %0 = vector.load %arg1[%c0, %c0_0, %c0_1, %c0_2] : memref<1x16x16x8xf32, #tpu.memory_space<vmem>>, vector<1x16x16x8xf32>
    %1 = vector.shape_cast %0 : vector<1x16x16x8xf32> to vector<16x16x8xf32>
    %c1 = arith.constant 1 : index
    %c0_3 = arith.constant 0 : index
    %c8 = arith.constant 8 : index
    %2 = vector.load %arg5[%c1, %c0_3, %c8] : memref<18x16x24xf32, #tpu.memory_space<vmem>>, vector<16x16x8xf32>
    tpu.vector_store %arg5[%c1, %c0_3, %c8], %1 {strides = array<i32>} : memref<18x16x24xf32, #tpu.memory_space<vmem>>, vector<16x16x8xf32>,
    %3 = vector.extract_strided_slice %1 {offsets = [0, 0, 0], sizes = [16, 15, 8], strides = [1, 1, 1]} : vector<16x16x8xf32> to vector<16x15x8xf32>
    %c1_4 = arith.constant 1 : index
    %c1_5 = arith.constant 1 : index
    %c0_6 = arith.constant 0 : index
    %4 = vector.load %arg5[%c1_4, %c1_5, %c0_6] : memref<18x16x24xf32, #tpu.memory_space<vmem>>, vector<16x15x8xf32>
    tpu.vector_store %arg5[%c1_4, %c1_5, %c0_6], %3 {strides = array<i32>} : memref<18x16x24xf32, #tpu.memory_space<vmem>>, vector<16x15x8xf32>,
    %5 = vector.extract_strided_slice %1 {offsets = [0, 1, 0], sizes = [16, 1, 8], strides = [1, 1, 1]} : vector<16x16x8xf32> to vector<16x1x8xf32>
    %c1_7 = arith.constant 1 : index
    %c0_8 = arith.constant 0 : index
    %c0_9 = arith.constant 0 : index
    %6 = vector.load %arg5[%c1_7, %c0_8, %c0_9] : memref<18x16x24xf32, #tpu.memory_space<vmem>>, vector<16x1x8xf32>
    tpu.vector_store %arg5[%c1_7, %c0_8, %c0_9], %5 {strides = array<i32>} : memref<18x16x24xf32, #tpu.memory_space<vmem>>, vector<16x1x8xf32>,
    %7 = vector.extract_strided_slice %1 {offsets = [0, 1, 0], sizes = [16, 15, 8], strides = [1, 1, 1]} : vector<16x16x8xf32> to vector<16x15x8xf32>
    %c1_10 = arith.constant 1 : index
    %c0_11 = arith.constant 0 : index
    %c16 = arith.constant 16 : index
    %8 = vector.load %arg5[%c1_10, %c0_11, %c16] : memref<18x16x24xf32, #tpu.memory_space<vmem>>, vector<16x15x8xf32>
    tpu.vector_store %arg5[%c1_10, %c0_11, %c16], %7 {strides = array<i32>} : memref<18x16x24xf32, #tpu.memory_space<vmem>>, vector<16x15x8xf32>,
    %9 = vector.extract_strided_slice %1 {offsets = [0, 14, 0], sizes = [16, 1, 8], strides = [1, 1, 1]} : vector<16x16x8xf32> to vector<16x1x8xf32>
    %c1_12 = arith.constant 1 : index
    %c15 = arith.constant 15 : index
    %c16_13 = arith.constant 16 : index
    %10 = vector.load %arg5[%c1_12, %c15, %c16_13] : memref<18x16x24xf32, #tpu.memory_space<vmem>>, vector<16x1x8xf32>
    tpu.vector_store %arg5[%c1_12, %c15, %c16_13], %9 {strides = array<i32>} : memref<18x16x24xf32, #tpu.memory_space<vmem>>, vector<16x1x8xf32>,
    %c2 = arith.constant 2 : index
    %c0_14 = arith.constant 0 : index
    %c0_15 = arith.constant 0 : index
    %11 = vector.load %arg5[%c2, %c0_14, %c0_15] : memref<18x16x24xf32, #tpu.memory_space<vmem>>, vector<1x16x24xf32>
    %c0_16 = arith.constant 0 : index
    %c0_17 = arith.constant 0 : index
    %c0_18 = arith.constant 0 : index
    %12 = vector.load %arg5[%c0_16, %c0_17, %c0_18] : memref<18x16x24xf32, #tpu.memory_space<vmem>>, vector<1x16x24xf32>
    tpu.vector_store %arg5[%c0_16, %c0_17, %c0_18], %11 {strides = array<i32>} : memref<18x16x24xf32, #tpu.memory_space<vmem>>, vector<1x16x24xf32>,
    %c15_19 = arith.constant 15 : index
    %c0_20 = arith.constant 0 : index
    %c0_21 = arith.constant 0 : index
    %13 = vector.load %arg5[%c15_19, %c0_20, %c0_21] : memref<18x16x24xf32, #tpu.memory_space<vmem>>, vector<1x16x24xf32>
    %c17 = arith.constant 17 : index
    %c0_22 = arith.constant 0 : index
    %c0_23 = arith.constant 0 : index
    %14 = vector.load %arg5[%c17, %c0_22, %c0_23] : memref<18x16x24xf32, #tpu.memory_space<vmem>>, vector<1x16x24xf32>
    tpu.vector_store %arg5[%c17, %c0_22, %c0_23], %13 {strides = array<i32>} : memref<18x16x24xf32, #tpu.memory_space<vmem>>, vector<1x16x24xf32>,
    %c0_24 = arith.constant 0 : index
    %c0_25 = arith.constant 0 : index
    %c0_26 = arith.constant 0 : index
    %15 = vector.load %arg5[%c0_24, %c0_25, %c0_26] : memref<18x16x24xf32, #tpu.memory_space<vmem>>, vector<16x16x24xf32>
    %16 = vector.shape_cast %15 : vector<16x16x24xf32> to vector<256x24xf32>
    %c0_27 = arith.constant 0 : index
    %c0_28 = arith.constant 0 : index
    %c0_29 = arith.constant 0 : index
    %17 = vector.load %arg2[%c0_27, %c0_28, %c0_29] : memref<3x24x8xf32, #tpu.memory_space<vmem>>, vector<1x24x8xf32>
    %18 = vector.shape_cast %17 : vector<1x24x8xf32> to vector<24x8xf32>
    %cst = arith.constant dense<0.000000e+00> : vector<256x8xf32>
    %19 = tpu.matmul %16, %18, %cst {dimension_numbers = #tpu.dot_dimension_numbers<[1], [0], [0], [1], [0, 0, 1, 1], [], []>} : vector<256x24xf32>, vector<24x8xf32>, vector<256x8xf32> -> vector<256x8xf32>
    %c1_30 = arith.constant 1 : index
    %c0_31 = arith.constant 0 : index
    %c0_32 = arith.constant 0 : index
    %20 = vector.load %arg5[%c1_30, %c0_31, %c0_32] : memref<18x16x24xf32, #tpu.memory_space<vmem>>, vector<16x16x24xf32>
    %21 = vector.shape_cast %20 : vector<16x16x24xf32> to vector<256x24xf32>
    %c1_33 = arith.constant 1 : index
    %c0_34 = arith.constant 0 : index
    %c0_35 = arith.constant 0 : index
    %22 = vector.load %arg2[%c1_33, %c0_34, %c0_35] : memref<3x24x8xf32, #tpu.memory_space<vmem>>, vector<1x24x8xf32>
    %23 = vector.shape_cast %22 : vector<1x24x8xf32> to vector<24x8xf32>
    %cst_36 = arith.constant dense<0.000000e+00> : vector<256x8xf32>
    %24 = tpu.matmul %21, %23, %cst_36 {dimension_numbers = #tpu.dot_dimension_numbers<[1], [0], [0], [1], [0, 0, 1, 1], [], []>} : vector<256x24xf32>, vector<24x8xf32>, vector<256x8xf32> -> vector<256x8xf32>
    %25 = arith.addf %19, %24 : vector<256x8xf32>
    %c2_37 = arith.constant 2 : index
    %c0_38 = arith.constant 0 : index
    %c0_39 = arith.constant 0 : index
    %26 = vector.load %arg5[%c2_37, %c0_38, %c0_39] : memref<18x16x24xf32, #tpu.memory_space<vmem>>, vector<16x16x24xf32>
    %27 = vector.shape_cast %26 : vector<16x16x24xf32> to vector<256x24xf32>
    %c2_40 = arith.constant 2 : index
    %c0_41 = arith.constant 0 : index
    %c0_42 = arith.constant 0 : index
    %28 = vector.load %arg2[%c2_40, %c0_41, %c0_42] : memref<3x24x8xf32, #tpu.memory_space<vmem>>, vector<1x24x8xf32>
    %29 = vector.shape_cast %28 : vector<1x24x8xf32> to vector<24x8xf32>
    %cst_43 = arith.constant dense<0.000000e+00> : vector<256x8xf32>
    %30 = tpu.matmul %27, %29, %cst_43 {dimension_numbers = #tpu.dot_dimension_numbers<[1], [0], [0], [1], [0, 0, 1, 1], [], []>} : vector<256x24xf32>, vector<24x8xf32>, vector<256x8xf32> -> vector<256x8xf32>
    %31 = arith.addf %25, %30 : vector<256x8xf32>
    %cst_44 = arith.constant dense<0.000000e+00> : vector<8xf32>
    %32 = vector.multi_reduction <add>, %31, %cst_44 [0] : vector<256x8xf32> to vector<8xf32>
    %33 = vector.shape_cast %32 : vector<8xf32> to vector<1x8xf32>
    %cst_45 = arith.constant 3.906250e-03 : f32
    %34 = vector.broadcast %cst_45 : f32 to vector<1x8xf32>
    %35 = arith.mulf %33, %34 : vector<1x8xf32>
    %36 = arith.mulf %31, %31 : vector<256x8xf32>
    %cst_46 = arith.constant dense<0.000000e+00> : vector<8xf32>
    %37 = vector.multi_reduction <add>, %36, %cst_46 [0] : vector<256x8xf32> to vector<8xf32>
    %38 = vector.shape_cast %37 : vector<8xf32> to vector<1x8xf32>
    %cst_47 = arith.constant 3.906250e-03 : f32
    %39 = vector.broadcast %cst_47 : f32 to vector<1x8xf32>
    %40 = arith.mulf %38, %39 : vector<1x8xf32>
    %41 = arith.mulf %35, %35 : vector<1x8xf32>
    %42 = arith.subf %40, %41 : vector<1x8xf32>
    %cst_48 = arith.constant 0.000000e+00 : f32
    %43 = vector.broadcast %cst_48 : f32 to vector<1x8xf32>
    %44 = arith.maximumf %42, %43 : vector<1x8xf32>
    %45 = vector.broadcast %35 : vector<1x8xf32> to vector<256x8xf32>
    %46 = arith.subf %31, %45 : vector<256x8xf32>
    %cst_49 = arith.constant 9.99999974E-6 : f32
    %47 = vector.broadcast %cst_49 : f32 to vector<1x8xf32>
    %48 = arith.addf %44, %47 : vector<1x8xf32>
    %49 = math.rsqrt %48 : vector<1x8xf32>
    %50 = vector.broadcast %49 : vector<1x8xf32> to vector<256x8xf32>
    %51 = arith.mulf %46, %50 : vector<256x8xf32>
    %cst_50 = arith.constant 0.000000e+00 : f32
    %52 = vector.broadcast %cst_50 : f32 to vector<256x8xf32>
    %53 = arith.maximumf %51, %52 : vector<256x8xf32>
    %54 = vector.shape_cast %53 : vector<256x8xf32> to vector<16x16x8xf32>
    %c1_51 = arith.constant 1 : index
    %c0_52 = arith.constant 0 : index
    %c8_53 = arith.constant 8 : index
    %55 = vector.load %arg5[%c1_51, %c0_52, %c8_53] : memref<18x16x24xf32, #tpu.memory_space<vmem>>, vector<16x16x8xf32>
    tpu.vector_store %arg5[%c1_51, %c0_52, %c8_53], %54 {strides = array<i32>} : memref<18x16x24xf32, #tpu.memory_space<vmem>>, vector<16x16x8xf32>,
    %56 = vector.extract_strided_slice %54 {offsets = [0, 0, 0], sizes = [16, 15, 8], strides = [1, 1, 1]} : vector<16x16x8xf32> to vector<16x15x8xf32>
    %c1_54 = arith.constant 1 : index
    %c1_55 = arith.constant 1 : index
    %c0_56 = arith.constant 0 : index
    %57 = vector.load %arg5[%c1_54, %c1_55, %c0_56] : memref<18x16x24xf32, #tpu.memory_space<vmem>>, vector<16x15x8xf32>
    tpu.vector_store %arg5[%c1_54, %c1_55, %c0_56], %56 {strides = array<i32>} : memref<18x16x24xf32, #tpu.memory_space<vmem>>, vector<16x15x8xf32>,
    %58 = vector.extract_strided_slice %54 {offsets = [0, 1, 0], sizes = [16, 1, 8], strides = [1, 1, 1]} : vector<16x16x8xf32> to vector<16x1x8xf32>
    %c1_57 = arith.constant 1 : index
    %c0_58 = arith.constant 0 : index
    %c0_59 = arith.constant 0 : index
    %59 = vector.load %arg5[%c1_57, %c0_58, %c0_59] : memref<18x16x24xf32, #tpu.memory_space<vmem>>, vector<16x1x8xf32>
    tpu.vector_store %arg5[%c1_57, %c0_58, %c0_59], %58 {strides = array<i32>} : memref<18x16x24xf32, #tpu.memory_space<vmem>>, vector<16x1x8xf32>,
    %60 = vector.extract_strided_slice %54 {offsets = [0, 1, 0], sizes = [16, 15, 8], strides = [1, 1, 1]} : vector<16x16x8xf32> to vector<16x15x8xf32>
    %c1_60 = arith.constant 1 : index
    %c0_61 = arith.constant 0 : index
    %c16_62 = arith.constant 16 : index
    %61 = vector.load %arg5[%c1_60, %c0_61, %c16_62] : memref<18x16x24xf32, #tpu.memory_space<vmem>>, vector<16x15x8xf32>
    tpu.vector_store %arg5[%c1_60, %c0_61, %c16_62], %60 {strides = array<i32>} : memref<18x16x24xf32, #tpu.memory_space<vmem>>, vector<16x15x8xf32>,
    %62 = vector.extract_strided_slice %54 {offsets = [0, 14, 0], sizes = [16, 1, 8], strides = [1, 1, 1]} : vector<16x16x8xf32> to vector<16x1x8xf32>
    %c1_63 = arith.constant 1 : index
    %c15_64 = arith.constant 15 : index
    %c16_65 = arith.constant 16 : index
    %63 = vector.load %arg5[%c1_63, %c15_64, %c16_65] : memref<18x16x24xf32, #tpu.memory_space<vmem>>, vector<16x1x8xf32>
    tpu.vector_store %arg5[%c1_63, %c15_64, %c16_65], %62 {strides = array<i32>} : memref<18x16x24xf32, #tpu.memory_space<vmem>>, vector<16x1x8xf32>,
    %c2_66 = arith.constant 2 : index
    %c0_67 = arith.constant 0 : index
    %c0_68 = arith.constant 0 : index
    %64 = vector.load %arg5[%c2_66, %c0_67, %c0_68] : memref<18x16x24xf32, #tpu.memory_space<vmem>>, vector<1x16x24xf32>
    %c0_69 = arith.constant 0 : index
    %c0_70 = arith.constant 0 : index
    %c0_71 = arith.constant 0 : index
    %65 = vector.load %arg5[%c0_69, %c0_70, %c0_71] : memref<18x16x24xf32, #tpu.memory_space<vmem>>, vector<1x16x24xf32>
    tpu.vector_store %arg5[%c0_69, %c0_70, %c0_71], %64 {strides = array<i32>} : memref<18x16x24xf32, #tpu.memory_space<vmem>>, vector<1x16x24xf32>,
    %c15_72 = arith.constant 15 : index
    %c0_73 = arith.constant 0 : index
    %c0_74 = arith.constant 0 : index
    %66 = vector.load %arg5[%c15_72, %c0_73, %c0_74] : memref<18x16x24xf32, #tpu.memory_space<vmem>>, vector<1x16x24xf32>
    %c17_75 = arith.constant 17 : index
    %c0_76 = arith.constant 0 : index
    %c0_77 = arith.constant 0 : index
    %67 = vector.load %arg5[%c17_75, %c0_76, %c0_77] : memref<18x16x24xf32, #tpu.memory_space<vmem>>, vector<1x16x24xf32>
    tpu.vector_store %arg5[%c17_75, %c0_76, %c0_77], %66 {strides = array<i32>} : memref<18x16x24xf32, #tpu.memory_space<vmem>>, vector<1x16x24xf32>,
    %c0_78 = arith.constant 0 : index
    %c0_79 = arith.constant 0 : index
    %c0_80 = arith.constant 0 : index
    %68 = vector.load %arg5[%c0_78, %c0_79, %c0_80] : memref<18x16x24xf32, #tpu.memory_space<vmem>>, vector<16x16x24xf32>
    %69 = vector.shape_cast %68 : vector<16x16x24xf32> to vector<256x24xf32>
    %c0_81 = arith.constant 0 : index
    %c0_82 = arith.constant 0 : index
    %c0_83 = arith.constant 0 : index
    %70 = vector.load %arg3[%c0_81, %c0_82, %c0_83] : memref<3x24x8xf32, #tpu.memory_space<vmem>>, vector<1x24x8xf32>
    %71 = vector.shape_cast %70 : vector<1x24x8xf32> to vector<24x8xf32>
    %cst_84 = arith.constant dense<0.000000e+00> : vector<256x8xf32>
    %72 = tpu.matmul %69, %71, %cst_84 {dimension_numbers = #tpu.dot_dimension_numbers<[1], [0], [0], [1], [0, 0, 1, 1], [], []>} : vector<256x24xf32>, vector<24x8xf32>, vector<256x8xf32> -> vector<256x8xf32>
    %c1_85 = arith.constant 1 : index
    %c0_86 = arith.constant 0 : index
    %c0_87 = arith.constant 0 : index
    %73 = vector.load %arg5[%c1_85, %c0_86, %c0_87] : memref<18x16x24xf32, #tpu.memory_space<vmem>>, vector<16x16x24xf32>
    %74 = vector.shape_cast %73 : vector<16x16x24xf32> to vector<256x24xf32>
    %c1_88 = arith.constant 1 : index
    %c0_89 = arith.constant 0 : index
    %c0_90 = arith.constant 0 : index
    %75 = vector.load %arg3[%c1_88, %c0_89, %c0_90] : memref<3x24x8xf32, #tpu.memory_space<vmem>>, vector<1x24x8xf32>
    %76 = vector.shape_cast %75 : vector<1x24x8xf32> to vector<24x8xf32>
    %cst_91 = arith.constant dense<0.000000e+00> : vector<256x8xf32>
    %77 = tpu.matmul %74, %76, %cst_91 {dimension_numbers = #tpu.dot_dimension_numbers<[1], [0], [0], [1], [0, 0, 1, 1], [], []>} : vector<256x24xf32>, vector<24x8xf32>, vector<256x8xf32> -> vector<256x8xf32>
    %78 = arith.addf %72, %77 : vector<256x8xf32>
    %c2_92 = arith.constant 2 : index
    %c0_93 = arith.constant 0 : index
    %c0_94 = arith.constant 0 : index
    %79 = vector.load %arg5[%c2_92, %c0_93, %c0_94] : memref<18x16x24xf32, #tpu.memory_space<vmem>>, vector<16x16x24xf32>
    %80 = vector.shape_cast %79 : vector<16x16x24xf32> to vector<256x24xf32>
    %c2_95 = arith.constant 2 : index
    %c0_96 = arith.constant 0 : index
    %c0_97 = arith.constant 0 : index
    %81 = vector.load %arg3[%c2_95, %c0_96, %c0_97] : memref<3x24x8xf32, #tpu.memory_space<vmem>>, vector<1x24x8xf32>
    %82 = vector.shape_cast %81 : vector<1x24x8xf32> to vector<24x8xf32>
    %cst_98 = arith.constant dense<0.000000e+00> : vector<256x8xf32>
    %83 = tpu.matmul %80, %82, %cst_98 {dimension_numbers = #tpu.dot_dimension_numbers<[1], [0], [0], [1], [0, 0, 1, 1], [], []>} : vector<256x24xf32>, vector<24x8xf32>, vector<256x8xf32> -> vector<256x8xf32>
    %84 = arith.addf %78, %83 : vector<256x8xf32>
    %cst_99 = arith.constant dense<0.000000e+00> : vector<8xf32>
    %85 = vector.multi_reduction <add>, %84, %cst_99 [0] : vector<256x8xf32> to vector<8xf32>
    %86 = vector.shape_cast %85 : vector<8xf32> to vector<1x8xf32>
    %cst_100 = arith.constant 3.906250e-03 : f32
    %87 = vector.broadcast %cst_100 : f32 to vector<1x8xf32>
    %88 = arith.mulf %86, %87 : vector<1x8xf32>
    %89 = arith.mulf %84, %84 : vector<256x8xf32>
    %cst_101 = arith.constant dense<0.000000e+00> : vector<8xf32>
    %90 = vector.multi_reduction <add>, %89, %cst_101 [0] : vector<256x8xf32> to vector<8xf32>
    %91 = vector.shape_cast %90 : vector<8xf32> to vector<1x8xf32>
    %cst_102 = arith.constant 3.906250e-03 : f32
    %92 = vector.broadcast %cst_102 : f32 to vector<1x8xf32>
    %93 = arith.mulf %91, %92 : vector<1x8xf32>
    %94 = arith.mulf %88, %88 : vector<1x8xf32>
    %95 = arith.subf %93, %94 : vector<1x8xf32>
    %cst_103 = arith.constant 0.000000e+00 : f32
    %96 = vector.broadcast %cst_103 : f32 to vector<1x8xf32>
    %97 = arith.maximumf %95, %96 : vector<1x8xf32>
    %98 = vector.broadcast %88 : vector<1x8xf32> to vector<256x8xf32>
    %99 = arith.subf %84, %98 : vector<256x8xf32>
    %cst_104 = arith.constant 9.99999974E-6 : f32
    %100 = vector.broadcast %cst_104 : f32 to vector<1x8xf32>
    %101 = arith.addf %97, %100 : vector<1x8xf32>
    %102 = math.rsqrt %101 : vector<1x8xf32>
    %103 = vector.broadcast %102 : vector<1x8xf32> to vector<256x8xf32>
    %104 = arith.mulf %99, %103 : vector<256x8xf32>
    %c0_105 = arith.constant 0 : index
    %c0_106 = arith.constant 0 : index
    %c0_107 = arith.constant 0 : index
    %c0_108 = arith.constant 0 : index
    %105 = vector.load %arg1[%c0_105, %c0_106, %c0_107, %c0_108] : memref<1x16x16x8xf32, #tpu.memory_space<vmem>>, vector<1x16x16x8xf32>
    %106 = vector.shape_cast %105 : vector<1x16x16x8xf32> to vector<16x16x8xf32>
    %107 = vector.shape_cast %104 : vector<256x8xf32> to vector<16x16x8xf32>
    %108 = arith.addf %106, %107 : vector<16x16x8xf32>
    %c0_109 = arith.constant 0 : index
    %c0_110 = arith.constant 0 : index
    %c0_111 = arith.constant 0 : index
    %c0_112 = arith.constant 0 : index
    %109 = vector.load %arg4[%c0_109, %c0_110, %c0_111, %c0_112] : memref<1x16x16x8xf32, #tpu.memory_space<vmem>>, vector<1x16x16x8xf32>
    %110 = vector.shape_cast %109 : vector<1x16x16x8xf32> to vector<16x16x8xf32>
    %111 = vector.shape_cast %108 : vector<16x16x8xf32> to vector<1x16x16x8xf32>
    tpu.vector_store %arg4[%c0_109, %c0_110, %c0_111, %c0_112], %111 {strides = array<i32>} : memref<1x16x16x8xf32, #tpu.memory_space<vmem>>, vector<1x16x16x8xf32>,
    return
  }
  func.func @transform_0(%arg0: i32) -> (i32, i32, i32, i32) {
    %c0_i32 = arith.constant 0 : i32
    %c0_i32_0 = arith.constant 0 : i32
    %c0_i32_1 = arith.constant 0 : i32
    %c0_i32_2 = arith.constant 0 : i32
    return %arg0, %c0_i32, %c0_i32_0, %c0_i32_1 : i32, i32, i32, i32
  }
  func.func @transform_1(%arg0: i32) -> (i32, i32, i32) {
    %c0_i32 = arith.constant 0 : i32
    %c0_i32_0 = arith.constant 0 : i32
    %c0_i32_1 = arith.constant 0 : i32
    %c0_i32_2 = arith.constant 0 : i32
    return %c0_i32, %c0_i32_0, %c0_i32_1 : i32, i32, i32
  }
  func.func @transform_2(%arg0: i32) -> (i32, i32, i32) {
    %c0_i32 = arith.constant 0 : i32
    %c0_i32_0 = arith.constant 0 : i32
    %c0_i32_1 = arith.constant 0 : i32
    %c0_i32_2 = arith.constant 0 : i32
    return %c0_i32, %c0_i32_0, %c0_i32_1 : i32, i32, i32
  }
  func.func @transform_3(%arg0: i32) -> (i32, i32, i32, i32) {
    %c0_i32 = arith.constant 0 : i32
    %c0_i32_0 = arith.constant 0 : i32
    %c0_i32_1 = arith.constant 0 : i32
    %c0_i32_2 = arith.constant 0 : i32
    return %arg0, %c0_i32, %c0_i32_0, %c0_i32_1 : i32, i32, i32, i32
  }
}

module attributes {stable_mosaic.version = 11 : i64} {
  func.func @_residual_block_kernel(%arg0: i32, %arg1: memref<1x16x16x8xf32, #tpu.memory_space<vmem>>, %arg2: memref<3x24x8xf32, #tpu.memory_space<vmem>>, %arg3: memref<3x24x8xf32, #tpu.memory_space<vmem>>, %arg4: memref<1x16x16x8xf32, #tpu.memory_space<vmem>>, %arg5: memref<18x16x24xf32, #tpu.memory_space<vmem>>) attributes {dimension_semantics = [#tpu.dimension_semantics<parallel>], iteration_bounds = array<i64: 2>, scalar_prefetch = 0 : i64, scratch_operands = 1 : i64, tpu.core_type = #tpu.core_type<tc>, window_params = [{transform_indices = @transform_0, window_bounds = array<i64: 1, 16, 16, 8>}, {pipeline_mode = #tpu.pipeline_mode<synchronous>, transform_indices = @transform_1, window_bounds = array<i64: 3, 24, 8>}, {pipeline_mode = #tpu.pipeline_mode<synchronous>, transform_indices = @transform_2, window_bounds = array<i64: 3, 24, 8>}, {transform_indices = @transform_3, window_bounds = array<i64: 1, 16, 16, 8>}]} {
    %c0 = arith.constant 0 : index
    %c0_0 = arith.constant 0 : index
    %c0_1 = arith.constant 0 : index
    %c0_2 = arith.constant 0 : index
    %0 = vector.load %arg1[%c0, %c0_0, %c0_1, %c0_2] : memref<1x16x16x8xf32, #tpu.memory_space<vmem>>, vector<1x16x16x8xf32>
    %1 = vector.shape_cast %0 : vector<1x16x16x8xf32> to vector<16x16x8xf32>
    %c1 = arith.constant 1 : index
    %c0_3 = arith.constant 0 : index
    %c8 = arith.constant 8 : index
    %2 = vector.load %arg5[%c1, %c0_3, %c8] : memref<18x16x24xf32, #tpu.memory_space<vmem>>, vector<16x16x8xf32>
    tpu.vector_store %arg5[%c1, %c0_3, %c8], %1 {strides = array<i32>} : memref<18x16x24xf32, #tpu.memory_space<vmem>>, vector<16x16x8xf32>,
    %3 = vector.extract_strided_slice %1 {offsets = [0, 0, 0], sizes = [16, 15, 8], strides = [1, 1, 1]} : vector<16x16x8xf32> to vector<16x15x8xf32>
    %c1_4 = arith.constant 1 : index
    %c1_5 = arith.constant 1 : index
    %c0_6 = arith.constant 0 : index
    %4 = vector.load %arg5[%c1_4, %c1_5, %c0_6] : memref<18x16x24xf32, #tpu.memory_space<vmem>>, vector<16x15x8xf32>
    tpu.vector_store %arg5[%c1_4, %c1_5, %c0_6], %3 {strides = array<i32>} : memref<18x16x24xf32, #tpu.memory_space<vmem>>, vector<16x15x8xf32>,
    %5 = vector.extract_strided_slice %1 {offsets = [0, 1, 0], sizes = [16, 1, 8], strides = [1, 1, 1]} : vector<16x16x8xf32> to vector<16x1x8xf32>
    %c1_7 = arith.constant 1 : index
    %c0_8 = arith.constant 0 : index
    %c0_9 = arith.constant 0 : index
    %6 = vector.load %arg5[%c1_7, %c0_8, %c0_9] : memref<18x16x24xf32, #tpu.memory_space<vmem>>, vector<16x1x8xf32>
    tpu.vector_store %arg5[%c1_7, %c0_8, %c0_9], %5 {strides = array<i32>} : memref<18x16x24xf32, #tpu.memory_space<vmem>>, vector<16x1x8xf32>,
    %7 = vector.extract_strided_slice %1 {offsets = [0, 1, 0], sizes = [16, 15, 8], strides = [1, 1, 1]} : vector<16x16x8xf32> to vector<16x15x8xf32>
    %c1_10 = arith.constant 1 : index
    %c0_11 = arith.constant 0 : index
    %c16 = arith.constant 16 : index
    %8 = vector.load %arg5[%c1_10, %c0_11, %c16] : memref<18x16x24xf32, #tpu.memory_space<vmem>>, vector<16x15x8xf32>
    tpu.vector_store %arg5[%c1_10, %c0_11, %c16], %7 {strides = array<i32>} : memref<18x16x24xf32, #tpu.memory_space<vmem>>, vector<16x15x8xf32>,
    %9 = vector.extract_strided_slice %1 {offsets = [0, 14, 0], sizes = [16, 1, 8], strides = [1, 1, 1]} : vector<16x16x8xf32> to vector<16x1x8xf32>
    %c1_12 = arith.constant 1 : index
    %c15 = arith.constant 15 : index
    %c16_13 = arith.constant 16 : index
    %10 = vector.load %arg5[%c1_12, %c15, %c16_13] : memref<18x16x24xf32, #tpu.memory_space<vmem>>, vector<16x1x8xf32>
    tpu.vector_store %arg5[%c1_12, %c15, %c16_13], %9 {strides = array<i32>} : memref<18x16x24xf32, #tpu.memory_space<vmem>>, vector<16x1x8xf32>,
    %c2 = arith.constant 2 : index
    %c0_14 = arith.constant 0 : index
    %c0_15 = arith.constant 0 : index
    %11 = vector.load %arg5[%c2, %c0_14, %c0_15] : memref<18x16x24xf32, #tpu.memory_space<vmem>>, vector<1x16x24xf32>
    %c0_16 = arith.constant 0 : index
    %c0_17 = arith.constant 0 : index
    %c0_18 = arith.constant 0 : index
    %12 = vector.load %arg5[%c0_16, %c0_17, %c0_18] : memref<18x16x24xf32, #tpu.memory_space<vmem>>, vector<1x16x24xf32>
    tpu.vector_store %arg5[%c0_16, %c0_17, %c0_18], %11 {strides = array<i32>} : memref<18x16x24xf32, #tpu.memory_space<vmem>>, vector<1x16x24xf32>,
    %c15_19 = arith.constant 15 : index
    %c0_20 = arith.constant 0 : index
    %c0_21 = arith.constant 0 : index
    %13 = vector.load %arg5[%c15_19, %c0_20, %c0_21] : memref<18x16x24xf32, #tpu.memory_space<vmem>>, vector<1x16x24xf32>
    %c17 = arith.constant 17 : index
    %c0_22 = arith.constant 0 : index
    %c0_23 = arith.constant 0 : index
    %14 = vector.load %arg5[%c17, %c0_22, %c0_23] : memref<18x16x24xf32, #tpu.memory_space<vmem>>, vector<1x16x24xf32>
    tpu.vector_store %arg5[%c17, %c0_22, %c0_23], %13 {strides = array<i32>} : memref<18x16x24xf32, #tpu.memory_space<vmem>>, vector<1x16x24xf32>,
    %c0_24 = arith.constant 0 : index
    %c0_25 = arith.constant 0 : index
    %c0_26 = arith.constant 0 : index
    %15 = vector.load %arg5[%c0_24, %c0_25, %c0_26] : memref<18x16x24xf32, #tpu.memory_space<vmem>>, vector<16x16x24xf32>
    %16 = vector.shape_cast %15 : vector<16x16x24xf32> to vector<256x24xf32>
    %c0_27 = arith.constant 0 : index
    %c0_28 = arith.constant 0 : index
    %c0_29 = arith.constant 0 : index
    %17 = vector.load %arg2[%c0_27, %c0_28, %c0_29] : memref<3x24x8xf32, #tpu.memory_space<vmem>>, vector<1x24x8xf32>
    %18 = vector.shape_cast %17 : vector<1x24x8xf32> to vector<24x8xf32>
    %cst = arith.constant dense<0.000000e+00> : vector<256x8xf32>
    %19 = tpu.matmul %16, %18, %cst {dimension_numbers = #tpu.dot_dimension_numbers<[1], [0], [0], [1], [0, 0, 1, 1], [], []>} : vector<256x24xf32>, vector<24x8xf32>, vector<256x8xf32> -> vector<256x8xf32>
    %c1_30 = arith.constant 1 : index
    %c0_31 = arith.constant 0 : index
    %c0_32 = arith.constant 0 : index
    %20 = vector.load %arg5[%c1_30, %c0_31, %c0_32] : memref<18x16x24xf32, #tpu.memory_space<vmem>>, vector<16x16x24xf32>
    %21 = vector.shape_cast %20 : vector<16x16x24xf32> to vector<256x24xf32>
    %c1_33 = arith.constant 1 : index
    %c0_34 = arith.constant 0 : index
    %c0_35 = arith.constant 0 : index
    %22 = vector.load %arg2[%c1_33, %c0_34, %c0_35] : memref<3x24x8xf32, #tpu.memory_space<vmem>>, vector<1x24x8xf32>
    %23 = vector.shape_cast %22 : vector<1x24x8xf32> to vector<24x8xf32>
    %cst_36 = arith.constant dense<0.000000e+00> : vector<256x8xf32>
    %24 = tpu.matmul %21, %23, %cst_36 {dimension_numbers = #tpu.dot_dimension_numbers<[1], [0], [0], [1], [0, 0, 1, 1], [], []>} : vector<256x24xf32>, vector<24x8xf32>, vector<256x8xf32> -> vector<256x8xf32>
    %25 = arith.addf %19, %24 : vector<256x8xf32>
    %c2_37 = arith.constant 2 : index
    %c0_38 = arith.constant 0 : index
    %c0_39 = arith.constant 0 : index
    %26 = vector.load %arg5[%c2_37, %c0_38, %c0_39] : memref<18x16x24xf32, #tpu.memory_space<vmem>>, vector<16x16x24xf32>
    %27 = vector.shape_cast %26 : vector<16x16x24xf32> to vector<256x24xf32>
    %c2_40 = arith.constant 2 : index
    %c0_41 = arith.constant 0 : index
    %c0_42 = arith.constant 0 : index
    %28 = vector.load %arg2[%c2_40, %c0_41, %c0_42] : memref<3x24x8xf32, #tpu.memory_space<vmem>>, vector<1x24x8xf32>
    %29 = vector.shape_cast %28 : vector<1x24x8xf32> to vector<24x8xf32>
    %cst_43 = arith.constant dense<0.000000e+00> : vector<256x8xf32>
    %30 = tpu.matmul %27, %29, %cst_43 {dimension_numbers = #tpu.dot_dimension_numbers<[1], [0], [0], [1], [0, 0, 1, 1], [], []>} : vector<256x24xf32>, vector<24x8xf32>, vector<256x8xf32> -> vector<256x8xf32>
    %31 = arith.addf %25, %30 : vector<256x8xf32>
    %cst_44 = arith.constant dense<0.000000e+00> : vector<8xf32>
    %32 = vector.multi_reduction <add>, %31, %cst_44 [0] : vector<256x8xf32> to vector<8xf32>
    %33 = vector.shape_cast %32 : vector<8xf32> to vector<1x8xf32>
    %cst_45 = arith.constant 3.906250e-03 : f32
    %34 = vector.broadcast %cst_45 : f32 to vector<1x8xf32>
    %35 = arith.mulf %33, %34 : vector<1x8xf32>
    %36 = arith.mulf %31, %31 : vector<256x8xf32>
    %cst_46 = arith.constant dense<0.000000e+00> : vector<8xf32>
    %37 = vector.multi_reduction <add>, %36, %cst_46 [0] : vector<256x8xf32> to vector<8xf32>
    %38 = vector.shape_cast %37 : vector<8xf32> to vector<1x8xf32>
    %cst_47 = arith.constant 3.906250e-03 : f32
    %39 = vector.broadcast %cst_47 : f32 to vector<1x8xf32>
    %40 = arith.mulf %38, %39 : vector<1x8xf32>
    %41 = arith.mulf %35, %35 : vector<1x8xf32>
    %42 = arith.subf %40, %41 : vector<1x8xf32>
    %cst_48 = arith.constant 0.000000e+00 : f32
    %43 = vector.broadcast %cst_48 : f32 to vector<1x8xf32>
    %44 = arith.maximumf %42, %43 : vector<1x8xf32>
    %45 = vector.broadcast %35 : vector<1x8xf32> to vector<256x8xf32>
    %46 = arith.subf %31, %45 : vector<256x8xf32>
    %cst_49 = arith.constant 9.99999974E-6 : f32
    %47 = vector.broadcast %cst_49 : f32 to vector<1x8xf32>
    %48 = arith.addf %44, %47 : vector<1x8xf32>
    %49 = math.rsqrt %48 : vector<1x8xf32>
    %50 = vector.broadcast %49 : vector<1x8xf32> to vector<256x8xf32>
    %51 = arith.mulf %46, %50 : vector<256x8xf32>
    %cst_50 = arith.constant 0.000000e+00 : f32
    %52 = vector.broadcast %cst_50 : f32 to vector<256x8xf32>
    %53 = arith.maximumf %51, %52 : vector<256x8xf32>
    %54 = vector.shape_cast %53 : vector<256x8xf32> to vector<16x16x8xf32>
    %c1_51 = arith.constant 1 : index
    %c0_52 = arith.constant 0 : index
    %c8_53 = arith.constant 8 : index
    %55 = vector.load %arg5[%c1_51, %c0_52, %c8_53] : memref<18x16x24xf32, #tpu.memory_space<vmem>>, vector<16x16x8xf32>
    tpu.vector_store %arg5[%c1_51, %c0_52, %c8_53], %54 {strides = array<i32>} : memref<18x16x24xf32, #tpu.memory_space<vmem>>, vector<16x16x8xf32>,
    %56 = vector.extract_strided_slice %54 {offsets = [0, 0, 0], sizes = [16, 15, 8], strides = [1, 1, 1]} : vector<16x16x8xf32> to vector<16x15x8xf32>
    %c1_54 = arith.constant 1 : index
    %c1_55 = arith.constant 1 : index
    %c0_56 = arith.constant 0 : index
    %57 = vector.load %arg5[%c1_54, %c1_55, %c0_56] : memref<18x16x24xf32, #tpu.memory_space<vmem>>, vector<16x15x8xf32>
    tpu.vector_store %arg5[%c1_54, %c1_55, %c0_56], %56 {strides = array<i32>} : memref<18x16x24xf32, #tpu.memory_space<vmem>>, vector<16x15x8xf32>,
    %58 = vector.extract_strided_slice %54 {offsets = [0, 1, 0], sizes = [16, 1, 8], strides = [1, 1, 1]} : vector<16x16x8xf32> to vector<16x1x8xf32>
    %c1_57 = arith.constant 1 : index
    %c0_58 = arith.constant 0 : index
    %c0_59 = arith.constant 0 : index
    %59 = vector.load %arg5[%c1_57, %c0_58, %c0_59] : memref<18x16x24xf32, #tpu.memory_space<vmem>>, vector<16x1x8xf32>
    tpu.vector_store %arg5[%c1_57, %c0_58, %c0_59], %58 {strides = array<i32>} : memref<18x16x24xf32, #tpu.memory_space<vmem>>, vector<16x1x8xf32>,
    %60 = vector.extract_strided_slice %54 {offsets = [0, 1, 0], sizes = [16, 15, 8], strides = [1, 1, 1]} : vector<16x16x8xf32> to vector<16x15x8xf32>
    %c1_60 = arith.constant 1 : index
    %c0_61 = arith.constant 0 : index
    %c16_62 = arith.constant 16 : index
    %61 = vector.load %arg5[%c1_60, %c0_61, %c16_62] : memref<18x16x24xf32, #tpu.memory_space<vmem>>, vector<16x15x8xf32>
    tpu.vector_store %arg5[%c1_60, %c0_61, %c16_62], %60 {strides = array<i32>} : memref<18x16x24xf32, #tpu.memory_space<vmem>>, vector<16x15x8xf32>,
    %62 = vector.extract_strided_slice %54 {offsets = [0, 14, 0], sizes = [16, 1, 8], strides = [1, 1, 1]} : vector<16x16x8xf32> to vector<16x1x8xf32>
    %c1_63 = arith.constant 1 : index
    %c15_64 = arith.constant 15 : index
    %c16_65 = arith.constant 16 : index
    %63 = vector.load %arg5[%c1_63, %c15_64, %c16_65] : memref<18x16x24xf32, #tpu.memory_space<vmem>>, vector<16x1x8xf32>
    tpu.vector_store %arg5[%c1_63, %c15_64, %c16_65], %62 {strides = array<i32>} : memref<18x16x24xf32, #tpu.memory_space<vmem>>, vector<16x1x8xf32>,
    %c2_66 = arith.constant 2 : index
    %c0_67 = arith.constant 0 : index
    %c0_68 = arith.constant 0 : index
    %64 = vector.load %arg5[%c2_66, %c0_67, %c0_68] : memref<18x16x24xf32, #tpu.memory_space<vmem>>, vector<1x16x24xf32>
    %c0_69 = arith.constant 0 : index
    %c0_70 = arith.constant 0 : index
    %c0_71 = arith.constant 0 : index
    %65 = vector.load %arg5[%c0_69, %c0_70, %c0_71] : memref<18x16x24xf32, #tpu.memory_space<vmem>>, vector<1x16x24xf32>
    tpu.vector_store %arg5[%c0_69, %c0_70, %c0_71], %64 {strides = array<i32>} : memref<18x16x24xf32, #tpu.memory_space<vmem>>, vector<1x16x24xf32>,
    %c15_72 = arith.constant 15 : index
    %c0_73 = arith.constant 0 : index
    %c0_74 = arith.constant 0 : index
    %66 = vector.load %arg5[%c15_72, %c0_73, %c0_74] : memref<18x16x24xf32, #tpu.memory_space<vmem>>, vector<1x16x24xf32>
    %c17_75 = arith.constant 17 : index
    %c0_76 = arith.constant 0 : index
    %c0_77 = arith.constant 0 : index
    %67 = vector.load %arg5[%c17_75, %c0_76, %c0_77] : memref<18x16x24xf32, #tpu.memory_space<vmem>>, vector<1x16x24xf32>
    tpu.vector_store %arg5[%c17_75, %c0_76, %c0_77], %66 {strides = array<i32>} : memref<18x16x24xf32, #tpu.memory_space<vmem>>, vector<1x16x24xf32>,
    %c0_78 = arith.constant 0 : index
    %c0_79 = arith.constant 0 : index
    %c0_80 = arith.constant 0 : index
    %68 = vector.load %arg5[%c0_78, %c0_79, %c0_80] : memref<18x16x24xf32, #tpu.memory_space<vmem>>, vector<16x16x24xf32>
    %69 = vector.shape_cast %68 : vector<16x16x24xf32> to vector<256x24xf32>
    %c0_81 = arith.constant 0 : index
    %c0_82 = arith.constant 0 : index
    %c0_83 = arith.constant 0 : index
    %70 = vector.load %arg3[%c0_81, %c0_82, %c0_83] : memref<3x24x8xf32, #tpu.memory_space<vmem>>, vector<1x24x8xf32>
    %71 = vector.shape_cast %70 : vector<1x24x8xf32> to vector<24x8xf32>
    %cst_84 = arith.constant dense<0.000000e+00> : vector<256x8xf32>
    %72 = tpu.matmul %69, %71, %cst_84 {dimension_numbers = #tpu.dot_dimension_numbers<[1], [0], [0], [1], [0, 0, 1, 1], [], []>} : vector<256x24xf32>, vector<24x8xf32>, vector<256x8xf32> -> vector<256x8xf32>
    %c1_85 = arith.constant 1 : index
    %c0_86 = arith.constant 0 : index
    %c0_87 = arith.constant 0 : index
    %73 = vector.load %arg5[%c1_85, %c0_86, %c0_87] : memref<18x16x24xf32, #tpu.memory_space<vmem>>, vector<16x16x24xf32>
    %74 = vector.shape_cast %73 : vector<16x16x24xf32> to vector<256x24xf32>
    %c1_88 = arith.constant 1 : index
    %c0_89 = arith.constant 0 : index
    %c0_90 = arith.constant 0 : index
    %75 = vector.load %arg3[%c1_88, %c0_89, %c0_90] : memref<3x24x8xf32, #tpu.memory_space<vmem>>, vector<1x24x8xf32>
    %76 = vector.shape_cast %75 : vector<1x24x8xf32> to vector<24x8xf32>
    %cst_91 = arith.constant dense<0.000000e+00> : vector<256x8xf32>
    %77 = tpu.matmul %74, %76, %cst_91 {dimension_numbers = #tpu.dot_dimension_numbers<[1], [0], [0], [1], [0, 0, 1, 1], [], []>} : vector<256x24xf32>, vector<24x8xf32>, vector<256x8xf32> -> vector<256x8xf32>
    %78 = arith.addf %72, %77 : vector<256x8xf32>
    %c2_92 = arith.constant 2 : index
    %c0_93 = arith.constant 0 : index
    %c0_94 = arith.constant 0 : index
    %79 = vector.load %arg5[%c2_92, %c0_93, %c0_94] : memref<18x16x24xf32, #tpu.memory_space<vmem>>, vector<16x16x24xf32>
    %80 = vector.shape_cast %79 : vector<16x16x24xf32> to vector<256x24xf32>
    %c2_95 = arith.constant 2 : index
    %c0_96 = arith.constant 0 : index
    %c0_97 = arith.constant 0 : index
    %81 = vector.load %arg3[%c2_95, %c0_96, %c0_97] : memref<3x24x8xf32, #tpu.memory_space<vmem>>, vector<1x24x8xf32>
    %82 = vector.shape_cast %81 : vector<1x24x8xf32> to vector<24x8xf32>
    %cst_98 = arith.constant dense<0.000000e+00> : vector<256x8xf32>
    %83 = tpu.matmul %80, %82, %cst_98 {dimension_numbers = #tpu.dot_dimension_numbers<[1], [0], [0], [1], [0, 0, 1, 1], [], []>} : vector<256x24xf32>, vector<24x8xf32>, vector<256x8xf32> -> vector<256x8xf32>
    %84 = arith.addf %78, %83 : vector<256x8xf32>
    %cst_99 = arith.constant dense<0.000000e+00> : vector<8xf32>
    %85 = vector.multi_reduction <add>, %84, %cst_99 [0] : vector<256x8xf32> to vector<8xf32>
    %86 = vector.shape_cast %85 : vector<8xf32> to vector<1x8xf32>
    %cst_100 = arith.constant 3.906250e-03 : f32
    %87 = vector.broadcast %cst_100 : f32 to vector<1x8xf32>
    %88 = arith.mulf %86, %87 : vector<1x8xf32>
    %89 = arith.mulf %84, %84 : vector<256x8xf32>
    %cst_101 = arith.constant dense<0.000000e+00> : vector<8xf32>
    %90 = vector.multi_reduction <add>, %89, %cst_101 [0] : vector<256x8xf32> to vector<8xf32>
    %91 = vector.shape_cast %90 : vector<8xf32> to vector<1x8xf32>
    %cst_102 = arith.constant 3.906250e-03 : f32
    %92 = vector.broadcast %cst_102 : f32 to vector<1x8xf32>
    %93 = arith.mulf %91, %92 : vector<1x8xf32>
    %94 = arith.mulf %88, %88 : vector<1x8xf32>
    %95 = arith.subf %93, %94 : vector<1x8xf32>
    %cst_103 = arith.constant 0.000000e+00 : f32
    %96 = vector.broadcast %cst_103 : f32 to vector<1x8xf32>
    %97 = arith.maximumf %95, %96 : vector<1x8xf32>
    %98 = vector.broadcast %88 : vector<1x8xf32> to vector<256x8xf32>
    %99 = arith.subf %84, %98 : vector<256x8xf32>
    %cst_104 = arith.constant 9.99999974E-6 : f32
    %100 = vector.broadcast %cst_104 : f32 to vector<1x8xf32>
    %101 = arith.addf %97, %100 : vector<1x8xf32>
    %102 = math.rsqrt %101 : vector<1x8xf32>
    %103 = vector.broadcast %102 : vector<1x8xf32> to vector<256x8xf32>
    %104 = arith.mulf %99, %103 : vector<256x8xf32>
    %c0_105 = arith.constant 0 : index
    %c0_106 = arith.constant 0 : index
    %c0_107 = arith.constant 0 : index
    %c0_108 = arith.constant 0 : index
    %105 = vector.load %arg1[%c0_105, %c0_106, %c0_107, %c0_108] : memref<1x16x16x8xf32, #tpu.memory_space<vmem>>, vector<1x16x16x8xf32>
    %106 = vector.shape_cast %105 : vector<1x16x16x8xf32> to vector<16x16x8xf32>
    %107 = vector.shape_cast %104 : vector<256x8xf32> to vector<16x16x8xf32>
    %108 = arith.addf %106, %107 : vector<16x16x8xf32>
    %c0_109 = arith.constant 0 : index
    %c0_110 = arith.constant 0 : index
    %c0_111 = arith.constant 0 : index
    %c0_112 = arith.constant 0 : index
    %109 = vector.load %arg4[%c0_109, %c0_110, %c0_111, %c0_112] : memref<1x16x16x8xf32, #tpu.memory_space<vmem>>, vector<1x16x16x8xf32>
    %110 = vector.shape_cast %109 : vector<1x16x16x8xf32> to vector<16x16x8xf32>
    %111 = vector.shape_cast %108 : vector<16x16x8xf32> to vector<1x16x16x8xf32>
    tpu.vector_store %arg4[%c0_109, %c0_110, %c0_111, %c0_112], %111 {strides = array<i32>} : memref<1x16x16x8xf32, #tpu.memory_space<vmem>>, vector<1x16x16x8xf32>,
    return
  }
  func.func @transform_0(%arg0: i32) -> (i32, i32, i32, i32) {
    %c0_i32 = arith.constant 0 : i32
    %c0_i32_0 = arith.constant 0 : i32
    %c0_i32_1 = arith.constant 0 : i32
    %c0_i32_2 = arith.constant 0 : i32
    return %arg0, %c0_i32, %c0_i32_0, %c0_i32_1 : i32, i32, i32, i32
  }
  func.func @transform_1(%arg0: i32) -> (i32, i32, i32) {
    %c0_i32 = arith.constant 0 : i32
    %c0_i32_0 = arith.constant 0 : i32
    %c0_i32_1 = arith.constant 0 : i32
    %c0_i32_2 = arith.constant 0 : i32
    return %c0_i32, %c0_i32_0, %c0_i32_1 : i32, i32, i32
  }
  func.func @transform_2(%arg0: i32) -> (i32, i32, i32) {
    %c0_i32 = arith.constant 0 : i32
    %c0_i32_0 = arith.constant 0 : i32
    %c0_i32_1 = arith.constant 0 : i32
    %c0_i32_2 = arith.constant 0 : i32
    return %c0_i32, %c0_i32_0, %c0_i32_1 : i32, i32, i32
  }
  func.func @transform_3(%arg0: i32) -> (i32, i32, i32, i32) {
    %c0_i32 = arith.constant 0 : i32
    %c0_i32_0 = arith.constant 0 : i32
    %c0_i32_1 = arith.constant 0 : i32
    %c0_i32_2 = arith.constant 0 : i32
    return %arg0, %c0_i32, %c0_i32_0, %c0_i32_1 : i32, i32, i32, i32
  }
}

</mosaic_0001>

<llo_original>
// kernel: tpu_custom_call.1
$region0: #{tpu_custom_call.1}
  #allocation0 [shape = 'u32[]', space=smem, size = 0x4, offset = 0x4, fixed_abs, tag = 'smem constant byte address 0x4 - core index']
  #allocation1 [shape = 'u32[144,128]{1,0:T(1,128)}', space=vmem, size = 0x12000, scoped, tag = 'internal scratch']
  #allocation2 [shape = 'f32[18,16,24]{2,1,0:T(8,128)}', space=vmem, size = 0x24000, scoped, tag = 'scratch operand']
  %s0 = inlined_call_operand.vmem [shape: f32[2,16,16,8], index: 0, kind: input, shape index: {}]
  %s1 = inlined_call_operand.vmem [shape: f32[3,24,8], index: 1, kind: input, shape index: {}]
  %s2 = inlined_call_operand.vmem [shape: f32[3,24,8], index: 2, kind: input, shape index: {}]
  %s3 = inlined_call_operand.vmem [shape: f32[2,16,16,8], index: 3, kind: output, shape index: {}]
  %s4 = sld [smem:[#allocation0]]
  $region45: #{tpu_custom_call.1} parent=0
    _
  %s6 = ssub.s32 1, %s4
  %s7 = scalar_select 0, %s6, %s4
  loop: start=0, step=1, limit=4
  $region2: #{tpu_custom_call.1} parent=0 // loop_pre_header
    _
  $region3: #{tpu_custom_call.1} parent=0 // loop_header
    %s9 = sphi 0, %s13
    %p10 = scmp.ge.s32.totalorder %s9, 4
    %s19 = sphi 0, %s21
    %s22 = sphi 0, %s19
    %s23 = sphi 0, %s22
    %s39 = sphi 0, %s23
    %s43 = sphi 0, %s43
    %s45 = sphi 0, %s43
    %s46 = sphi 0, %s45
    %s60 = sphi 0, %s46
    %s64 = sphi 0, %s64
    %s66 = sphi 0, %s64
    %s67 = sphi 0, %s66
    %s81 = sphi 0, %s67
    %s87 = sphi 0, %s89
    %s90 = sphi 0, %s87
    %s91 = sphi 0, %s90
    %s107 = sphi 0, %s91
  $region4: #{tpu_custom_call.1} parent=0 // loop_header_branch
    %12 = sbr.rel (%p10) target = $region8
  $region5: #{tpu_custom_call.1} parent=0 // loop_body
    %s14 = ssub.s32 %s9, 1
    %s15 = ssub.s32 %s9, 2
    %s16 = sadd.s32 %s9, 1
    %s17 = ssub.s32 %s9, %s16
    %p18 = scmp.eq.s32.totalorder %s17, 0
    %s20 = sadd.s32 %s19, 1
    %s21 = scalar_select %p18, %s19, %s20
    %p24 = pneg %p18
    %p25 = scmp.eq.s32.totalorder %s9, 1
    %p26 = por %p24, %p25
    %p27 = scmp.ne.s32.totalorder %s19, %s22
    %p28 = scmp.eq.s32.totalorder %s9, 0
    %p29 = por %p27, %p28
    %p30 = scmp.ne.s32.totalorder %s19, %s22
    %p31 = scmp.eq.s32.totalorder %s14, 1
    %p32 = por %p30, %p31
    %p33 = scmp.ne.s32.totalorder %s22, %s23
    %p34 = scmp.eq.s32.totalorder %s14, 0
    %p35 = por %p33, %p34
    %p36 = scmp.ne.s32.totalorder %s22, %s23
    %p37 = scmp.eq.s32.totalorder %s15, 1
    %p38 = por %p36, %p37
    %p40 = scmp.ne.s32.totalorder %s23, %s39
    %p41 = scmp.eq.s32.totalorder %s15, 0
    %p42 = por %p40, %p41
    %s44 = sadd.s32 %s43, 1
    %p47 = scmp.eq.s32.totalorder %s9, 1
    %p48 = scmp.ne.s32.totalorder %s43, %s45
    %p49 = scmp.eq.s32.totalorder %s9, 0
    %p50 = por %p48, %p49
    %p51 = scmp.ne.s32.totalorder %s43, %s45
    %p52 = scmp.eq.s32.totalorder %s14, 1
    %p53 = por %p51, %p52
    %p54 = scmp.ne.s32.totalorder %s45, %s46
    %p55 = scmp.eq.s32.totalorder %s14, 0
    %p56 = por %p54, %p55
    %p57 = scmp.ne.s32.totalorder %s45, %s46
    %p58 = scmp.eq.s32.totalorder %s15, 1
    %p59 = por %p57, %p58
    %p61 = scmp.ne.s32.totalorder %s46, %s60
    %p62 = scmp.eq.s32.totalorder %s15, 0
    %p63 = por %p61, %p62
    %s65 = sadd.s32 %s64, 1
    %p68 = scmp.eq.s32.totalorder %s9, 1
    %p69 = scmp.ne.s32.totalorder %s64, %s66
    %p70 = scmp.eq.s32.totalorder %s9, 0
    %p71 = por %p69, %p70
    %p72 = scmp.ne.s32.totalorder %s64, %s66
    %p73 = scmp.eq.s32.totalorder %s14, 1
    %p74 = por %p72, %p73
    %p75 = scmp.ne.s32.totalorder %s66, %s67
    %p76 = scmp.eq.s32.totalorder %s14, 0
    %p77 = por %p75, %p76
    %p78 = scmp.ne.s32.totalorder %s66, %s67
    %p79 = scmp.eq.s32.totalorder %s15, 1
    %p80 = por %p78, %p79
    %p82 = scmp.ne.s32.totalorder %s67, %s81
    %p83 = scmp.eq.s32.totalorder %s15, 0
    %p84 = por %p82, %p83
    %s85 = ssub.s32 %s9, %s16
    %p86 = scmp.eq.s32.totalorder %s85, 0
    %s88 = sadd.s32 %s87, 1
    %s89 = scalar_select %p86, %s87, %s88
    %p92 = pneg %p86
    %p93 = scmp.eq.s32.totalorder %s9, 1
    %p94 = por %p92, %p93
    %p95 = scmp.ne.s32.totalorder %s87, %s90
    %p96 = scmp.eq.s32.totalorder %s9, 0
    %p97 = por %p95, %p96
    %p98 = scmp.ne.s32.totalorder %s87, %s90
    %p99 = scmp.eq.s32.totalorder %s14, 1
    %p100 = por %p98, %p99
    %p101 = scmp.ne.s32.totalorder %s90, %s91
    %p102 = scmp.eq.s32.totalorder %s14, 0
    %p103 = por %p101, %p102
    %p104 = scmp.ne.s32.totalorder %s90, %s91
    %p105 = scmp.eq.s32.totalorder %s15, 1
    %p106 = por %p104, %p105
    %p108 = scmp.ne.s32.totalorder %s91, %s107
    %p109 = scmp.eq.s32.totalorder %s15, 0
    %p110 = por %p108, %p109
    %p111 = scmp.le.s32.totalorder 1, %s9
    %p112 = scmp.lt.s32.totalorder %s9, 3
    %p113 = pnand %p111, %p112
    %p114 = pneg %p113
    // Predicated region
    $region9: #{tpu_custom_call.1} parent=5 // pred_check
      _
    $region10: #{tpu_custom_call.1} parent=5 // pred_check_branch
      %116 = sbr.rel (%p113) target = $region12
    $region11: #{tpu_custom_call.1} parent=5 // pred_region
      %s117 = ssub.s32 %s9, 1
      // Predicated region
      $region13: #{tpu_custom_call.1} parent=11 // pred_check
        %p118 = pneg %p56
      $region14: #{tpu_custom_call.1} parent=11 // pred_check_branch
        %120 = sbr.rel (%p118) target = $region16
      $region15: #{tpu_custom_call.1} parent=11 // pred_region
        _
      $region16: #{tpu_custom_call.1} parent=11 // pred_fallthru
        _
      // Predicated region
      $region17: #{tpu_custom_call.1} parent=11 // pred_check
        %p121 = pneg %p77
      $region18: #{tpu_custom_call.1} parent=11 // pred_check_branch
        %123 = sbr.rel (%p121) target = $region20
      $region19: #{tpu_custom_call.1} parent=11 // pred_region
        _
      $region20: #{tpu_custom_call.1} parent=11 // pred_fallthru
        _
    $region12: #{tpu_custom_call.1} parent=5 // pred_fallthru
      _
    %p124 = scmp.lt.s32.totalorder %s9, 2
    // Predicated region
    $region21: #{tpu_custom_call.1} parent=5 // pred_check
      %p125 = pneg %p124
    $region22: #{tpu_custom_call.1} parent=5 // pred_check_branch
      %127 = sbr.rel (%p125) target = $region24
    $region23: #{tpu_custom_call.1} parent=5 // pred_region
      // Predicated region
      $region25: #{tpu_custom_call.1} parent=23 // pred_check
        %p128 = pneg %p29
      $region26: #{tpu_custom_call.1} parent=23 // pred_check_branch
        %130 = sbr.rel (%p128) target = $region28
      $region27: #{tpu_custom_call.1} parent=23 // pred_region
        %p131 = scmp.lt.s32.totalorder %s9, 1
        %s132 = scalar_select %p131, %s9, 1
        %s133 = smul.addr %s132, 32
        %s134 = smul.addr %s133, 8
        %s135 = scalar_lea.vmem %s0, %s134
      $region28: #{tpu_custom_call.1} parent=23 // pred_fallthru
        _
    $region24: #{tpu_custom_call.1} parent=5 // pred_fallthru
      _
    %p136 = scmp.le.s32.totalorder 1, %s9
    %p137 = scmp.lt.s32.totalorder %s9, 3
    %p138 = pnand %p136, %p137
    %p139 = pneg %p138
    // Predicated region
    $region29: #{tpu_custom_call.1} parent=5 // pred_check
      _
    $region30: #{tpu_custom_call.1} parent=5 // pred_check_branch
      %141 = sbr.rel (%p138) target = $region32
    $region31: #{tpu_custom_call.1} parent=5 // pred_region
      %s142 = ssub.s32 %s9, 1
      %p143 = scmp.lt.s32.totalorder %s14, 1
      %s144 = scalar_select %p143, %s14, 1
      %s145 = smul.addr %s144, 32
      %s146 = smul.addr %s145, 8
      %s147 = scalar_lea.vmem %s0, %s146
      %p148 = pneg %p35
      %p149 = pneg %p32
      %p150 = pneg %p56
      %p151 = pneg %p53
      %p152 = pneg %p77
      %p153 = pneg %p74
      %p154 = pneg %p103
      %p155 = pneg %p100
      %p156 = scmp.lt.s32.totalorder %s14, 1
      %s157 = scalar_select %p156, %s14, 1
      %s158 = smul.addr %s157, 32
      %s159 = smul.addr %s158, 8
      %s160 = scalar_lea.vmem %s3, %s159
      %p161 = scmp.lt.s32.totalorder %s14, 1
      %s162 = scalar_select %p161, %s14, 1
      %s163 = smul.addr %s162, 32
      %s164 = smul.addr %s163, 8
      %s165 = scalar_lea.vmem %s0, %s164
      %p166 = scmp.lt.s32.totalorder %s14, 1
      %s167 = scalar_select %p166, %s14, 1
      %s168 = smul.addr %s167, 32
      %s169 = smul.addr %s168, 8
      %s170 = scalar_lea.vmem %s3, %s169
      %v171 = vld [vmem:[%s165] sm:$0xff]
      %v172 = vld [vmem:[%s165 + $0x8] sm:$0xff]
      %v173 = vld [vmem:[%s165 + $0x10] sm:$0xff]
      %v174 = vld [vmem:[%s165 + $0x18] sm:$0xff]
      %v175 = vld [vmem:[%s165 + $0x20] sm:$0xff]
      %v176 = vld [vmem:[%s165 + $0x28] sm:$0xff]
      %v177 = vld [vmem:[%s165 + $0x30] sm:$0xff]
      %v178 = vld [vmem:[%s165 + $0x38] sm:$0xff]
      %v179 = vld [vmem:[%s165 + $0x40] sm:$0xff]
      %v180 = vld [vmem:[%s165 + $0x48] sm:$0xff]
      %v181 = vld [vmem:[%s165 + $0x50] sm:$0xff]
      %v182 = vld [vmem:[%s165 + $0x58] sm:$0xff]
      %v183 = vld [vmem:[%s165 + $0x60] sm:$0xff]
      %v184 = vld [vmem:[%s165 + $0x68] sm:$0xff]
      %v185 = vld [vmem:[%s165 + $0x70] sm:$0xff]
      %v186 = vld [vmem:[%s165 + $0x78] sm:$0xff]
      %v187 = vld [vmem:[%s165 + $0x80] sm:$0xff]
      %v188 = vld [vmem:[%s165 + $0x88] sm:$0xff]
      %v189 = vld [vmem:[%s165 + $0x90] sm:$0xff]
      %v190 = vld [vmem:[%s165 + $0x98] sm:$0xff]
      %v191 = vld [vmem:[%s165 + $0xa0] sm:$0xff]
      %v192 = vld [vmem:[%s165 + $0xa8] sm:$0xff]
      %v193 = vld [vmem:[%s165 + $0xb0] sm:$0xff]
      %v194 = vld [vmem:[%s165 + $0xb8] sm:$0xff]
      %v195 = vld [vmem:[%s165 + $0xc0] sm:$0xff]
      %v196 = vld [vmem:[%s165 + $0xc8] sm:$0xff]
      %v197 = vld [vmem:[%s165 + $0xd0] sm:$0xff]
      %v198 = vld [vmem:[%s165 + $0xd8] sm:$0xff]
      %v199 = vld [vmem:[%s165 + $0xe0] sm:$0xff]
      %v200 = vld [vmem:[%s165 + $0xe8] sm:$0xff]
      %v201 = vld [vmem:[%s165 + $0xf0] sm:$0xff]
      %v202 = vld [vmem:[%s165 + $0xf8] sm:$0xff]
      %235 = vrot.lane.b32.xlu0 %v171, 8
      %v236 = vpop.permute.xlu0 %235
      %237 = vrot.lane.b32.xlu0 %v172, 8
      %v238 = vpop.permute.xlu0 %237
      %239 = vrot.lane.b32.xlu0 %v173, 8
      %v240 = vpop.permute.xlu0 %239
      %241 = vrot.lane.b32.xlu0 %v174, 8
      %v242 = vpop.permute.xlu0 %241
      %243 = vrot.lane.b32.xlu0 %v175, 8
      %v244 = vpop.permute.xlu0 %243
      %245 = vrot.lane.b32.xlu0 %v176, 8
      %v246 = vpop.permute.xlu0 %245
      %247 = vrot.lane.b32.xlu0 %v177, 8
      %v248 = vpop.permute.xlu0 %247
      %249 = vrot.lane.b32.xlu0 %v178, 8
      %v250 = vpop.permute.xlu0 %249
      %251 = vrot.lane.b32.xlu0 %v179, 8
      %v252 = vpop.permute.xlu0 %251
      %253 = vrot.lane.b32.xlu0 %v180, 8
      %v254 = vpop.permute.xlu0 %253
      %255 = vrot.lane.b32.xlu0 %v181, 8
      %v256 = vpop.permute.xlu0 %255
      %257 = vrot.lane.b32.xlu0 %v182, 8
      %v258 = vpop.permute.xlu0 %257
      %259 = vrot.lane.b32.xlu0 %v183, 8
      %v260 = vpop.permute.xlu0 %259
      %261 = vrot.lane.b32.xlu0 %v184, 8
      %v262 = vpop.permute.xlu0 %261
      %263 = vrot.lane.b32.xlu0 %v185, 8
      %v264 = vpop.permute.xlu0 %263
      %265 = vrot.lane.b32.xlu0 %v186, 8
      %v266 = vpop.permute.xlu0 %265
      %267 = vrot.lane.b32.xlu0 %v187, 8
      %v268 = vpop.permute.xlu0 %267
      %269 = vrot.lane.b32.xlu0 %v188, 8
      %v270 = vpop.permute.xlu0 %269
      %271 = vrot.lane.b32.xlu0 %v189, 8
      %v272 = vpop.permute.xlu0 %271
      %273 = vrot.lane.b32.xlu0 %v190, 8
      %v274 = vpop.permute.xlu0 %273
      %275 = vrot.lane.b32.xlu0 %v191, 8
      %v276 = vpop.permute.xlu0 %275
      %277 = vrot.lane.b32.xlu0 %v192, 8
      %v278 = vpop.permute.xlu0 %277
      %279 = vrot.lane.b32.xlu0 %v193, 8
      %v280 = vpop.permute.xlu0 %279
      %281 = vrot.lane.b32.xlu0 %v194, 8
      %v282 = vpop.permute.xlu0 %281
      %283 = vrot.lane.b32.xlu0 %v195, 8
      %v284 = vpop.permute.xlu0 %283
      %285 = vrot.lane.b32.xlu0 %v196, 8
      %v286 = vpop.permute.xlu0 %285
      %287 = vrot.lane.b32.xlu0 %v197, 8
      %v288 = vpop.permute.xlu0 %287
      %289 = vrot.lane.b32.xlu0 %v198, 8
      %v290 = vpop.permute.xlu0 %289
      %291 = vrot.lane.b32.xlu0 %v199, 8
      %v292 = vpop.permute.xlu0 %291
      %293 = vrot.lane.b32.xlu0 %v200, 8
      %v294 = vpop.permute.xlu0 %293
      %295 = vrot.lane.b32.xlu0 %v201, 8
      %v296 = vpop.permute.xlu0 %295
      %297 = vrot.lane.b32.xlu0 %v202, 8
      %v298 = vpop.permute.xlu0 %297
      %s331 = scalar_lea.vmem [#allocation2], 16
      %vm332 = vcmask 130112
      %333 = vst.msk [vmem:[%s331] sm:$0xff] %vm332, %v236
      %334 = vst.msk [vmem:[%s331 + $0x8] sm:$0xff] %vm332, %v238
      %335 = vst.msk [vmem:[%s331 + $0x10] sm:$0xff] %vm332, %v240
      %336 = vst.msk [vmem:[%s331 + $0x18] sm:$0xff] %vm332, %v242
      %337 = vst.msk [vmem:[%s331 + $0x20] sm:$0xff] %vm332, %v244
      %338 = vst.msk [vmem:[%s331 + $0x28] sm:$0xff] %vm332, %v246
      %339 = vst.msk [vmem:[%s331 + $0x30] sm:$0xff] %vm332, %v248
      %340 = vst.msk [vmem:[%s331 + $0x38] sm:$0xff] %vm332, %v250
      %341 = vst.msk [vmem:[%s331 + $0x40] sm:$0xff] %vm332, %v252
      %342 = vst.msk [vmem:[%s331 + $0x48] sm:$0xff] %vm332, %v254
      %343 = vst.msk [vmem:[%s331 + $0x50] sm:$0xff] %vm332, %v256
      %344 = vst.msk [vmem:[%s331 + $0x58] sm:$0xff] %vm332, %v258
      %345 = vst.msk [vmem:[%s331 + $0x60] sm:$0xff] %vm332, %v260
      %346 = vst.msk [vmem:[%s331 + $0x68] sm:$0xff] %vm332, %v262
      %347 = vst.msk [vmem:[%s331 + $0x70] sm:$0xff] %vm332, %v264
      %348 = vst.msk [vmem:[%s331 + $0x78] sm:$0xff] %vm332, %v266
      %349 = vst.msk [vmem:[%s331 + $0x80] sm:$0xff] %vm332, %v268
      %350 = vst.msk [vmem:[%s331 + $0x88] sm:$0xff] %vm332, %v270
      %351 = vst.msk [vmem:[%s331 + $0x90] sm:$0xff] %vm332, %v272
      %352 = vst.msk [vmem:[%s331 + $0x98] sm:$0xff] %vm332, %v274
      %353 = vst.msk [vmem:[%s331 + $0xa0] sm:$0xff] %vm332, %v276
      %354 = vst.msk [vmem:[%s331 + $0xa8] sm:$0xff] %vm332, %v278
      %355 = vst.msk [vmem:[%s331 + $0xb0] sm:$0xff] %vm332, %v280
      %356 = vst.msk [vmem:[%s331 + $0xb8] sm:$0xff] %vm332, %v282
      %357 = vst.msk [vmem:[%s331 + $0xc0] sm:$0xff] %vm332, %v284
      %358 = vst.msk [vmem:[%s331 + $0xc8] sm:$0xff] %vm332, %v286
      %359 = vst.msk [vmem:[%s331 + $0xd0] sm:$0xff] %vm332, %v288
      %360 = vst.msk [vmem:[%s331 + $0xd8] sm:$0xff] %vm332, %v290
      %361 = vst.msk [vmem:[%s331 + $0xe0] sm:$0xff] %vm332, %v292
      %362 = vst.msk [vmem:[%s331 + $0xe8] sm:$0xff] %vm332, %v294
      %363 = vst.msk [vmem:[%s331 + $0xf0] sm:$0xff] %vm332, %v296
      %364 = vst.msk [vmem:[%s331 + $0xf8] sm:$0xff] %vm332, %v298
      %vm365 = vcmask 64512
      %366 = vst.msk [vmem:[%s331 + $0x1] sm:$0xff] %vm365, %v171
      %vm367 = vcmask 63488
      %368 = vst.msk [vmem:[%s331 + $0x9] sm:$0x7f] %vm367, %v172
      %369 = vst.msk [vmem:[%s331 + $0x11] sm:$0xff] %vm365, %v173
      %370 = vst.msk [vmem:[%s331 + $0x19] sm:$0x7f] %vm367, %v174
      %371 = vst.msk [vmem:[%s331 + $0x21] sm:$0xff] %vm365, %v175
      %372 = vst.msk [vmem:[%s331 + $0x29] sm:$0x7f] %vm367, %v176
      %373 = vst.msk [vmem:[%s331 + $0x31] sm:$0xff] %vm365, %v177
      %374 = vst.msk [vmem:[%s331 + $0x39] sm:$0x7f] %vm367, %v178
      %375 = vst.msk [vmem:[%s331 + $0x41] sm:$0xff] %vm365, %v179
      %376 = vst.msk [vmem:[%s331 + $0x49] sm:$0x7f] %vm367, %v180
      %377 = vst.msk [vmem:[%s331 + $0x51] sm:$0xff] %vm365, %v181
      %378 = vst.msk [vmem:[%s331 + $0x59] sm:$0x7f] %vm367, %v182
      %379 = vst.msk [vmem:[%s331 + $0x61] sm:$0xff] %vm365, %v183
      %380 = vst.msk [vmem:[%s331 + $0x69] sm:$0x7f] %vm367, %v184
      %381 = vst.msk [vmem:[%s331 + $0x71] sm:$0xff] %vm365, %v185
      %382 = vst.msk [vmem:[%s331 + $0x79] sm:$0x7f] %vm367, %v186
      %383 = vst.msk [vmem:[%s331 + $0x81] sm:$0xff] %vm365, %v187
      %384 = vst.msk [vmem:[%s331 + $0x89] sm:$0x7f] %vm367, %v188
      %385 = vst.msk [vmem:[%s331 + $0x91] sm:$0xff] %vm365, %v189
      %386 = vst.msk [vmem:[%s331 + $0x99] sm:$0x7f] %vm367, %v190
      %387 = vst.msk [vmem:[%s331 + $0xa1] sm:$0xff] %vm365, %v191
      %388 = vst.msk [vmem:[%s331 + $0xa9] sm:$0x7f] %vm367, %v192
      %389 = vst.msk [vmem:[%s331 + $0xb1] sm:$0xff] %vm365, %v193
      %390 = vst.msk [vmem:[%s331 + $0xb9] sm:$0x7f] %vm367, %v194
      %391 = vst.msk [vmem:[%s331 + $0xc1] sm:$0xff] %vm365, %v195
      %392 = vst.msk [vmem:[%s331 + $0xc9] sm:$0x7f] %vm367, %v196
      %393 = vst.msk [vmem:[%s331 + $0xd1] sm:$0xff] %vm365, %v197
      %394 = vst.msk [vmem:[%s331 + $0xd9] sm:$0x7f] %vm367, %v198
      %395 = vst.msk [vmem:[%s331 + $0xe1] sm:$0xff] %vm365, %v199
      %396 = vst.msk [vmem:[%s331 + $0xe9] sm:$0x7f] %vm367, %v200
      %397 = vst.msk [vmem:[%s331 + $0xf1] sm:$0xff] %vm365, %v201
      %398 = vst.msk [vmem:[%s331 + $0xf9] sm:$0x7f] %vm367, %v202
      %vm399 = vcmask 58369
      %400 = vst.msk [vmem:[%s331 - $0x1] sm:$0x2] %vm399, %v171
      %401 = vst.msk [vmem:[%s331 + $0xf] sm:$0x2] %vm399, %v173
      %402 = vst.msk [vmem:[%s331 + $0x1f] sm:$0x2] %vm399, %v175
      %403 = vst.msk [vmem:[%s331 + $0x2f] sm:$0x2] %vm399, %v177
      %404 = vst.msk [vmem:[%s331 + $0x3f] sm:$0x2] %vm399, %v179
      %405 = vst.msk [vmem:[%s331 + $0x4f] sm:$0x2] %vm399, %v181
      %406 = vst.msk [vmem:[%s331 + $0x5f] sm:$0x2] %vm399, %v183
      %407 = vst.msk [vmem:[%s331 + $0x6f] sm:$0x2] %vm399, %v185
      %408 = vst.msk [vmem:[%s331 + $0x7f] sm:$0x2] %vm399, %v187
      %409 = vst.msk [vmem:[%s331 + $0x8f] sm:$0x2] %vm399, %v189
      %410 = vst.msk [vmem:[%s331 + $0x9f] sm:$0x2] %vm399, %v191
      %411 = vst.msk [vmem:[%s331 + $0xaf] sm:$0x2] %vm399, %v193
      %412 = vst.msk [vmem:[%s331 + $0xbf] sm:$0x2] %vm399, %v195
      %413 = vst.msk [vmem:[%s331 + $0xcf] sm:$0x2] %vm399, %v197
      %414 = vst.msk [vmem:[%s331 + $0xdf] sm:$0x2] %vm399, %v199
      %415 = vst.msk [vmem:[%s331 + $0xef] sm:$0x2] %vm399, %v201
      %416 = vrot.lane.b32.xlu0 %v171, 16
      %v417 = vpop.permute.xlu0 %416
      %418 = vrot.lane.b32.xlu0 %v172, 16
      %v419 = vpop.permute.xlu0 %418
      %420 = vrot.lane.b32.xlu0 %v173, 16
      %v421 = vpop.permute.xlu0 %420
      %422 = vrot.lane.b32.xlu0 %v174, 16
      %v423 = vpop.permute.xlu0 %422
      %424 = vrot.lane.b32.xlu0 %v175, 16
      %v425 = vpop.permute.xlu0 %424
      %426 = vrot.lane.b32.xlu0 %v176, 16
      %v427 = vpop.permute.xlu0 %426
      %428 = vrot.lane.b32.xlu0 %v177, 16
      %v429 = vpop.permute.xlu0 %428
      %430 = vrot.lane.b32.xlu0 %v178, 16
      %v431 = vpop.permute.xlu0 %430
      %432 = vrot.lane.b32.xlu0 %v179, 16
      %v433 = vpop.permute.xlu0 %432
      %434 = vrot.lane.b32.xlu0 %v180, 16
      %v435 = vpop.permute.xlu0 %434
      %436 = vrot.lane.b32.xlu0 %v181, 16
      %v437 = vpop.permute.xlu0 %436
      %438 = vrot.lane.b32.xlu0 %v182, 16
      %v439 = vpop.permute.xlu0 %438
      %440 = vrot.lane.b32.xlu0 %v183, 16
      %v441 = vpop.permute.xlu0 %440
      %442 = vrot.lane.b32.xlu0 %v184, 16
      %v443 = vpop.permute.xlu0 %442
      %444 = vrot.lane.b32.xlu0 %v185, 16
      %v445 = vpop.permute.xlu0 %444
      %446 = vrot.lane.b32.xlu0 %v186, 16
      %v447 = vpop.permute.xlu0 %446
      %448 = vrot.lane.b32.xlu0 %v187, 16
      %v449 = vpop.permute.xlu0 %448
      %450 = vrot.lane.b32.xlu0 %v188, 16
      %v451 = vpop.permute.xlu0 %450
      %452 = vrot.lane.b32.xlu0 %v189, 16
      %v453 = vpop.permute.xlu0 %452
      %454 = vrot.lane.b32.xlu0 %v190, 16
      %v455 = vpop.permute.xlu0 %454
      %456 = vrot.lane.b32.xlu0 %v191, 16
      %v457 = vpop.permute.xlu0 %456
      %458 = vrot.lane.b32.xlu0 %v192, 16
      %v459 = vpop.permute.xlu0 %458
      %460 = vrot.lane.b32.xlu0 %v193, 16
      %v461 = vpop.permute.xlu0 %460
      %462 = vrot.lane.b32.xlu0 %v194, 16
      %v463 = vpop.permute.xlu0 %462
      %464 = vrot.lane.b32.xlu0 %v195, 16
      %v465 = vpop.permute.xlu0 %464
      %466 = vrot.lane.b32.xlu0 %v196, 16
      %v467 = vpop.permute.xlu0 %466
      %468 = vrot.lane.b32.xlu0 %v197, 16
      %v469 = vpop.permute.xlu0 %468
      %470 = vrot.lane.b32.xlu0 %v198, 16
      %v471 = vpop.permute.xlu0 %470
      %472 = vrot.lane.b32.xlu0 %v199, 16
      %v473 = vpop.permute.xlu0 %472
      %474 = vrot.lane.b32.xlu0 %v200, 16
      %v475 = vpop.permute.xlu0 %474
      %476 = vrot.lane.b32.xlu0 %v201, 16
      %v477 = vpop.permute.xlu0 %476
      %478 = vrot.lane.b32.xlu0 %v202, 16
      %v479 = vpop.permute.xlu0 %478
      %vm512 = vcmask 195713
      %513 = vst.msk [vmem:[%s331 - $0x1] sm:$0xfe] %vm512, %v417
      %vm514 = vcmask 195712
      %515 = vst.msk [vmem:[%s331 + $0x7] sm:$0xff] %vm514, %v419
      %516 = vst.msk [vmem:[%s331 + $0xf] sm:$0xfe] %vm512, %v421
      %517 = vst.msk [vmem:[%s331 + $0x17] sm:$0xff] %vm514, %v423
      %518 = vst.msk [vmem:[%s331 + $0x1f] sm:$0xfe] %vm512, %v425
      %519 = vst.msk [vmem:[%s331 + $0x27] sm:$0xff] %vm514, %v427
      %520 = vst.msk [vmem:[%s331 + $0x2f] sm:$0xfe] %vm512, %v429
      %521 = vst.msk [vmem:[%s331 + $0x37] sm:$0xff] %vm514, %v431
      %522 = vst.msk [vmem:[%s331 + $0x3f] sm:$0xfe] %vm512, %v433
      %523 = vst.msk [vmem:[%s331 + $0x47] sm:$0xff] %vm514, %v435
      %524 = vst.msk [vmem:[%s331 + $0x4f] sm:$0xfe] %vm512, %v437
      %525 = vst.msk [vmem:[%s331 + $0x57] sm:$0xff] %vm514, %v439
      %526 = vst.msk [vmem:[%s331 + $0x5f] sm:$0xfe] %vm512, %v441
      %527 = vst.msk [vmem:[%s331 + $0x67] sm:$0xff] %vm514, %v443
      %528 = vst.msk [vmem:[%s331 + $0x6f] sm:$0xfe] %vm512, %v445
      %529 = vst.msk [vmem:[%s331 + $0x77] sm:$0xff] %vm514, %v447
      %530 = vst.msk [vmem:[%s331 + $0x7f] sm:$0xfe] %vm512, %v449
      %531 = vst.msk [vmem:[%s331 + $0x87] sm:$0xff] %vm514, %v451
      %532 = vst.msk [vmem:[%s331 + $0x8f] sm:$0xfe] %vm512, %v453
      %533 = vst.msk [vmem:[%s331 + $0x97] sm:$0xff] %vm514, %v455
      %534 = vst.msk [vmem:[%s331 + $0x9f] sm:$0xfe] %vm512, %v457
      %535 = vst.msk [vmem:[%s331 + $0xa7] sm:$0xff] %vm514, %v459
      %536 = vst.msk [vmem:[%s331 + $0xaf] sm:$0xfe] %vm512, %v461
      %537 = vst.msk [vmem:[%s331 + $0xb7] sm:$0xff] %vm514, %v463
      %538 = vst.msk [vmem:[%s331 + $0xbf] sm:$0xfe] %vm512, %v465
      %539 = vst.msk [vmem:[%s331 + $0xc7] sm:$0xff] %vm514, %v467
      %540 = vst.msk [vmem:[%s331 + $0xcf] sm:$0xfe] %vm512, %v469
      %541 = vst.msk [vmem:[%s331 + $0xd7] sm:$0xff] %vm514, %v471
      %542 = vst.msk [vmem:[%s331 + $0xdf] sm:$0xfe] %vm512, %v473
      %543 = vst.msk [vmem:[%s331 + $0xe7] sm:$0xff] %vm514, %v475
      %544 = vst.msk [vmem:[%s331 + $0xef] sm:$0xfe] %vm512, %v477
      %545 = vst.msk [vmem:[%s331 + $0xf7] sm:$0xff] %vm514, %v479
      %vm546 = vcmask 194694
      %547 = vst.msk [vmem:[%s331 + $0x9] sm:$0x40] %vm546, %v419
      %548 = vst.msk [vmem:[%s331 + $0x19] sm:$0x40] %vm546, %v423
      %549 = vst.msk [vmem:[%s331 + $0x29] sm:$0x40] %vm546, %v427
      %550 = vst.msk [vmem:[%s331 + $0x39] sm:$0x40] %vm546, %v431
      %551 = vst.msk [vmem:[%s331 + $0x49] sm:$0x40] %vm546, %v435
      %552 = vst.msk [vmem:[%s331 + $0x59] sm:$0x40] %vm546, %v439
      %553 = vst.msk [vmem:[%s331 + $0x69] sm:$0x40] %vm546, %v443
      %554 = vst.msk [vmem:[%s331 + $0x79] sm:$0x40] %vm546, %v447
      %555 = vst.msk [vmem:[%s331 + $0x89] sm:$0x40] %vm546, %v451
      %556 = vst.msk [vmem:[%s331 + $0x99] sm:$0x40] %vm546, %v455
      %557 = vst.msk [vmem:[%s331 + $0xa9] sm:$0x40] %vm546, %v459
      %558 = vst.msk [vmem:[%s331 + $0xb9] sm:$0x40] %vm546, %v463
      %559 = vst.msk [vmem:[%s331 + $0xc9] sm:$0x40] %vm546, %v467
      %560 = vst.msk [vmem:[%s331 + $0xd9] sm:$0x40] %vm546, %v471
      %561 = vst.msk [vmem:[%s331 + $0xe9] sm:$0x40] %vm546, %v475
      %562 = vst.msk [vmem:[%s331 + $0xf9] sm:$0x40] %vm546, %v479
      %s563 = scalar_lea.vmem [#allocation2], 32
      %v564 = vld [vmem:[%s563] sm:$0xff]
      %v565 = vld [vmem:[%s563 + $0x8] sm:$0xff]
      %vm566 = vcmask 195584
      %567 = vst.msk [vmem:[#allocation2] sm:$0xff] %vm566, %v564
      %568 = vst.msk [vmem:[#allocation2 + $0x8] sm:$0xff] %vm566, %v565
      %s569 = scalar_lea.vmem [#allocation2], 240
      %v570 = vld [vmem:[%s569] sm:$0xff]
      %v571 = vld [vmem:[%s569 + $0x8] sm:$0xff]
      %s572 = scalar_lea.vmem [#allocation2], 272
      %573 = vst.msk [vmem:[%s572] sm:$0xff] %vm566, %v570
      %574 = vst.msk [vmem:[%s572 + $0x8] sm:$0xff] %vm566, %v571
      %v575 = vld [vmem:[#allocation2] sm:$0xff]
      %v576 = vld [vmem:[#allocation2 + $0x8] sm:$0xff]
      %v577 = vld [vmem:[#allocation2 + $0x10] sm:$0xff]
      %v578 = vld [vmem:[#allocation2 + $0x18] sm:$0xff]
      %v579 = vld [vmem:[#allocation2 + $0x20] sm:$0xff]
      %v580 = vld [vmem:[#allocation2 + $0x28] sm:$0xff]
      %v581 = vld [vmem:[#allocation2 + $0x30] sm:$0xff]
      %v582 = vld [vmem:[#allocation2 + $0x38] sm:$0xff]
      %v583 = vld [vmem:[#allocation2 + $0x40] sm:$0xff]
      %v584 = vld [vmem:[#allocation2 + $0x48] sm:$0xff]
      %v585 = vld [vmem:[#allocation2 + $0x50] sm:$0xff]
      %v586 = vld [vmem:[#allocation2 + $0x58] sm:$0xff]
      %v587 = vld [vmem:[#allocation2 + $0x60] sm:$0xff]
      %v588 = vld [vmem:[#allocation2 + $0x68] sm:$0xff]
      %v589 = vld [vmem:[#allocation2 + $0x70] sm:$0xff]
      %v590 = vld [vmem:[#allocation2 + $0x78] sm:$0xff]
      %v591 = vld [vmem:[#allocation2 + $0x80] sm:$0xff]
      %v592 = vld [vmem:[#allocation2 + $0x88] sm:$0xff]
      %v593 = vld [vmem:[#allocation2 + $0x90] sm:$0xff]
      %v594 = vld [vmem:[#allocation2 + $0x98] sm:$0xff]
      %v595 = vld [vmem:[#allocation2 + $0xa0] sm:$0xff]
      %v596 = vld [vmem:[#allocation2 + $0xa8] sm:$0xff]
      %v597 = vld [vmem:[#allocation2 + $0xb0] sm:$0xff]
      %v598 = vld [vmem:[#allocation2 + $0xb8] sm:$0xff]
      %v599 = vld [vmem:[#allocation2 + $0xc0] sm:$0xff]
      %v600 = vld [vmem:[#allocation2 + $0xc8] sm:$0xff]
      %v601 = vld [vmem:[#allocation2 + $0xd0] sm:$0xff]
      %v602 = vld [vmem:[#allocation2 + $0xd8] sm:$0xff]
      %v603 = vld [vmem:[#allocation2 + $0xe0] sm:$0xff]
      %v604 = vld [vmem:[#allocation2 + $0xe8] sm:$0xff]
      %v605 = vld [vmem:[#allocation2 + $0xf0] sm:$0xff]
      %v606 = vld [vmem:[#allocation2 + $0xf8] sm:$0xff]
      %v607 = vld [vmem:[%s1] sm:$0xff]
      %v608 = vld [vmem:[%s1 + $0x8] sm:$0xff]
      %v609 = vld [vmem:[%s1 + $0x10] sm:$0xff]
      %v610 = vld [vmem:[%s331] sm:$0xff]
      %v611 = vld [vmem:[%s331 + $0x8] sm:$0xff]
      %v612 = vld [vmem:[%s331 + $0x10] sm:$0xff]
      %v613 = vld [vmem:[%s331 + $0x18] sm:$0xff]
      %v614 = vld [vmem:[%s331 + $0x20] sm:$0xff]
      %v615 = vld [vmem:[%s331 + $0x28] sm:$0xff]
      %v616 = vld [vmem:[%s331 + $0x30] sm:$0xff]
      %v617 = vld [vmem:[%s331 + $0x38] sm:$0xff]
      %v618 = vld [vmem:[%s331 + $0x40] sm:$0xff]
      %v619 = vld [vmem:[%s331 + $0x48] sm:$0xff]
      %v620 = vld [vmem:[%s331 + $0x50] sm:$0xff]
      %v621 = vld [vmem:[%s331 + $0x58] sm:$0xff]
      %v622 = vld [vmem:[%s331 + $0x60] sm:$0xff]
      %v623 = vld [vmem:[%s331 + $0x68] sm:$0xff]
      %v624 = vld [vmem:[%s331 + $0x70] sm:$0xff]
      %v625 = vld [vmem:[%s331 + $0x78] sm:$0xff]
      %v626 = vld [vmem:[%s331 + $0x80] sm:$0xff]
      %v627 = vld [vmem:[%s331 + $0x88] sm:$0xff]
      %v628 = vld [vmem:[%s331 + $0x90] sm:$0xff]
      %v629 = vld [vmem:[%s331 + $0x98] sm:$0xff]
      %v630 = vld [vmem:[%s331 + $0xa0] sm:$0xff]
      %v631 = vld [vmem:[%s331 + $0xa8] sm:$0xff]
      %v632 = vld [vmem:[%s331 + $0xb0] sm:$0xff]
      %v633 = vld [vmem:[%s331 + $0xb8] sm:$0xff]
      %v634 = vld [vmem:[%s331 + $0xc0] sm:$0xff]
      %v635 = vld [vmem:[%s331 + $0xc8] sm:$0xff]
      %v636 = vld [vmem:[%s331 + $0xd0] sm:$0xff]
      %v637 = vld [vmem:[%s331 + $0xd8] sm:$0xff]
      %v638 = vld [vmem:[%s331 + $0xe0] sm:$0xff]
      %v639 = vld [vmem:[%s331 + $0xe8] sm:$0xff]
      %v640 = vld [vmem:[%s331 + $0xf0] sm:$0xff]
      %v641 = vld [vmem:[%s331 + $0xf8] sm:$0xff]
      %s642 = scalar_lea.vmem %s1, 24
      %v643 = vld [vmem:[%s642] sm:$0xff]
      %v644 = vld [vmem:[%s642 + $0x8] sm:$0xff]
      %v645 = vld [vmem:[%s642 + $0x10] sm:$0xff]
      %v647 = vsel %vm566, %v610, 0
      %v650 = vsel %vm566, %v611, 0
      %v653 = vsel %vm566, %v612, 0
      %v656 = vsel %vm566, %v613, 0
      %v659 = vsel %vm566, %v614, 0
      %v662 = vsel %vm566, %v615, 0
      %v665 = vsel %vm566, %v616, 0
      %v668 = vsel %vm566, %v617, 0
      %v671 = vsel %vm566, %v618, 0
      %v674 = vsel %vm566, %v619, 0
      %v677 = vsel %vm566, %v620, 0
      %v680 = vsel %vm566, %v621, 0
      %v683 = vsel %vm566, %v622, 0
      %v686 = vsel %vm566, %v623, 0
      %v689 = vsel %vm566, %v624, 0
      %v692 = vsel %vm566, %v625, 0
      %v695 = vsel %vm566, %v626, 0
      %v698 = vsel %vm566, %v627, 0
      %v701 = vsel %vm566, %v628, 0
      %v704 = vsel %vm566, %v629, 0
      %v707 = vsel %vm566, %v630, 0
      %v710 = vsel %vm566, %v631, 0
      %v713 = vsel %vm566, %v632, 0
      %v716 = vsel %vm566, %v633, 0
      %v719 = vsel %vm566, %v634, 0
      %v722 = vsel %vm566, %v635, 0
      %v725 = vsel %vm566, %v636, 0
      %v728 = vsel %vm566, %v637, 0
      %v731 = vsel %vm566, %v638, 0
      %v734 = vsel %vm566, %v639, 0
      %v737 = vsel %vm566, %v640, 0
      %v740 = vsel %vm566, %v641, 0
      %742 = vmatprep.subr.mxu0 0.0
      %743 = vmatpush1.msra.mxu0 %v643
      %744 = vmatprep.subr.mxu0 0.0
      %745 = vmatpush1.msra.mxu0 %v644
      %746 = vmatprep.subr.mxu0 0.0
      %747 = vmatpush1.msra.mxu0 %v645
      %748 = vmatprep.subr.mxu0 0.0
      %749 = vmatpush1.msra.mxu0 0.0
      %750 = vmatprep.subr.mxu0 0.0
      %751 = vmatpush1.msra.mxu0 0.0
      %752 = vmatprep.subr.mxu0 0.0
      %753 = vmatpush1.msra.mxu0 0.0
      %754 = vmatprep.subr.mxu0 0.0
      %755 = vmatpush1.msra.mxu0 0.0
      %756 = vmatprep.subr.mxu0 0.0
      %757 = vmatpush1.msra.mxu0 0.0
      %758 = vmatprep.subr.mxu0 0.0
      %759 = vmatpush1.msra.mxu0 0.0
      %760 = vmatprep.subr.mxu0 0.0
      %761 = vmatpush1.msra.mxu0 0.0
      %762 = vmatprep.subr.mxu0 0.0
      %763 = vmatpush1.msra.mxu0 0.0
      %764 = vmatprep.subr.mxu0 0.0
      %765 = vmatpush1.msra.mxu0 0.0
      %766 = vmatprep.subr.mxu0 0.0
      %767 = vmatpush1.msra.mxu0 0.0
      %768 = vmatprep.subr.mxu0 0.0
      %769 = vmatpush1.msra.mxu0 0.0
      %770 = vmatprep.subr.mxu0 0.0
      %771 = vmatpush1.msra.mxu0 0.0
      %772 = vmatprep.subr.mxu0 0.0
      %773 = vmatpush1.msra.mxu0 0.0
      %774 = vmatprep.subr.mxu0 0.0
      %775 = vmatpush1.msra.mxu0 0.0
      %776 = vmatprep.subr.mxu0 0.0
      %777 = vmatpush1.msra.mxu0 0.0
      %778 = vmatprep.subr.mxu0 0.0
      %779 = vmatpush1.msra.mxu0 0.0
      %780 = vmatprep.subr.mxu0 0.0
      %781 = vmatpush1.msra.mxu0 0.0
      %782 = vmatprep.subr.mxu0 0.0
      %783 = vmatpush1.msra.mxu0 0.0
      %784 = vmatprep.subr.mxu0 0.0
      %785 = vmatpush1.msra.mxu0 0.0
      %786 = vmatprep.subr.mxu0 0.0
      %787 = vmatpush1.msra.mxu0 0.0
      %788 = vmatprep.subr.mxu0 0.0
      %789 = vmatpush1.msra.mxu0 0.0
      %790 = vmatprep.subr.mxu0 0.0
      %791 = vmatpush1.msra.mxu0 0.0
      %792 = vmatprep.subr.mxu0 0.0
      %793 = vmatpush1.msra.mxu0 0.0
      %794 = vmatprep.subr.mxu0 0.0
      %795 = vmatpush1.msra.mxu0 0.0
      %796 = vmatprep.subr.mxu0 0.0
      %797 = vmatpush1.msra.mxu0 0.0
      %798 = vmatprep.subr.mxu0 0.0
      %799 = vmatpush1.msra.mxu0 0.0
      %800 = vmatprep.subr.mxu0 0.0
      %801 = vmatpush1.msra.mxu0 0.0
      %802 = vmatprep.subr.mxu0 0.0
      %803 = vmatpush1.msra.mxu0 0.0
      %804 = vmatprep.subr.mxu0 0.0
      %805 = vmatpush1.msra.mxu0 0.0
      %806 = vmatprep.mubr.f32.mxu0 0.0
      %807 = vmatmul.mubr.f32.gmra.mrb[0].mxu0 %v647
      %v808 = vpop.f32.mrb[0].mxu0
      %v809 = vadd.f32 0.0, %v808
      %v810 = vpop.f32.mrb[0].mxu0
      %811 = vmatprep.mubr.f32.mxu0 0.0
      %812 = vmatmul.mubr.f32.gmra.mrb[0].mxu0 %v650
      %v813 = vpop.f32.mrb[0].mxu0
      %v814 = vadd.f32 0.0, %v813
      %v815 = vpop.f32.mrb[0].mxu0
      %816 = vmatprep.mubr.f32.mxu0 0.0
      %817 = vmatmul.mubr.f32.gmra.mrb[0].mxu0 %v653
      %v818 = vpop.f32.mrb[0].mxu0
      %v819 = vadd.f32 0.0, %v818
      %v820 = vpop.f32.mrb[0].mxu0
      %821 = vmatprep.mubr.f32.mxu0 0.0
      %822 = vmatmul.mubr.f32.gmra.mrb[0].mxu0 %v656
      %v823 = vpop.f32.mrb[0].mxu0
      %v824 = vadd.f32 0.0, %v823
      %v825 = vpop.f32.mrb[0].mxu0
      %826 = vmatprep.mubr.f32.mxu0 0.0
      %827 = vmatmul.mubr.f32.gmra.mrb[0].mxu0 %v659
      %v828 = vpop.f32.mrb[0].mxu0
      %v829 = vadd.f32 0.0, %v828
      %v830 = vpop.f32.mrb[0].mxu0
      %831 = vmatprep.mubr.f32.mxu0 0.0
      %832 = vmatmul.mubr.f32.gmra.mrb[0].mxu0 %v662
      %v833 = vpop.f32.mrb[0].mxu0
      %v834 = vadd.f32 0.0, %v833
      %v835 = vpop.f32.mrb[0].mxu0
      %836 = vmatprep.mubr.f32.mxu0 0.0
      %837 = vmatmul.mubr.f32.gmra.mrb[0].mxu0 %v665
      %v838 = vpop.f32.mrb[0].mxu0
      %v839 = vadd.f32 0.0, %v838
      %v840 = vpop.f32.mrb[0].mxu0
      %841 = vmatprep.mubr.f32.mxu0 0.0
      %842 = vmatmul.mubr.f32.gmra.mrb[0].mxu0 %v668
      %v843 = vpop.f32.mrb[0].mxu0
      %v844 = vadd.f32 0.0, %v843
      %v845 = vpop.f32.mrb[0].mxu0
      %846 = vmatprep.mubr.f32.mxu0 0.0
      %847 = vmatmul.mubr.f32.gmra.mrb[0].mxu0 %v671
      %v848 = vpop.f32.mrb[0].mxu0
      %v849 = vadd.f32 0.0, %v848
      %v850 = vpop.f32.mrb[0].mxu0
      %851 = vmatprep.mubr.f32.mxu0 0.0
      %852 = vmatmul.mubr.f32.gmra.mrb[0].mxu0 %v674
      %v853 = vpop.f32.mrb[0].mxu0
      %v854 = vadd.f32 0.0, %v853
      %v855 = vpop.f32.mrb[0].mxu0
      %856 = vmatprep.mubr.f32.mxu0 0.0
      %857 = vmatmul.mubr.f32.gmra.mrb[0].mxu0 %v677
      %v858 = vpop.f32.mrb[0].mxu0
      %v859 = vadd.f32 0.0, %v858
      %v860 = vpop.f32.mrb[0].mxu0
      %861 = vmatprep.mubr.f32.mxu0 0.0
      %862 = vmatmul.mubr.f32.gmra.mrb[0].mxu0 %v680
      %v863 = vpop.f32.mrb[0].mxu0
      %v864 = vadd.f32 0.0, %v863
      %v865 = vpop.f32.mrb[0].mxu0
      %866 = vmatprep.mubr.f32.mxu0 0.0
      %867 = vmatmul.mubr.f32.gmra.mrb[0].mxu0 %v683
      %v868 = vpop.f32.mrb[0].mxu0
      %v869 = vadd.f32 0.0, %v868
      %v870 = vpop.f32.mrb[0].mxu0
      %871 = vmatprep.mubr.f32.mxu0 0.0
      %872 = vmatmul.mubr.f32.gmra.mrb[0].mxu0 %v686
      %v873 = vpop.f32.mrb[0].mxu0
      %v874 = vadd.f32 0.0, %v873
      %v875 = vpop.f32.mrb[0].mxu0
      %876 = vmatprep.mubr.f32.mxu0 0.0
      %877 = vmatmul.mubr.f32.gmra.mrb[0].mxu0 %v689
      %v878 = vpop.f32.mrb[0].mxu0
      %v879 = vadd.f32 0.0, %v878
      %v880 = vpop.f32.mrb[0].mxu0
      %881 = vmatprep.mubr.f32.mxu0 0.0
      %882 = vmatmul.mubr.f32.gmra.mrb[0].mxu0 %v692
      %v883 = vpop.f32.mrb[0].mxu0
      %v884 = vadd.f32 0.0, %v883
      %v885 = vpop.f32.mrb[0].mxu0
      %886 = vmatprep.mubr.f32.mxu0 0.0
      %887 = vmatmul.mubr.f32.gmra.mrb[0].mxu0 %v695
      %v888 = vpop.f32.mrb[0].mxu0
      %v889 = vadd.f32 0.0, %v888
      %v890 = vpop.f32.mrb[0].mxu0
      %891 = vmatprep.mubr.f32.mxu0 0.0
      %892 = vmatmul.mubr.f32.gmra.mrb[0].mxu0 %v698
      %v893 = vpop.f32.mrb[0].mxu0
      %v894 = vadd.f32 0.0, %v893
      %v895 = vpop.f32.mrb[0].mxu0
      %896 = vmatprep.mubr.f32.mxu0 0.0
      %897 = vmatmul.mubr.f32.gmra.mrb[0].mxu0 %v701
      %v898 = vpop.f32.mrb[0].mxu0
      %v899 = vadd.f32 0.0, %v898
      %v900 = vpop.f32.mrb[0].mxu0
      %901 = vmatprep.mubr.f32.mxu0 0.0
      %902 = vmatmul.mubr.f32.gmra.mrb[0].mxu0 %v704
      %v903 = vpop.f32.mrb[0].mxu0
      %v904 = vadd.f32 0.0, %v903
      %v905 = vpop.f32.mrb[0].mxu0
      %906 = vmatprep.mubr.f32.mxu0 0.0
      %907 = vmatmul.mubr.f32.gmra.mrb[0].mxu0 %v707
      %v908 = vpop.f32.mrb[0].mxu0
      %v909 = vadd.f32 0.0, %v908
      %v910 = vpop.f32.mrb[0].mxu0
      %911 = vmatprep.mubr.f32.mxu0 0.0
      %912 = vmatmul.mubr.f32.gmra.mrb[0].mxu0 %v710
      %v913 = vpop.f32.mrb[0].mxu0
      %v914 = vadd.f32 0.0, %v913
      %v915 = vpop.f32.mrb[0].mxu0
      %916 = vmatprep.mubr.f32.mxu0 0.0
      %917 = vmatmul.mubr.f32.gmra.mrb[0].mxu0 %v713
      %v918 = vpop.f32.mrb[0].mxu0
      %v919 = vadd.f32 0.0, %v918
      %v920 = vpop.f32.mrb[0].mxu0
      %921 = vmatprep.mubr.f32.mxu0 0.0
      %922 = vmatmul.mubr.f32.gmra.mrb[0].mxu0 %v716
      %v923 = vpop.f32.mrb[0].mxu0
      %v924 = vadd.f32 0.0, %v923
      %v925 = vpop.f32.mrb[0].mxu0
      %926 = vmatprep.mubr.f32.mxu0 0.0
      %927 = vmatmul.mubr.f32.gmra.mrb[0].mxu0 %v719
      %v928 = vpop.f32.mrb[0].mxu0
      %v929 = vadd.f32 0.0, %v928
      %v930 = vpop.f32.mrb[0].mxu0
      %931 = vmatprep.mubr.f32.mxu0 0.0
      %932 = vmatmul.mubr.f32.gmra.mrb[0].mxu0 %v722
      %v933 = vpop.f32.mrb[0].mxu0
      %v934 = vadd.f32 0.0, %v933
      %v935 = vpop.f32.mrb[0].mxu0
      %936 = vmatprep.mubr.f32.mxu0 0.0
      %937 = vmatmul.mubr.f32.gmra.mrb[0].mxu0 %v725
      %v938 = vpop.f32.mrb[0].mxu0
      %v939 = vadd.f32 0.0, %v938
      %v940 = vpop.f32.mrb[0].mxu0
      %941 = vmatprep.mubr.f32.mxu0 0.0
      %942 = vmatmul.mubr.f32.gmra.mrb[0].mxu0 %v728
      %v943 = vpop.f32.mrb[0].mxu0
      %v944 = vadd.f32 0.0, %v943
      %v945 = vpop.f32.mrb[0].mxu0
      %946 = vmatprep.mubr.f32.mxu0 0.0
      %947 = vmatmul.mubr.f32.gmra.mrb[0].mxu0 %v731
      %v948 = vpop.f32.mrb[0].mxu0
      %v949 = vadd.f32 0.0, %v948
      %v950 = vpop.f32.mrb[0].mxu0
      %951 = vmatprep.mubr.f32.mxu0 0.0
      %952 = vmatmul.mubr.f32.gmra.mrb[0].mxu0 %v734
      %v953 = vpop.f32.mrb[0].mxu0
      %v954 = vadd.f32 0.0, %v953
      %v955 = vpop.f32.mrb[0].mxu0
      %956 = vmatprep.mubr.f32.mxu0 0.0
      %957 = vmatmul.mubr.f32.gmra.mrb[0].mxu0 %v737
      %v958 = vpop.f32.mrb[0].mxu0
      %v959 = vadd.f32 0.0, %v958
      %v960 = vpop.f32.mrb[0].mxu0
      %961 = vmatprep.mubr.f32.mxu0 0.0
      %962 = vmatmul.mubr.f32.gmra.mrb[0].mxu0 %v740
      %v963 = vpop.f32.mrb[0].mxu0
      %v964 = vadd.f32 0.0, %v963
      %v965 = vpop.f32.mrb[0].mxu0
      %966 = vdwg.mxu0
      %v968 = vsel %vm566, %v575, 0
      %v971 = vsel %vm566, %v576, 0
      %v974 = vsel %vm566, %v577, 0
      %v977 = vsel %vm566, %v578, 0
      %v980 = vsel %vm566, %v579, 0
      %v983 = vsel %vm566, %v580, 0
      %v986 = vsel %vm566, %v581, 0
      %v989 = vsel %vm566, %v582, 0
      %v992 = vsel %vm566, %v583, 0
      %v995 = vsel %vm566, %v584, 0
      %v998 = vsel %vm566, %v585, 0
      %v1001 = vsel %vm566, %v586, 0
      %v1004 = vsel %vm566, %v587, 0
      %v1007 = vsel %vm566, %v588, 0
      %v1010 = vsel %vm566, %v589, 0
      %v1013 = vsel %vm566, %v590, 0
      %v1016 = vsel %vm566, %v591, 0
      %v1019 = vsel %vm566, %v592, 0
      %v1022 = vsel %vm566, %v593, 0
      %v1025 = vsel %vm566, %v594, 0
      %v1028 = vsel %vm566, %v595, 0
      %v1031 = vsel %vm566, %v596, 0
      %v1034 = vsel %vm566, %v597, 0
      %v1037 = vsel %vm566, %v598, 0
      %v1040 = vsel %vm566, %v599, 0
      %v1043 = vsel %vm566, %v600, 0
      %v1046 = vsel %vm566, %v601, 0
      %v1049 = vsel %vm566, %v602, 0
      %v1052 = vsel %vm566, %v603, 0
      %v1055 = vsel %vm566, %v604, 0
      %v1058 = vsel %vm566, %v605, 0
      %v1061 = vsel %vm566, %v606, 0
      %1063 = vmatprep.subr.mxu0 0.0
      %1064 = vmatpush1.msra.mxu0 %v607
      %1065 = vmatprep.subr.mxu0 0.0
      %1066 = vmatpush1.msra.mxu0 %v608
      %1067 = vmatprep.subr.mxu0 0.0
      %1068 = vmatpush1.msra.mxu0 %v609
      %1069 = vmatprep.subr.mxu0 0.0
      %1070 = vmatpush1.msra.mxu0 0.0
      %1071 = vmatprep.subr.mxu0 0.0
      %1072 = vmatpush1.msra.mxu0 0.0
      %1073 = vmatprep.subr.mxu0 0.0
      %1074 = vmatpush1.msra.mxu0 0.0
      %1075 = vmatprep.subr.mxu0 0.0
      %1076 = vmatpush1.msra.mxu0 0.0
      %1077 = vmatprep.subr.mxu0 0.0
      %1078 = vmatpush1.msra.mxu0 0.0
      %1079 = vmatprep.subr.mxu0 0.0
      %1080 = vmatpush1.msra.mxu0 0.0
      %1081 = vmatprep.subr.mxu0 0.0
      %1082 = vmatpush1.msra.mxu0 0.0
      %1083 = vmatprep.subr.mxu0 0.0
      %1084 = vmatpush1.msra.mxu0 0.0
      %1085 = vmatprep.subr.mxu0 0.0
      %1086 = vmatpush1.msra.mxu0 0.0
      %1087 = vmatprep.subr.mxu0 0.0
      %1088 = vmatpush1.msra.mxu0 0.0
      %1089 = vmatprep.subr.mxu0 0.0
      %1090 = vmatpush1.msra.mxu0 0.0
      %1091 = vmatprep.subr.mxu0 0.0
      %1092 = vmatpush1.msra.mxu0 0.0
      %1093 = vmatprep.subr.mxu0 0.0
      %1094 = vmatpush1.msra.mxu0 0.0
      %1095 = vmatprep.subr.mxu0 0.0
      %1096 = vmatpush1.msra.mxu0 0.0
      %1097 = vmatprep.subr.mxu0 0.0
      %1098 = vmatpush1.msra.mxu0 0.0
      %1099 = vmatprep.subr.mxu0 0.0
      %1100 = vmatpush1.msra.mxu0 0.0
      %1101 = vmatprep.subr.mxu0 0.0
      %1102 = vmatpush1.msra.mxu0 0.0
      %1103 = vmatprep.subr.mxu0 0.0
      %1104 = vmatpush1.msra.mxu0 0.0
      %1105 = vmatprep.subr.mxu0 0.0
      %1106 = vmatpush1.msra.mxu0 0.0
      %1107 = vmatprep.subr.mxu0 0.0
      %1108 = vmatpush1.msra.mxu0 0.0
      %1109 = vmatprep.subr.mxu0 0.0
      %1110 = vmatpush1.msra.mxu0 0.0
      %1111 = vmatprep.subr.mxu0 0.0
      %1112 = vmatpush1.msra.mxu0 0.0
      %1113 = vmatprep.subr.mxu0 0.0
      %1114 = vmatpush1.msra.mxu0 0.0
      %1115 = vmatprep.subr.mxu0 0.0
      %1116 = vmatpush1.msra.mxu0 0.0
      %1117 = vmatprep.subr.mxu0 0.0
      %1118 = vmatpush1.msra.mxu0 0.0
      %1119 = vmatprep.subr.mxu0 0.0
      %1120 = vmatpush1.msra.mxu0 0.0
      %1121 = vmatprep.subr.mxu0 0.0
      %1122 = vmatpush1.msra.mxu0 0.0
      %1123 = vmatprep.subr.mxu0 0.0
      %1124 = vmatpush1.msra.mxu0 0.0
      %1125 = vmatprep.subr.mxu0 0.0
      %1126 = vmatpush1.msra.mxu0 0.0
      %1127 = vmatprep.mubr.f32.mxu0 0.0
      %1128 = vmatmul.mubr.f32.gmra.mrb[0].mxu0 %v968
      %v1129 = vpop.f32.mrb[0].mxu0
      %v1130 = vadd.f32 %v809, %v1129
      %v1131 = vpop.f32.mrb[0].mxu0
      %1132 = vmatprep.mubr.f32.mxu0 0.0
      %1133 = vmatmul.mubr.f32.gmra.mrb[0].mxu0 %v971
      %v1134 = vpop.f32.mrb[0].mxu0
      %v1135 = vadd.f32 %v814, %v1134
      %v1136 = vpop.f32.mrb[0].mxu0
      %1137 = vmatprep.mubr.f32.mxu0 0.0
      %1138 = vmatmul.mubr.f32.gmra.mrb[0].mxu0 %v974
      %v1139 = vpop.f32.mrb[0].mxu0
      %v1140 = vadd.f32 %v819, %v1139
      %v1141 = vpop.f32.mrb[0].mxu0
      %1142 = vmatprep.mubr.f32.mxu0 0.0
      %1143 = vmatmul.mubr.f32.gmra.mrb[0].mxu0 %v977
      %v1144 = vpop.f32.mrb[0].mxu0
      %v1145 = vadd.f32 %v824, %v1144
      %v1146 = vpop.f32.mrb[0].mxu0
      %1147 = vmatprep.mubr.f32.mxu0 0.0
      %1148 = vmatmul.mubr.f32.gmra.mrb[0].mxu0 %v980
      %v1149 = vpop.f32.mrb[0].mxu0
      %v1150 = vadd.f32 %v829, %v1149
      %v1151 = vpop.f32.mrb[0].mxu0
      %1152 = vmatprep.mubr.f32.mxu0 0.0
      %1153 = vmatmul.mubr.f32.gmra.mrb[0].mxu0 %v983
      %v1154 = vpop.f32.mrb[0].mxu0
      %v1155 = vadd.f32 %v834, %v1154
      %v1156 = vpop.f32.mrb[0].mxu0
      %1157 = vmatprep.mubr.f32.mxu0 0.0
      %1158 = vmatmul.mubr.f32.gmra.mrb[0].mxu0 %v986
      %v1159 = vpop.f32.mrb[0].mxu0
      %v1160 = vadd.f32 %v839, %v1159
      %v1161 = vpop.f32.mrb[0].mxu0
      %1162 = vmatprep.mubr.f32.mxu0 0.0
      %1163 = vmatmul.mubr.f32.gmra.mrb[0].mxu0 %v989
      %v1164 = vpop.f32.mrb[0].mxu0
      %v1165 = vadd.f32 %v844, %v1164
      %v1166 = vpop.f32.mrb[0].mxu0
      %1167 = vmatprep.mubr.f32.mxu0 0.0
      %1168 = vmatmul.mubr.f32.gmra.mrb[0].mxu0 %v992
      %v1169 = vpop.f32.mrb[0].mxu0
      %v1170 = vadd.f32 %v849, %v1169
      %v1171 = vpop.f32.mrb[0].mxu0
      %1172 = vmatprep.mubr.f32.mxu0 0.0
      %1173 = vmatmul.mubr.f32.gmra.mrb[0].mxu0 %v995
      %v1174 = vpop.f32.mrb[0].mxu0
      %v1175 = vadd.f32 %v854, %v1174
      %v1176 = vpop.f32.mrb[0].mxu0
      %1177 = vmatprep.mubr.f32.mxu0 0.0
      %1178 = vmatmul.mubr.f32.gmra.mrb[0].mxu0 %v998
      %v1179 = vpop.f32.mrb[0].mxu0
      %v1180 = vadd.f32 %v859, %v1179
      %v1181 = vpop.f32.mrb[0].mxu0
      %1182 = vmatprep.mubr.f32.mxu0 0.0
      %1183 = vmatmul.mubr.f32.gmra.mrb[0].mxu0 %v1001
      %v1184 = vpop.f32.mrb[0].mxu0
      %v1185 = vadd.f32 %v864, %v1184
      %v1186 = vpop.f32.mrb[0].mxu0
      %1187 = vmatprep.mubr.f32.mxu0 0.0
      %1188 = vmatmul.mubr.f32.gmra.mrb[0].mxu0 %v1004
      %v1189 = vpop.f32.mrb[0].mxu0
      %v1190 = vadd.f32 %v869, %v1189
      %v1191 = vpop.f32.mrb[0].mxu0
      %1192 = vmatprep.mubr.f32.mxu0 0.0
      %1193 = vmatmul.mubr.f32.gmra.mrb[0].mxu0 %v1007
      %v1194 = vpop.f32.mrb[0].mxu0
      %v1195 = vadd.f32 %v874, %v1194
      %v1196 = vpop.f32.mrb[0].mxu0
      %1197 = vmatprep.mubr.f32.mxu0 0.0
      %1198 = vmatmul.mubr.f32.gmra.mrb[0].mxu0 %v1010
      %v1199 = vpop.f32.mrb[0].mxu0
      %v1200 = vadd.f32 %v879, %v1199
      %v1201 = vpop.f32.mrb[0].mxu0
      %1202 = vmatprep.mubr.f32.mxu0 0.0
      %1203 = vmatmul.mubr.f32.gmra.mrb[0].mxu0 %v1013
      %v1204 = vpop.f32.mrb[0].mxu0
      %v1205 = vadd.f32 %v884, %v1204
      %v1206 = vpop.f32.mrb[0].mxu0
      %1207 = vmatprep.mubr.f32.mxu0 0.0
      %1208 = vmatmul.mubr.f32.gmra.mrb[0].mxu0 %v1016
      %v1209 = vpop.f32.mrb[0].mxu0
      %v1210 = vadd.f32 %v889, %v1209
      %v1211 = vpop.f32.mrb[0].mxu0
      %1212 = vmatprep.mubr.f32.mxu0 0.0
      %1213 = vmatmul.mubr.f32.gmra.mrb[0].mxu0 %v1019
      %v1214 = vpop.f32.mrb[0].mxu0
      %v1215 = vadd.f32 %v894, %v1214
      %v1216 = vpop.f32.mrb[0].mxu0
      %1217 = vmatprep.mubr.f32.mxu0 0.0
      %1218 = vmatmul.mubr.f32.gmra.mrb[0].mxu0 %v1022
      %v1219 = vpop.f32.mrb[0].mxu0
      %v1220 = vadd.f32 %v899, %v1219
      %v1221 = vpop.f32.mrb[0].mxu0
      %1222 = vmatprep.mubr.f32.mxu0 0.0
      %1223 = vmatmul.mubr.f32.gmra.mrb[0].mxu0 %v1025
      %v1224 = vpop.f32.mrb[0].mxu0
      %v1225 = vadd.f32 %v904, %v1224
      %v1226 = vpop.f32.mrb[0].mxu0
      %1227 = vmatprep.mubr.f32.mxu0 0.0
      %1228 = vmatmul.mubr.f32.gmra.mrb[0].mxu0 %v1028
      %v1229 = vpop.f32.mrb[0].mxu0
      %v1230 = vadd.f32 %v909, %v1229
      %v1231 = vpop.f32.mrb[0].mxu0
      %1232 = vmatprep.mubr.f32.mxu0 0.0
      %1233 = vmatmul.mubr.f32.gmra.mrb[0].mxu0 %v1031
      %v1234 = vpop.f32.mrb[0].mxu0
      %v1235 = vadd.f32 %v914, %v1234
      %v1236 = vpop.f32.mrb[0].mxu0
      %1237 = vmatprep.mubr.f32.mxu0 0.0
      %1238 = vmatmul.mubr.f32.gmra.mrb[0].mxu0 %v1034
      %v1239 = vpop.f32.mrb[0].mxu0
      %v1240 = vadd.f32 %v919, %v1239
      %v1241 = vpop.f32.mrb[0].mxu0
      %1242 = vmatprep.mubr.f32.mxu0 0.0
      %1243 = vmatmul.mubr.f32.gmra.mrb[0].mxu0 %v1037
      %v1244 = vpop.f32.mrb[0].mxu0
      %v1245 = vadd.f32 %v924, %v1244
      %v1246 = vpop.f32.mrb[0].mxu0
      %1247 = vmatprep.mubr.f32.mxu0 0.0
      %1248 = vmatmul.mubr.f32.gmra.mrb[0].mxu0 %v1040
      %v1249 = vpop.f32.mrb[0].mxu0
      %v1250 = vadd.f32 %v929, %v1249
      %v1251 = vpop.f32.mrb[0].mxu0
      %1252 = vmatprep.mubr.f32.mxu0 0.0
      %1253 = vmatmul.mubr.f32.gmra.mrb[0].mxu0 %v1043
      %v1254 = vpop.f32.mrb[0].mxu0
      %v1255 = vadd.f32 %v934, %v1254
      %v1256 = vpop.f32.mrb[0].mxu0
      %1257 = vmatprep.mubr.f32.mxu0 0.0
      %1258 = vmatmul.mubr.f32.gmra.mrb[0].mxu0 %v1046
      %v1259 = vpop.f32.mrb[0].mxu0
      %v1260 = vadd.f32 %v939, %v1259
      %v1261 = vpop.f32.mrb[0].mxu0
      %1262 = vmatprep.mubr.f32.mxu0 0.0
      %1263 = vmatmul.mubr.f32.gmra.mrb[0].mxu0 %v1049
      %v1264 = vpop.f32.mrb[0].mxu0
      %v1265 = vadd.f32 %v944, %v1264
      %v1266 = vpop.f32.mrb[0].mxu0
      %1267 = vmatprep.mubr.f32.mxu0 0.0
      %1268 = vmatmul.mubr.f32.gmra.mrb[0].mxu0 %v1052
      %v1269 = vpop.f32.mrb[0].mxu0
      %v1270 = vadd.f32 %v949, %v1269
      %v1271 = vpop.f32.mrb[0].mxu0
      %1272 = vmatprep.mubr.f32.mxu0 0.0
      %1273 = vmatmul.mubr.f32.gmra.mrb[0].mxu0 %v1055
      %v1274 = vpop.f32.mrb[0].mxu0
      %v1275 = vadd.f32 %v954, %v1274
      %v1276 = vpop.f32.mrb[0].mxu0
      %1277 = vmatprep.mubr.f32.mxu0 0.0
      %1278 = vmatmul.mubr.f32.gmra.mrb[0].mxu0 %v1058
      %v1279 = vpop.f32.mrb[0].mxu0
      %v1280 = vadd.f32 %v959, %v1279
      %v1281 = vpop.f32.mrb[0].mxu0
      %1282 = vmatprep.mubr.f32.mxu0 0.0
      %1283 = vmatmul.mubr.f32.gmra.mrb[0].mxu0 %v1061
      %v1284 = vpop.f32.mrb[0].mxu0
      %v1285 = vadd.f32 %v964, %v1284
      %v1286 = vpop.f32.mrb[0].mxu0
      %1287 = vdwg.mxu0
      %v1288 = vld [vmem:[%s563] sm:$0xff]
      %v1289 = vld [vmem:[%s563 + $0x8] sm:$0xff]
      %v1290 = vld [vmem:[%s563 + $0x10] sm:$0xff]
      %v1291 = vld [vmem:[%s563 + $0x18] sm:$0xff]
      %v1292 = vld [vmem:[%s563 + $0x20] sm:$0xff]
      %v1293 = vld [vmem:[%s563 + $0x28] sm:$0xff]
      %v1294 = vld [vmem:[%s563 + $0x30] sm:$0xff]
      %v1295 = vld [vmem:[%s563 + $0x38] sm:$0xff]
      %v1296 = vld [vmem:[%s563 + $0x40] sm:$0xff]
      %v1297 = vld [vmem:[%s563 + $0x48] sm:$0xff]
      %v1298 = vld [vmem:[%s563 + $0x50] sm:$0xff]
      %v1299 = vld [vmem:[%s563 + $0x58] sm:$0xff]
      %v1300 = vld [vmem:[%s563 + $0x60] sm:$0xff]
      %v1301 = vld [vmem:[%s563 + $0x68] sm:$0xff]
      %v1302 = vld [vmem:[%s563 + $0x70] sm:$0xff]
      %v1303 = vld [vmem:[%s563 + $0x78] sm:$0xff]
      %v1304 = vld [vmem:[%s563 + $0x80] sm:$0xff]
      %v1305 = vld [vmem:[%s563 + $0x88] sm:$0xff]
      %v1306 = vld [vmem:[%s563 + $0x90] sm:$0xff]
      %v1307 = vld [vmem:[%s563 + $0x98] sm:$0xff]
      %v1308 = vld [vmem:[%s563 + $0xa0] sm:$0xff]
      %v1309 = vld [vmem:[%s563 + $0xa8] sm:$0xff]
      %v1310 = vld [vmem:[%s563 + $0xb0] sm:$0xff]
      %v1311 = vld [vmem:[%s563 + $0xb8] sm:$0xff]
      %v1312 = vld [vmem:[%s563 + $0xc0] sm:$0xff]
      %v1313 = vld [vmem:[%s563 + $0xc8] sm:$0xff]
      %v1314 = vld [vmem:[%s563 + $0xd0] sm:$0xff]
      %v1315 = vld [vmem:[%s563 + $0xd8] sm:$0xff]
      %v1316 = vld [vmem:[%s563 + $0xe0] sm:$0xff]
      %v1317 = vld [vmem:[%s563 + $0xe8] sm:$0xff]
      %v1318 = vld [vmem:[%s563 + $0xf0] sm:$0xff]
      %v1319 = vld [vmem:[%s563 + $0xf8] sm:$0xff]
      %s1320 = scalar_lea.vmem %s1, 48
      %v1321 = vld [vmem:[%s1320] sm:$0xff]
      %v1322 = vld [vmem:[%s1320 + $0x8] sm:$0xff]
      %v1323 = vld [vmem:[%s1320 + $0x10] sm:$0xff]
      %v1325 = vsel %vm566, %v1288, 0
      %v1328 = vsel %vm566, %v1289, 0
      %v1331 = vsel %vm566, %v1290, 0
      %v1334 = vsel %vm566, %v1291, 0
      %v1337 = vsel %vm566, %v1292, 0
      %v1340 = vsel %vm566, %v1293, 0
      %v1343 = vsel %vm566, %v1294, 0
      %v1346 = vsel %vm566, %v1295, 0
      %v1349 = vsel %vm566, %v1296, 0
      %v1352 = vsel %vm566, %v1297, 0
      %v1355 = vsel %vm566, %v1298, 0
      %v1358 = vsel %vm566, %v1299, 0
      %v1361 = vsel %vm566, %v1300, 0
      %v1364 = vsel %vm566, %v1301, 0
      %v1367 = vsel %vm566, %v1302, 0
      %v1370 = vsel %vm566, %v1303, 0
      %v1373 = vsel %vm566, %v1304, 0
      %v1376 = vsel %vm566, %v1305, 0
      %v1379 = vsel %vm566, %v1306, 0
      %v1382 = vsel %vm566, %v1307, 0
      %v1385 = vsel %vm566, %v1308, 0
      %v1388 = vsel %vm566, %v1309, 0
      %v1391 = vsel %vm566, %v1310, 0
      %v1394 = vsel %vm566, %v1311, 0
      %v1397 = vsel %vm566, %v1312, 0
      %v1400 = vsel %vm566, %v1313, 0
      %v1403 = vsel %vm566, %v1314, 0
      %v1406 = vsel %vm566, %v1315, 0
      %v1409 = vsel %vm566, %v1316, 0
      %v1412 = vsel %vm566, %v1317, 0
      %v1415 = vsel %vm566, %v1318, 0
      %v1418 = vsel %vm566, %v1319, 0
      %1420 = vmatprep.subr.mxu0 0.0
      %1421 = vmatpush1.msra.mxu0 %v1321
      %1422 = vmatprep.subr.mxu0 0.0
      %1423 = vmatpush1.msra.mxu0 %v1322
      %1424 = vmatprep.subr.mxu0 0.0
      %1425 = vmatpush1.msra.mxu0 %v1323
      %1426 = vmatprep.subr.mxu0 0.0
      %1427 = vmatpush1.msra.mxu0 0.0
      %1428 = vmatprep.subr.mxu0 0.0
      %1429 = vmatpush1.msra.mxu0 0.0
      %1430 = vmatprep.subr.mxu0 0.0
      %1431 = vmatpush1.msra.mxu0 0.0
      %1432 = vmatprep.subr.mxu0 0.0
      %1433 = vmatpush1.msra.mxu0 0.0
      %1434 = vmatprep.subr.mxu0 0.0
      %1435 = vmatpush1.msra.mxu0 0.0
      %1436 = vmatprep.subr.mxu0 0.0
      %1437 = vmatpush1.msra.mxu0 0.0
      %1438 = vmatprep.subr.mxu0 0.0
      %1439 = vmatpush1.msra.mxu0 0.0
      %1440 = vmatprep.subr.mxu0 0.0
      %1441 = vmatpush1.msra.mxu0 0.0
      %1442 = vmatprep.subr.mxu0 0.0
      %1443 = vmatpush1.msra.mxu0 0.0
      %1444 = vmatprep.subr.mxu0 0.0
      %1445 = vmatpush1.msra.mxu0 0.0
      %1446 = vmatprep.subr.mxu0 0.0
      %1447 = vmatpush1.msra.mxu0 0.0
      %1448 = vmatprep.subr.mxu0 0.0
      %1449 = vmatpush1.msra.mxu0 0.0
      %1450 = vmatprep.subr.mxu0 0.0
      %1451 = vmatpush1.msra.mxu0 0.0
      %1452 = vmatprep.subr.mxu0 0.0
      %1453 = vmatpush1.msra.mxu0 0.0
      %1454 = vmatprep.subr.mxu0 0.0
      %1455 = vmatpush1.msra.mxu0 0.0
      %1456 = vmatprep.subr.mxu0 0.0
      %1457 = vmatpush1.msra.mxu0 0.0
      %1458 = vmatprep.subr.mxu0 0.0
      %1459 = vmatpush1.msra.mxu0 0.0
      %1460 = vmatprep.subr.mxu0 0.0
      %1461 = vmatpush1.msra.mxu0 0.0
      %1462 = vmatprep.subr.mxu0 0.0
      %1463 = vmatpush1.msra.mxu0 0.0
      %1464 = vmatprep.subr.mxu0 0.0
      %1465 = vmatpush1.msra.mxu0 0.0
      %1466 = vmatprep.subr.mxu0 0.0
      %1467 = vmatpush1.msra.mxu0 0.0
      %1468 = vmatprep.subr.mxu0 0.0
      %1469 = vmatpush1.msra.mxu0 0.0
      %1470 = vmatprep.subr.mxu0 0.0
      %1471 = vmatpush1.msra.mxu0 0.0
      %1472 = vmatprep.subr.mxu0 0.0
      %1473 = vmatpush1.msra.mxu0 0.0
      %1474 = vmatprep.subr.mxu0 0.0
      %1475 = vmatpush1.msra.mxu0 0.0
      %1476 = vmatprep.subr.mxu0 0.0
      %1477 = vmatpush1.msra.mxu0 0.0
      %1478 = vmatprep.subr.mxu0 0.0
      %1479 = vmatpush1.msra.mxu0 0.0
      %1480 = vmatprep.subr.mxu0 0.0
      %1481 = vmatpush1.msra.mxu0 0.0
      %1482 = vmatprep.subr.mxu0 0.0
      %1483 = vmatpush1.msra.mxu0 0.0
      %1484 = vmatprep.mubr.f32.mxu0 0.0
      %1485 = vmatmul.mubr.f32.gmra.mrb[0].mxu0 %v1325
      %v1486 = vpop.f32.mrb[0].mxu0
      %v1487 = vadd.f32 0.0, %v1486
      %v1488 = vpop.f32.mrb[0].mxu0
      %1489 = vmatprep.mubr.f32.mxu0 0.0
      %1490 = vmatmul.mubr.f32.gmra.mrb[0].mxu0 %v1328
      %v1491 = vpop.f32.mrb[0].mxu0
      %v1492 = vadd.f32 0.0, %v1491
      %v1493 = vpop.f32.mrb[0].mxu0
      %1494 = vmatprep.mubr.f32.mxu0 0.0
      %1495 = vmatmul.mubr.f32.gmra.mrb[0].mxu0 %v1331
      %v1496 = vpop.f32.mrb[0].mxu0
      %v1497 = vadd.f32 0.0, %v1496
      %v1498 = vpop.f32.mrb[0].mxu0
      %1499 = vmatprep.mubr.f32.mxu0 0.0
      %1500 = vmatmul.mubr.f32.gmra.mrb[0].mxu0 %v1334
      %v1501 = vpop.f32.mrb[0].mxu0
      %v1502 = vadd.f32 0.0, %v1501
      %v1503 = vpop.f32.mrb[0].mxu0
      %1504 = vmatprep.mubr.f32.mxu0 0.0
      %1505 = vmatmul.mubr.f32.gmra.mrb[0].mxu0 %v1337
      %v1506 = vpop.f32.mrb[0].mxu0
      %v1507 = vadd.f32 0.0, %v1506
      %v1508 = vpop.f32.mrb[0].mxu0
      %1509 = vmatprep.mubr.f32.mxu0 0.0
      %1510 = vmatmul.mubr.f32.gmra.mrb[0].mxu0 %v1340
      %v1511 = vpop.f32.mrb[0].mxu0
      %v1512 = vadd.f32 0.0, %v1511
      %v1513 = vpop.f32.mrb[0].mxu0
      %1514 = vmatprep.mubr.f32.mxu0 0.0
      %1515 = vmatmul.mubr.f32.gmra.mrb[0].mxu0 %v1343
      %v1516 = vpop.f32.mrb[0].mxu0
      %v1517 = vadd.f32 0.0, %v1516
      %v1518 = vpop.f32.mrb[0].mxu0
      %1519 = vmatprep.mubr.f32.mxu0 0.0
      %1520 = vmatmul.mubr.f32.gmra.mrb[0].mxu0 %v1346
      %v1521 = vpop.f32.mrb[0].mxu0
      %v1522 = vadd.f32 0.0, %v1521
      %v1523 = vpop.f32.mrb[0].mxu0
      %1524 = vmatprep.mubr.f32.mxu0 0.0
      %1525 = vmatmul.mubr.f32.gmra.mrb[0].mxu0 %v1349
      %v1526 = vpop.f32.mrb[0].mxu0
      %v1527 = vadd.f32 0.0, %v1526
      %v1528 = vpop.f32.mrb[0].mxu0
      %1529 = vmatprep.mubr.f32.mxu0 0.0
      %1530 = vmatmul.mubr.f32.gmra.mrb[0].mxu0 %v1352
      %v1531 = vpop.f32.mrb[0].mxu0
      %v1532 = vadd.f32 0.0, %v1531
      %v1533 = vpop.f32.mrb[0].mxu0
      %1534 = vmatprep.mubr.f32.mxu0 0.0
      %1535 = vmatmul.mubr.f32.gmra.mrb[0].mxu0 %v1355
      %v1536 = vpop.f32.mrb[0].mxu0
      %v1537 = vadd.f32 0.0, %v1536
      %v1538 = vpop.f32.mrb[0].mxu0
      %1539 = vmatprep.mubr.f32.mxu0 0.0
      %1540 = vmatmul.mubr.f32.gmra.mrb[0].mxu0 %v1358
      %v1541 = vpop.f32.mrb[0].mxu0
      %v1542 = vadd.f32 0.0, %v1541
      %v1543 = vpop.f32.mrb[0].mxu0
      %1544 = vmatprep.mubr.f32.mxu0 0.0
      %1545 = vmatmul.mubr.f32.gmra.mrb[0].mxu0 %v1361
      %v1546 = vpop.f32.mrb[0].mxu0
      %v1547 = vadd.f32 0.0, %v1546
      %v1548 = vpop.f32.mrb[0].mxu0
      %1549 = vmatprep.mubr.f32.mxu0 0.0
      %1550 = vmatmul.mubr.f32.gmra.mrb[0].mxu0 %v1364
      %v1551 = vpop.f32.mrb[0].mxu0
      %v1552 = vadd.f32 0.0, %v1551
      %v1553 = vpop.f32.mrb[0].mxu0
      %1554 = vmatprep.mubr.f32.mxu0 0.0
      %1555 = vmatmul.mubr.f32.gmra.mrb[0].mxu0 %v1367
      %v1556 = vpop.f32.mrb[0].mxu0
      %v1557 = vadd.f32 0.0, %v1556
      %v1558 = vpop.f32.mrb[0].mxu0
      %1559 = vmatprep.mubr.f32.mxu0 0.0
      %1560 = vmatmul.mubr.f32.gmra.mrb[0].mxu0 %v1370
      %v1561 = vpop.f32.mrb[0].mxu0
      %v1562 = vadd.f32 0.0, %v1561
      %v1563 = vpop.f32.mrb[0].mxu0
      %1564 = vmatprep.mubr.f32.mxu0 0.0
      %1565 = vmatmul.mubr.f32.gmra.mrb[0].mxu0 %v1373
      %v1566 = vpop.f32.mrb[0].mxu0
      %v1567 = vadd.f32 0.0, %v1566
      %v1568 = vpop.f32.mrb[0].mxu0
      %1569 = vmatprep.mubr.f32.mxu0 0.0
      %1570 = vmatmul.mubr.f32.gmra.mrb[0].mxu0 %v1376
      %v1571 = vpop.f32.mrb[0].mxu0
      %v1572 = vadd.f32 0.0, %v1571
      %v1573 = vpop.f32.mrb[0].mxu0
      %1574 = vmatprep.mubr.f32.mxu0 0.0
      %1575 = vmatmul.mubr.f32.gmra.mrb[0].mxu0 %v1379
      %v1576 = vpop.f32.mrb[0].mxu0
      %v1577 = vadd.f32 0.0, %v1576
      %v1578 = vpop.f32.mrb[0].mxu0
      %1579 = vmatprep.mubr.f32.mxu0 0.0
      %1580 = vmatmul.mubr.f32.gmra.mrb[0].mxu0 %v1382
      %v1581 = vpop.f32.mrb[0].mxu0
      %v1582 = vadd.f32 0.0, %v1581
      %v1583 = vpop.f32.mrb[0].mxu0
      %1584 = vmatprep.mubr.f32.mxu0 0.0
      %1585 = vmatmul.mubr.f32.gmra.mrb[0].mxu0 %v1385
      %v1586 = vpop.f32.mrb[0].mxu0
      %v1587 = vadd.f32 0.0, %v1586
      %v1588 = vpop.f32.mrb[0].mxu0
      %1589 = vmatprep.mubr.f32.mxu0 0.0
      %1590 = vmatmul.mubr.f32.gmra.mrb[0].mxu0 %v1388
      %v1591 = vpop.f32.mrb[0].mxu0
      %v1592 = vadd.f32 0.0, %v1591
      %v1593 = vpop.f32.mrb[0].mxu0
      %1594 = vmatprep.mubr.f32.mxu0 0.0
      %1595 = vmatmul.mubr.f32.gmra.mrb[0].mxu0 %v1391
      %v1596 = vpop.f32.mrb[0].mxu0
      %v1597 = vadd.f32 0.0, %v1596
      %v1598 = vpop.f32.mrb[0].mxu0
      %1599 = vmatprep.mubr.f32.mxu0 0.0
      %1600 = vmatmul.mubr.f32.gmra.mrb[0].mxu0 %v1394
      %v1601 = vpop.f32.mrb[0].mxu0
      %v1602 = vadd.f32 0.0, %v1601
      %v1603 = vpop.f32.mrb[0].mxu0
      %1604 = vmatprep.mubr.f32.mxu0 0.0
      %1605 = vmatmul.mubr.f32.gmra.mrb[0].mxu0 %v1397
      %v1606 = vpop.f32.mrb[0].mxu0
      %v1607 = vadd.f32 0.0, %v1606
      %v1608 = vpop.f32.mrb[0].mxu0
      %1609 = vmatprep.mubr.f32.mxu0 0.0
      %1610 = vmatmul.mubr.f32.gmra.mrb[0].mxu0 %v1400
      %v1611 = vpop.f32.mrb[0].mxu0
      %v1612 = vadd.f32 0.0, %v1611
      %v1613 = vpop.f32.mrb[0].mxu0
      %1614 = vmatprep.mubr.f32.mxu0 0.0
      %1615 = vmatmul.mubr.f32.gmra.mrb[0].mxu0 %v1403
      %v1616 = vpop.f32.mrb[0].mxu0
      %v1617 = vadd.f32 0.0, %v1616
      %v1618 = vpop.f32.mrb[0].mxu0
      %1619 = vmatprep.mubr.f32.mxu0 0.0
      %1620 = vmatmul.mubr.f32.gmra.mrb[0].mxu0 %v1406
      %v1621 = vpop.f32.mrb[0].mxu0
      %v1622 = vadd.f32 0.0, %v1621
      %v1623 = vpop.f32.mrb[0].mxu0
      %1624 = vmatprep.mubr.f32.mxu0 0.0
      %1625 = vmatmul.mubr.f32.gmra.mrb[0].mxu0 %v1409
      %v1626 = vpop.f32.mrb[0].mxu0
      %v1627 = vadd.f32 0.0, %v1626
      %v1628 = vpop.f32.mrb[0].mxu0
      %1629 = vmatprep.mubr.f32.mxu0 0.0
      %1630 = vmatmul.mubr.f32.gmra.mrb[0].mxu0 %v1412
      %v1631 = vpop.f32.mrb[0].mxu0
      %v1632 = vadd.f32 0.0, %v1631
      %v1633 = vpop.f32.mrb[0].mxu0
      %1634 = vmatprep.mubr.f32.mxu0 0.0
      %1635 = vmatmul.mubr.f32.gmra.mrb[0].mxu0 %v1415
      %v1636 = vpop.f32.mrb[0].mxu0
      %v1637 = vadd.f32 0.0, %v1636
      %v1638 = vpop.f32.mrb[0].mxu0
      %1639 = vmatprep.mubr.f32.mxu0 0.0
      %1640 = vmatmul.mubr.f32.gmra.mrb[0].mxu0 %v1418
      %v1641 = vpop.f32.mrb[0].mxu0
      %v1642 = vadd.f32 0.0, %v1641
      %v1643 = vpop.f32.mrb[0].mxu0
      %1644 = vdwg.mxu0
      %v1645 = vadd.f32 %v1130, %v1487
      %v1646 = vadd.f32 %v1135, %v1492
      %v1647 = vadd.f32 %v1140, %v1497
      %v1648 = vadd.f32 %v1145, %v1502
      %v1649 = vadd.f32 %v1150, %v1507
      %v1650 = vadd.f32 %v1155, %v1512
      %v1651 = vadd.f32 %v1160, %v1517
      %v1652 = vadd.f32 %v1165, %v1522
      %v1653 = vadd.f32 %v1170, %v1527
      %v1654 = vadd.f32 %v1175, %v1532
      %v1655 = vadd.f32 %v1180, %v1537
      %v1656 = vadd.f32 %v1185, %v1542
      %v1657 = vadd.f32 %v1190, %v1547
      %v1658 = vadd.f32 %v1195, %v1552
      %v1659 = vadd.f32 %v1200, %v1557
      %v1660 = vadd.f32 %v1205, %v1562
      %v1661 = vadd.f32 %v1210, %v1567
      %v1662 = vadd.f32 %v1215, %v1572
      %v1663 = vadd.f32 %v1220, %v1577
      %v1664 = vadd.f32 %v1225, %v1582
      %v1665 = vadd.f32 %v1230, %v1587
      %v1666 = vadd.f32 %v1235, %v1592
      %v1667 = vadd.f32 %v1240, %v1597
      %v1668 = vadd.f32 %v1245, %v1602
      %v1669 = vadd.f32 %v1250, %v1607
      %v1670 = vadd.f32 %v1255, %v1612
      %v1671 = vadd.f32 %v1260, %v1617
      %v1672 = vadd.f32 %v1265, %v1622
      %v1673 = vadd.f32 %v1270, %v1627
      %v1674 = vadd.f32 %v1275, %v1632
      %v1675 = vadd.f32 %v1280, %v1637
      %v1676 = vadd.f32 %v1285, %v1642
      %v1677 = vsel %vm365, %v1645, 0.0
      %v1678 = vsel %vm365, %v1646, 0.0
      %v1679 = vadd.f32 %v1677, %v1678
      %v1680 = vsel %vm365, %v1647, 0.0
      %v1681 = vadd.f32 %v1679, %v1680
      %v1682 = vsel %vm365, %v1648, 0.0
      %v1683 = vadd.f32 %v1681, %v1682
      %v1684 = vsel %vm365, %v1649, 0.0
      %v1685 = vadd.f32 %v1683, %v1684
      %v1686 = vsel %vm365, %v1650, 0.0
      %v1687 = vadd.f32 %v1685, %v1686
      %v1688 = vsel %vm365, %v1651, 0.0
      %v1689 = vadd.f32 %v1687, %v1688
      %v1690 = vsel %vm365, %v1652, 0.0
      %v1691 = vadd.f32 %v1689, %v1690
      %v1692 = vsel %vm365, %v1653, 0.0
      %v1693 = vadd.f32 %v1691, %v1692
      %v1694 = vsel %vm365, %v1654, 0.0
      %v1695 = vadd.f32 %v1693, %v1694
      %v1696 = vsel %vm365, %v1655, 0.0
      %v1697 = vadd.f32 %v1695, %v1696
      %v1698 = vsel %vm365, %v1656, 0.0
      %v1699 = vadd.f32 %v1697, %v1698
      %v1700 = vsel %vm365, %v1657, 0.0
      %v1701 = vadd.f32 %v1699, %v1700
      %v1702 = vsel %vm365, %v1658, 0.0
      %v1703 = vadd.f32 %v1701, %v1702
      %v1704 = vsel %vm365, %v1659, 0.0
      %v1705 = vadd.f32 %v1703, %v1704
      %v1706 = vsel %vm365, %v1660, 0.0
      %v1707 = vadd.f32 %v1705, %v1706
      %v1708 = vsel %vm365, %v1661, 0.0
      %v1709 = vadd.f32 %v1707, %v1708
      %v1710 = vsel %vm365, %v1662, 0.0
      %v1711 = vadd.f32 %v1709, %v1710
      %v1712 = vsel %vm365, %v1663, 0.0
      %v1713 = vadd.f32 %v1711, %v1712
      %v1714 = vsel %vm365, %v1664, 0.0
      %v1715 = vadd.f32 %v1713, %v1714
      %v1716 = vsel %vm365, %v1665, 0.0
      %v1717 = vadd.f32 %v1715, %v1716
      %v1718 = vsel %vm365, %v1666, 0.0
      %v1719 = vadd.f32 %v1717, %v1718
      %v1720 = vsel %vm365, %v1667, 0.0
      %v1721 = vadd.f32 %v1719, %v1720
      %v1722 = vsel %vm365, %v1668, 0.0
      %v1723 = vadd.f32 %v1721, %v1722
      %v1724 = vsel %vm365, %v1669, 0.0
      %v1725 = vadd.f32 %v1723, %v1724
      %v1726 = vsel %vm365, %v1670, 0.0
      %v1727 = vadd.f32 %v1725, %v1726
      %v1728 = vsel %vm365, %v1671, 0.0
      %v1729 = vadd.f32 %v1727, %v1728
      %v1730 = vsel %vm365, %v1672, 0.0
      %v1731 = vadd.f32 %v1729, %v1730
      %v1732 = vsel %vm365, %v1673, 0.0
      %v1733 = vadd.f32 %v1731, %v1732
      %v1734 = vsel %vm365, %v1674, 0.0
      %v1735 = vadd.f32 %v1733, %v1734
      %v1736 = vsel %vm365, %v1675, 0.0
      %v1737 = vadd.f32 %v1735, %v1736
      %v1738 = vsel %vm365, %v1676, 0.0
      %v1739 = vadd.f32 %v1737, %v1738
      %v1740 = vrot.slane %v1739, 4
      %v1741 = vadd.f32 %v1739, %v1740
      %v1742 = vrot.slane %v1741, 2
      %v1743 = vadd.f32 %v1741, %v1742
      %v1744 = vrot.slane %v1743, 1
      %v1745 = vadd.f32 %v1743, %v1744
      %v1746 = vmul.f32 %v1745, 0.00390625
      %v1747 = vmul.f32 %v1645, %v1645
      %v1748 = vmul.f32 %v1646, %v1646
      %v1749 = vmul.f32 %v1647, %v1647
      %v1750 = vmul.f32 %v1648, %v1648
      %v1751 = vmul.f32 %v1649, %v1649
      %v1752 = vmul.f32 %v1650, %v1650
      %v1753 = vmul.f32 %v1651, %v1651
      %v1754 = vmul.f32 %v1652, %v1652
      %v1755 = vmul.f32 %v1653, %v1653
      %v1756 = vmul.f32 %v1654, %v1654
      %v1757 = vmul.f32 %v1655, %v1655
      %v1758 = vmul.f32 %v1656, %v1656
      %v1759 = vmul.f32 %v1657, %v1657
      %v1760 = vmul.f32 %v1658, %v1658
      %v1761 = vmul.f32 %v1659, %v1659
      %v1762 = vmul.f32 %v1660, %v1660
      %v1763 = vmul.f32 %v1661, %v1661
      %v1764 = vmul.f32 %v1662, %v1662
      %v1765 = vmul.f32 %v1663, %v1663
      %v1766 = vmul.f32 %v1664, %v1664
      %v1767 = vmul.f32 %v1665, %v1665
      %v1768 = vmul.f32 %v1666, %v1666
      %v1769 = vmul.f32 %v1667, %v1667
      %v1770 = vmul.f32 %v1668, %v1668
      %v1771 = vmul.f32 %v1669, %v1669
      %v1772 = vmul.f32 %v1670, %v1670
      %v1773 = vmul.f32 %v1671, %v1671
      %v1774 = vmul.f32 %v1672, %v1672
      %v1775 = vmul.f32 %v1673, %v1673
      %v1776 = vmul.f32 %v1674, %v1674
      %v1777 = vmul.f32 %v1675, %v1675
      %v1778 = vmul.f32 %v1676, %v1676
      %v1779 = vsel %vm365, %v1747, 0.0
      %v1780 = vsel %vm365, %v1748, 0.0
      %v1781 = vadd.f32 %v1779, %v1780
      %v1782 = vsel %vm365, %v1749, 0.0
      %v1783 = vadd.f32 %v1781, %v1782
      %v1784 = vsel %vm365, %v1750, 0.0
      %v1785 = vadd.f32 %v1783, %v1784
      %v1786 = vsel %vm365, %v1751, 0.0
      %v1787 = vadd.f32 %v1785, %v1786
      %v1788 = vsel %vm365, %v1752, 0.0
      %v1789 = vadd.f32 %v1787, %v1788
      %v1790 = vsel %vm365, %v1753, 0.0
      %v1791 = vadd.f32 %v1789, %v1790
      %v1792 = vsel %vm365, %v1754, 0.0
      %v1793 = vadd.f32 %v1791, %v1792
      %v1794 = vsel %vm365, %v1755, 0.0
      %v1795 = vadd.f32 %v1793, %v1794
      %v1796 = vsel %vm365, %v1756, 0.0
      %v1797 = vadd.f32 %v1795, %v1796
      %v1798 = vsel %vm365, %v1757, 0.0
      %v1799 = vadd.f32 %v1797, %v1798
      %v1800 = vsel %vm365, %v1758, 0.0
      %v1801 = vadd.f32 %v1799, %v1800
      %v1802 = vsel %vm365, %v1759, 0.0
      %v1803 = vadd.f32 %v1801, %v1802
      %v1804 = vsel %vm365, %v1760, 0.0
      %v1805 = vadd.f32 %v1803, %v1804
      %v1806 = vsel %vm365, %v1761, 0.0
      %v1807 = vadd.f32 %v1805, %v1806
      %v1808 = vsel %vm365, %v1762, 0.0
      %v1809 = vadd.f32 %v1807, %v1808
      %v1810 = vsel %vm365, %v1763, 0.0
      %v1811 = vadd.f32 %v1809, %v1810
      %v1812 = vsel %vm365, %v1764, 0.0
      %v1813 = vadd.f32 %v1811, %v1812
      %v1814 = vsel %vm365, %v1765, 0.0
      %v1815 = vadd.f32 %v1813, %v1814
      %v1816 = vsel %vm365, %v1766, 0.0
      %v1817 = vadd.f32 %v1815, %v1816
      %v1818 = vsel %vm365, %v1767, 0.0
      %v1819 = vadd.f32 %v1817, %v1818
      %v1820 = vsel %vm365, %v1768, 0.0
      %v1821 = vadd.f32 %v1819, %v1820
      %v1822 = vsel %vm365, %v1769, 0.0
      %v1823 = vadd.f32 %v1821, %v1822
      %v1824 = vsel %vm365, %v1770, 0.0
      %v1825 = vadd.f32 %v1823, %v1824
      %v1826 = vsel %vm365, %v1771, 0.0
      %v1827 = vadd.f32 %v1825, %v1826
      %v1828 = vsel %vm365, %v1772, 0.0
      %v1829 = vadd.f32 %v1827, %v1828
      %v1830 = vsel %vm365, %v1773, 0.0
      %v1831 = vadd.f32 %v1829, %v1830
      %v1832 = vsel %vm365, %v1774, 0.0
      %v1833 = vadd.f32 %v1831, %v1832
      %v1834 = vsel %vm365, %v1775, 0.0
      %v1835 = vadd.f32 %v1833, %v1834
      %v1836 = vsel %vm365, %v1776, 0.0
      %v1837 = vadd.f32 %v1835, %v1836
      %v1838 = vsel %vm365, %v1777, 0.0
      %v1839 = vadd.f32 %v1837, %v1838
      %v1840 = vsel %vm365, %v1778, 0.0
      %v1841 = vadd.f32 %v1839, %v1840
      %v1842 = vrot.slane %v1841, 4
      %v1843 = vadd.f32 %v1841, %v1842
      %v1844 = vrot.slane %v1843, 2
      %v1845 = vadd.f32 %v1843, %v1844
      %v1846 = vrot.slane %v1845, 1
      %v1847 = vadd.f32 %v1845, %v1846
      %v1848 = vmul.f32 %v1847, 0.00390625
      %v1849 = vmul.f32 %v1746, %v1746
      %v1850 = vsub.f32 %v1848, %v1849
      %v1851 = vmax.f32 %v1850, 0.0
      %v1852 = vsub.f32 %v1645, %v1746
      %v1853 = vsub.f32 %v1646, %v1746
      %v1854 = vsub.f32 %v1647, %v1746
      %v1855 = vsub.f32 %v1648, %v1746
      %v1856 = vsub.f32 %v1649, %v1746
      %v1857 = vsub.f32 %v1650, %v1746
      %v1858 = vsub.f32 %v1651, %v1746
      %v1859 = vsub.f32 %v1652, %v1746
      %v1860 = vsub.f32 %v1653, %v1746
      %v1861 = vsub.f32 %v1654, %v1746
      %v1862 = vsub.f32 %v1655, %v1746
      %v1863 = vsub.f32 %v1656, %v1746
      %v1864 = vsub.f32 %v1657, %v1746
      %v1865 = vsub.f32 %v1658, %v1746
      %v1866 = vsub.f32 %v1659, %v1746
      %v1867 = vsub.f32 %v1660, %v1746
      %v1868 = vsub.f32 %v1661, %v1746
      %v1869 = vsub.f32 %v1662, %v1746
      %v1870 = vsub.f32 %v1663, %v1746
      %v1871 = vsub.f32 %v1664, %v1746
      %v1872 = vsub.f32 %v1665, %v1746
      %v1873 = vsub.f32 %v1666, %v1746
      %v1874 = vsub.f32 %v1667, %v1746
      %v1875 = vsub.f32 %v1668, %v1746
      %v1876 = vsub.f32 %v1669, %v1746
      %v1877 = vsub.f32 %v1670, %v1746
      %v1878 = vsub.f32 %v1671, %v1746
      %v1879 = vsub.f32 %v1672, %v1746
      %v1880 = vsub.f32 %v1673, %v1746
      %v1881 = vsub.f32 %v1674, %v1746
      %v1882 = vsub.f32 %v1675, %v1746
      %v1883 = vsub.f32 %v1676, %v1746
      %v1884 = vadd.f32 %v1851, 1e-05
      %v1885 = vrsqrt.pop %v1884
      %v1886 = vmul.f32 %v1852, %v1885
      %v1887 = vmul.f32 %v1853, %v1885
      %v1888 = vmul.f32 %v1854, %v1885
      %v1889 = vmul.f32 %v1855, %v1885
      %v1890 = vmul.f32 %v1856, %v1885
      %v1891 = vmul.f32 %v1857, %v1885
      %v1892 = vmul.f32 %v1858, %v1885
      %v1893 = vmul.f32 %v1859, %v1885
      %v1894 = vmul.f32 %v1860, %v1885
      %v1895 = vmul.f32 %v1861, %v1885
      %v1896 = vmul.f32 %v1862, %v1885
      %v1897 = vmul.f32 %v1863, %v1885
      %v1898 = vmul.f32 %v1864, %v1885
      %v1899 = vmul.f32 %v1865, %v1885
      %v1900 = vmul.f32 %v1866, %v1885
      %v1901 = vmul.f32 %v1867, %v1885
      %v1902 = vmul.f32 %v1868, %v1885
      %v1903 = vmul.f32 %v1869, %v1885
      %v1904 = vmul.f32 %v1870, %v1885
      %v1905 = vmul.f32 %v1871, %v1885
      %v1906 = vmul.f32 %v1872, %v1885
      %v1907 = vmul.f32 %v1873, %v1885
      %v1908 = vmul.f32 %v1874, %v1885
      %v1909 = vmul.f32 %v1875, %v1885
      %v1910 = vmul.f32 %v1876, %v1885
      %v1911 = vmul.f32 %v1877, %v1885
      %v1912 = vmul.f32 %v1878, %v1885
      %v1913 = vmul.f32 %v1879, %v1885
      %v1914 = vmul.f32 %v1880, %v1885
      %v1915 = vmul.f32 %v1881, %v1885
      %v1916 = vmul.f32 %v1882, %v1885
      %v1917 = vmul.f32 %v1883, %v1885
      %v1918 = vmax.f32 %v1886, 0.0
      %v1919 = vmax.f32 %v1887, 0.0
      %v1920 = vmax.f32 %v1888, 0.0
      %v1921 = vmax.f32 %v1889, 0.0
      %v1922 = vmax.f32 %v1890, 0.0
      %v1923 = vmax.f32 %v1891, 0.0
      %v1924 = vmax.f32 %v1892, 0.0
      %v1925 = vmax.f32 %v1893, 0.0
      %v1926 = vmax.f32 %v1894, 0.0
      %v1927 = vmax.f32 %v1895, 0.0
      %v1928 = vmax.f32 %v1896, 0.0
      %v1929 = vmax.f32 %v1897, 0.0
      %v1930 = vmax.f32 %v1898, 0.0
      %v1931 = vmax.f32 %v1899, 0.0
      %v1932 = vmax.f32 %v1900, 0.0
      %v1933 = vmax.f32 %v1901, 0.0
      %v1934 = vmax.f32 %v1902, 0.0
      %v1935 = vmax.f32 %v1903, 0.0
      %v1936 = vmax.f32 %v1904, 0.0
      %v1937 = vmax.f32 %v1905, 0.0
      %v1938 = vmax.f32 %v1906, 0.0
      %v1939 = vmax.f32 %v1907, 0.0
      %v1940 = vmax.f32 %v1908, 0.0
      %v1941 = vmax.f32 %v1909, 0.0
      %v1942 = vmax.f32 %v1910, 0.0
      %v1943 = vmax.f32 %v1911, 0.0
      %v1944 = vmax.f32 %v1912, 0.0
      %v1945 = vmax.f32 %v1913, 0.0
      %v1946 = vmax.f32 %v1914, 0.0
      %v1947 = vmax.f32 %v1915, 0.0
      %v1948 = vmax.f32 %v1916, 0.0
      %v1949 = vmax.f32 %v1917, 0.0
      %1982 = vrot.lane.b32.xlu0 %v1918, 8
      %v1983 = vpop.permute.xlu0 %1982
      %1984 = vrot.lane.b32.xlu0 %v1919, 8
      %v1985 = vpop.permute.xlu0 %1984
      %1986 = vrot.lane.b32.xlu0 %v1920, 8
      %v1987 = vpop.permute.xlu0 %1986
      %1988 = vrot.lane.b32.xlu0 %v1921, 8
      %v1989 = vpop.permute.xlu0 %1988
      %1990 = vrot.lane.b32.xlu0 %v1922, 8
      %v1991 = vpop.permute.xlu0 %1990
      %1992 = vrot.lane.b32.xlu0 %v1923, 8
      %v1993 = vpop.permute.xlu0 %1992
      %1994 = vrot.lane.b32.xlu0 %v1924, 8
      %v1995 = vpop.permute.xlu0 %1994
      %1996 = vrot.lane.b32.xlu0 %v1925, 8
      %v1997 = vpop.permute.xlu0 %1996
      %1998 = vrot.lane.b32.xlu0 %v1926, 8
      %v1999 = vpop.permute.xlu0 %1998
      %2000 = vrot.lane.b32.xlu0 %v1927, 8
      %v2001 = vpop.permute.xlu0 %2000
      %2002 = vrot.lane.b32.xlu0 %v1928, 8
      %v2003 = vpop.permute.xlu0 %2002
      %2004 = vrot.lane.b32.xlu0 %v1929, 8
      %v2005 = vpop.permute.xlu0 %2004
      %2006 = vrot.lane.b32.xlu0 %v1930, 8
      %v2007 = vpop.permute.xlu0 %2006
      %2008 = vrot.lane.b32.xlu0 %v1931, 8
      %v2009 = vpop.permute.xlu0 %2008
      %2010 = vrot.lane.b32.xlu0 %v1932, 8
      %v2011 = vpop.permute.xlu0 %2010
      %2012 = vrot.lane.b32.xlu0 %v1933, 8
      %v2013 = vpop.permute.xlu0 %2012
      %2014 = vrot.lane.b32.xlu0 %v1934, 8
      %v2015 = vpop.permute.xlu0 %2014
      %2016 = vrot.lane.b32.xlu0 %v1935, 8
      %v2017 = vpop.permute.xlu0 %2016
      %2018 = vrot.lane.b32.xlu0 %v1936, 8
      %v2019 = vpop.permute.xlu0 %2018
      %2020 = vrot.lane.b32.xlu0 %v1937, 8
      %v2021 = vpop.permute.xlu0 %2020
      %2022 = vrot.lane.b32.xlu0 %v1938, 8
      %v2023 = vpop.permute.xlu0 %2022
      %2024 = vrot.lane.b32.xlu0 %v1939, 8
      %v2025 = vpop.permute.xlu0 %2024
      %2026 = vrot.lane.b32.xlu0 %v1940, 8
      %v2027 = vpop.permute.xlu0 %2026
      %2028 = vrot.lane.b32.xlu0 %v1941, 8
      %v2029 = vpop.permute.xlu0 %2028
      %2030 = vrot.lane.b32.xlu0 %v1942, 8
      %v2031 = vpop.permute.xlu0 %2030
      %2032 = vrot.lane.b32.xlu0 %v1943, 8
      %v2033 = vpop.permute.xlu0 %2032
      %2034 = vrot.lane.b32.xlu0 %v1944, 8
      %v2035 = vpop.permute.xlu0 %2034
      %2036 = vrot.lane.b32.xlu0 %v1945, 8
      %v2037 = vpop.permute.xlu0 %2036
      %2038 = vrot.lane.b32.xlu0 %v1946, 8
      %v2039 = vpop.permute.xlu0 %2038
      %2040 = vrot.lane.b32.xlu0 %v1947, 8
      %v2041 = vpop.permute.xlu0 %2040
      %2042 = vrot.lane.b32.xlu0 %v1948, 8
      %v2043 = vpop.permute.xlu0 %2042
      %2044 = vrot.lane.b32.xlu0 %v1949, 8
      %v2045 = vpop.permute.xlu0 %2044
      %2078 = vst.msk [vmem:[%s331] sm:$0xff] %vm332, %v1983
      %2079 = vst.msk [vmem:[%s331 + $0x8] sm:$0xff] %vm332, %v1985
      %2080 = vst.msk [vmem:[%s331 + $0x10] sm:$0xff] %vm332, %v1987
      %2081 = vst.msk [vmem:[%s331 + $0x18] sm:$0xff] %vm332, %v1989
      %2082 = vst.msk [vmem:[%s331 + $0x20] sm:$0xff] %vm332, %v1991
      %2083 = vst.msk [vmem:[%s331 + $0x28] sm:$0xff] %vm332, %v1993
      %2084 = vst.msk [vmem:[%s331 + $0x30] sm:$0xff] %vm332, %v1995
      %2085 = vst.msk [vmem:[%s331 + $0x38] sm:$0xff] %vm332, %v1997
      %2086 = vst.msk [vmem:[%s331 + $0x40] sm:$0xff] %vm332, %v1999
      %2087 = vst.msk [vmem:[%s331 + $0x48] sm:$0xff] %vm332, %v2001
      %2088 = vst.msk [vmem:[%s331 + $0x50] sm:$0xff] %vm332, %v2003
      %2089 = vst.msk [vmem:[%s331 + $0x58] sm:$0xff] %vm332, %v2005
      %2090 = vst.msk [vmem:[%s331 + $0x60] sm:$0xff] %vm332, %v2007
      %2091 = vst.msk [vmem:[%s331 + $0x68] sm:$0xff] %vm332, %v2009
      %2092 = vst.msk [vmem:[%s331 + $0x70] sm:$0xff] %vm332, %v2011
      %2093 = vst.msk [vmem:[%s331 + $0x78] sm:$0xff] %vm332, %v2013
      %2094 = vst.msk [vmem:[%s331 + $0x80] sm:$0xff] %vm332, %v2015
      %2095 = vst.msk [vmem:[%s331 + $0x88] sm:$0xff] %vm332, %v2017
      %2096 = vst.msk [vmem:[%s331 + $0x90] sm:$0xff] %vm332, %v2019
      %2097 = vst.msk [vmem:[%s331 + $0x98] sm:$0xff] %vm332, %v2021
      %2098 = vst.msk [vmem:[%s331 + $0xa0] sm:$0xff] %vm332, %v2023
      %2099 = vst.msk [vmem:[%s331 + $0xa8] sm:$0xff] %vm332, %v2025
      %2100 = vst.msk [vmem:[%s331 + $0xb0] sm:$0xff] %vm332, %v2027
      %2101 = vst.msk [vmem:[%s331 + $0xb8] sm:$0xff] %vm332, %v2029
      %2102 = vst.msk [vmem:[%s331 + $0xc0] sm:$0xff] %vm332, %v2031
      %2103 = vst.msk [vmem:[%s331 + $0xc8] sm:$0xff] %vm332, %v2033
      %2104 = vst.msk [vmem:[%s331 + $0xd0] sm:$0xff] %vm332, %v2035
      %2105 = vst.msk [vmem:[%s331 + $0xd8] sm:$0xff] %vm332, %v2037
      %2106 = vst.msk [vmem:[%s331 + $0xe0] sm:$0xff] %vm332, %v2039
      %2107 = vst.msk [vmem:[%s331 + $0xe8] sm:$0xff] %vm332, %v2041
      %2108 = vst.msk [vmem:[%s331 + $0xf0] sm:$0xff] %vm332, %v2043
      %2109 = vst.msk [vmem:[%s331 + $0xf8] sm:$0xff] %vm332, %v2045
      %2110 = vst.msk [vmem:[%s331 + $0x1] sm:$0xff] %vm365, %v1918
      %2111 = vst.msk [vmem:[%s331 + $0x9] sm:$0x7f] %vm367, %v1919
      %2112 = vst.msk [vmem:[%s331 + $0x11] sm:$0xff] %vm365, %v1920
      %2113 = vst.msk [vmem:[%s331 + $0x19] sm:$0x7f] %vm367, %v1921
      %2114 = vst.msk [vmem:[%s331 + $0x21] sm:$0xff] %vm365, %v1922
      %2115 = vst.msk [vmem:[%s331 + $0x29] sm:$0x7f] %vm367, %v1923
      %2116 = vst.msk [vmem:[%s331 + $0x31] sm:$0xff] %vm365, %v1924
      %2117 = vst.msk [vmem:[%s331 + $0x39] sm:$0x7f] %vm367, %v1925
      %2118 = vst.msk [vmem:[%s331 + $0x41] sm:$0xff] %vm365, %v1926
      %2119 = vst.msk [vmem:[%s331 + $0x49] sm:$0x7f] %vm367, %v1927
      %2120 = vst.msk [vmem:[%s331 + $0x51] sm:$0xff] %vm365, %v1928
      %2121 = vst.msk [vmem:[%s331 + $0x59] sm:$0x7f] %vm367, %v1929
      %2122 = vst.msk [vmem:[%s331 + $0x61] sm:$0xff] %vm365, %v1930
      %2123 = vst.msk [vmem:[%s331 + $0x69] sm:$0x7f] %vm367, %v1931
      %2124 = vst.msk [vmem:[%s331 + $0x71] sm:$0xff] %vm365, %v1932
      %2125 = vst.msk [vmem:[%s331 + $0x79] sm:$0x7f] %vm367, %v1933
      %2126 = vst.msk [vmem:[%s331 + $0x81] sm:$0xff] %vm365, %v1934
      %2127 = vst.msk [vmem:[%s331 + $0x89] sm:$0x7f] %vm367, %v1935
      %2128 = vst.msk [vmem:[%s331 + $0x91] sm:$0xff] %vm365, %v1936
      %2129 = vst.msk [vmem:[%s331 + $0x99] sm:$0x7f] %vm367, %v1937
      %2130 = vst.msk [vmem:[%s331 + $0xa1] sm:$0xff] %vm365, %v1938
      %2131 = vst.msk [vmem:[%s331 + $0xa9] sm:$0x7f] %vm367, %v1939
      %2132 = vst.msk [vmem:[%s331 + $0xb1] sm:$0xff] %vm365, %v1940
      %2133 = vst.msk [vmem:[%s331 + $0xb9] sm:$0x7f] %vm367, %v1941
      %2134 = vst.msk [vmem:[%s331 + $0xc1] sm:$0xff] %vm365, %v1942
      %2135 = vst.msk [vmem:[%s331 + $0xc9] sm:$0x7f] %vm367, %v1943
      %2136 = vst.msk [vmem:[%s331 + $0xd1] sm:$0xff] %vm365, %v1944
      %2137 = vst.msk [vmem:[%s331 + $0xd9] sm:$0x7f] %vm367, %v1945
      %2138 = vst.msk [vmem:[%s331 + $0xe1] sm:$0xff] %vm365, %v1946
      %2139 = vst.msk [vmem:[%s331 + $0xe9] sm:$0x7f] %vm367, %v1947
      %2140 = vst.msk [vmem:[%s331 + $0xf1] sm:$0xff] %vm365, %v1948
      %2141 = vst.msk [vmem:[%s331 + $0xf9] sm:$0x7f] %vm367, %v1949
      %2142 = vst.msk [vmem:[%s331 - $0x1] sm:$0x2] %vm399, %v1918
      %2143 = vst.msk [vmem:[%s331 + $0xf] sm:$0x2] %vm399, %v1920
      %2144 = vst.msk [vmem:[%s331 + $0x1f] sm:$0x2] %vm399, %v1922
      %2145 = vst.msk [vmem:[%s331 + $0x2f] sm:$0x2] %vm399, %v1924
      %2146 = vst.msk [vmem:[%s331 + $0x3f] sm:$0x2] %vm399, %v1926
      %2147 = vst.msk [vmem:[%s331 + $0x4f] sm:$0x2] %vm399, %v1928
      %2148 = vst.msk [vmem:[%s331 + $0x5f] sm:$0x2] %vm399, %v1930
      %2149 = vst.msk [vmem:[%s331 + $0x6f] sm:$0x2] %vm399, %v1932
      %2150 = vst.msk [vmem:[%s331 + $0x7f] sm:$0x2] %vm399, %v1934
      %2151 = vst.msk [vmem:[%s331 + $0x8f] sm:$0x2] %vm399, %v1936
      %2152 = vst.msk [vmem:[%s331 + $0x9f] sm:$0x2] %vm399, %v1938
      %2153 = vst.msk [vmem:[%s331 + $0xaf] sm:$0x2] %vm399, %v1940
      %2154 = vst.msk [vmem:[%s331 + $0xbf] sm:$0x2] %vm399, %v1942
      %2155 = vst.msk [vmem:[%s331 + $0xcf] sm:$0x2] %vm399, %v1944
      %2156 = vst.msk [vmem:[%s331 + $0xdf] sm:$0x2] %vm399, %v1946
      %2157 = vst.msk [vmem:[%s331 + $0xef] sm:$0x2] %vm399, %v1948
      %2158 = vrot.lane.b32.xlu0 %v1918, 16
      %v2159 = vpop.permute.xlu0 %2158
      %2160 = vrot.lane.b32.xlu0 %v1919, 16
      %v2161 = vpop.permute.xlu0 %2160
      %2162 = vrot.lane.b32.xlu0 %v1920, 16
      %v2163 = vpop.permute.xlu0 %2162
      %2164 = vrot.lane.b32.xlu0 %v1921, 16
      %v2165 = vpop.permute.xlu0 %2164
      %2166 = vrot.lane.b32.xlu0 %v1922, 16
      %v2167 = vpop.permute.xlu0 %2166
      %2168 = vrot.lane.b32.xlu0 %v1923, 16
      %v2169 = vpop.permute.xlu0 %2168
      %2170 = vrot.lane.b32.xlu0 %v1924, 16
      %v2171 = vpop.permute.xlu0 %2170
      %2172 = vrot.lane.b32.xlu0 %v1925, 16
      %v2173 = vpop.permute.xlu0 %2172
      %2174 = vrot.lane.b32.xlu0 %v1926, 16
      %v2175 = vpop.permute.xlu0 %2174
      %2176 = vrot.lane.b32.xlu0 %v1927, 16
      %v2177 = vpop.permute.xlu0 %2176
      %2178 = vrot.lane.b32.xlu0 %v1928, 16
      %v2179 = vpop.permute.xlu0 %2178
      %2180 = vrot.lane.b32.xlu0 %v1929, 16
      %v2181 = vpop.permute.xlu0 %2180
      %2182 = vrot.lane.b32.xlu0 %v1930, 16
      %v2183 = vpop.permute.xlu0 %2182
      %2184 = vrot.lane.b32.xlu0 %v1931, 16
      %v2185 = vpop.permute.xlu0 %2184
      %2186 = vrot.lane.b32.xlu0 %v1932, 16
      %v2187 = vpop.permute.xlu0 %2186
      %2188 = vrot.lane.b32.xlu0 %v1933, 16
      %v2189 = vpop.permute.xlu0 %2188
      %2190 = vrot.lane.b32.xlu0 %v1934, 16
      %v2191 = vpop.permute.xlu0 %2190
      %2192 = vrot.lane.b32.xlu0 %v1935, 16
      %v2193 = vpop.permute.xlu0 %2192
      %2194 = vrot.lane.b32.xlu0 %v1936, 16
      %v2195 = vpop.permute.xlu0 %2194
      %2196 = vrot.lane.b32.xlu0 %v1937, 16
      %v2197 = vpop.permute.xlu0 %2196
      %2198 = vrot.lane.b32.xlu0 %v1938, 16
      %v2199 = vpop.permute.xlu0 %2198
      %2200 = vrot.lane.b32.xlu0 %v1939, 16
      %v2201 = vpop.permute.xlu0 %2200
      %2202 = vrot.lane.b32.xlu0 %v1940, 16
      %v2203 = vpop.permute.xlu0 %2202
      %2204 = vrot.lane.b32.xlu0 %v1941, 16
      %v2205 = vpop.permute.xlu0 %2204
      %2206 = vrot.lane.b32.xlu0 %v1942, 16
      %v2207 = vpop.permute.xlu0 %2206
      %2208 = vrot.lane.b32.xlu0 %v1943, 16
      %v2209 = vpop.permute.xlu0 %2208
      %2210 = vrot.lane.b32.xlu0 %v1944, 16
      %v2211 = vpop.permute.xlu0 %2210
      %2212 = vrot.lane.b32.xlu0 %v1945, 16
      %v2213 = vpop.permute.xlu0 %2212
      %2214 = vrot.lane.b32.xlu0 %v1946, 16
      %v2215 = vpop.permute.xlu0 %2214
      %2216 = vrot.lane.b32.xlu0 %v1947, 16
      %v2217 = vpop.permute.xlu0 %2216
      %2218 = vrot.lane.b32.xlu0 %v1948, 16
      %v2219 = vpop.permute.xlu0 %2218
      %2220 = vrot.lane.b32.xlu0 %v1949, 16
      %v2221 = vpop.permute.xlu0 %2220
      %2254 = vst.msk [vmem:[%s331 - $0x1] sm:$0xfe] %vm512, %v2159
      %2255 = vst.msk [vmem:[%s331 + $0x7] sm:$0xff] %vm514, %v2161
      %2256 = vst.msk [vmem:[%s331 + $0xf] sm:$0xfe] %vm512, %v2163
      %2257 = vst.msk [vmem:[%s331 + $0x17] sm:$0xff] %vm514, %v2165
      %2258 = vst.msk [vmem:[%s331 + $0x1f] sm:$0xfe] %vm512, %v2167
      %2259 = vst.msk [vmem:[%s331 + $0x27] sm:$0xff] %vm514, %v2169
      %2260 = vst.msk [vmem:[%s331 + $0x2f] sm:$0xfe] %vm512, %v2171
      %2261 = vst.msk [vmem:[%s331 + $0x37] sm:$0xff] %vm514, %v2173
      %2262 = vst.msk [vmem:[%s331 + $0x3f] sm:$0xfe] %vm512, %v2175
      %2263 = vst.msk [vmem:[%s331 + $0x47] sm:$0xff] %vm514, %v2177
      %2264 = vst.msk [vmem:[%s331 + $0x4f] sm:$0xfe] %vm512, %v2179
      %2265 = vst.msk [vmem:[%s331 + $0x57] sm:$0xff] %vm514, %v2181
      %2266 = vst.msk [vmem:[%s331 + $0x5f] sm:$0xfe] %vm512, %v2183
      %2267 = vst.msk [vmem:[%s331 + $0x67] sm:$0xff] %vm514, %v2185
      %2268 = vst.msk [vmem:[%s331 + $0x6f] sm:$0xfe] %vm512, %v2187
      %2269 = vst.msk [vmem:[%s331 + $0x77] sm:$0xff] %vm514, %v2189
      %2270 = vst.msk [vmem:[%s331 + $0x7f] sm:$0xfe] %vm512, %v2191
      %2271 = vst.msk [vmem:[%s331 + $0x87] sm:$0xff] %vm514, %v2193
      %2272 = vst.msk [vmem:[%s331 + $0x8f] sm:$0xfe] %vm512, %v2195
      %2273 = vst.msk [vmem:[%s331 + $0x97] sm:$0xff] %vm514, %v2197
      %2274 = vst.msk [vmem:[%s331 + $0x9f] sm:$0xfe] %vm512, %v2199
      %2275 = vst.msk [vmem:[%s331 + $0xa7] sm:$0xff] %vm514, %v2201
      %2276 = vst.msk [vmem:[%s331 + $0xaf] sm:$0xfe] %vm512, %v2203
      %2277 = vst.msk [vmem:[%s331 + $0xb7] sm:$0xff] %vm514, %v2205
      %2278 = vst.msk [vmem:[%s331 + $0xbf] sm:$0xfe] %vm512, %v2207
      %2279 = vst.msk [vmem:[%s331 + $0xc7] sm:$0xff] %vm514, %v2209
      %2280 = vst.msk [vmem:[%s331 + $0xcf] sm:$0xfe] %vm512, %v2211
      %2281 = vst.msk [vmem:[%s331 + $0xd7] sm:$0xff] %vm514, %v2213
      %2282 = vst.msk [vmem:[%s331 + $0xdf] sm:$0xfe] %vm512, %v2215
      %2283 = vst.msk [vmem:[%s331 + $0xe7] sm:$0xff] %vm514, %v2217
      %2284 = vst.msk [vmem:[%s331 + $0xef] sm:$0xfe] %vm512, %v2219
      %2285 = vst.msk [vmem:[%s331 + $0xf7] sm:$0xff] %vm514, %v2221
      %2286 = vst.msk [vmem:[%s331 + $0x9] sm:$0x40] %vm546, %v2161
      %2287 = vst.msk [vmem:[%s331 + $0x19] sm:$0x40] %vm546, %v2165
      %2288 = vst.msk [vmem:[%s331 + $0x29] sm:$0x40] %vm546, %v2169
      %2289 = vst.msk [vmem:[%s331 + $0x39] sm:$0x40] %vm546, %v2173
      %2290 = vst.msk [vmem:[%s331 + $0x49] sm:$0x40] %vm546, %v2177
      %2291 = vst.msk [vmem:[%s331 + $0x59] sm:$0x40] %vm546, %v2181
      %2292 = vst.msk [vmem:[%s331 + $0x69] sm:$0x40] %vm546, %v2185
      %2293 = vst.msk [vmem:[%s331 + $0x79] sm:$0x40] %vm546, %v2189
      %2294 = vst.msk [vmem:[%s331 + $0x89] sm:$0x40] %vm546, %v2193
      %2295 = vst.msk [vmem:[%s331 + $0x99] sm:$0x40] %vm546, %v2197
      %2296 = vst.msk [vmem:[%s331 + $0xa9] sm:$0x40] %vm546, %v2201
      %2297 = vst.msk [vmem:[%s331 + $0xb9] sm:$0x40] %vm546, %v2205
      %2298 = vst.msk [vmem:[%s331 + $0xc9] sm:$0x40] %vm546, %v2209
      %2299 = vst.msk [vmem:[%s331 + $0xd9] sm:$0x40] %vm546, %v2213
      %2300 = vst.msk [vmem:[%s331 + $0xe9] sm:$0x40] %vm546, %v2217
      %2301 = vst.msk [vmem:[%s331 + $0xf9] sm:$0x40] %vm546, %v2221
      %v2302 = vld [vmem:[%s563] sm:$0xff]
      %v2303 = vld [vmem:[%s563 + $0x8] sm:$0xff]
      %2304 = vst.msk [vmem:[#allocation2] sm:$0xff] %vm566, %v2302
      %2305 = vst.msk [vmem:[#allocation2 + $0x8] sm:$0xff] %vm566, %v2303
      %v2306 = vld [vmem:[%s569] sm:$0xff]
      %v2307 = vld [vmem:[%s569 + $0x8] sm:$0xff]
      %2308 = vst.msk [vmem:[%s572] sm:$0xff] %vm566, %v2306
      %2309 = vst.msk [vmem:[%s572 + $0x8] sm:$0xff] %vm566, %v2307
      %v2310 = vld [vmem:[#allocation2] sm:$0xff]
      %v2311 = vld [vmem:[#allocation2 + $0x8] sm:$0xff]
      %v2312 = vld [vmem:[#allocation2 + $0x10] sm:$0xff]
      %v2313 = vld [vmem:[#allocation2 + $0x18] sm:$0xff]
      %v2314 = vld [vmem:[#allocation2 + $0x20] sm:$0xff]
      %v2315 = vld [vmem:[#allocation2 + $0x28] sm:$0xff]
      %v2316 = vld [vmem:[#allocation2 + $0x30] sm:$0xff]
      %v2317 = vld [vmem:[#allocation2 + $0x38] sm:$0xff]
      %v2318 = vld [vmem:[#allocation2 + $0x40] sm:$0xff]
      %v2319 = vld [vmem:[#allocation2 + $0x48] sm:$0xff]
      %v2320 = vld [vmem:[#allocation2 + $0x50] sm:$0xff]
      %v2321 = vld [vmem:[#allocation2 + $0x58] sm:$0xff]
      %v2322 = vld [vmem:[#allocation2 + $0x60] sm:$0xff]
      %v2323 = vld [vmem:[#allocation2 + $0x68] sm:$0xff]
      %v2324 = vld [vmem:[#allocation2 + $0x70] sm:$0xff]
      %v2325 = vld [vmem:[#allocation2 + $0x78] sm:$0xff]
      %v2326 = vld [vmem:[#allocation2 + $0x80] sm:$0xff]
      %v2327 = vld [vmem:[#allocation2 + $0x88] sm:$0xff]
      %v2328 = vld [vmem:[#allocation2 + $0x90] sm:$0xff]
      %v2329 = vld [vmem:[#allocation2 + $0x98] sm:$0xff]
      %v2330 = vld [vmem:[#allocation2 + $0xa0] sm:$0xff]
      %v2331 = vld [vmem:[#allocation2 + $0xa8] sm:$0xff]
      %v2332 = vld [vmem:[#allocation2 + $0xb0] sm:$0xff]
      %v2333 = vld [vmem:[#allocation2 + $0xb8] sm:$0xff]
      %v2334 = vld [vmem:[#allocation2 + $0xc0] sm:$0xff]
      %v2335 = vld [vmem:[#allocation2 + $0xc8] sm:$0xff]
      %v2336 = vld [vmem:[#allocation2 + $0xd0] sm:$0xff]
      %v2337 = vld [vmem:[#allocation2 + $0xd8] sm:$0xff]
      %v2338 = vld [vmem:[#allocation2 + $0xe0] sm:$0xff]
      %v2339 = vld [vmem:[#allocation2 + $0xe8] sm:$0xff]
      %v2340 = vld [vmem:[#allocation2 + $0xf0] sm:$0xff]
      %v2341 = vld [vmem:[#allocation2 + $0xf8] sm:$0xff]
      %v2342 = vld [vmem:[%s2] sm:$0xff]
      %v2343 = vld [vmem:[%s2 + $0x8] sm:$0xff]
      %v2344 = vld [vmem:[%s2 + $0x10] sm:$0xff]
      %v2345 = vld [vmem:[%s331] sm:$0xff]
      %v2346 = vld [vmem:[%s331 + $0x8] sm:$0xff]
      %v2347 = vld [vmem:[%s331 + $0x10] sm:$0xff]
      %v2348 = vld [vmem:[%s331 + $0x18] sm:$0xff]
      %v2349 = vld [vmem:[%s331 + $0x20] sm:$0xff]
      %v2350 = vld [vmem:[%s331 + $0x28] sm:$0xff]
      %v2351 = vld [vmem:[%s331 + $0x30] sm:$0xff]
      %v2352 = vld [vmem:[%s331 + $0x38] sm:$0xff]
      %v2353 = vld [vmem:[%s331 + $0x40] sm:$0xff]
      %v2354 = vld [vmem:[%s331 + $0x48] sm:$0xff]
      %v2355 = vld [vmem:[%s331 + $0x50] sm:$0xff]
      %v2356 = vld [vmem:[%s331 + $0x58] sm:$0xff]
      %v2357 = vld [vmem:[%s331 + $0x60] sm:$0xff]
      %v2358 = vld [vmem:[%s331 + $0x68] sm:$0xff]
      %v2359 = vld [vmem:[%s331 + $0x70] sm:$0xff]
      %v2360 = vld [vmem:[%s331 + $0x78] sm:$0xff]
      %v2361 = vld [vmem:[%s331 + $0x80] sm:$0xff]
      %v2362 = vld [vmem:[%s331 + $0x88] sm:$0xff]
      %v2363 = vld [vmem:[%s331 + $0x90] sm:$0xff]
      %v2364 = vld [vmem:[%s331 + $0x98] sm:$0xff]
      %v2365 = vld [vmem:[%s331 + $0xa0] sm:$0xff]
      %v2366 = vld [vmem:[%s331 + $0xa8] sm:$0xff]
      %v2367 = vld [vmem:[%s331 + $0xb0] sm:$0xff]
      %v2368 = vld [vmem:[%s331 + $0xb8] sm:$0xff]
      %v2369 = vld [vmem:[%s331 + $0xc0] sm:$0xff]
      %v2370 = vld [vmem:[%s331 + $0xc8] sm:$0xff]
      %v2371 = vld [vmem:[%s331 + $0xd0] sm:$0xff]
      %v2372 = vld [vmem:[%s331 + $0xd8] sm:$0xff]
      %v2373 = vld [vmem:[%s331 + $0xe0] sm:$0xff]
      %v2374 = vld [vmem:[%s331 + $0xe8] sm:$0xff]
      %v2375 = vld [vmem:[%s331 + $0xf0] sm:$0xff]
      %v2376 = vld [vmem:[%s331 + $0xf8] sm:$0xff]
      %s2377 = scalar_lea.vmem %s2, 24
      %v2378 = vld [vmem:[%s2377] sm:$0xff]
      %v2379 = vld [vmem:[%s2377 + $0x8] sm:$0xff]
      %v2380 = vld [vmem:[%s2377 + $0x10] sm:$0xff]
      %v2382 = vsel %vm566, %v2345, 0
      %v2385 = vsel %vm566, %v2346, 0
      %v2388 = vsel %vm566, %v2347, 0
      %v2391 = vsel %vm566, %v2348, 0
      %v2394 = vsel %vm566, %v2349, 0
      %v2397 = vsel %vm566, %v2350, 0
      %v2400 = vsel %vm566, %v2351, 0
      %v2403 = vsel %vm566, %v2352, 0
      %v2406 = vsel %vm566, %v2353, 0
      %v2409 = vsel %vm566, %v2354, 0
      %v2412 = vsel %vm566, %v2355, 0
      %v2415 = vsel %vm566, %v2356, 0
      %v2418 = vsel %vm566, %v2357, 0
      %v2421 = vsel %vm566, %v2358, 0
      %v2424 = vsel %vm566, %v2359, 0
      %v2427 = vsel %vm566, %v2360, 0
      %v2430 = vsel %vm566, %v2361, 0
      %v2433 = vsel %vm566, %v2362, 0
      %v2436 = vsel %vm566, %v2363, 0
      %v2439 = vsel %vm566, %v2364, 0
      %v2442 = vsel %vm566, %v2365, 0
      %v2445 = vsel %vm566, %v2366, 0
      %v2448 = vsel %vm566, %v2367, 0
      %v2451 = vsel %vm566, %v2368, 0
      %v2454 = vsel %vm566, %v2369, 0
      %v2457 = vsel %vm566, %v2370, 0
      %v2460 = vsel %vm566, %v2371, 0
      %v2463 = vsel %vm566, %v2372, 0
      %v2466 = vsel %vm566, %v2373, 0
      %v2469 = vsel %vm566, %v2374, 0
      %v2472 = vsel %vm566, %v2375, 0
      %v2475 = vsel %vm566, %v2376, 0
      %2477 = vmatprep.subr.mxu0 0.0
      %2478 = vmatpush1.msra.mxu0 %v2378
      %2479 = vmatprep.subr.mxu0 0.0
      %2480 = vmatpush1.msra.mxu0 %v2379
      %2481 = vmatprep.subr.mxu0 0.0
      %2482 = vmatpush1.msra.mxu0 %v2380
      %2483 = vmatprep.subr.mxu0 0.0
      %2484 = vmatpush1.msra.mxu0 0.0
      %2485 = vmatprep.subr.mxu0 0.0
      %2486 = vmatpush1.msra.mxu0 0.0
      %2487 = vmatprep.subr.mxu0 0.0
      %2488 = vmatpush1.msra.mxu0 0.0
      %2489 = vmatprep.subr.mxu0 0.0
      %2490 = vmatpush1.msra.mxu0 0.0
      %2491 = vmatprep.subr.mxu0 0.0
      %2492 = vmatpush1.msra.mxu0 0.0
      %2493 = vmatprep.subr.mxu0 0.0
      %2494 = vmatpush1.msra.mxu0 0.0
      %2495 = vmatprep.subr.mxu0 0.0
      %2496 = vmatpush1.msra.mxu0 0.0
      %2497 = vmatprep.subr.mxu0 0.0
      %2498 = vmatpush1.msra.mxu0 0.0
      %2499 = vmatprep.subr.mxu0 0.0
      %2500 = vmatpush1.msra.mxu0 0.0
      %2501 = vmatprep.subr.mxu0 0.0
      %2502 = vmatpush1.msra.mxu0 0.0
      %2503 = vmatprep.subr.mxu0 0.0
      %2504 = vmatpush1.msra.mxu0 0.0
      %2505 = vmatprep.subr.mxu0 0.0
      %2506 = vmatpush1.msra.mxu0 0.0
      %2507 = vmatprep.subr.mxu0 0.0
      %2508 = vmatpush1.msra.mxu0 0.0
      %2509 = vmatprep.subr.mxu0 0.0
      %2510 = vmatpush1.msra.mxu0 0.0
      %2511 = vmatprep.subr.mxu0 0.0
      %2512 = vmatpush1.msra.mxu0 0.0
      %2513 = vmatprep.subr.mxu0 0.0
      %2514 = vmatpush1.msra.mxu0 0.0
      %2515 = vmatprep.subr.mxu0 0.0
      %2516 = vmatpush1.msra.mxu0 0.0
      %2517 = vmatprep.subr.mxu0 0.0
      %2518 = vmatpush1.msra.mxu0 0.0
      %2519 = vmatprep.subr.mxu0 0.0
      %2520 = vmatpush1.msra.mxu0 0.0
      %2521 = vmatprep.subr.mxu0 0.0
      %2522 = vmatpush1.msra.mxu0 0.0
      %2523 = vmatprep.subr.mxu0 0.0
      %2524 = vmatpush1.msra.mxu0 0.0
      %2525 = vmatprep.subr.mxu0 0.0
      %2526 = vmatpush1.msra.mxu0 0.0
      %2527 = vmatprep.subr.mxu0 0.0
      %2528 = vmatpush1.msra.mxu0 0.0
      %2529 = vmatprep.subr.mxu0 0.0
      %2530 = vmatpush1.msra.mxu0 0.0
      %2531 = vmatprep.subr.mxu0 0.0
      %2532 = vmatpush1.msra.mxu0 0.0
      %2533 = vmatprep.subr.mxu0 0.0
      %2534 = vmatpush1.msra.mxu0 0.0
      %2535 = vmatprep.subr.mxu0 0.0
      %2536 = vmatpush1.msra.mxu0 0.0
      %2537 = vmatprep.subr.mxu0 0.0
      %2538 = vmatpush1.msra.mxu0 0.0
      %2539 = vmatprep.subr.mxu0 0.0
      %2540 = vmatpush1.msra.mxu0 0.0
      %2541 = vmatprep.mubr.f32.mxu0 0.0
      %2542 = vmatmul.mubr.f32.gmra.mrb[0].mxu0 %v2382
      %v2543 = vpop.f32.mrb[0].mxu0
      %v2544 = vadd.f32 0.0, %v2543
      %v2545 = vpop.f32.mrb[0].mxu0
      %2546 = vmatprep.mubr.f32.mxu0 0.0
      %2547 = vmatmul.mubr.f32.gmra.mrb[0].mxu0 %v2385
      %v2548 = vpop.f32.mrb[0].mxu0
      %v2549 = vadd.f32 0.0, %v2548
      %v2550 = vpop.f32.mrb[0].mxu0
      %2551 = vmatprep.mubr.f32.mxu0 0.0
      %2552 = vmatmul.mubr.f32.gmra.mrb[0].mxu0 %v2388
      %v2553 = vpop.f32.mrb[0].mxu0
      %v2554 = vadd.f32 0.0, %v2553
      %v2555 = vpop.f32.mrb[0].mxu0
      %2556 = vmatprep.mubr.f32.mxu0 0.0
      %2557 = vmatmul.mubr.f32.gmra.mrb[0].mxu0 %v2391
      %v2558 = vpop.f32.mrb[0].mxu0
      %v2559 = vadd.f32 0.0, %v2558
      %v2560 = vpop.f32.mrb[0].mxu0
      %2561 = vmatprep.mubr.f32.mxu0 0.0
      %2562 = vmatmul.mubr.f32.gmra.mrb[0].mxu0 %v2394
      %v2563 = vpop.f32.mrb[0].mxu0
      %v2564 = vadd.f32 0.0, %v2563
      %v2565 = vpop.f32.mrb[0].mxu0
      %2566 = vmatprep.mubr.f32.mxu0 0.0
      %2567 = vmatmul.mubr.f32.gmra.mrb[0].mxu0 %v2397
      %v2568 = vpop.f32.mrb[0].mxu0
      %v2569 = vadd.f32 0.0, %v2568
      %v2570 = vpop.f32.mrb[0].mxu0
      %2571 = vmatprep.mubr.f32.mxu0 0.0
      %2572 = vmatmul.mubr.f32.gmra.mrb[0].mxu0 %v2400
      %v2573 = vpop.f32.mrb[0].mxu0
      %v2574 = vadd.f32 0.0, %v2573
      %v2575 = vpop.f32.mrb[0].mxu0
      %2576 = vmatprep.mubr.f32.mxu0 0.0
      %2577 = vmatmul.mubr.f32.gmra.mrb[0].mxu0 %v2403
      %v2578 = vpop.f32.mrb[0].mxu0
      %v2579 = vadd.f32 0.0, %v2578
      %v2580 = vpop.f32.mrb[0].mxu0
      %2581 = vmatprep.mubr.f32.mxu0 0.0
      %2582 = vmatmul.mubr.f32.gmra.mrb[0].mxu0 %v2406
      %v2583 = vpop.f32.mrb[0].mxu0
      %v2584 = vadd.f32 0.0, %v2583
      %v2585 = vpop.f32.mrb[0].mxu0
      %2586 = vmatprep.mubr.f32.mxu0 0.0
      %2587 = vmatmul.mubr.f32.gmra.mrb[0].mxu0 %v2409
      %v2588 = vpop.f32.mrb[0].mxu0
      %v2589 = vadd.f32 0.0, %v2588
      %v2590 = vpop.f32.mrb[0].mxu0
      %2591 = vmatprep.mubr.f32.mxu0 0.0
      %2592 = vmatmul.mubr.f32.gmra.mrb[0].mxu0 %v2412
      %v2593 = vpop.f32.mrb[0].mxu0
      %v2594 = vadd.f32 0.0, %v2593
      %v2595 = vpop.f32.mrb[0].mxu0
      %2596 = vmatprep.mubr.f32.mxu0 0.0
      %2597 = vmatmul.mubr.f32.gmra.mrb[0].mxu0 %v2415
      %v2598 = vpop.f32.mrb[0].mxu0
      %v2599 = vadd.f32 0.0, %v2598
      %v2600 = vpop.f32.mrb[0].mxu0
      %2601 = vmatprep.mubr.f32.mxu0 0.0
      %2602 = vmatmul.mubr.f32.gmra.mrb[0].mxu0 %v2418
      %v2603 = vpop.f32.mrb[0].mxu0
      %v2604 = vadd.f32 0.0, %v2603
      %v2605 = vpop.f32.mrb[0].mxu0
      %2606 = vmatprep.mubr.f32.mxu0 0.0
      %2607 = vmatmul.mubr.f32.gmra.mrb[0].mxu0 %v2421
      %v2608 = vpop.f32.mrb[0].mxu0
      %v2609 = vadd.f32 0.0, %v2608
      %v2610 = vpop.f32.mrb[0].mxu0
      %2611 = vmatprep.mubr.f32.mxu0 0.0
      %2612 = vmatmul.mubr.f32.gmra.mrb[0].mxu0 %v2424
      %v2613 = vpop.f32.mrb[0].mxu0
      %v2614 = vadd.f32 0.0, %v2613
      %v2615 = vpop.f32.mrb[0].mxu0
      %2616 = vmatprep.mubr.f32.mxu0 0.0
      %2617 = vmatmul.mubr.f32.gmra.mrb[0].mxu0 %v2427
      %v2618 = vpop.f32.mrb[0].mxu0
      %v2619 = vadd.f32 0.0, %v2618
      %v2620 = vpop.f32.mrb[0].mxu0
      %2621 = vmatprep.mubr.f32.mxu0 0.0
      %2622 = vmatmul.mubr.f32.gmra.mrb[0].mxu0 %v2430
      %v2623 = vpop.f32.mrb[0].mxu0
      %v2624 = vadd.f32 0.0, %v2623
      %v2625 = vpop.f32.mrb[0].mxu0
      %2626 = vmatprep.mubr.f32.mxu0 0.0
      %2627 = vmatmul.mubr.f32.gmra.mrb[0].mxu0 %v2433
      %v2628 = vpop.f32.mrb[0].mxu0
      %v2629 = vadd.f32 0.0, %v2628
      %v2630 = vpop.f32.mrb[0].mxu0
      %2631 = vmatprep.mubr.f32.mxu0 0.0
      %2632 = vmatmul.mubr.f32.gmra.mrb[0].mxu0 %v2436
      %v2633 = vpop.f32.mrb[0].mxu0
      %v2634 = vadd.f32 0.0, %v2633
      %v2635 = vpop.f32.mrb[0].mxu0
      %2636 = vmatprep.mubr.f32.mxu0 0.0
      %2637 = vmatmul.mubr.f32.gmra.mrb[0].mxu0 %v2439
      %v2638 = vpop.f32.mrb[0].mxu0
      %v2639 = vadd.f32 0.0, %v2638
      %v2640 = vpop.f32.mrb[0].mxu0
      %2641 = vmatprep.mubr.f32.mxu0 0.0
      %2642 = vmatmul.mubr.f32.gmra.mrb[0].mxu0 %v2442
      %v2643 = vpop.f32.mrb[0].mxu0
      %v2644 = vadd.f32 0.0, %v2643
      %v2645 = vpop.f32.mrb[0].mxu0
      %2646 = vmatprep.mubr.f32.mxu0 0.0
      %2647 = vmatmul.mubr.f32.gmra.mrb[0].mxu0 %v2445
      %v2648 = vpop.f32.mrb[0].mxu0
      %v2649 = vadd.f32 0.0, %v2648
      %v2650 = vpop.f32.mrb[0].mxu0
      %2651 = vmatprep.mubr.f32.mxu0 0.0
      %2652 = vmatmul.mubr.f32.gmra.mrb[0].mxu0 %v2448
      %v2653 = vpop.f32.mrb[0].mxu0
      %v2654 = vadd.f32 0.0, %v2653
      %v2655 = vpop.f32.mrb[0].mxu0
      %2656 = vmatprep.mubr.f32.mxu0 0.0
      %2657 = vmatmul.mubr.f32.gmra.mrb[0].mxu0 %v2451
      %v2658 = vpop.f32.mrb[0].mxu0
      %v2659 = vadd.f32 0.0, %v2658
      %v2660 = vpop.f32.mrb[0].mxu0
      %2661 = vmatprep.mubr.f32.mxu0 0.0
      %2662 = vmatmul.mubr.f32.gmra.mrb[0].mxu0 %v2454
      %v2663 = vpop.f32.mrb[0].mxu0
      %v2664 = vadd.f32 0.0, %v2663
      %v2665 = vpop.f32.mrb[0].mxu0
      %2666 = vmatprep.mubr.f32.mxu0 0.0
      %2667 = vmatmul.mubr.f32.gmra.mrb[0].mxu0 %v2457
      %v2668 = vpop.f32.mrb[0].mxu0
      %v2669 = vadd.f32 0.0, %v2668
      %v2670 = vpop.f32.mrb[0].mxu0
      %2671 = vmatprep.mubr.f32.mxu0 0.0
      %2672 = vmatmul.mubr.f32.gmra.mrb[0].mxu0 %v2460
      %v2673 = vpop.f32.mrb[0].mxu0
      %v2674 = vadd.f32 0.0, %v2673
      %v2675 = vpop.f32.mrb[0].mxu0
      %2676 = vmatprep.mubr.f32.mxu0 0.0
      %2677 = vmatmul.mubr.f32.gmra.mrb[0].mxu0 %v2463
      %v2678 = vpop.f32.mrb[0].mxu0
      %v2679 = vadd.f32 0.0, %v2678
      %v2680 = vpop.f32.mrb[0].mxu0
      %2681 = vmatprep.mubr.f32.mxu0 0.0
      %2682 = vmatmul.mubr.f32.gmra.mrb[0].mxu0 %v2466
      %v2683 = vpop.f32.mrb[0].mxu0
      %v2684 = vadd.f32 0.0, %v2683
      %v2685 = vpop.f32.mrb[0].mxu0
      %2686 = vmatprep.mubr.f32.mxu0 0.0
      %2687 = vmatmul.mubr.f32.gmra.mrb[0].mxu0 %v2469
      %v2688 = vpop.f32.mrb[0].mxu0
      %v2689 = vadd.f32 0.0, %v2688
      %v2690 = vpop.f32.mrb[0].mxu0
      %2691 = vmatprep.mubr.f32.mxu0 0.0
      %2692 = vmatmul.mubr.f32.gmra.mrb[0].mxu0 %v2472
      %v2693 = vpop.f32.mrb[0].mxu0
      %v2694 = vadd.f32 0.0, %v2693
      %v2695 = vpop.f32.mrb[0].mxu0
      %2696 = vmatprep.mubr.f32.mxu0 0.0
      %2697 = vmatmul.mubr.f32.gmra.mrb[0].mxu0 %v2475
      %v2698 = vpop.f32.mrb[0].mxu0
      %v2699 = vadd.f32 0.0, %v2698
      %v2700 = vpop.f32.mrb[0].mxu0
      %2701 = vdwg.mxu0
      %v2703 = vsel %vm566, %v2310, 0
      %v2706 = vsel %vm566, %v2311, 0
      %v2709 = vsel %vm566, %v2312, 0
      %v2712 = vsel %vm566, %v2313, 0
      %v2715 = vsel %vm566, %v2314, 0
      %v2718 = vsel %vm566, %v2315, 0
      %v2721 = vsel %vm566, %v2316, 0
      %v2724 = vsel %vm566, %v2317, 0
      %v2727 = vsel %vm566, %v2318, 0
      %v2730 = vsel %vm566, %v2319, 0
      %v2733 = vsel %vm566, %v2320, 0
      %v2736 = vsel %vm566, %v2321, 0
      %v2739 = vsel %vm566, %v2322, 0
      %v2742 = vsel %vm566, %v2323, 0
      %v2745 = vsel %vm566, %v2324, 0
      %v2748 = vsel %vm566, %v2325, 0
      %v2751 = vsel %vm566, %v2326, 0
      %v2754 = vsel %vm566, %v2327, 0
      %v2757 = vsel %vm566, %v2328, 0
      %v2760 = vsel %vm566, %v2329, 0
      %v2763 = vsel %vm566, %v2330, 0
      %v2766 = vsel %vm566, %v2331, 0
      %v2769 = vsel %vm566, %v2332, 0
      %v2772 = vsel %vm566, %v2333, 0
      %v2775 = vsel %vm566, %v2334, 0
      %v2778 = vsel %vm566, %v2335, 0
      %v2781 = vsel %vm566, %v2336, 0
      %v2784 = vsel %vm566, %v2337, 0
      %v2787 = vsel %vm566, %v2338, 0
      %v2790 = vsel %vm566, %v2339, 0
      %v2793 = vsel %vm566, %v2340, 0
      %v2796 = vsel %vm566, %v2341, 0
      %2798 = vmatprep.subr.mxu0 0.0
      %2799 = vmatpush1.msra.mxu0 %v2342
      %2800 = vmatprep.subr.mxu0 0.0
      %2801 = vmatpush1.msra.mxu0 %v2343
      %2802 = vmatprep.subr.mxu0 0.0
      %2803 = vmatpush1.msra.mxu0 %v2344
      %2804 = vmatprep.subr.mxu0 0.0
      %2805 = vmatpush1.msra.mxu0 0.0
      %2806 = vmatprep.subr.mxu0 0.0
      %2807 = vmatpush1.msra.mxu0 0.0
      %2808 = vmatprep.subr.mxu0 0.0
      %2809 = vmatpush1.msra.mxu0 0.0
      %2810 = vmatprep.subr.mxu0 0.0
      %2811 = vmatpush1.msra.mxu0 0.0
      %2812 = vmatprep.subr.mxu0 0.0
      %2813 = vmatpush1.msra.mxu0 0.0
      %2814 = vmatprep.subr.mxu0 0.0
      %2815 = vmatpush1.msra.mxu0 0.0
      %2816 = vmatprep.subr.mxu0 0.0
      %2817 = vmatpush1.msra.mxu0 0.0
      %2818 = vmatprep.subr.mxu0 0.0
      %2819 = vmatpush1.msra.mxu0 0.0
      %2820 = vmatprep.subr.mxu0 0.0
      %2821 = vmatpush1.msra.mxu0 0.0
      %2822 = vmatprep.subr.mxu0 0.0
      %2823 = vmatpush1.msra.mxu0 0.0
      %2824 = vmatprep.subr.mxu0 0.0
      %2825 = vmatpush1.msra.mxu0 0.0
      %2826 = vmatprep.subr.mxu0 0.0
      %2827 = vmatpush1.msra.mxu0 0.0
      %2828 = vmatprep.subr.mxu0 0.0
      %2829 = vmatpush1.msra.mxu0 0.0
      %2830 = vmatprep.subr.mxu0 0.0
      %2831 = vmatpush1.msra.mxu0 0.0
      %2832 = vmatprep.subr.mxu0 0.0
      %2833 = vmatpush1.msra.mxu0 0.0
      %2834 = vmatprep.subr.mxu0 0.0
      %2835 = vmatpush1.msra.mxu0 0.0
      %2836 = vmatprep.subr.mxu0 0.0
      %2837 = vmatpush1.msra.mxu0 0.0
      %2838 = vmatprep.subr.mxu0 0.0
      %2839 = vmatpush1.msra.mxu0 0.0
      %2840 = vmatprep.subr.mxu0 0.0
      %2841 = vmatpush1.msra.mxu0 0.0
      %2842 = vmatprep.subr.mxu0 0.0
      %2843 = vmatpush1.msra.mxu0 0.0
      %2844 = vmatprep.subr.mxu0 0.0
      %2845 = vmatpush1.msra.mxu0 0.0
      %2846 = vmatprep.subr.mxu0 0.0
      %2847 = vmatpush1.msra.mxu0 0.0
      %2848 = vmatprep.subr.mxu0 0.0
      %2849 = vmatpush1.msra.mxu0 0.0
      %2850 = vmatprep.subr.mxu0 0.0
      %2851 = vmatpush1.msra.mxu0 0.0
      %2852 = vmatprep.subr.mxu0 0.0
      %2853 = vmatpush1.msra.mxu0 0.0
      %2854 = vmatprep.subr.mxu0 0.0
      %2855 = vmatpush1.msra.mxu0 0.0
      %2856 = vmatprep.subr.mxu0 0.0
      %2857 = vmatpush1.msra.mxu0 0.0
      %2858 = vmatprep.subr.mxu0 0.0
      %2859 = vmatpush1.msra.mxu0 0.0
      %2860 = vmatprep.subr.mxu0 0.0
      %2861 = vmatpush1.msra.mxu0 0.0
      %2862 = vmatprep.mubr.f32.mxu0 0.0
      %2863 = vmatmul.mubr.f32.gmra.mrb[0].mxu0 %v2703
      %v2864 = vpop.f32.mrb[0].mxu0
      %v2865 = vadd.f32 %v2544, %v2864
      %v2866 = vpop.f32.mrb[0].mxu0
      %2867 = vmatprep.mubr.f32.mxu0 0.0
      %2868 = vmatmul.mubr.f32.gmra.mrb[0].mxu0 %v2706
      %v2869 = vpop.f32.mrb[0].mxu0
      %v2870 = vadd.f32 %v2549, %v2869
      %v2871 = vpop.f32.mrb[0].mxu0
      %2872 = vmatprep.mubr.f32.mxu0 0.0
      %2873 = vmatmul.mubr.f32.gmra.mrb[0].mxu0 %v2709
      %v2874 = vpop.f32.mrb[0].mxu0
      %v2875 = vadd.f32 %v2554, %v2874
      %v2876 = vpop.f32.mrb[0].mxu0
      %2877 = vmatprep.mubr.f32.mxu0 0.0
      %2878 = vmatmul.mubr.f32.gmra.mrb[0].mxu0 %v2712
      %v2879 = vpop.f32.mrb[0].mxu0
      %v2880 = vadd.f32 %v2559, %v2879
      %v2881 = vpop.f32.mrb[0].mxu0
      %2882 = vmatprep.mubr.f32.mxu0 0.0
      %2883 = vmatmul.mubr.f32.gmra.mrb[0].mxu0 %v2715
      %v2884 = vpop.f32.mrb[0].mxu0
      %v2885 = vadd.f32 %v2564, %v2884
      %v2886 = vpop.f32.mrb[0].mxu0
      %2887 = vmatprep.mubr.f32.mxu0 0.0
      %2888 = vmatmul.mubr.f32.gmra.mrb[0].mxu0 %v2718
      %v2889 = vpop.f32.mrb[0].mxu0
      %v2890 = vadd.f32 %v2569, %v2889
      %v2891 = vpop.f32.mrb[0].mxu0
      %2892 = vmatprep.mubr.f32.mxu0 0.0
      %2893 = vmatmul.mubr.f32.gmra.mrb[0].mxu0 %v2721
      %v2894 = vpop.f32.mrb[0].mxu0
      %v2895 = vadd.f32 %v2574, %v2894
      %v2896 = vpop.f32.mrb[0].mxu0
      %2897 = vmatprep.mubr.f32.mxu0 0.0
      %2898 = vmatmul.mubr.f32.gmra.mrb[0].mxu0 %v2724
      %v2899 = vpop.f32.mrb[0].mxu0
      %v2900 = vadd.f32 %v2579, %v2899
      %v2901 = vpop.f32.mrb[0].mxu0
      %2902 = vmatprep.mubr.f32.mxu0 0.0
      %2903 = vmatmul.mubr.f32.gmra.mrb[0].mxu0 %v2727
      %v2904 = vpop.f32.mrb[0].mxu0
      %v2905 = vadd.f32 %v2584, %v2904
      %v2906 = vpop.f32.mrb[0].mxu0
      %2907 = vmatprep.mubr.f32.mxu0 0.0
      %2908 = vmatmul.mubr.f32.gmra.mrb[0].mxu0 %v2730
      %v2909 = vpop.f32.mrb[0].mxu0
      %v2910 = vadd.f32 %v2589, %v2909
      %v2911 = vpop.f32.mrb[0].mxu0
      %2912 = vmatprep.mubr.f32.mxu0 0.0
      %2913 = vmatmul.mubr.f32.gmra.mrb[0].mxu0 %v2733
      %v2914 = vpop.f32.mrb[0].mxu0
      %v2915 = vadd.f32 %v2594, %v2914
      %v2916 = vpop.f32.mrb[0].mxu0
      %2917 = vmatprep.mubr.f32.mxu0 0.0
      %2918 = vmatmul.mubr.f32.gmra.mrb[0].mxu0 %v2736
      %v2919 = vpop.f32.mrb[0].mxu0
      %v2920 = vadd.f32 %v2599, %v2919
      %v2921 = vpop.f32.mrb[0].mxu0
      %2922 = vmatprep.mubr.f32.mxu0 0.0
      %2923 = vmatmul.mubr.f32.gmra.mrb[0].mxu0 %v2739
      %v2924 = vpop.f32.mrb[0].mxu0
      %v2925 = vadd.f32 %v2604, %v2924
      %v2926 = vpop.f32.mrb[0].mxu0
      %2927 = vmatprep.mubr.f32.mxu0 0.0
      %2928 = vmatmul.mubr.f32.gmra.mrb[0].mxu0 %v2742
      %v2929 = vpop.f32.mrb[0].mxu0
      %v2930 = vadd.f32 %v2609, %v2929
      %v2931 = vpop.f32.mrb[0].mxu0
      %2932 = vmatprep.mubr.f32.mxu0 0.0
      %2933 = vmatmul.mubr.f32.gmra.mrb[0].mxu0 %v2745
      %v2934 = vpop.f32.mrb[0].mxu0
      %v2935 = vadd.f32 %v2614, %v2934
      %v2936 = vpop.f32.mrb[0].mxu0
      %2937 = vmatprep.mubr.f32.mxu0 0.0
      %2938 = vmatmul.mubr.f32.gmra.mrb[0].mxu0 %v2748
      %v2939 = vpop.f32.mrb[0].mxu0
      %v2940 = vadd.f32 %v2619, %v2939
      %v2941 = vpop.f32.mrb[0].mxu0
      %2942 = vmatprep.mubr.f32.mxu0 0.0
      %2943 = vmatmul.mubr.f32.gmra.mrb[0].mxu0 %v2751
      %v2944 = vpop.f32.mrb[0].mxu0
      %v2945 = vadd.f32 %v2624, %v2944
      %v2946 = vpop.f32.mrb[0].mxu0
      %2947 = vmatprep.mubr.f32.mxu0 0.0
      %2948 = vmatmul.mubr.f32.gmra.mrb[0].mxu0 %v2754
      %v2949 = vpop.f32.mrb[0].mxu0
      %v2950 = vadd.f32 %v2629, %v2949
      %v2951 = vpop.f32.mrb[0].mxu0
      %2952 = vmatprep.mubr.f32.mxu0 0.0
      %2953 = vmatmul.mubr.f32.gmra.mrb[0].mxu0 %v2757
      %v2954 = vpop.f32.mrb[0].mxu0
      %v2955 = vadd.f32 %v2634, %v2954
      %v2956 = vpop.f32.mrb[0].mxu0
      %2957 = vmatprep.mubr.f32.mxu0 0.0
      %2958 = vmatmul.mubr.f32.gmra.mrb[0].mxu0 %v2760
      %v2959 = vpop.f32.mrb[0].mxu0
      %v2960 = vadd.f32 %v2639, %v2959
      %v2961 = vpop.f32.mrb[0].mxu0
      %2962 = vmatprep.mubr.f32.mxu0 0.0
      %2963 = vmatmul.mubr.f32.gmra.mrb[0].mxu0 %v2763
      %v2964 = vpop.f32.mrb[0].mxu0
      %v2965 = vadd.f32 %v2644, %v2964
      %v2966 = vpop.f32.mrb[0].mxu0
      %2967 = vmatprep.mubr.f32.mxu0 0.0
      %2968 = vmatmul.mubr.f32.gmra.mrb[0].mxu0 %v2766
      %v2969 = vpop.f32.mrb[0].mxu0
      %v2970 = vadd.f32 %v2649, %v2969
      %v2971 = vpop.f32.mrb[0].mxu0
      %2972 = vmatprep.mubr.f32.mxu0 0.0
      %2973 = vmatmul.mubr.f32.gmra.mrb[0].mxu0 %v2769
      %v2974 = vpop.f32.mrb[0].mxu0
      %v2975 = vadd.f32 %v2654, %v2974
      %v2976 = vpop.f32.mrb[0].mxu0
      %2977 = vmatprep.mubr.f32.mxu0 0.0
      %2978 = vmatmul.mubr.f32.gmra.mrb[0].mxu0 %v2772
      %v2979 = vpop.f32.mrb[0].mxu0
      %v2980 = vadd.f32 %v2659, %v2979
      %v2981 = vpop.f32.mrb[0].mxu0
      %2982 = vmatprep.mubr.f32.mxu0 0.0
      %2983 = vmatmul.mubr.f32.gmra.mrb[0].mxu0 %v2775
      %v2984 = vpop.f32.mrb[0].mxu0
      %v2985 = vadd.f32 %v2664, %v2984
      %v2986 = vpop.f32.mrb[0].mxu0
      %2987 = vmatprep.mubr.f32.mxu0 0.0
      %2988 = vmatmul.mubr.f32.gmra.mrb[0].mxu0 %v2778
      %v2989 = vpop.f32.mrb[0].mxu0
      %v2990 = vadd.f32 %v2669, %v2989
      %v2991 = vpop.f32.mrb[0].mxu0
      %2992 = vmatprep.mubr.f32.mxu0 0.0
      %2993 = vmatmul.mubr.f32.gmra.mrb[0].mxu0 %v2781
      %v2994 = vpop.f32.mrb[0].mxu0
      %v2995 = vadd.f32 %v2674, %v2994
      %v2996 = vpop.f32.mrb[0].mxu0
      %2997 = vmatprep.mubr.f32.mxu0 0.0
      %2998 = vmatmul.mubr.f32.gmra.mrb[0].mxu0 %v2784
      %v2999 = vpop.f32.mrb[0].mxu0
      %v3000 = vadd.f32 %v2679, %v2999
      %v3001 = vpop.f32.mrb[0].mxu0
      %3002 = vmatprep.mubr.f32.mxu0 0.0
      %3003 = vmatmul.mubr.f32.gmra.mrb[0].mxu0 %v2787
      %v3004 = vpop.f32.mrb[0].mxu0
      %v3005 = vadd.f32 %v2684, %v3004
      %v3006 = vpop.f32.mrb[0].mxu0
      %3007 = vmatprep.mubr.f32.mxu0 0.0
      %3008 = vmatmul.mubr.f32.gmra.mrb[0].mxu0 %v2790
      %v3009 = vpop.f32.mrb[0].mxu0
      %v3010 = vadd.f32 %v2689, %v3009
      %v3011 = vpop.f32.mrb[0].mxu0
      %3012 = vmatprep.mubr.f32.mxu0 0.0
      %3013 = vmatmul.mubr.f32.gmra.mrb[0].mxu0 %v2793
      %v3014 = vpop.f32.mrb[0].mxu0
      %v3015 = vadd.f32 %v2694, %v3014
      %v3016 = vpop.f32.mrb[0].mxu0
      %3017 = vmatprep.mubr.f32.mxu0 0.0
      %3018 = vmatmul.mubr.f32.gmra.mrb[0].mxu0 %v2796
      %v3019 = vpop.f32.mrb[0].mxu0
      %v3020 = vadd.f32 %v2699, %v3019
      %v3021 = vpop.f32.mrb[0].mxu0
      %3022 = vdwg.mxu0
      %v3023 = vld [vmem:[%s563] sm:$0xff]
      %v3024 = vld [vmem:[%s563 + $0x8] sm:$0xff]
      %v3025 = vld [vmem:[%s563 + $0x10] sm:$0xff]
      %v3026 = vld [vmem:[%s563 + $0x18] sm:$0xff]
      %v3027 = vld [vmem:[%s563 + $0x20] sm:$0xff]
      %v3028 = vld [vmem:[%s563 + $0x28] sm:$0xff]
      %v3029 = vld [vmem:[%s563 + $0x30] sm:$0xff]
      %v3030 = vld [vmem:[%s563 + $0x38] sm:$0xff]
      %v3031 = vld [vmem:[%s563 + $0x40] sm:$0xff]
      %v3032 = vld [vmem:[%s563 + $0x48] sm:$0xff]
      %v3033 = vld [vmem:[%s563 + $0x50] sm:$0xff]
      %v3034 = vld [vmem:[%s563 + $0x58] sm:$0xff]
      %v3035 = vld [vmem:[%s563 + $0x60] sm:$0xff]
      %v3036 = vld [vmem:[%s563 + $0x68] sm:$0xff]
      %v3037 = vld [vmem:[%s563 + $0x70] sm:$0xff]
      %v3038 = vld [vmem:[%s563 + $0x78] sm:$0xff]
      %v3039 = vld [vmem:[%s563 + $0x80] sm:$0xff]
      %v3040 = vld [vmem:[%s563 + $0x88] sm:$0xff]
      %v3041 = vld [vmem:[%s563 + $0x90] sm:$0xff]
      %v3042 = vld [vmem:[%s563 + $0x98] sm:$0xff]
      %v3043 = vld [vmem:[%s563 + $0xa0] sm:$0xff]
      %v3044 = vld [vmem:[%s563 + $0xa8] sm:$0xff]
      %v3045 = vld [vmem:[%s563 + $0xb0] sm:$0xff]
      %v3046 = vld [vmem:[%s563 + $0xb8] sm:$0xff]
      %v3047 = vld [vmem:[%s563 + $0xc0] sm:$0xff]
      %v3048 = vld [vmem:[%s563 + $0xc8] sm:$0xff]
      %v3049 = vld [vmem:[%s563 + $0xd0] sm:$0xff]
      %v3050 = vld [vmem:[%s563 + $0xd8] sm:$0xff]
      %v3051 = vld [vmem:[%s563 + $0xe0] sm:$0xff]
      %v3052 = vld [vmem:[%s563 + $0xe8] sm:$0xff]
      %v3053 = vld [vmem:[%s563 + $0xf0] sm:$0xff]
      %v3054 = vld [vmem:[%s563 + $0xf8] sm:$0xff]
      %s3055 = scalar_lea.vmem %s2, 48
      %v3056 = vld [vmem:[%s3055] sm:$0xff]
      %v3057 = vld [vmem:[%s3055 + $0x8] sm:$0xff]
      %v3058 = vld [vmem:[%s3055 + $0x10] sm:$0xff]
      %v3060 = vsel %vm566, %v3023, 0
      %v3063 = vsel %vm566, %v3024, 0
      %v3066 = vsel %vm566, %v3025, 0
      %v3069 = vsel %vm566, %v3026, 0
      %v3072 = vsel %vm566, %v3027, 0
      %v3075 = vsel %vm566, %v3028, 0
      %v3078 = vsel %vm566, %v3029, 0
      %v3081 = vsel %vm566, %v3030, 0
      %v3084 = vsel %vm566, %v3031, 0
      %v3087 = vsel %vm566, %v3032, 0
      %v3090 = vsel %vm566, %v3033, 0
      %v3093 = vsel %vm566, %v3034, 0
      %v3096 = vsel %vm566, %v3035, 0
      %v3099 = vsel %vm566, %v3036, 0
      %v3102 = vsel %vm566, %v3037, 0
      %v3105 = vsel %vm566, %v3038, 0
      %v3108 = vsel %vm566, %v3039, 0
      %v3111 = vsel %vm566, %v3040, 0
      %v3114 = vsel %vm566, %v3041, 0
      %v3117 = vsel %vm566, %v3042, 0
      %v3120 = vsel %vm566, %v3043, 0
      %v3123 = vsel %vm566, %v3044, 0
      %v3126 = vsel %vm566, %v3045, 0
      %v3129 = vsel %vm566, %v3046, 0
      %v3132 = vsel %vm566, %v3047, 0
      %v3135 = vsel %vm566, %v3048, 0
      %v3138 = vsel %vm566, %v3049, 0
      %v3141 = vsel %vm566, %v3050, 0
      %v3144 = vsel %vm566, %v3051, 0
      %v3147 = vsel %vm566, %v3052, 0
      %v3150 = vsel %vm566, %v3053, 0
      %v3153 = vsel %vm566, %v3054, 0
      %3155 = vmatprep.subr.mxu0 0.0
      %3156 = vmatpush1.msra.mxu0 %v3056
      %3157 = vmatprep.subr.mxu0 0.0
      %3158 = vmatpush1.msra.mxu0 %v3057
      %3159 = vmatprep.subr.mxu0 0.0
      %3160 = vmatpush1.msra.mxu0 %v3058
      %3161 = vmatprep.subr.mxu0 0.0
      %3162 = vmatpush1.msra.mxu0 0.0
      %3163 = vmatprep.subr.mxu0 0.0
      %3164 = vmatpush1.msra.mxu0 0.0
      %3165 = vmatprep.subr.mxu0 0.0
      %3166 = vmatpush1.msra.mxu0 0.0
      %3167 = vmatprep.subr.mxu0 0.0
      %3168 = vmatpush1.msra.mxu0 0.0
      %3169 = vmatprep.subr.mxu0 0.0
      %3170 = vmatpush1.msra.mxu0 0.0
      %3171 = vmatprep.subr.mxu0 0.0
      %3172 = vmatpush1.msra.mxu0 0.0
      %3173 = vmatprep.subr.mxu0 0.0
      %3174 = vmatpush1.msra.mxu0 0.0
      %3175 = vmatprep.subr.mxu0 0.0
      %3176 = vmatpush1.msra.mxu0 0.0
      %3177 = vmatprep.subr.mxu0 0.0
      %3178 = vmatpush1.msra.mxu0 0.0
      %3179 = vmatprep.subr.mxu0 0.0
      %3180 = vmatpush1.msra.mxu0 0.0
      %3181 = vmatprep.subr.mxu0 0.0
      %3182 = vmatpush1.msra.mxu0 0.0
      %3183 = vmatprep.subr.mxu0 0.0
      %3184 = vmatpush1.msra.mxu0 0.0
      %3185 = vmatprep.subr.mxu0 0.0
      %3186 = vmatpush1.msra.mxu0 0.0
      %3187 = vmatprep.subr.mxu0 0.0
      %3188 = vmatpush1.msra.mxu0 0.0
      %3189 = vmatprep.subr.mxu0 0.0
      %3190 = vmatpush1.msra.mxu0 0.0
      %3191 = vmatprep.subr.mxu0 0.0
      %3192 = vmatpush1.msra.mxu0 0.0
      %3193 = vmatprep.subr.mxu0 0.0
      %3194 = vmatpush1.msra.mxu0 0.0
      %3195 = vmatprep.subr.mxu0 0.0
      %3196 = vmatpush1.msra.mxu0 0.0
      %3197 = vmatprep.subr.mxu0 0.0
      %3198 = vmatpush1.msra.mxu0 0.0
      %3199 = vmatprep.subr.mxu0 0.0
      %3200 = vmatpush1.msra.mxu0 0.0
      %3201 = vmatprep.subr.mxu0 0.0
      %3202 = vmatpush1.msra.mxu0 0.0
      %3203 = vmatprep.subr.mxu0 0.0
      %3204 = vmatpush1.msra.mxu0 0.0
      %3205 = vmatprep.subr.mxu0 0.0
      %3206 = vmatpush1.msra.mxu0 0.0
      %3207 = vmatprep.subr.mxu0 0.0
      %3208 = vmatpush1.msra.mxu0 0.0
      %3209 = vmatprep.subr.mxu0 0.0
      %3210 = vmatpush1.msra.mxu0 0.0
      %3211 = vmatprep.subr.mxu0 0.0
      %3212 = vmatpush1.msra.mxu0 0.0
      %3213 = vmatprep.subr.mxu0 0.0
      %3214 = vmatpush1.msra.mxu0 0.0
      %3215 = vmatprep.subr.mxu0 0.0
      %3216 = vmatpush1.msra.mxu0 0.0
      %3217 = vmatprep.subr.mxu0 0.0
      %3218 = vmatpush1.msra.mxu0 0.0
      %3219 = vmatprep.mubr.f32.mxu0 0.0
      %3220 = vmatmul.mubr.f32.gmra.mrb[0].mxu0 %v3060
      %v3221 = vpop.f32.mrb[0].mxu0
      %v3222 = vadd.f32 0.0, %v3221
      %v3223 = vpop.f32.mrb[0].mxu0
      %3224 = vmatprep.mubr.f32.mxu0 0.0
      %3225 = vmatmul.mubr.f32.gmra.mrb[0].mxu0 %v3063
      %v3226 = vpop.f32.mrb[0].mxu0
      %v3227 = vadd.f32 0.0, %v3226
      %v3228 = vpop.f32.mrb[0].mxu0
      %3229 = vmatprep.mubr.f32.mxu0 0.0
      %3230 = vmatmul.mubr.f32.gmra.mrb[0].mxu0 %v3066
      %v3231 = vpop.f32.mrb[0].mxu0
      %v3232 = vadd.f32 0.0, %v3231
      %v3233 = vpop.f32.mrb[0].mxu0
      %3234 = vmatprep.mubr.f32.mxu0 0.0
      %3235 = vmatmul.mubr.f32.gmra.mrb[0].mxu0 %v3069
      %v3236 = vpop.f32.mrb[0].mxu0
      %v3237 = vadd.f32 0.0, %v3236
      %v3238 = vpop.f32.mrb[0].mxu0
      %3239 = vmatprep.mubr.f32.mxu0 0.0
      %3240 = vmatmul.mubr.f32.gmra.mrb[0].mxu0 %v3072
      %v3241 = vpop.f32.mrb[0].mxu0
      %v3242 = vadd.f32 0.0, %v3241
      %v3243 = vpop.f32.mrb[0].mxu0
      %3244 = vmatprep.mubr.f32.mxu0 0.0
      %3245 = vmatmul.mubr.f32.gmra.mrb[0].mxu0 %v3075
      %v3246 = vpop.f32.mrb[0].mxu0
      %v3247 = vadd.f32 0.0, %v3246
      %v3248 = vpop.f32.mrb[0].mxu0
      %3249 = vmatprep.mubr.f32.mxu0 0.0
      %3250 = vmatmul.mubr.f32.gmra.mrb[0].mxu0 %v3078
      %v3251 = vpop.f32.mrb[0].mxu0
      %v3252 = vadd.f32 0.0, %v3251
      %v3253 = vpop.f32.mrb[0].mxu0
      %3254 = vmatprep.mubr.f32.mxu0 0.0
      %3255 = vmatmul.mubr.f32.gmra.mrb[0].mxu0 %v3081
      %v3256 = vpop.f32.mrb[0].mxu0
      %v3257 = vadd.f32 0.0, %v3256
      %v3258 = vpop.f32.mrb[0].mxu0
      %3259 = vmatprep.mubr.f32.mxu0 0.0
      %3260 = vmatmul.mubr.f32.gmra.mrb[0].mxu0 %v3084
      %v3261 = vpop.f32.mrb[0].mxu0
      %v3262 = vadd.f32 0.0, %v3261
      %v3263 = vpop.f32.mrb[0].mxu0
      %3264 = vmatprep.mubr.f32.mxu0 0.0
      %3265 = vmatmul.mubr.f32.gmra.mrb[0].mxu0 %v3087
      %v3266 = vpop.f32.mrb[0].mxu0
      %v3267 = vadd.f32 0.0, %v3266
      %v3268 = vpop.f32.mrb[0].mxu0
      %3269 = vmatprep.mubr.f32.mxu0 0.0
      %3270 = vmatmul.mubr.f32.gmra.mrb[0].mxu0 %v3090
      %v3271 = vpop.f32.mrb[0].mxu0
      %v3272 = vadd.f32 0.0, %v3271
      %v3273 = vpop.f32.mrb[0].mxu0
      %3274 = vmatprep.mubr.f32.mxu0 0.0
      %3275 = vmatmul.mubr.f32.gmra.mrb[0].mxu0 %v3093
      %v3276 = vpop.f32.mrb[0].mxu0
      %v3277 = vadd.f32 0.0, %v3276
      %v3278 = vpop.f32.mrb[0].mxu0
      %3279 = vmatprep.mubr.f32.mxu0 0.0
      %3280 = vmatmul.mubr.f32.gmra.mrb[0].mxu0 %v3096
      %v3281 = vpop.f32.mrb[0].mxu0
      %v3282 = vadd.f32 0.0, %v3281
      %v3283 = vpop.f32.mrb[0].mxu0
      %3284 = vmatprep.mubr.f32.mxu0 0.0
      %3285 = vmatmul.mubr.f32.gmra.mrb[0].mxu0 %v3099
      %v3286 = vpop.f32.mrb[0].mxu0
      %v3287 = vadd.f32 0.0, %v3286
      %v3288 = vpop.f32.mrb[0].mxu0
      %3289 = vmatprep.mubr.f32.mxu0 0.0
      %3290 = vmatmul.mubr.f32.gmra.mrb[0].mxu0 %v3102
      %v3291 = vpop.f32.mrb[0].mxu0
      %v3292 = vadd.f32 0.0, %v3291
      %v3293 = vpop.f32.mrb[0].mxu0
      %3294 = vmatprep.mubr.f32.mxu0 0.0
      %3295 = vmatmul.mubr.f32.gmra.mrb[0].mxu0 %v3105
      %v3296 = vpop.f32.mrb[0].mxu0
      %v3297 = vadd.f32 0.0, %v3296
      %v3298 = vpop.f32.mrb[0].mxu0
      %3299 = vmatprep.mubr.f32.mxu0 0.0
      %3300 = vmatmul.mubr.f32.gmra.mrb[0].mxu0 %v3108
      %v3301 = vpop.f32.mrb[0].mxu0
      %v3302 = vadd.f32 0.0, %v3301
      %v3303 = vpop.f32.mrb[0].mxu0
      %3304 = vmatprep.mubr.f32.mxu0 0.0
      %3305 = vmatmul.mubr.f32.gmra.mrb[0].mxu0 %v3111
      %v3306 = vpop.f32.mrb[0].mxu0
      %v3307 = vadd.f32 0.0, %v3306
      %v3308 = vpop.f32.mrb[0].mxu0
      %3309 = vmatprep.mubr.f32.mxu0 0.0
      %3310 = vmatmul.mubr.f32.gmra.mrb[0].mxu0 %v3114
      %v3311 = vpop.f32.mrb[0].mxu0
      %v3312 = vadd.f32 0.0, %v3311
      %v3313 = vpop.f32.mrb[0].mxu0
      %3314 = vmatprep.mubr.f32.mxu0 0.0
      %3315 = vmatmul.mubr.f32.gmra.mrb[0].mxu0 %v3117
      %v3316 = vpop.f32.mrb[0].mxu0
      %v3317 = vadd.f32 0.0, %v3316
      %v3318 = vpop.f32.mrb[0].mxu0
      %3319 = vmatprep.mubr.f32.mxu0 0.0
      %3320 = vmatmul.mubr.f32.gmra.mrb[0].mxu0 %v3120
      %v3321 = vpop.f32.mrb[0].mxu0
      %v3322 = vadd.f32 0.0, %v3321
      %v3323 = vpop.f32.mrb[0].mxu0
      %3324 = vmatprep.mubr.f32.mxu0 0.0
      %3325 = vmatmul.mubr.f32.gmra.mrb[0].mxu0 %v3123
      %v3326 = vpop.f32.mrb[0].mxu0
      %v3327 = vadd.f32 0.0, %v3326
      %v3328 = vpop.f32.mrb[0].mxu0
      %3329 = vmatprep.mubr.f32.mxu0 0.0
      %3330 = vmatmul.mubr.f32.gmra.mrb[0].mxu0 %v3126
      %v3331 = vpop.f32.mrb[0].mxu0
      %v3332 = vadd.f32 0.0, %v3331
      %v3333 = vpop.f32.mrb[0].mxu0
      %3334 = vmatprep.mubr.f32.mxu0 0.0
      %3335 = vmatmul.mubr.f32.gmra.mrb[0].mxu0 %v3129
      %v3336 = vpop.f32.mrb[0].mxu0
      %v3337 = vadd.f32 0.0, %v3336
      %v3338 = vpop.f32.mrb[0].mxu0
      %3339 = vmatprep.mubr.f32.mxu0 0.0
      %3340 = vmatmul.mubr.f32.gmra.mrb[0].mxu0 %v3132
      %v3341 = vpop.f32.mrb[0].mxu0
      %v3342 = vadd.f32 0.0, %v3341
      %v3343 = vpop.f32.mrb[0].mxu0
      %3344 = vmatprep.mubr.f32.mxu0 0.0
      %3345 = vmatmul.mubr.f32.gmra.mrb[0].mxu0 %v3135
      %v3346 = vpop.f32.mrb[0].mxu0
      %v3347 = vadd.f32 0.0, %v3346
      %v3348 = vpop.f32.mrb[0].mxu0
      %3349 = vmatprep.mubr.f32.mxu0 0.0
      %3350 = vmatmul.mubr.f32.gmra.mrb[0].mxu0 %v3138
      %v3351 = vpop.f32.mrb[0].mxu0
      %v3352 = vadd.f32 0.0, %v3351
      %v3353 = vpop.f32.mrb[0].mxu0
      %3354 = vmatprep.mubr.f32.mxu0 0.0
      %3355 = vmatmul.mubr.f32.gmra.mrb[0].mxu0 %v3141
      %v3356 = vpop.f32.mrb[0].mxu0
      %v3357 = vadd.f32 0.0, %v3356
      %v3358 = vpop.f32.mrb[0].mxu0
      %3359 = vmatprep.mubr.f32.mxu0 0.0
      %3360 = vmatmul.mubr.f32.gmra.mrb[0].mxu0 %v3144
      %v3361 = vpop.f32.mrb[0].mxu0
      %v3362 = vadd.f32 0.0, %v3361
      %v3363 = vpop.f32.mrb[0].mxu0
      %3364 = vmatprep.mubr.f32.mxu0 0.0
      %3365 = vmatmul.mubr.f32.gmra.mrb[0].mxu0 %v3147
      %v3366 = vpop.f32.mrb[0].mxu0
      %v3367 = vadd.f32 0.0, %v3366
      %v3368 = vpop.f32.mrb[0].mxu0
      %3369 = vmatprep.mubr.f32.mxu0 0.0
      %3370 = vmatmul.mubr.f32.gmra.mrb[0].mxu0 %v3150
      %v3371 = vpop.f32.mrb[0].mxu0
      %v3372 = vadd.f32 0.0, %v3371
      %v3373 = vpop.f32.mrb[0].mxu0
      %3374 = vmatprep.mubr.f32.mxu0 0.0
      %3375 = vmatmul.mubr.f32.gmra.mrb[0].mxu0 %v3153
      %v3376 = vpop.f32.mrb[0].mxu0
      %v3377 = vadd.f32 0.0, %v3376
      %v3378 = vpop.f32.mrb[0].mxu0
      %3379 = vdwg.mxu0
      %v3380 = vadd.f32 %v2865, %v3222
      %v3381 = vadd.f32 %v2870, %v3227
      %v3382 = vadd.f32 %v2875, %v3232
      %v3383 = vadd.f32 %v2880, %v3237
      %v3384 = vadd.f32 %v2885, %v3242
      %v3385 = vadd.f32 %v2890, %v3247
      %v3386 = vadd.f32 %v2895, %v3252
      %v3387 = vadd.f32 %v2900, %v3257
      %v3388 = vadd.f32 %v2905, %v3262
      %v3389 = vadd.f32 %v2910, %v3267
      %v3390 = vadd.f32 %v2915, %v3272
      %v3391 = vadd.f32 %v2920, %v3277
      %v3392 = vadd.f32 %v2925, %v3282
      %v3393 = vadd.f32 %v2930, %v3287
      %v3394 = vadd.f32 %v2935, %v3292
      %v3395 = vadd.f32 %v2940, %v3297
      %v3396 = vadd.f32 %v2945, %v3302
      %v3397 = vadd.f32 %v2950, %v3307
      %v3398 = vadd.f32 %v2955, %v3312
      %v3399 = vadd.f32 %v2960, %v3317
      %v3400 = vadd.f32 %v2965, %v3322
      %v3401 = vadd.f32 %v2970, %v3327
      %v3402 = vadd.f32 %v2975, %v3332
      %v3403 = vadd.f32 %v2980, %v3337
      %v3404 = vadd.f32 %v2985, %v3342
      %v3405 = vadd.f32 %v2990, %v3347
      %v3406 = vadd.f32 %v2995, %v3352
      %v3407 = vadd.f32 %v3000, %v3357
      %v3408 = vadd.f32 %v3005, %v3362
      %v3409 = vadd.f32 %v3010, %v3367
      %v3410 = vadd.f32 %v3015, %v3372
      %v3411 = vadd.f32 %v3020, %v3377
      %v3412 = vsel %vm365, %v3380, 0.0
      %v3413 = vsel %vm365, %v3381, 0.0
      %v3414 = vadd.f32 %v3412, %v3413
      %v3415 = vsel %vm365, %v3382, 0.0
      %v3416 = vadd.f32 %v3414, %v3415
      %v3417 = vsel %vm365, %v3383, 0.0
      %v3418 = vadd.f32 %v3416, %v3417
      %v3419 = vsel %vm365, %v3384, 0.0
      %v3420 = vadd.f32 %v3418, %v3419
      %v3421 = vsel %vm365, %v3385, 0.0
      %v3422 = vadd.f32 %v3420, %v3421
      %v3423 = vsel %vm365, %v3386, 0.0
      %v3424 = vadd.f32 %v3422, %v3423
      %v3425 = vsel %vm365, %v3387, 0.0
      %v3426 = vadd.f32 %v3424, %v3425
      %v3427 = vsel %vm365, %v3388, 0.0
      %v3428 = vadd.f32 %v3426, %v3427
      %v3429 = vsel %vm365, %v3389, 0.0
      %v3430 = vadd.f32 %v3428, %v3429
      %v3431 = vsel %vm365, %v3390, 0.0
      %v3432 = vadd.f32 %v3430, %v3431
      %v3433 = vsel %vm365, %v3391, 0.0
      %v3434 = vadd.f32 %v3432, %v3433
      %v3435 = vsel %vm365, %v3392, 0.0
      %v3436 = vadd.f32 %v3434, %v3435
      %v3437 = vsel %vm365, %v3393, 0.0
      %v3438 = vadd.f32 %v3436, %v3437
      %v3439 = vsel %vm365, %v3394, 0.0
      %v3440 = vadd.f32 %v3438, %v3439
      %v3441 = vsel %vm365, %v3395, 0.0
      %v3442 = vadd.f32 %v3440, %v3441
      %v3443 = vsel %vm365, %v3396, 0.0
      %v3444 = vadd.f32 %v3442, %v3443
      %v3445 = vsel %vm365, %v3397, 0.0
      %v3446 = vadd.f32 %v3444, %v3445
      %v3447 = vsel %vm365, %v3398, 0.0
      %v3448 = vadd.f32 %v3446, %v3447
      %v3449 = vsel %vm365, %v3399, 0.0
      %v3450 = vadd.f32 %v3448, %v3449
      %v3451 = vsel %vm365, %v3400, 0.0
      %v3452 = vadd.f32 %v3450, %v3451
      %v3453 = vsel %vm365, %v3401, 0.0
      %v3454 = vadd.f32 %v3452, %v3453
      %v3455 = vsel %vm365, %v3402, 0.0
      %v3456 = vadd.f32 %v3454, %v3455
      %v3457 = vsel %vm365, %v3403, 0.0
      %v3458 = vadd.f32 %v3456, %v3457
      %v3459 = vsel %vm365, %v3404, 0.0
      %v3460 = vadd.f32 %v3458, %v3459
      %v3461 = vsel %vm365, %v3405, 0.0
      %v3462 = vadd.f32 %v3460, %v3461
      %v3463 = vsel %vm365, %v3406, 0.0
      %v3464 = vadd.f32 %v3462, %v3463
      %v3465 = vsel %vm365, %v3407, 0.0
      %v3466 = vadd.f32 %v3464, %v3465
      %v3467 = vsel %vm365, %v3408, 0.0
      %v3468 = vadd.f32 %v3466, %v3467
      %v3469 = vsel %vm365, %v3409, 0.0
      %v3470 = vadd.f32 %v3468, %v3469
      %v3471 = vsel %vm365, %v3410, 0.0
      %v3472 = vadd.f32 %v3470, %v3471
      %v3473 = vsel %vm365, %v3411, 0.0
      %v3474 = vadd.f32 %v3472, %v3473
      %v3475 = vrot.slane %v3474, 4
      %v3476 = vadd.f32 %v3474, %v3475
      %v3477 = vrot.slane %v3476, 2
      %v3478 = vadd.f32 %v3476, %v3477
      %v3479 = vrot.slane %v3478, 1
      %v3480 = vadd.f32 %v3478, %v3479
      %v3481 = vmul.f32 %v3480, 0.00390625
      %v3482 = vmul.f32 %v3380, %v3380
      %v3483 = vmul.f32 %v3381, %v3381
      %v3484 = vmul.f32 %v3382, %v3382
      %v3485 = vmul.f32 %v3383, %v3383
      %v3486 = vmul.f32 %v3384, %v3384
      %v3487 = vmul.f32 %v3385, %v3385
      %v3488 = vmul.f32 %v3386, %v3386
      %v3489 = vmul.f32 %v3387, %v3387
      %v3490 = vmul.f32 %v3388, %v3388
      %v3491 = vmul.f32 %v3389, %v3389
      %v3492 = vmul.f32 %v3390, %v3390
      %v3493 = vmul.f32 %v3391, %v3391
      %v3494 = vmul.f32 %v3392, %v3392
      %v3495 = vmul.f32 %v3393, %v3393
      %v3496 = vmul.f32 %v3394, %v3394
      %v3497 = vmul.f32 %v3395, %v3395
      %v3498 = vmul.f32 %v3396, %v3396
      %v3499 = vmul.f32 %v3397, %v3397
      %v3500 = vmul.f32 %v3398, %v3398
      %v3501 = vmul.f32 %v3399, %v3399
      %v3502 = vmul.f32 %v3400, %v3400
      %v3503 = vmul.f32 %v3401, %v3401
      %v3504 = vmul.f32 %v3402, %v3402
      %v3505 = vmul.f32 %v3403, %v3403
      %v3506 = vmul.f32 %v3404, %v3404
      %v3507 = vmul.f32 %v3405, %v3405
      %v3508 = vmul.f32 %v3406, %v3406
      %v3509 = vmul.f32 %v3407, %v3407
      %v3510 = vmul.f32 %v3408, %v3408
      %v3511 = vmul.f32 %v3409, %v3409
      %v3512 = vmul.f32 %v3410, %v3410
      %v3513 = vmul.f32 %v3411, %v3411
      %v3514 = vsel %vm365, %v3482, 0.0
      %v3515 = vsel %vm365, %v3483, 0.0
      %v3516 = vadd.f32 %v3514, %v3515
      %v3517 = vsel %vm365, %v3484, 0.0
      %v3518 = vadd.f32 %v3516, %v3517
      %v3519 = vsel %vm365, %v3485, 0.0
      %v3520 = vadd.f32 %v3518, %v3519
      %v3521 = vsel %vm365, %v3486, 0.0
      %v3522 = vadd.f32 %v3520, %v3521
      %v3523 = vsel %vm365, %v3487, 0.0
      %v3524 = vadd.f32 %v3522, %v3523
      %v3525 = vsel %vm365, %v3488, 0.0
      %v3526 = vadd.f32 %v3524, %v3525
      %v3527 = vsel %vm365, %v3489, 0.0
      %v3528 = vadd.f32 %v3526, %v3527
      %v3529 = vsel %vm365, %v3490, 0.0
      %v3530 = vadd.f32 %v3528, %v3529
      %v3531 = vsel %vm365, %v3491, 0.0
      %v3532 = vadd.f32 %v3530, %v3531
      %v3533 = vsel %vm365, %v3492, 0.0
      %v3534 = vadd.f32 %v3532, %v3533
      %v3535 = vsel %vm365, %v3493, 0.0
      %v3536 = vadd.f32 %v3534, %v3535
      %v3537 = vsel %vm365, %v3494, 0.0
      %v3538 = vadd.f32 %v3536, %v3537
      %v3539 = vsel %vm365, %v3495, 0.0
      %v3540 = vadd.f32 %v3538, %v3539
      %v3541 = vsel %vm365, %v3496, 0.0
      %v3542 = vadd.f32 %v3540, %v3541
      %v3543 = vsel %vm365, %v3497, 0.0
      %v3544 = vadd.f32 %v3542, %v3543
      %v3545 = vsel %vm365, %v3498, 0.0
      %v3546 = vadd.f32 %v3544, %v3545
      %v3547 = vsel %vm365, %v3499, 0.0
      %v3548 = vadd.f32 %v3546, %v3547
      %v3549 = vsel %vm365, %v3500, 0.0
      %v3550 = vadd.f32 %v3548, %v3549
      %v3551 = vsel %vm365, %v3501, 0.0
      %v3552 = vadd.f32 %v3550, %v3551
      %v3553 = vsel %vm365, %v3502, 0.0
      %v3554 = vadd.f32 %v3552, %v3553
      %v3555 = vsel %vm365, %v3503, 0.0
      %v3556 = vadd.f32 %v3554, %v3555
      %v3557 = vsel %vm365, %v3504, 0.0
      %v3558 = vadd.f32 %v3556, %v3557
      %v3559 = vsel %vm365, %v3505, 0.0
      %v3560 = vadd.f32 %v3558, %v3559
      %v3561 = vsel %vm365, %v3506, 0.0
      %v3562 = vadd.f32 %v3560, %v3561
      %v3563 = vsel %vm365, %v3507, 0.0
      %v3564 = vadd.f32 %v3562, %v3563
      %v3565 = vsel %vm365, %v3508, 0.0
      %v3566 = vadd.f32 %v3564, %v3565
      %v3567 = vsel %vm365, %v3509, 0.0
      %v3568 = vadd.f32 %v3566, %v3567
      %v3569 = vsel %vm365, %v3510, 0.0
      %v3570 = vadd.f32 %v3568, %v3569
      %v3571 = vsel %vm365, %v3511, 0.0
      %v3572 = vadd.f32 %v3570, %v3571
      %v3573 = vsel %vm365, %v3512, 0.0
      %v3574 = vadd.f32 %v3572, %v3573
      %v3575 = vsel %vm365, %v3513, 0.0
      %v3576 = vadd.f32 %v3574, %v3575
      %v3577 = vrot.slane %v3576, 4
      %v3578 = vadd.f32 %v3576, %v3577
      %v3579 = vrot.slane %v3578, 2
      %v3580 = vadd.f32 %v3578, %v3579
      %v3581 = vrot.slane %v3580, 1
      %v3582 = vadd.f32 %v3580, %v3581
      %v3583 = vmul.f32 %v3582, 0.00390625
      %v3584 = vmul.f32 %v3481, %v3481
      %v3585 = vsub.f32 %v3583, %v3584
      %v3586 = vmax.f32 %v3585, 0.0
      %v3587 = vsub.f32 %v3380, %v3481
      %v3588 = vsub.f32 %v3381, %v3481
      %v3589 = vsub.f32 %v3382, %v3481
      %v3590 = vsub.f32 %v3383, %v3481
      %v3591 = vsub.f32 %v3384, %v3481
      %v3592 = vsub.f32 %v3385, %v3481
      %v3593 = vsub.f32 %v3386, %v3481
      %v3594 = vsub.f32 %v3387, %v3481
      %v3595 = vsub.f32 %v3388, %v3481
      %v3596 = vsub.f32 %v3389, %v3481
      %v3597 = vsub.f32 %v3390, %v3481
      %v3598 = vsub.f32 %v3391, %v3481
      %v3599 = vsub.f32 %v3392, %v3481
      %v3600 = vsub.f32 %v3393, %v3481
      %v3601 = vsub.f32 %v3394, %v3481
      %v3602 = vsub.f32 %v3395, %v3481
      %v3603 = vsub.f32 %v3396, %v3481
      %v3604 = vsub.f32 %v3397, %v3481
      %v3605 = vsub.f32 %v3398, %v3481
      %v3606 = vsub.f32 %v3399, %v3481
      %v3607 = vsub.f32 %v3400, %v3481
      %v3608 = vsub.f32 %v3401, %v3481
      %v3609 = vsub.f32 %v3402, %v3481
      %v3610 = vsub.f32 %v3403, %v3481
      %v3611 = vsub.f32 %v3404, %v3481
      %v3612 = vsub.f32 %v3405, %v3481
      %v3613 = vsub.f32 %v3406, %v3481
      %v3614 = vsub.f32 %v3407, %v3481
      %v3615 = vsub.f32 %v3408, %v3481
      %v3616 = vsub.f32 %v3409, %v3481
      %v3617 = vsub.f32 %v3410, %v3481
      %v3618 = vsub.f32 %v3411, %v3481
      %v3619 = vadd.f32 %v3586, 1e-05
      %v3620 = vrsqrt.pop %v3619
      %v3621 = vmul.f32 %v3587, %v3620
      %v3622 = vmul.f32 %v3588, %v3620
      %v3623 = vmul.f32 %v3589, %v3620
      %v3624 = vmul.f32 %v3590, %v3620
      %v3625 = vmul.f32 %v3591, %v3620
      %v3626 = vmul.f32 %v3592, %v3620
      %v3627 = vmul.f32 %v3593, %v3620
      %v3628 = vmul.f32 %v3594, %v3620
      %v3629 = vmul.f32 %v3595, %v3620
      %v3630 = vmul.f32 %v3596, %v3620
      %v3631 = vmul.f32 %v3597, %v3620
      %v3632 = vmul.f32 %v3598, %v3620
      %v3633 = vmul.f32 %v3599, %v3620
      %v3634 = vmul.f32 %v3600, %v3620
      %v3635 = vmul.f32 %v3601, %v3620
      %v3636 = vmul.f32 %v3602, %v3620
      %v3637 = vmul.f32 %v3603, %v3620
      %v3638 = vmul.f32 %v3604, %v3620
      %v3639 = vmul.f32 %v3605, %v3620
      %v3640 = vmul.f32 %v3606, %v3620
      %v3641 = vmul.f32 %v3607, %v3620
      %v3642 = vmul.f32 %v3608, %v3620
      %v3643 = vmul.f32 %v3609, %v3620
      %v3644 = vmul.f32 %v3610, %v3620
      %v3645 = vmul.f32 %v3611, %v3620
      %v3646 = vmul.f32 %v3612, %v3620
      %v3647 = vmul.f32 %v3613, %v3620
      %v3648 = vmul.f32 %v3614, %v3620
      %v3649 = vmul.f32 %v3615, %v3620
      %v3650 = vmul.f32 %v3616, %v3620
      %v3651 = vmul.f32 %v3617, %v3620
      %v3652 = vmul.f32 %v3618, %v3620
      %v3653 = vld [vmem:[%s165] sm:$0xff]
      %v3654 = vld [vmem:[%s165 + $0x8] sm:$0xff]
      %v3655 = vld [vmem:[%s165 + $0x10] sm:$0xff]
      %v3656 = vld [vmem:[%s165 + $0x18] sm:$0xff]
      %v3657 = vld [vmem:[%s165 + $0x20] sm:$0xff]
      %v3658 = vld [vmem:[%s165 + $0x28] sm:$0xff]
      %v3659 = vld [vmem:[%s165 + $0x30] sm:$0xff]
      %v3660 = vld [vmem:[%s165 + $0x38] sm:$0xff]
      %v3661 = vld [vmem:[%s165 + $0x40] sm:$0xff]
      %v3662 = vld [vmem:[%s165 + $0x48] sm:$0xff]
      %v3663 = vld [vmem:[%s165 + $0x50] sm:$0xff]
      %v3664 = vld [vmem:[%s165 + $0x58] sm:$0xff]
      %v3665 = vld [vmem:[%s165 + $0x60] sm:$0xff]
      %v3666 = vld [vmem:[%s165 + $0x68] sm:$0xff]
      %v3667 = vld [vmem:[%s165 + $0x70] sm:$0xff]
      %v3668 = vld [vmem:[%s165 + $0x78] sm:$0xff]
      %v3669 = vld [vmem:[%s165 + $0x80] sm:$0xff]
      %v3670 = vld [vmem:[%s165 + $0x88] sm:$0xff]
      %v3671 = vld [vmem:[%s165 + $0x90] sm:$0xff]
      %v3672 = vld [vmem:[%s165 + $0x98] sm:$0xff]
      %v3673 = vld [vmem:[%s165 + $0xa0] sm:$0xff]
      %v3674 = vld [vmem:[%s165 + $0xa8] sm:$0xff]
      %v3675 = vld [vmem:[%s165 + $0xb0] sm:$0xff]
      %v3676 = vld [vmem:[%s165 + $0xb8] sm:$0xff]
      %v3677 = vld [vmem:[%s165 + $0xc0] sm:$0xff]
      %v3678 = vld [vmem:[%s165 + $0xc8] sm:$0xff]
      %v3679 = vld [vmem:[%s165 + $0xd0] sm:$0xff]
      %v3680 = vld [vmem:[%s165 + $0xd8] sm:$0xff]
      %v3681 = vld [vmem:[%s165 + $0xe0] sm:$0xff]
      %v3682 = vld [vmem:[%s165 + $0xe8] sm:$0xff]
      %v3683 = vld [vmem:[%s165 + $0xf0] sm:$0xff]
      %v3684 = vld [vmem:[%s165 + $0xf8] sm:$0xff]
      %v3685 = vadd.f32 %v3653, %v3621
      %v3686 = vadd.f32 %v3654, %v3622
      %v3687 = vadd.f32 %v3655, %v3623
      %v3688 = vadd.f32 %v3656, %v3624
      %v3689 = vadd.f32 %v3657, %v3625
      %v3690 = vadd.f32 %v3658, %v3626
      %v3691 = vadd.f32 %v3659, %v3627
      %v3692 = vadd.f32 %v3660, %v3628
      %v3693 = vadd.f32 %v3661, %v3629
      %v3694 = vadd.f32 %v3662, %v3630
      %v3695 = vadd.f32 %v3663, %v3631
      %v3696 = vadd.f32 %v3664, %v3632
      %v3697 = vadd.f32 %v3665, %v3633
      %v3698 = vadd.f32 %v3666, %v3634
      %v3699 = vadd.f32 %v3667, %v3635
      %v3700 = vadd.f32 %v3668, %v3636
      %v3701 = vadd.f32 %v3669, %v3637
      %v3702 = vadd.f32 %v3670, %v3638
      %v3703 = vadd.f32 %v3671, %v3639
      %v3704 = vadd.f32 %v3672, %v3640
      %v3705 = vadd.f32 %v3673, %v3641
      %v3706 = vadd.f32 %v3674, %v3642
      %v3707 = vadd.f32 %v3675, %v3643
      %v3708 = vadd.f32 %v3676, %v3644
      %v3709 = vadd.f32 %v3677, %v3645
      %v3710 = vadd.f32 %v3678, %v3646
      %v3711 = vadd.f32 %v3679, %v3647
      %v3712 = vadd.f32 %v3680, %v3648
      %v3713 = vadd.f32 %v3681, %v3649
      %v3714 = vadd.f32 %v3682, %v3650
      %v3715 = vadd.f32 %v3683, %v3651
      %v3716 = vadd.f32 %v3684, %v3652
      %3717 = vst.msk [vmem:[%s170] sm:$0xff] %vm365, %v3685
      %3718 = vst.msk [vmem:[%s170 + $0x8] sm:$0xff] %vm365, %v3686
      %3719 = vst.msk [vmem:[%s170 + $0x10] sm:$0xff] %vm365, %v3687
      %3720 = vst.msk [vmem:[%s170 + $0x18] sm:$0xff] %vm365, %v3688
      %3721 = vst.msk [vmem:[%s170 + $0x20] sm:$0xff] %vm365, %v3689
      %3722 = vst.msk [vmem:[%s170 + $0x28] sm:$0xff] %vm365, %v3690
      %3723 = vst.msk [vmem:[%s170 + $0x30] sm:$0xff] %vm365, %v3691
      %3724 = vst.msk [vmem:[%s170 + $0x38] sm:$0xff] %vm365, %v3692
      %3725 = vst.msk [vmem:[%s170 + $0x40] sm:$0xff] %vm365, %v3693
      %3726 = vst.msk [vmem:[%s170 + $0x48] sm:$0xff] %vm365, %v3694
      %3727 = vst.msk [vmem:[%s170 + $0x50] sm:$0xff] %vm365, %v3695
      %3728 = vst.msk [vmem:[%s170 + $0x58] sm:$0xff] %vm365, %v3696
      %3729 = vst.msk [vmem:[%s170 + $0x60] sm:$0xff] %vm365, %v3697
      %3730 = vst.msk [vmem:[%s170 + $0x68] sm:$0xff] %vm365, %v3698
      %3731 = vst.msk [vmem:[%s170 + $0x70] sm:$0xff] %vm365, %v3699
      %3732 = vst.msk [vmem:[%s170 + $0x78] sm:$0xff] %vm365, %v3700
      %3733 = vst.msk [vmem:[%s170 + $0x80] sm:$0xff] %vm365, %v3701
      %3734 = vst.msk [vmem:[%s170 + $0x88] sm:$0xff] %vm365, %v3702
      %3735 = vst.msk [vmem:[%s170 + $0x90] sm:$0xff] %vm365, %v3703
      %3736 = vst.msk [vmem:[%s170 + $0x98] sm:$0xff] %vm365, %v3704
      %3737 = vst.msk [vmem:[%s170 + $0xa0] sm:$0xff] %vm365, %v3705
      %3738 = vst.msk [vmem:[%s170 + $0xa8] sm:$0xff] %vm365, %v3706
      %3739 = vst.msk [vmem:[%s170 + $0xb0] sm:$0xff] %vm365, %v3707
      %3740 = vst.msk [vmem:[%s170 + $0xb8] sm:$0xff] %vm365, %v3708
      %3741 = vst.msk [vmem:[%s170 + $0xc0] sm:$0xff] %vm365, %v3709
      %3742 = vst.msk [vmem:[%s170 + $0xc8] sm:$0xff] %vm365, %v3710
      %3743 = vst.msk [vmem:[%s170 + $0xd0] sm:$0xff] %vm365, %v3711
      %3744 = vst.msk [vmem:[%s170 + $0xd8] sm:$0xff] %vm365, %v3712
      %3745 = vst.msk [vmem:[%s170 + $0xe0] sm:$0xff] %vm365, %v3713
      %3746 = vst.msk [vmem:[%s170 + $0xe8] sm:$0xff] %vm365, %v3714
      %3747 = vst.msk [vmem:[%s170 + $0xf0] sm:$0xff] %vm365, %v3715
      %3748 = vst.msk [vmem:[%s170 + $0xf8] sm:$0xff] %vm365, %v3716
      %p3749 = scmp.lt.s32.totalorder %s14, 1
      %s3750 = scalar_select %p3749, %s14, 1
      %s3751 = smul.addr %s3750, 32
      %s3752 = smul.addr %s3751, 8
      %s3753 = scalar_lea.vmem %s3, %s3752
      // Predicated region
      $region33: #{tpu_custom_call.1} parent=31 // pred_check
        %p3754 = pneg %p100
      $region34: #{tpu_custom_call.1} parent=31 // pred_check_branch
        %3756 = sbr.rel (%p3754) target = $region36
      $region35: #{tpu_custom_call.1} parent=31 // pred_region
        _
      $region36: #{tpu_custom_call.1} parent=31 // pred_fallthru
        _
    $region32: #{tpu_custom_call.1} parent=5 // pred_fallthru
      _
    %p3757 = scmp.le.s32.totalorder 2, %s9
    // Predicated region
    $region37: #{tpu_custom_call.1} parent=5 // pred_check
      %p3758 = pneg %p3757
    $region38: #{tpu_custom_call.1} parent=5 // pred_check_branch
      %3760 = sbr.rel (%p3758) target = $region40
    $region39: #{tpu_custom_call.1} parent=5 // pred_region
      %s3761 = ssub.s32 %s9, 2
      // Predicated region
      $region41: #{tpu_custom_call.1} parent=39 // pred_check
        %p3762 = pneg %p106
      $region42: #{tpu_custom_call.1} parent=39 // pred_check_branch
        %3764 = sbr.rel (%p3762) target = $region44
      $region43: #{tpu_custom_call.1} parent=39 // pred_region
        %p3765 = scmp.lt.s32.totalorder %s15, 1
        %s3766 = scalar_select %p3765, %s15, 1
        %s3767 = smul.addr %s3766, 32
        %s3768 = smul.addr %s3767, 8
        %s3769 = scalar_lea.vmem %s3, %s3768
      $region44: #{tpu_custom_call.1} parent=39 // pred_fallthru
        _
    $region40: #{tpu_custom_call.1} parent=5 // pred_fallthru
      _
  $region6: #{tpu_custom_call.1} parent=0 // loop_footer
    %s13 = sadd.s32 1, %s9
  $region7: #{tpu_custom_call.1} parent=0 // loop_footer_branch
    %8 = sbr.rel target = $region3
  $region8: #{tpu_custom_call.1} parent=0 // loop_exit
    _

// kernel: tpu_custom_call.1
$region0: #{tpu_custom_call.1}
  #allocation0 [shape = 'u32[]', space=smem, size = 0x4, offset = 0x4, fixed_abs, tag = 'smem constant byte address 0x4 - core index']
  #allocation1 [shape = 'u32[144,128]{1,0:T(1,128)}', space=vmem, size = 0x12000, scoped, tag = 'internal scratch']
  #allocation2 [shape = 'f32[18,16,24]{2,1,0:T(8,128)}', space=vmem, size = 0x24000, scoped, tag = 'scratch operand']
  %s0 = inlined_call_operand.vmem [shape: f32[2,16,16,8], index: 0, kind: input, shape index: {}]
  %s1 = inlined_call_operand.vmem [shape: f32[3,24,8], index: 1, kind: input, shape index: {}]
  %s2 = inlined_call_operand.vmem [shape: f32[3,24,8], index: 2, kind: input, shape index: {}]
  %s3 = inlined_call_operand.vmem [shape: f32[2,16,16,8], index: 3, kind: output, shape index: {}]
  %s4 = sld [smem:[#allocation0]]
  $region45: #{tpu_custom_call.1} parent=0
    _
  %s6 = ssub.s32 1, %s4
  %s7 = scalar_select 0, %s6, %s4
  loop: start=0, step=1, limit=4
  $region2: #{tpu_custom_call.1} parent=0 // loop_pre_header
    _
  $region3: #{tpu_custom_call.1} parent=0 // loop_header
    %s9 = sphi 0, %s13
    %p10 = scmp.ge.s32.totalorder %s9, 4
    %s19 = sphi 0, %s21
    %s22 = sphi 0, %s19
    %s23 = sphi 0, %s22
    %s39 = sphi 0, %s23
    %s43 = sphi 0, %s43
    %s45 = sphi 0, %s43
    %s46 = sphi 0, %s45
    %s60 = sphi 0, %s46
    %s64 = sphi 0, %s64
    %s66 = sphi 0, %s64
    %s67 = sphi 0, %s66
    %s81 = sphi 0, %s67
    %s87 = sphi 0, %s89
    %s90 = sphi 0, %s87
    %s91 = sphi 0, %s90
    %s107 = sphi 0, %s91
  $region4: #{tpu_custom_call.1} parent=0 // loop_header_branch
    %12 = sbr.rel (%p10) target = $region8
  $region5: #{tpu_custom_call.1} parent=0 // loop_body
    %s14 = ssub.s32 %s9, 1
    %s15 = ssub.s32 %s9, 2
    %s16 = sadd.s32 %s9, 1
    %s17 = ssub.s32 %s9, %s16
    %p18 = scmp.eq.s32.totalorder %s17, 0
    %s20 = sadd.s32 %s19, 1
    %s21 = scalar_select %p18, %s19, %s20
    %p24 = pneg %p18
    %p25 = scmp.eq.s32.totalorder %s9, 1
    %p26 = por %p24, %p25
    %p27 = scmp.ne.s32.totalorder %s19, %s22
    %p28 = scmp.eq.s32.totalorder %s9, 0
    %p29 = por %p27, %p28
    %p30 = scmp.ne.s32.totalorder %s19, %s22
    %p31 = scmp.eq.s32.totalorder %s14, 1
    %p32 = por %p30, %p31
    %p33 = scmp.ne.s32.totalorder %s22, %s23
    %p34 = scmp.eq.s32.totalorder %s14, 0
    %p35 = por %p33, %p34
    %p36 = scmp.ne.s32.totalorder %s22, %s23
    %p37 = scmp.eq.s32.totalorder %s15, 1
    %p38 = por %p36, %p37
    %p40 = scmp.ne.s32.totalorder %s23, %s39
    %p41 = scmp.eq.s32.totalorder %s15, 0
    %p42 = por %p40, %p41
    %s44 = sadd.s32 %s43, 1
    %p47 = scmp.eq.s32.totalorder %s9, 1
    %p48 = scmp.ne.s32.totalorder %s43, %s45
    %p49 = scmp.eq.s32.totalorder %s9, 0
    %p50 = por %p48, %p49
    %p51 = scmp.ne.s32.totalorder %s43, %s45
    %p52 = scmp.eq.s32.totalorder %s14, 1
    %p53 = por %p51, %p52
    %p54 = scmp.ne.s32.totalorder %s45, %s46
    %p55 = scmp.eq.s32.totalorder %s14, 0
    %p56 = por %p54, %p55
    %p57 = scmp.ne.s32.totalorder %s45, %s46
    %p58 = scmp.eq.s32.totalorder %s15, 1
    %p59 = por %p57, %p58
    %p61 = scmp.ne.s32.totalorder %s46, %s60
    %p62 = scmp.eq.s32.totalorder %s15, 0
    %p63 = por %p61, %p62
    %s65 = sadd.s32 %s64, 1
    %p68 = scmp.eq.s32.totalorder %s9, 1
    %p69 = scmp.ne.s32.totalorder %s64, %s66
    %p70 = scmp.eq.s32.totalorder %s9, 0
    %p71 = por %p69, %p70
    %p72 = scmp.ne.s32.totalorder %s64, %s66
    %p73 = scmp.eq.s32.totalorder %s14, 1
    %p74 = por %p72, %p73
    %p75 = scmp.ne.s32.totalorder %s66, %s67
    %p76 = scmp.eq.s32.totalorder %s14, 0
    %p77 = por %p75, %p76
    %p78 = scmp.ne.s32.totalorder %s66, %s67
    %p79 = scmp.eq.s32.totalorder %s15, 1
    %p80 = por %p78, %p79
    %p82 = scmp.ne.s32.totalorder %s67, %s81
    %p83 = scmp.eq.s32.totalorder %s15, 0
    %p84 = por %p82, %p83
    %s85 = ssub.s32 %s9, %s16
    %p86 = scmp.eq.s32.totalorder %s85, 0
    %s88 = sadd.s32 %s87, 1
    %s89 = scalar_select %p86, %s87, %s88
    %p92 = pneg %p86
    %p93 = scmp.eq.s32.totalorder %s9, 1
    %p94 = por %p92, %p93
    %p95 = scmp.ne.s32.totalorder %s87, %s90
    %p96 = scmp.eq.s32.totalorder %s9, 0
    %p97 = por %p95, %p96
    %p98 = scmp.ne.s32.totalorder %s87, %s90
    %p99 = scmp.eq.s32.totalorder %s14, 1
    %p100 = por %p98, %p99
    %p101 = scmp.ne.s32.totalorder %s90, %s91
    %p102 = scmp.eq.s32.totalorder %s14, 0
    %p103 = por %p101, %p102
    %p104 = scmp.ne.s32.totalorder %s90, %s91
    %p105 = scmp.eq.s32.totalorder %s15, 1
    %p106 = por %p104, %p105
    %p108 = scmp.ne.s32.totalorder %s91, %s107
    %p109 = scmp.eq.s32.totalorder %s15, 0
    %p110 = por %p108, %p109
    %p111 = scmp.le.s32.totalorder 1, %s9
    %p112 = scmp.lt.s32.totalorder %s9, 3
    %p113 = pnand %p111, %p112
    %p114 = pneg %p113
    // Predicated region
    $region9: #{tpu_custom_call.1} parent=5 // pred_check
      _
    $region10: #{tpu_custom_call.1} parent=5 // pred_check_branch
      %116 = sbr.rel (%p113) target = $region12
    $region11: #{tpu_custom_call.1} parent=5 // pred_region
      %s117 = ssub.s32 %s9, 1
      // Predicated region
      $region13: #{tpu_custom_call.1} parent=11 // pred_check
        %p118 = pneg %p56
      $region14: #{tpu_custom_call.1} parent=11 // pred_check_branch
        %120 = sbr.rel (%p118) target = $region16
      $region15: #{tpu_custom_call.1} parent=11 // pred_region
        _
      $region16: #{tpu_custom_call.1} parent=11 // pred_fallthru
        _
      // Predicated region
      $region17: #{tpu_custom_call.1} parent=11 // pred_check
        %p121 = pneg %p77
      $region18: #{tpu_custom_call.1} parent=11 // pred_check_branch
        %123 = sbr.rel (%p121) target = $region20
      $region19: #{tpu_custom_call.1} parent=11 // pred_region
        _
      $region20: #{tpu_custom_call.1} parent=11 // pred_fallthru
        _
    $region12: #{tpu_custom_call.1} parent=5 // pred_fallthru
      _
    %p124 = scmp.lt.s32.totalorder %s9, 2
    // Predicated region
    $region21: #{tpu_custom_call.1} parent=5 // pred_check
      %p125 = pneg %p124
    $region22: #{tpu_custom_call.1} parent=5 // pred_check_branch
      %127 = sbr.rel (%p125) target = $region24
    $region23: #{tpu_custom_call.1} parent=5 // pred_region
      // Predicated region
      $region25: #{tpu_custom_call.1} parent=23 // pred_check
        %p128 = pneg %p29
      $region26: #{tpu_custom_call.1} parent=23 // pred_check_branch
        %130 = sbr.rel (%p128) target = $region28
      $region27: #{tpu_custom_call.1} parent=23 // pred_region
        %p131 = scmp.lt.s32.totalorder %s9, 1
        %s132 = scalar_select %p131, %s9, 1
        %s133 = smul.addr %s132, 32
        %s134 = smul.addr %s133, 8
        %s135 = scalar_lea.vmem %s0, %s134
      $region28: #{tpu_custom_call.1} parent=23 // pred_fallthru
        _
    $region24: #{tpu_custom_call.1} parent=5 // pred_fallthru
      _
    %p136 = scmp.le.s32.totalorder 1, %s9
    %p137 = scmp.lt.s32.totalorder %s9, 3
    %p138 = pnand %p136, %p137
    %p139 = pneg %p138
    // Predicated region
    $region29: #{tpu_custom_call.1} parent=5 // pred_check
      _
    $region30: #{tpu_custom_call.1} parent=5 // pred_check_branch
      %141 = sbr.rel (%p138) target = $region32
    $region31: #{tpu_custom_call.1} parent=5 // pred_region
      %s142 = ssub.s32 %s9, 1
      %p143 = scmp.lt.s32.totalorder %s14, 1
      %s144 = scalar_select %p143, %s14, 1
      %s145 = smul.addr %s144, 32
      %s146 = smul.addr %s145, 8
      %s147 = scalar_lea.vmem %s0, %s146
      %p148 = pneg %p35
      %p149 = pneg %p32
      %p150 = pneg %p56
      %p151 = pneg %p53
      %p152 = pneg %p77
      %p153 = pneg %p74
      %p154 = pneg %p103
      %p155 = pneg %p100
      %p156 = scmp.lt.s32.totalorder %s14, 1
      %s157 = scalar_select %p156, %s14, 1
      %s158 = smul.addr %s157, 32
      %s159 = smul.addr %s158, 8
      %s160 = scalar_lea.vmem %s3, %s159
      %p161 = scmp.lt.s32.totalorder %s14, 1
      %s162 = scalar_select %p161, %s14, 1
      %s163 = smul.addr %s162, 32
      %s164 = smul.addr %s163, 8
      %s165 = scalar_lea.vmem %s0, %s164
      %p166 = scmp.lt.s32.totalorder %s14, 1
      %s167 = scalar_select %p166, %s14, 1
      %s168 = smul.addr %s167, 32
      %s169 = smul.addr %s168, 8
      %s170 = scalar_lea.vmem %s3, %s169
      %v171 = vld [vmem:[%s165] sm:$0xff]
      %v172 = vld [vmem:[%s165 + $0x8] sm:$0xff]
      %v173 = vld [vmem:[%s165 + $0x10] sm:$0xff]
      %v174 = vld [vmem:[%s165 + $0x18] sm:$0xff]
      %v175 = vld [vmem:[%s165 + $0x20] sm:$0xff]
      %v176 = vld [vmem:[%s165 + $0x28] sm:$0xff]
      %v177 = vld [vmem:[%s165 + $0x30] sm:$0xff]
      %v178 = vld [vmem:[%s165 + $0x38] sm:$0xff]
      %v179 = vld [vmem:[%s165 + $0x40] sm:$0xff]
      %v180 = vld [vmem:[%s165 + $0x48] sm:$0xff]
      %v181 = vld [vmem:[%s165 + $0x50] sm:$0xff]
      %v182 = vld [vmem:[%s165 + $0x58] sm:$0xff]
      %v183 = vld [vmem:[%s165 + $0x60] sm:$0xff]
      %v184 = vld [vmem:[%s165 + $0x68] sm:$0xff]
      %v185 = vld [vmem:[%s165 + $0x70] sm:$0xff]
      %v186 = vld [vmem:[%s165 + $0x78] sm:$0xff]
      %v187 = vld [vmem:[%s165 + $0x80] sm:$0xff]
      %v188 = vld [vmem:[%s165 + $0x88] sm:$0xff]
      %v189 = vld [vmem:[%s165 + $0x90] sm:$0xff]
      %v190 = vld [vmem:[%s165 + $0x98] sm:$0xff]
      %v191 = vld [vmem:[%s165 + $0xa0] sm:$0xff]
      %v192 = vld [vmem:[%s165 + $0xa8] sm:$0xff]
      %v193 = vld [vmem:[%s165 + $0xb0] sm:$0xff]
      %v194 = vld [vmem:[%s165 + $0xb8] sm:$0xff]
      %v195 = vld [vmem:[%s165 + $0xc0] sm:$0xff]
      %v196 = vld [vmem:[%s165 + $0xc8] sm:$0xff]
      %v197 = vld [vmem:[%s165 + $0xd0] sm:$0xff]
      %v198 = vld [vmem:[%s165 + $0xd8] sm:$0xff]
      %v199 = vld [vmem:[%s165 + $0xe0] sm:$0xff]
      %v200 = vld [vmem:[%s165 + $0xe8] sm:$0xff]
      %v201 = vld [vmem:[%s165 + $0xf0] sm:$0xff]
      %v202 = vld [vmem:[%s165 + $0xf8] sm:$0xff]
      %235 = vrot.lane.b32.xlu0 %v171, 8
      %v236 = vpop.permute.xlu0 %235
      %237 = vrot.lane.b32.xlu0 %v172, 8
      %v238 = vpop.permute.xlu0 %237
      %239 = vrot.lane.b32.xlu0 %v173, 8
      %v240 = vpop.permute.xlu0 %239
      %241 = vrot.lane.b32.xlu0 %v174, 8
      %v242 = vpop.permute.xlu0 %241
      %243 = vrot.lane.b32.xlu0 %v175, 8
      %v244 = vpop.permute.xlu0 %243
      %245 = vrot.lane.b32.xlu0 %v176, 8
      %v246 = vpop.permute.xlu0 %245
      %247 = vrot.lane.b32.xlu0 %v177, 8
      %v248 = vpop.permute.xlu0 %247
      %249 = vrot.lane.b32.xlu0 %v178, 8
      %v250 = vpop.permute.xlu0 %249
      %251 = vrot.lane.b32.xlu0 %v179, 8
      %v252 = vpop.permute.xlu0 %251
      %253 = vrot.lane.b32.xlu0 %v180, 8
      %v254 = vpop.permute.xlu0 %253
      %255 = vrot.lane.b32.xlu0 %v181, 8
      %v256 = vpop.permute.xlu0 %255
      %257 = vrot.lane.b32.xlu0 %v182, 8
      %v258 = vpop.permute.xlu0 %257
      %259 = vrot.lane.b32.xlu0 %v183, 8
      %v260 = vpop.permute.xlu0 %259
      %261 = vrot.lane.b32.xlu0 %v184, 8
      %v262 = vpop.permute.xlu0 %261
      %263 = vrot.lane.b32.xlu0 %v185, 8
      %v264 = vpop.permute.xlu0 %263
      %265 = vrot.lane.b32.xlu0 %v186, 8
      %v266 = vpop.permute.xlu0 %265
      %267 = vrot.lane.b32.xlu0 %v187, 8
      %v268 = vpop.permute.xlu0 %267
      %269 = vrot.lane.b32.xlu0 %v188, 8
      %v270 = vpop.permute.xlu0 %269
      %271 = vrot.lane.b32.xlu0 %v189, 8
      %v272 = vpop.permute.xlu0 %271
      %273 = vrot.lane.b32.xlu0 %v190, 8
      %v274 = vpop.permute.xlu0 %273
      %275 = vrot.lane.b32.xlu0 %v191, 8
      %v276 = vpop.permute.xlu0 %275
      %277 = vrot.lane.b32.xlu0 %v192, 8
      %v278 = vpop.permute.xlu0 %277
      %279 = vrot.lane.b32.xlu0 %v193, 8
      %v280 = vpop.permute.xlu0 %279
      %281 = vrot.lane.b32.xlu0 %v194, 8
      %v282 = vpop.permute.xlu0 %281
      %283 = vrot.lane.b32.xlu0 %v195, 8
      %v284 = vpop.permute.xlu0 %283
      %285 = vrot.lane.b32.xlu0 %v196, 8
      %v286 = vpop.permute.xlu0 %285
      %287 = vrot.lane.b32.xlu0 %v197, 8
      %v288 = vpop.permute.xlu0 %287
      %289 = vrot.lane.b32.xlu0 %v198, 8
      %v290 = vpop.permute.xlu0 %289
      %291 = vrot.lane.b32.xlu0 %v199, 8
      %v292 = vpop.permute.xlu0 %291
      %293 = vrot.lane.b32.xlu0 %v200, 8
      %v294 = vpop.permute.xlu0 %293
      %295 = vrot.lane.b32.xlu0 %v201, 8
      %v296 = vpop.permute.xlu0 %295
      %297 = vrot.lane.b32.xlu0 %v202, 8
      %v298 = vpop.permute.xlu0 %297
      %s331 = scalar_lea.vmem [#allocation2], 16
      %vm332 = vcmask 130112
      %333 = vst.msk [vmem:[%s331] sm:$0xff] %vm332, %v236
      %334 = vst.msk [vmem:[%s331 + $0x8] sm:$0xff] %vm332, %v238
      %335 = vst.msk [vmem:[%s331 + $0x10] sm:$0xff] %vm332, %v240
      %336 = vst.msk [vmem:[%s331 + $0x18] sm:$0xff] %vm332, %v242
      %337 = vst.msk [vmem:[%s331 + $0x20] sm:$0xff] %vm332, %v244
      %338 = vst.msk [vmem:[%s331 + $0x28] sm:$0xff] %vm332, %v246
      %339 = vst.msk [vmem:[%s331 + $0x30] sm:$0xff] %vm332, %v248
      %340 = vst.msk [vmem:[%s331 + $0x38] sm:$0xff] %vm332, %v250
      %341 = vst.msk [vmem:[%s331 + $0x40] sm:$0xff] %vm332, %v252
      %342 = vst.msk [vmem:[%s331 + $0x48] sm:$0xff] %vm332, %v254
      %343 = vst.msk [vmem:[%s331 + $0x50] sm:$0xff] %vm332, %v256
      %344 = vst.msk [vmem:[%s331 + $0x58] sm:$0xff] %vm332, %v258
      %345 = vst.msk [vmem:[%s331 + $0x60] sm:$0xff] %vm332, %v260
      %346 = vst.msk [vmem:[%s331 + $0x68] sm:$0xff] %vm332, %v262
      %347 = vst.msk [vmem:[%s331 + $0x70] sm:$0xff] %vm332, %v264
      %348 = vst.msk [vmem:[%s331 + $0x78] sm:$0xff] %vm332, %v266
      %349 = vst.msk [vmem:[%s331 + $0x80] sm:$0xff] %vm332, %v268
      %350 = vst.msk [vmem:[%s331 + $0x88] sm:$0xff] %vm332, %v270
      %351 = vst.msk [vmem:[%s331 + $0x90] sm:$0xff] %vm332, %v272
      %352 = vst.msk [vmem:[%s331 + $0x98] sm:$0xff] %vm332, %v274
      %353 = vst.msk [vmem:[%s331 + $0xa0] sm:$0xff] %vm332, %v276
      %354 = vst.msk [vmem:[%s331 + $0xa8] sm:$0xff] %vm332, %v278
      %355 = vst.msk [vmem:[%s331 + $0xb0] sm:$0xff] %vm332, %v280
      %356 = vst.msk [vmem:[%s331 + $0xb8] sm:$0xff] %vm332, %v282
      %357 = vst.msk [vmem:[%s331 + $0xc0] sm:$0xff] %vm332, %v284
      %358 = vst.msk [vmem:[%s331 + $0xc8] sm:$0xff] %vm332, %v286
      %359 = vst.msk [vmem:[%s331 + $0xd0] sm:$0xff] %vm332, %v288
      %360 = vst.msk [vmem:[%s331 + $0xd8] sm:$0xff] %vm332, %v290
      %361 = vst.msk [vmem:[%s331 + $0xe0] sm:$0xff] %vm332, %v292
      %362 = vst.msk [vmem:[%s331 + $0xe8] sm:$0xff] %vm332, %v294
      %363 = vst.msk [vmem:[%s331 + $0xf0] sm:$0xff] %vm332, %v296
      %364 = vst.msk [vmem:[%s331 + $0xf8] sm:$0xff] %vm332, %v298
      %vm365 = vcmask 64512
      %366 = vst.msk [vmem:[%s331 + $0x1] sm:$0xff] %vm365, %v171
      %vm367 = vcmask 63488
      %368 = vst.msk [vmem:[%s331 + $0x9] sm:$0x7f] %vm367, %v172
      %369 = vst.msk [vmem:[%s331 + $0x11] sm:$0xff] %vm365, %v173
      %370 = vst.msk [vmem:[%s331 + $0x19] sm:$0x7f] %vm367, %v174
      %371 = vst.msk [vmem:[%s331 + $0x21] sm:$0xff] %vm365, %v175
      %372 = vst.msk [vmem:[%s331 + $0x29] sm:$0x7f] %vm367, %v176
      %373 = vst.msk [vmem:[%s331 + $0x31] sm:$0xff] %vm365, %v177
      %374 = vst.msk [vmem:[%s331 + $0x39] sm:$0x7f] %vm367, %v178
      %375 = vst.msk [vmem:[%s331 + $0x41] sm:$0xff] %vm365, %v179
      %376 = vst.msk [vmem:[%s331 + $0x49] sm:$0x7f] %vm367, %v180
      %377 = vst.msk [vmem:[%s331 + $0x51] sm:$0xff] %vm365, %v181
      %378 = vst.msk [vmem:[%s331 + $0x59] sm:$0x7f] %vm367, %v182
      %379 = vst.msk [vmem:[%s331 + $0x61] sm:$0xff] %vm365, %v183
      %380 = vst.msk [vmem:[%s331 + $0x69] sm:$0x7f] %vm367, %v184
      %381 = vst.msk [vmem:[%s331 + $0x71] sm:$0xff] %vm365, %v185
      %382 = vst.msk [vmem:[%s331 + $0x79] sm:$0x7f] %vm367, %v186
      %383 = vst.msk [vmem:[%s331 + $0x81] sm:$0xff] %vm365, %v187
      %384 = vst.msk [vmem:[%s331 + $0x89] sm:$0x7f] %vm367, %v188
      %385 = vst.msk [vmem:[%s331 + $0x91] sm:$0xff] %vm365, %v189
      %386 = vst.msk [vmem:[%s331 + $0x99] sm:$0x7f] %vm367, %v190
      %387 = vst.msk [vmem:[%s331 + $0xa1] sm:$0xff] %vm365, %v191
      %388 = vst.msk [vmem:[%s331 + $0xa9] sm:$0x7f] %vm367, %v192
      %389 = vst.msk [vmem:[%s331 + $0xb1] sm:$0xff] %vm365, %v193
      %390 = vst.msk [vmem:[%s331 + $0xb9] sm:$0x7f] %vm367, %v194
      %391 = vst.msk [vmem:[%s331 + $0xc1] sm:$0xff] %vm365, %v195
      %392 = vst.msk [vmem:[%s331 + $0xc9] sm:$0x7f] %vm367, %v196
      %393 = vst.msk [vmem:[%s331 + $0xd1] sm:$0xff] %vm365, %v197
      %394 = vst.msk [vmem:[%s331 + $0xd9] sm:$0x7f] %vm367, %v198
      %395 = vst.msk [vmem:[%s331 + $0xe1] sm:$0xff] %vm365, %v199
      %396 = vst.msk [vmem:[%s331 + $0xe9] sm:$0x7f] %vm367, %v200
      %397 = vst.msk [vmem:[%s331 + $0xf1] sm:$0xff] %vm365, %v201
      %398 = vst.msk [vmem:[%s331 + $0xf9] sm:$0x7f] %vm367, %v202
      %vm399 = vcmask 58369
      %400 = vst.msk [vmem:[%s331 - $0x1] sm:$0x2] %vm399, %v171
      %401 = vst.msk [vmem:[%s331 + $0xf] sm:$0x2] %vm399, %v173
      %402 = vst.msk [vmem:[%s331 + $0x1f] sm:$0x2] %vm399, %v175
      %403 = vst.msk [vmem:[%s331 + $0x2f] sm:$0x2] %vm399, %v177
      %404 = vst.msk [vmem:[%s331 + $0x3f] sm:$0x2] %vm399, %v179
      %405 = vst.msk [vmem:[%s331 + $0x4f] sm:$0x2] %vm399, %v181
      %406 = vst.msk [vmem:[%s331 + $0x5f] sm:$0x2] %vm399, %v183
      %407 = vst.msk [vmem:[%s331 + $0x6f] sm:$0x2] %vm399, %v185
      %408 = vst.msk [vmem:[%s331 + $0x7f] sm:$0x2] %vm399, %v187
      %409 = vst.msk [vmem:[%s331 + $0x8f] sm:$0x2] %vm399, %v189
      %410 = vst.msk [vmem:[%s331 + $0x9f] sm:$0x2] %vm399, %v191
      %411 = vst.msk [vmem:[%s331 + $0xaf] sm:$0x2] %vm399, %v193
      %412 = vst.msk [vmem:[%s331 + $0xbf] sm:$0x2] %vm399, %v195
      %413 = vst.msk [vmem:[%s331 + $0xcf] sm:$0x2] %vm399, %v197
      %414 = vst.msk [vmem:[%s331 + $0xdf] sm:$0x2] %vm399, %v199
      %415 = vst.msk [vmem:[%s331 + $0xef] sm:$0x2] %vm399, %v201
      %416 = vrot.lane.b32.xlu0 %v171, 16
      %v417 = vpop.permute.xlu0 %416
      %418 = vrot.lane.b32.xlu0 %v172, 16
      %v419 = vpop.permute.xlu0 %418
      %420 = vrot.lane.b32.xlu0 %v173, 16
      %v421 = vpop.permute.xlu0 %420
      %422 = vrot.lane.b32.xlu0 %v174, 16
      %v423 = vpop.permute.xlu0 %422
      %424 = vrot.lane.b32.xlu0 %v175, 16
      %v425 = vpop.permute.xlu0 %424
      %426 = vrot.lane.b32.xlu0 %v176, 16
      %v427 = vpop.permute.xlu0 %426
      %428 = vrot.lane.b32.xlu0 %v177, 16
      %v429 = vpop.permute.xlu0 %428
      %430 = vrot.lane.b32.xlu0 %v178, 16
      %v431 = vpop.permute.xlu0 %430
      %432 = vrot.lane.b32.xlu0 %v179, 16
      %v433 = vpop.permute.xlu0 %432
      %434 = vrot.lane.b32.xlu0 %v180, 16
      %v435 = vpop.permute.xlu0 %434
      %436 = vrot.lane.b32.xlu0 %v181, 16
      %v437 = vpop.permute.xlu0 %436
      %438 = vrot.lane.b32.xlu0 %v182, 16
      %v439 = vpop.permute.xlu0 %438
      %440 = vrot.lane.b32.xlu0 %v183, 16
      %v441 = vpop.permute.xlu0 %440
      %442 = vrot.lane.b32.xlu0 %v184, 16
      %v443 = vpop.permute.xlu0 %442
      %444 = vrot.lane.b32.xlu0 %v185, 16
      %v445 = vpop.permute.xlu0 %444
      %446 = vrot.lane.b32.xlu0 %v186, 16
      %v447 = vpop.permute.xlu0 %446
      %448 = vrot.lane.b32.xlu0 %v187, 16
      %v449 = vpop.permute.xlu0 %448
      %450 = vrot.lane.b32.xlu0 %v188, 16
      %v451 = vpop.permute.xlu0 %450
      %452 = vrot.lane.b32.xlu0 %v189, 16
      %v453 = vpop.permute.xlu0 %452
      %454 = vrot.lane.b32.xlu0 %v190, 16
      %v455 = vpop.permute.xlu0 %454
      %456 = vrot.lane.b32.xlu0 %v191, 16
      %v457 = vpop.permute.xlu0 %456
      %458 = vrot.lane.b32.xlu0 %v192, 16
      %v459 = vpop.permute.xlu0 %458
      %460 = vrot.lane.b32.xlu0 %v193, 16
      %v461 = vpop.permute.xlu0 %460
      %462 = vrot.lane.b32.xlu0 %v194, 16
      %v463 = vpop.permute.xlu0 %462
      %464 = vrot.lane.b32.xlu0 %v195, 16
      %v465 = vpop.permute.xlu0 %464
      %466 = vrot.lane.b32.xlu0 %v196, 16
      %v467 = vpop.permute.xlu0 %466
      %468 = vrot.lane.b32.xlu0 %v197, 16
      %v469 = vpop.permute.xlu0 %468
      %470 = vrot.lane.b32.xlu0 %v198, 16
      %v471 = vpop.permute.xlu0 %470
      %472 = vrot.lane.b32.xlu0 %v199, 16
      %v473 = vpop.permute.xlu0 %472
      %474 = vrot.lane.b32.xlu0 %v200, 16
      %v475 = vpop.permute.xlu0 %474
      %476 = vrot.lane.b32.xlu0 %v201, 16
      %v477 = vpop.permute.xlu0 %476
      %478 = vrot.lane.b32.xlu0 %v202, 16
      %v479 = vpop.permute.xlu0 %478
      %vm512 = vcmask 195713
      %513 = vst.msk [vmem:[%s331 - $0x1] sm:$0xfe] %vm512, %v417
      %vm514 = vcmask 195712
      %515 = vst.msk [vmem:[%s331 + $0x7] sm:$0xff] %vm514, %v419
      %516 = vst.msk [vmem:[%s331 + $0xf] sm:$0xfe] %vm512, %v421
      %517 = vst.msk [vmem:[%s331 + $0x17] sm:$0xff] %vm514, %v423
      %518 = vst.msk [vmem:[%s331 + $0x1f] sm:$0xfe] %vm512, %v425
      %519 = vst.msk [vmem:[%s331 + $0x27] sm:$0xff] %vm514, %v427
      %520 = vst.msk [vmem:[%s331 + $0x2f] sm:$0xfe] %vm512, %v429
      %521 = vst.msk [vmem:[%s331 + $0x37] sm:$0xff] %vm514, %v431
      %522 = vst.msk [vmem:[%s331 + $0x3f] sm:$0xfe] %vm512, %v433
      %523 = vst.msk [vmem:[%s331 + $0x47] sm:$0xff] %vm514, %v435
      %524 = vst.msk [vmem:[%s331 + $0x4f] sm:$0xfe] %vm512, %v437
      %525 = vst.msk [vmem:[%s331 + $0x57] sm:$0xff] %vm514, %v439
      %526 = vst.msk [vmem:[%s331 + $0x5f] sm:$0xfe] %vm512, %v441
      %527 = vst.msk [vmem:[%s331 + $0x67] sm:$0xff] %vm514, %v443
      %528 = vst.msk [vmem:[%s331 + $0x6f] sm:$0xfe] %vm512, %v445
      %529 = vst.msk [vmem:[%s331 + $0x77] sm:$0xff] %vm514, %v447
      %530 = vst.msk [vmem:[%s331 + $0x7f] sm:$0xfe] %vm512, %v449
      %531 = vst.msk [vmem:[%s331 + $0x87] sm:$0xff] %vm514, %v451
      %532 = vst.msk [vmem:[%s331 + $0x8f] sm:$0xfe] %vm512, %v453
      %533 = vst.msk [vmem:[%s331 + $0x97] sm:$0xff] %vm514, %v455
      %534 = vst.msk [vmem:[%s331 + $0x9f] sm:$0xfe] %vm512, %v457
      %535 = vst.msk [vmem:[%s331 + $0xa7] sm:$0xff] %vm514, %v459
      %536 = vst.msk [vmem:[%s331 + $0xaf] sm:$0xfe] %vm512, %v461
      %537 = vst.msk [vmem:[%s331 + $0xb7] sm:$0xff] %vm514, %v463
      %538 = vst.msk [vmem:[%s331 + $0xbf] sm:$0xfe] %vm512, %v465
      %539 = vst.msk [vmem:[%s331 + $0xc7] sm:$0xff] %vm514, %v467
      %540 = vst.msk [vmem:[%s331 + $0xcf] sm:$0xfe] %vm512, %v469
      %541 = vst.msk [vmem:[%s331 + $0xd7] sm:$0xff] %vm514, %v471
      %542 = vst.msk [vmem:[%s331 + $0xdf] sm:$0xfe] %vm512, %v473
      %543 = vst.msk [vmem:[%s331 + $0xe7] sm:$0xff] %vm514, %v475
      %544 = vst.msk [vmem:[%s331 + $0xef] sm:$0xfe] %vm512, %v477
      %545 = vst.msk [vmem:[%s331 + $0xf7] sm:$0xff] %vm514, %v479
      %vm546 = vcmask 194694
      %547 = vst.msk [vmem:[%s331 + $0x9] sm:$0x40] %vm546, %v419
      %548 = vst.msk [vmem:[%s331 + $0x19] sm:$0x40] %vm546, %v423
      %549 = vst.msk [vmem:[%s331 + $0x29] sm:$0x40] %vm546, %v427
      %550 = vst.msk [vmem:[%s331 + $0x39] sm:$0x40] %vm546, %v431
      %551 = vst.msk [vmem:[%s331 + $0x49] sm:$0x40] %vm546, %v435
      %552 = vst.msk [vmem:[%s331 + $0x59] sm:$0x40] %vm546, %v439
      %553 = vst.msk [vmem:[%s331 + $0x69] sm:$0x40] %vm546, %v443
      %554 = vst.msk [vmem:[%s331 + $0x79] sm:$0x40] %vm546, %v447
      %555 = vst.msk [vmem:[%s331 + $0x89] sm:$0x40] %vm546, %v451
      %556 = vst.msk [vmem:[%s331 + $0x99] sm:$0x40] %vm546, %v455
      %557 = vst.msk [vmem:[%s331 + $0xa9] sm:$0x40] %vm546, %v459
      %558 = vst.msk [vmem:[%s331 + $0xb9] sm:$0x40] %vm546, %v463
      %559 = vst.msk [vmem:[%s331 + $0xc9] sm:$0x40] %vm546, %v467
      %560 = vst.msk [vmem:[%s331 + $0xd9] sm:$0x40] %vm546, %v471
      %561 = vst.msk [vmem:[%s331 + $0xe9] sm:$0x40] %vm546, %v475
      %562 = vst.msk [vmem:[%s331 + $0xf9] sm:$0x40] %vm546, %v479
      %s563 = scalar_lea.vmem [#allocation2], 32
      %v564 = vld [vmem:[%s563] sm:$0xff]
      %v565 = vld [vmem:[%s563 + $0x8] sm:$0xff]
      %vm566 = vcmask 195584
      %567 = vst.msk [vmem:[#allocation2] sm:$0xff] %vm566, %v564
      %568 = vst.msk [vmem:[#allocation2 + $0x8] sm:$0xff] %vm566, %v565
      %s569 = scalar_lea.vmem [#allocation2], 240
      %v570 = vld [vmem:[%s569] sm:$0xff]
      %v571 = vld [vmem:[%s569 + $0x8] sm:$0xff]
      %s572 = scalar_lea.vmem [#allocation2], 272
      %573 = vst.msk [vmem:[%s572] sm:$0xff] %vm566, %v570
      %574 = vst.msk [vmem:[%s572 + $0x8] sm:$0xff] %vm566, %v571
      %v575 = vld [vmem:[#allocation2] sm:$0xff]
      %v576 = vld [vmem:[#allocation2 + $0x8] sm:$0xff]
      %v577 = vld [vmem:[#allocation2 + $0x10] sm:$0xff]
      %v578 = vld [vmem:[#allocation2 + $0x18] sm:$0xff]
      %v579 = vld [vmem:[#allocation2 + $0x20] sm:$0xff]
      %v580 = vld [vmem:[#allocation2 + $0x28] sm:$0xff]
      %v581 = vld [vmem:[#allocation2 + $0x30] sm:$0xff]
      %v582 = vld [vmem:[#allocation2 + $0x38] sm:$0xff]
      %v583 = vld [vmem:[#allocation2 + $0x40] sm:$0xff]
      %v584 = vld [vmem:[#allocation2 + $0x48] sm:$0xff]
      %v585 = vld [vmem:[#allocation2 + $0x50] sm:$0xff]
      %v586 = vld [vmem:[#allocation2 + $0x58] sm:$0xff]
      %v587 = vld [vmem:[#allocation2 + $0x60] sm:$0xff]
      %v588 = vld [vmem:[#allocation2 + $0x68] sm:$0xff]
      %v589 = vld [vmem:[#allocation2 + $0x70] sm:$0xff]
      %v590 = vld [vmem:[#allocation2 + $0x78] sm:$0xff]
      %v591 = vld [vmem:[#allocation2 + $0x80] sm:$0xff]
      %v592 = vld [vmem:[#allocation2 + $0x88] sm:$0xff]
      %v593 = vld [vmem:[#allocation2 + $0x90] sm:$0xff]
      %v594 = vld [vmem:[#allocation2 + $0x98] sm:$0xff]
      %v595 = vld [vmem:[#allocation2 + $0xa0] sm:$0xff]
      %v596 = vld [vmem:[#allocation2 + $0xa8] sm:$0xff]
      %v597 = vld [vmem:[#allocation2 + $0xb0] sm:$0xff]
      %v598 = vld [vmem:[#allocation2 + $0xb8] sm:$0xff]
      %v599 = vld [vmem:[#allocation2 + $0xc0] sm:$0xff]
      %v600 = vld [vmem:[#allocation2 + $0xc8] sm:$0xff]
      %v601 = vld [vmem:[#allocation2 + $0xd0] sm:$0xff]
      %v602 = vld [vmem:[#allocation2 + $0xd8] sm:$0xff]
      %v603 = vld [vmem:[#allocation2 + $0xe0] sm:$0xff]
      %v604 = vld [vmem:[#allocation2 + $0xe8] sm:$0xff]
      %v605 = vld [vmem:[#allocation2 + $0xf0] sm:$0xff]
      %v606 = vld [vmem:[#allocation2 + $0xf8] sm:$0xff]
      %v607 = vld [vmem:[%s1] sm:$0xff]
      %v608 = vld [vmem:[%s1 + $0x8] sm:$0xff]
      %v609 = vld [vmem:[%s1 + $0x10] sm:$0xff]
      %v610 = vld [vmem:[%s331] sm:$0xff]
      %v611 = vld [vmem:[%s331 + $0x8] sm:$0xff]
      %v612 = vld [vmem:[%s331 + $0x10] sm:$0xff]
      %v613 = vld [vmem:[%s331 + $0x18] sm:$0xff]
      %v614 = vld [vmem:[%s331 + $0x20] sm:$0xff]
      %v615 = vld [vmem:[%s331 + $0x28] sm:$0xff]
      %v616 = vld [vmem:[%s331 + $0x30] sm:$0xff]
      %v617 = vld [vmem:[%s331 + $0x38] sm:$0xff]
      %v618 = vld [vmem:[%s331 + $0x40] sm:$0xff]
      %v619 = vld [vmem:[%s331 + $0x48] sm:$0xff]
      %v620 = vld [vmem:[%s331 + $0x50] sm:$0xff]
      %v621 = vld [vmem:[%s331 + $0x58] sm:$0xff]
      %v622 = vld [vmem:[%s331 + $0x60] sm:$0xff]
      %v623 = vld [vmem:[%s331 + $0x68] sm:$0xff]
      %v624 = vld [vmem:[%s331 + $0x70] sm:$0xff]
      %v625 = vld [vmem:[%s331 + $0x78] sm:$0xff]
      %v626 = vld [vmem:[%s331 + $0x80] sm:$0xff]
      %v627 = vld [vmem:[%s331 + $0x88] sm:$0xff]
      %v628 = vld [vmem:[%s331 + $0x90] sm:$0xff]
      %v629 = vld [vmem:[%s331 + $0x98] sm:$0xff]
      %v630 = vld [vmem:[%s331 + $0xa0] sm:$0xff]
      %v631 = vld [vmem:[%s331 + $0xa8] sm:$0xff]
      %v632 = vld [vmem:[%s331 + $0xb0] sm:$0xff]
      %v633 = vld [vmem:[%s331 + $0xb8] sm:$0xff]
      %v634 = vld [vmem:[%s331 + $0xc0] sm:$0xff]
      %v635 = vld [vmem:[%s331 + $0xc8] sm:$0xff]
      %v636 = vld [vmem:[%s331 + $0xd0] sm:$0xff]
      %v637 = vld [vmem:[%s331 + $0xd8] sm:$0xff]
      %v638 = vld [vmem:[%s331 + $0xe0] sm:$0xff]
      %v639 = vld [vmem:[%s331 + $0xe8] sm:$0xff]
      %v640 = vld [vmem:[%s331 + $0xf0] sm:$0xff]
      %v641 = vld [vmem:[%s331 + $0xf8] sm:$0xff]
      %s642 = scalar_lea.vmem %s1, 24
      %v643 = vld [vmem:[%s642] sm:$0xff]
      %v644 = vld [vmem:[%s642 + $0x8] sm:$0xff]
      %v645 = vld [vmem:[%s642 + $0x10] sm:$0xff]
      %v647 = vsel %vm566, %v610, 0
      %v650 = vsel %vm566, %v611, 0
      %v653 = vsel %vm566, %v612, 0
      %v656 = vsel %vm566, %v613, 0
      %v659 = vsel %vm566, %v614, 0
      %v662 = vsel %vm566, %v615, 0
      %v665 = vsel %vm566, %v616, 0
      %v668 = vsel %vm566, %v617, 0
      %v671 = vsel %vm566, %v618, 0
      %v674 = vsel %vm566, %v619, 0
      %v677 = vsel %vm566, %v620, 0
      %v680 = vsel %vm566, %v621, 0
      %v683 = vsel %vm566, %v622, 0
      %v686 = vsel %vm566, %v623, 0
      %v689 = vsel %vm566, %v624, 0
      %v692 = vsel %vm566, %v625, 0
      %v695 = vsel %vm566, %v626, 0
      %v698 = vsel %vm566, %v627, 0
      %v701 = vsel %vm566, %v628, 0
      %v704 = vsel %vm566, %v629, 0
      %v707 = vsel %vm566, %v630, 0
      %v710 = vsel %vm566, %v631, 0
      %v713 = vsel %vm566, %v632, 0
      %v716 = vsel %vm566, %v633, 0
      %v719 = vsel %vm566, %v634, 0
      %v722 = vsel %vm566, %v635, 0
      %v725 = vsel %vm566, %v636, 0
      %v728 = vsel %vm566, %v637, 0
      %v731 = vsel %vm566, %v638, 0
      %v734 = vsel %vm566, %v639, 0
      %v737 = vsel %vm566, %v640, 0
      %v740 = vsel %vm566, %v641, 0
      %742 = vmatprep.subr.mxu0 0.0
      %743 = vmatpush1.msra.mxu0 %v643
      %744 = vmatprep.subr.mxu0 0.0
      %745 = vmatpush1.msra.mxu0 %v644
      %746 = vmatprep.subr.mxu0 0.0
      %747 = vmatpush1.msra.mxu0 %v645
      %748 = vmatprep.subr.mxu0 0.0
      %749 = vmatpush1.msra.mxu0 0.0
      %750 = vmatprep.subr.mxu0 0.0
      %751 = vmatpush1.msra.mxu0 0.0
      %752 = vmatprep.subr.mxu0 0.0
      %753 = vmatpush1.msra.mxu0 0.0
      %754 = vmatprep.subr.mxu0 0.0
      %755 = vmatpush1.msra.mxu0 0.0
      %756 = vmatprep.subr.mxu0 0.0
      %757 = vmatpush1.msra.mxu0 0.0
      %758 = vmatprep.subr.mxu0 0.0
      %759 = vmatpush1.msra.mxu0 0.0
      %760 = vmatprep.subr.mxu0 0.0
      %761 = vmatpush1.msra.mxu0 0.0
      %762 = vmatprep.subr.mxu0 0.0
      %763 = vmatpush1.msra.mxu0 0.0
      %764 = vmatprep.subr.mxu0 0.0
      %765 = vmatpush1.msra.mxu0 0.0
      %766 = vmatprep.subr.mxu0 0.0
      %767 = vmatpush1.msra.mxu0 0.0
      %768 = vmatprep.subr.mxu0 0.0
      %769 = vmatpush1.msra.mxu0 0.0
      %770 = vmatprep.subr.mxu0 0.0
      %771 = vmatpush1.msra.mxu0 0.0
      %772 = vmatprep.subr.mxu0 0.0
      %773 = vmatpush1.msra.mxu0 0.0
      %774 = vmatprep.subr.mxu0 0.0
      %775 = vmatpush1.msra.mxu0 0.0
      %776 = vmatprep.subr.mxu0 0.0
      %777 = vmatpush1.msra.mxu0 0.0
      %778 = vmatprep.subr.mxu0 0.0
      %779 = vmatpush1.msra.mxu0 0.0
      %780 = vmatprep.subr.mxu0 0.0
      %781 = vmatpush1.msra.mxu0 0.0
      %782 = vmatprep.subr.mxu0 0.0
      %783 = vmatpush1.msra.mxu0 0.0
      %784 = vmatprep.subr.mxu0 0.0
      %785 = vmatpush1.msra.mxu0 0.0
      %786 = vmatprep.subr.mxu0 0.0
      %787 = vmatpush1.msra.mxu0 0.0
      %788 = vmatprep.subr.mxu0 0.0
      %789 = vmatpush1.msra.mxu0 0.0
      %790 = vmatprep.subr.mxu0 0.0
      %791 = vmatpush1.msra.mxu0 0.0
      %792 = vmatprep.subr.mxu0 0.0
      %793 = vmatpush1.msra.mxu0 0.0
      %794 = vmatprep.subr.mxu0 0.0
      %795 = vmatpush1.msra.mxu0 0.0
      %796 = vmatprep.subr.mxu0 0.0
      %797 = vmatpush1.msra.mxu0 0.0
      %798 = vmatprep.subr.mxu0 0.0
      %799 = vmatpush1.msra.mxu0 0.0
      %800 = vmatprep.subr.mxu0 0.0
      %801 = vmatpush1.msra.mxu0 0.0
      %802 = vmatprep.subr.mxu0 0.0
      %803 = vmatpush1.msra.mxu0 0.0
      %804 = vmatprep.subr.mxu0 0.0
      %805 = vmatpush1.msra.mxu0 0.0
      %806 = vmatprep.mubr.f32.mxu0 0.0
      %807 = vmatmul.mubr.f32.gmra.mrb[0].mxu0 %v647
      %v808 = vpop.f32.mrb[0].mxu0
      %v809 = vadd.f32 0.0, %v808
      %v810 = vpop.f32.mrb[0].mxu0
      %811 = vmatprep.mubr.f32.mxu0 0.0
      %812 = vmatmul.mubr.f32.gmra.mrb[0].mxu0 %v650
      %v813 = vpop.f32.mrb[0].mxu0
      %v814 = vadd.f32 0.0, %v813
      %v815 = vpop.f32.mrb[0].mxu0
      %816 = vmatprep.mubr.f32.mxu0 0.0
      %817 = vmatmul.mubr.f32.gmra.mrb[0].mxu0 %v653
      %v818 = vpop.f32.mrb[0].mxu0
      %v819 = vadd.f32 0.0, %v818
      %v820 = vpop.f32.mrb[0].mxu0
      %821 = vmatprep.mubr.f32.mxu0 0.0
      %822 = vmatmul.mubr.f32.gmra.mrb[0].mxu0 %v656
      %v823 = vpop.f32.mrb[0].mxu0
      %v824 = vadd.f32 0.0, %v823
      %v825 = vpop.f32.mrb[0].mxu0
      %826 = vmatprep.mubr.f32.mxu0 0.0
      %827 = vmatmul.mubr.f32.gmra.mrb[0].mxu0 %v659
      %v828 = vpop.f32.mrb[0].mxu0
      %v829 = vadd.f32 0.0, %v828
      %v830 = vpop.f32.mrb[0].mxu0
      %831 = vmatprep.mubr.f32.mxu0 0.0
      %832 = vmatmul.mubr.f32.gmra.mrb[0].mxu0 %v662
      %v833 = vpop.f32.mrb[0].mxu0
      %v834 = vadd.f32 0.0, %v833
      %v835 = vpop.f32.mrb[0].mxu0
      %836 = vmatprep.mubr.f32.mxu0 0.0
      %837 = vmatmul.mubr.f32.gmra.mrb[0].mxu0 %v665
      %v838 = vpop.f32.mrb[0].mxu0
      %v839 = vadd.f32 0.0, %v838
      %v840 = vpop.f32.mrb[0].mxu0
      %841 = vmatprep.mubr.f32.mxu0 0.0
      %842 = vmatmul.mubr.f32.gmra.mrb[0].mxu0 %v668
      %v843 = vpop.f32.mrb[0].mxu0
      %v844 = vadd.f32 0.0, %v843
      %v845 = vpop.f32.mrb[0].mxu0
      %846 = vmatprep.mubr.f32.mxu0 0.0
      %847 = vmatmul.mubr.f32.gmra.mrb[0].mxu0 %v671
      %v848 = vpop.f32.mrb[0].mxu0
      %v849 = vadd.f32 0.0, %v848
      %v850 = vpop.f32.mrb[0].mxu0
      %851 = vmatprep.mubr.f32.mxu0 0.0
      %852 = vmatmul.mubr.f32.gmra.mrb[0].mxu0 %v674
      %v853 = vpop.f32.mrb[0].mxu0
      %v854 = vadd.f32 0.0, %v853
      %v855 = vpop.f32.mrb[0].mxu0
      %856 = vmatprep.mubr.f32.mxu0 0.0
      %857 = vmatmul.mubr.f32.gmra.mrb[0].mxu0 %v677
      %v858 = vpop.f32.mrb[0].mxu0
      %v859 = vadd.f32 0.0, %v858
      %v860 = vpop.f32.mrb[0].mxu0
      %861 = vmatprep.mubr.f32.mxu0 0.0
      %862 = vmatmul.mubr.f32.gmra.mrb[0].mxu0 %v680
      %v863 = vpop.f32.mrb[0].mxu0
      %v864 = vadd.f32 0.0, %v863
      %v865 = vpop.f32.mrb[0].mxu0
      %866 = vmatprep.mubr.f32.mxu0 0.0
      %867 = vmatmul.mubr.f32.gmra.mrb[0].mxu0 %v683
      %v868 = vpop.f32.mrb[0].mxu0
      %v869 = vadd.f32 0.0, %v868
      %v870 = vpop.f32.mrb[0].mxu0
      %871 = vmatprep.mubr.f32.mxu0 0.0
      %872 = vmatmul.mubr.f32.gmra.mrb[0].mxu0 %v686
      %v873 = vpop.f32.mrb[0].mxu0
      %v874 = vadd.f32 0.0, %v873
      %v875 = vpop.f32.mrb[0].mxu0
      %876 = vmatprep.mubr.f32.mxu0 0.0
      %877 = vmatmul.mubr.f32.gmra.mrb[0].mxu0 %v689
      %v878 = vpop.f32.mrb[0].mxu0
      %v879 = vadd.f32 0.0, %v878
      %v880 = vpop.f32.mrb[0].mxu0
      %881 = vmatprep.mubr.f32.mxu0 0.0
      %882 = vmatmul.mubr.f32.gmra.mrb[0].mxu0 %v692
      %v883 = vpop.f32.mrb[0].mxu0
      %v884 = vadd.f32 0.0, %v883
      %v885 = vpop.f32.mrb[0].mxu0
      %886 = vmatprep.mubr.f32.mxu0 0.0
      %887 = vmatmul.mubr.f32.gmra.mrb[0].mxu0 %v695
      %v888 = vpop.f32.mrb[0].mxu0
      %v889 = vadd.f32 0.0, %v888
      %v890 = vpop.f32.mrb[0].mxu0
      %891 = vmatprep.mubr.f32.mxu0 0.0
      %892 = vmatmul.mubr.f32.gmra.mrb[0].mxu0 %v698
      %v893 = vpop.f32.mrb[0].mxu0
      %v894 = vadd.f32 0.0, %v893
      %v895 = vpop.f32.mrb[0].mxu0
      %896 = vmatprep.mubr.f32.mxu0 0.0
      %897 = vmatmul.mubr.f32.gmra.mrb[0].mxu0 %v701
      %v898 = vpop.f32.mrb[0].mxu0
      %v899 = vadd.f32 0.0, %v898
      %v900 = vpop.f32.mrb[0].mxu0
      %901 = vmatprep.mubr.f32.mxu0 0.0
      %902 = vmatmul.mubr.f32.gmra.mrb[0].mxu0 %v704
      %v903 = vpop.f32.mrb[0].mxu0
      %v904 = vadd.f32 0.0, %v903
      %v905 = vpop.f32.mrb[0].mxu0
      %906 = vmatprep.mubr.f32.mxu0 0.0
      %907 = vmatmul.mubr.f32.gmra.mrb[0].mxu0 %v707
      %v908 = vpop.f32.mrb[0].mxu0
      %v909 = vadd.f32 0.0, %v908
      %v910 = vpop.f32.mrb[0].mxu0
      %911 = vmatprep.mubr.f32.mxu0 0.0
      %912 = vmatmul.mubr.f32.gmra.mrb[0].mxu0 %v710
      %v913 = vpop.f32.mrb[0].mxu0
      %v914 = vadd.f32 0.0, %v913
      %v915 = vpop.f32.mrb[0].mxu0
      %916 = vmatprep.mubr.f32.mxu0 0.0
      %917 = vmatmul.mubr.f32.gmra.mrb[0].mxu0 %v713
      %v918 = vpop.f32.mrb[0].mxu0
      %v919 = vadd.f32 0.0, %v918
      %v920 = vpop.f32.mrb[0].mxu0
      %921 = vmatprep.mubr.f32.mxu0 0.0
      %922 = vmatmul.mubr.f32.gmra.mrb[0].mxu0 %v716
      %v923 = vpop.f32.mrb[0].mxu0
      %v924 = vadd.f32 0.0, %v923
      %v925 = vpop.f32.mrb[0].mxu0
      %926 = vmatprep.mubr.f32.mxu0 0.0
      %927 = vmatmul.mubr.f32.gmra.mrb[0].mxu0 %v719
      %v928 = vpop.f32.mrb[0].mxu0
      %v929 = vadd.f32 0.0, %v928
      %v930 = vpop.f32.mrb[0].mxu0
      %931 = vmatprep.mubr.f32.mxu0 0.0
      %932 = vmatmul.mubr.f32.gmra.mrb[0].mxu0 %v722
      %v933 = vpop.f32.mrb[0].mxu0
      %v934 = vadd.f32 0.0, %v933
      %v935 = vpop.f32.mrb[0].mxu0
      %936 = vmatprep.mubr.f32.mxu0 0.0
      %937 = vmatmul.mubr.f32.gmra.mrb[0].mxu0 %v725
      %v938 = vpop.f32.mrb[0].mxu0
      %v939 = vadd.f32 0.0, %v938
      %v940 = vpop.f32.mrb[0].mxu0
      %941 = vmatprep.mubr.f32.mxu0 0.0
      %942 = vmatmul.mubr.f32.gmra.mrb[0].mxu0 %v728
      %v943 = vpop.f32.mrb[0].mxu0
      %v944 = vadd.f32 0.0, %v943
      %v945 = vpop.f32.mrb[0].mxu0
      %946 = vmatprep.mubr.f32.mxu0 0.0
      %947 = vmatmul.mubr.f32.gmra.mrb[0].mxu0 %v731
      %v948 = vpop.f32.mrb[0].mxu0
      %v949 = vadd.f32 0.0, %v948
      %v950 = vpop.f32.mrb[0].mxu0
      %951 = vmatprep.mubr.f32.mxu0 0.0
      %952 = vmatmul.mubr.f32.gmra.mrb[0].mxu0 %v734
      %v953 = vpop.f32.mrb[0].mxu0
      %v954 = vadd.f32 0.0, %v953
      %v955 = vpop.f32.mrb[0].mxu0
      %956 = vmatprep.mubr.f32.mxu0 0.0
      %957 = vmatmul.mubr.f32.gmra.mrb[0].mxu0 %v737
      %v958 = vpop.f32.mrb[0].mxu0
      %v959 = vadd.f32 0.0, %v958
      %v960 = vpop.f32.mrb[0].mxu0
      %961 = vmatprep.mubr.f32.mxu0 0.0
      %962 = vmatmul.mubr.f32.gmra.mrb[0].mxu0 %v740
      %v963 = vpop.f32.mrb[0].mxu0
      %v964 = vadd.f32 0.0, %v963
      %v965 = vpop.f32.mrb[0].mxu0
      %966 = vdwg.mxu0
      %v968 = vsel %vm566, %v575, 0
      %v971 = vsel %vm566, %v576, 0
      %v974 = vsel %vm566, %v577, 0
      %v977 = vsel %vm566, %v578, 0
      %v980 = vsel %vm566, %v579, 0
      %v983 = vsel %vm566, %v580, 0
      %v986 = vsel %vm566, %v581, 0
      %v989 = vsel %vm566, %v582, 0
      %v992 = vsel %vm566, %v583, 0
      %v995 = vsel %vm566, %v584, 0
      %v998 = vsel %vm566, %v585, 0
      %v1001 = vsel %vm566, %v586, 0
      %v1004 = vsel %vm566, %v587, 0
      %v1007 = vsel %vm566, %v588, 0
      %v1010 = vsel %vm566, %v589, 0
      %v1013 = vsel %vm566, %v590, 0
      %v1016 = vsel %vm566, %v591, 0
      %v1019 = vsel %vm566, %v592, 0
      %v1022 = vsel %vm566, %v593, 0
      %v1025 = vsel %vm566, %v594, 0
      %v1028 = vsel %vm566, %v595, 0
      %v1031 = vsel %vm566, %v596, 0
      %v1034 = vsel %vm566, %v597, 0
      %v1037 = vsel %vm566, %v598, 0
      %v1040 = vsel %vm566, %v599, 0
      %v1043 = vsel %vm566, %v600, 0
      %v1046 = vsel %vm566, %v601, 0
      %v1049 = vsel %vm566, %v602, 0
      %v1052 = vsel %vm566, %v603, 0
      %v1055 = vsel %vm566, %v604, 0
      %v1058 = vsel %vm566, %v605, 0
      %v1061 = vsel %vm566, %v606, 0
      %1063 = vmatprep.subr.mxu0 0.0
      %1064 = vmatpush1.msra.mxu0 %v607
      %1065 = vmatprep.subr.mxu0 0.0
      %1066 = vmatpush1.msra.mxu0 %v608
      %1067 = vmatprep.subr.mxu0 0.0
      %1068 = vmatpush1.msra.mxu0 %v609
      %1069 = vmatprep.subr.mxu0 0.0
      %1070 = vmatpush1.msra.mxu0 0.0
      %1071 = vmatprep.subr.mxu0 0.0
      %1072 = vmatpush1.msra.mxu0 0.0
      %1073 = vmatprep.subr.mxu0 0.0
      %1074 = vmatpush1.msra.mxu0 0.0
      %1075 = vmatprep.subr.mxu0 0.0
      %1076 = vmatpush1.msra.mxu0 0.0
      %1077 = vmatprep.subr.mxu0 0.0
      %1078 = vmatpush1.msra.mxu0 0.0
      %1079 = vmatprep.subr.mxu0 0.0
      %1080 = vmatpush1.msra.mxu0 0.0
      %1081 = vmatprep.subr.mxu0 0.0
      %1082 = vmatpush1.msra.mxu0 0.0
      %1083 = vmatprep.subr.mxu0 0.0
      %1084 = vmatpush1.msra.mxu0 0.0
      %1085 = vmatprep.subr.mxu0 0.0
      %1086 = vmatpush1.msra.mxu0 0.0
      %1087 = vmatprep.subr.mxu0 0.0
      %1088 = vmatpush1.msra.mxu0 0.0
      %1089 = vmatprep.subr.mxu0 0.0
      %1090 = vmatpush1.msra.mxu0 0.0
      %1091 = vmatprep.subr.mxu0 0.0
      %1092 = vmatpush1.msra.mxu0 0.0
      %1093 = vmatprep.subr.mxu0 0.0
      %1094 = vmatpush1.msra.mxu0 0.0
      %1095 = vmatprep.subr.mxu0 0.0
      %1096 = vmatpush1.msra.mxu0 0.0
      %1097 = vmatprep.subr.mxu0 0.0
      %1098 = vmatpush1.msra.mxu0 0.0
      %1099 = vmatprep.subr.mxu0 0.0
      %1100 = vmatpush1.msra.mxu0 0.0
      %1101 = vmatprep.subr.mxu0 0.0
      %1102 = vmatpush1.msra.mxu0 0.0
      %1103 = vmatprep.subr.mxu0 0.0
      %1104 = vmatpush1.msra.mxu0 0.0
      %1105 = vmatprep.subr.mxu0 0.0
      %1106 = vmatpush1.msra.mxu0 0.0
      %1107 = vmatprep.subr.mxu0 0.0
      %1108 = vmatpush1.msra.mxu0 0.0
      %1109 = vmatprep.subr.mxu0 0.0
      %1110 = vmatpush1.msra.mxu0 0.0
      %1111 = vmatprep.subr.mxu0 0.0
      %1112 = vmatpush1.msra.mxu0 0.0
      %1113 = vmatprep.subr.mxu0 0.0
      %1114 = vmatpush1.msra.mxu0 0.0
      %1115 = vmatprep.subr.mxu0 0.0
      %1116 = vmatpush1.msra.mxu0 0.0
      %1117 = vmatprep.subr.mxu0 0.0
      %1118 = vmatpush1.msra.mxu0 0.0
      %1119 = vmatprep.subr.mxu0 0.0
      %1120 = vmatpush1.msra.mxu0 0.0
      %1121 = vmatprep.subr.mxu0 0.0
      %1122 = vmatpush1.msra.mxu0 0.0
      %1123 = vmatprep.subr.mxu0 0.0
      %1124 = vmatpush1.msra.mxu0 0.0
      %1125 = vmatprep.subr.mxu0 0.0
      %1126 = vmatpush1.msra.mxu0 0.0
      %1127 = vmatprep.mubr.f32.mxu0 0.0
      %1128 = vmatmul.mubr.f32.gmra.mrb[0].mxu0 %v968
      %v1129 = vpop.f32.mrb[0].mxu0
      %v1130 = vadd.f32 %v809, %v1129
      %v1131 = vpop.f32.mrb[0].mxu0
      %1132 = vmatprep.mubr.f32.mxu0 0.0
      %1133 = vmatmul.mubr.f32.gmra.mrb[0].mxu0 %v971
      %v1134 = vpop.f32.mrb[0].mxu0
      %v1135 = vadd.f32 %v814, %v1134
      %v1136 = vpop.f32.mrb[0].mxu0
      %1137 = vmatprep.mubr.f32.mxu0 0.0
      %1138 = vmatmul.mubr.f32.gmra.mrb[0].mxu0 %v974
      %v1139 = vpop.f32.mrb[0].mxu0
      %v1140 = vadd.f32 %v819, %v1139
      %v1141 = vpop.f32.mrb[0].mxu0
      %1142 = vmatprep.mubr.f32.mxu0 0.0
      %1143 = vmatmul.mubr.f32.gmra.mrb[0].mxu0 %v977
      %v1144 = vpop.f32.mrb[0].mxu0
      %v1145 = vadd.f32 %v824, %v1144
      %v1146 = vpop.f32.mrb[0].mxu0
      %1147 = vmatprep.mubr.f32.mxu0 0.0
      %1148 = vmatmul.mubr.f32.gmra.mrb[0].mxu0 %v980
      %v1149 = vpop.f32.mrb[0].mxu0
      %v1150 = vadd.f32 %v829, %v1149
      %v1151 = vpop.f32.mrb[0].mxu0
      %1152 = vmatprep.mubr.f32.mxu0 0.0
      %1153 = vmatmul.mubr.f32.gmra.mrb[0].mxu0 %v983
      %v1154 = vpop.f32.mrb[0].mxu0
      %v1155 = vadd.f32 %v834, %v1154
      %v1156 = vpop.f32.mrb[0].mxu0
      %1157 = vmatprep.mubr.f32.mxu0 0.0
      %1158 = vmatmul.mubr.f32.gmra.mrb[0].mxu0 %v986
      %v1159 = vpop.f32.mrb[0].mxu0
      %v1160 = vadd.f32 %v839, %v1159
      %v1161 = vpop.f32.mrb[0].mxu0
      %1162 = vmatprep.mubr.f32.mxu0 0.0
      %1163 = vmatmul.mubr.f32.gmra.mrb[0].mxu0 %v989
      %v1164 = vpop.f32.mrb[0].mxu0
      %v1165 = vadd.f32 %v844, %v1164
      %v1166 = vpop.f32.mrb[0].mxu0
      %1167 = vmatprep.mubr.f32.mxu0 0.0
      %1168 = vmatmul.mubr.f32.gmra.mrb[0].mxu0 %v992
      %v1169 = vpop.f32.mrb[0].mxu0
      %v1170 = vadd.f32 %v849, %v1169
      %v1171 = vpop.f32.mrb[0].mxu0
      %1172 = vmatprep.mubr.f32.mxu0 0.0
      %1173 = vmatmul.mubr.f32.gmra.mrb[0].mxu0 %v995
      %v1174 = vpop.f32.mrb[0].mxu0
      %v1175 = vadd.f32 %v854, %v1174
      %v1176 = vpop.f32.mrb[0].mxu0
      %1177 = vmatprep.mubr.f32.mxu0 0.0
      %1178 = vmatmul.mubr.f32.gmra.mrb[0].mxu0 %v998
      %v1179 = vpop.f32.mrb[0].mxu0
      %v1180 = vadd.f32 %v859, %v1179
      %v1181 = vpop.f32.mrb[0].mxu0
      %1182 = vmatprep.mubr.f32.mxu0 0.0
      %1183 = vmatmul.mubr.f32.gmra.mrb[0].mxu0 %v1001
      %v1184 = vpop.f32.mrb[0].mxu0
      %v1185 = vadd.f32 %v864, %v1184
      %v1186 = vpop.f32.mrb[0].mxu0
      %1187 = vmatprep.mubr.f32.mxu0 0.0
      %1188 = vmatmul.mubr.f32.gmra.mrb[0].mxu0 %v1004
      %v1189 = vpop.f32.mrb[0].mxu0
      %v1190 = vadd.f32 %v869, %v1189
      %v1191 = vpop.f32.mrb[0].mxu0
      %1192 = vmatprep.mubr.f32.mxu0 0.0
      %1193 = vmatmul.mubr.f32.gmra.mrb[0].mxu0 %v1007
      %v1194 = vpop.f32.mrb[0].mxu0
      %v1195 = vadd.f32 %v874, %v1194
      %v1196 = vpop.f32.mrb[0].mxu0
      %1197 = vmatprep.mubr.f32.mxu0 0.0
      %1198 = vmatmul.mubr.f32.gmra.mrb[0].mxu0 %v1010
      %v1199 = vpop.f32.mrb[0].mxu0
      %v1200 = vadd.f32 %v879, %v1199
      %v1201 = vpop.f32.mrb[0].mxu0
      %1202 = vmatprep.mubr.f32.mxu0 0.0
      %1203 = vmatmul.mubr.f32.gmra.mrb[0].mxu0 %v1013
      %v1204 = vpop.f32.mrb[0].mxu0
      %v1205 = vadd.f32 %v884, %v1204
      %v1206 = vpop.f32.mrb[0].mxu0
      %1207 = vmatprep.mubr.f32.mxu0 0.0
      %1208 = vmatmul.mubr.f32.gmra.mrb[0].mxu0 %v1016
      %v1209 = vpop.f32.mrb[0].mxu0
      %v1210 = vadd.f32 %v889, %v1209
      %v1211 = vpop.f32.mrb[0].mxu0
      %1212 = vmatprep.mubr.f32.mxu0 0.0
      %1213 = vmatmul.mubr.f32.gmra.mrb[0].mxu0 %v1019
      %v1214 = vpop.f32.mrb[0].mxu0
      %v1215 = vadd.f32 %v894, %v1214
      %v1216 = vpop.f32.mrb[0].mxu0
      %1217 = vmatprep.mubr.f32.mxu0 0.0
      %1218 = vmatmul.mubr.f32.gmra.mrb[0].mxu0 %v1022
      %v1219 = vpop.f32.mrb[0].mxu0
      %v1220 = vadd.f32 %v899, %v1219
      %v1221 = vpop.f32.mrb[0].mxu0
      %1222 = vmatprep.mubr.f32.mxu0 0.0
      %1223 = vmatmul.mubr.f32.gmra.mrb[0].mxu0 %v1025
      %v1224 = vpop.f32.mrb[0].mxu0
      %v1225 = vadd.f32 %v904, %v1224
      %v1226 = vpop.f32.mrb[0].mxu0
      %1227 = vmatprep.mubr.f32.mxu0 0.0
      %1228 = vmatmul.mubr.f32.gmra.mrb[0].mxu0 %v1028
      %v1229 = vpop.f32.mrb[0].mxu0
      %v1230 = vadd.f32 %v909, %v1229
      %v1231 = vpop.f32.mrb[0].mxu0
      %1232 = vmatprep.mubr.f32.mxu0 0.0
      %1233 = vmatmul.mubr.f32.gmra.mrb[0].mxu0 %v1031
      %v1234 = vpop.f32.mrb[0].mxu0
      %v1235 = vadd.f32 %v914, %v1234
      %v1236 = vpop.f32.mrb[0].mxu0
      %1237 = vmatprep.mubr.f32.mxu0 0.0
      %1238 = vmatmul.mubr.f32.gmra.mrb[0].mxu0 %v1034
      %v1239 = vpop.f32.mrb[0].mxu0
      %v1240 = vadd.f32 %v919, %v1239
      %v1241 = vpop.f32.mrb[0].mxu0
      %1242 = vmatprep.mubr.f32.mxu0 0.0
      %1243 = vmatmul.mubr.f32.gmra.mrb[0].mxu0 %v1037
      %v1244 = vpop.f32.mrb[0].mxu0
      %v1245 = vadd.f32 %v924, %v1244
      %v1246 = vpop.f32.mrb[0].mxu0
      %1247 = vmatprep.mubr.f32.mxu0 0.0
      %1248 = vmatmul.mubr.f32.gmra.mrb[0].mxu0 %v1040
      %v1249 = vpop.f32.mrb[0].mxu0
      %v1250 = vadd.f32 %v929, %v1249
      %v1251 = vpop.f32.mrb[0].mxu0
      %1252 = vmatprep.mubr.f32.mxu0 0.0
      %1253 = vmatmul.mubr.f32.gmra.mrb[0].mxu0 %v1043
      %v1254 = vpop.f32.mrb[0].mxu0
      %v1255 = vadd.f32 %v934, %v1254
      %v1256 = vpop.f32.mrb[0].mxu0
      %1257 = vmatprep.mubr.f32.mxu0 0.0
      %1258 = vmatmul.mubr.f32.gmra.mrb[0].mxu0 %v1046
      %v1259 = vpop.f32.mrb[0].mxu0
      %v1260 = vadd.f32 %v939, %v1259
      %v1261 = vpop.f32.mrb[0].mxu0
      %1262 = vmatprep.mubr.f32.mxu0 0.0
      %1263 = vmatmul.mubr.f32.gmra.mrb[0].mxu0 %v1049
      %v1264 = vpop.f32.mrb[0].mxu0
      %v1265 = vadd.f32 %v944, %v1264
      %v1266 = vpop.f32.mrb[0].mxu0
      %1267 = vmatprep.mubr.f32.mxu0 0.0
      %1268 = vmatmul.mubr.f32.gmra.mrb[0].mxu0 %v1052
      %v1269 = vpop.f32.mrb[0].mxu0
      %v1270 = vadd.f32 %v949, %v1269
      %v1271 = vpop.f32.mrb[0].mxu0
      %1272 = vmatprep.mubr.f32.mxu0 0.0
      %1273 = vmatmul.mubr.f32.gmra.mrb[0].mxu0 %v1055
      %v1274 = vpop.f32.mrb[0].mxu0
      %v1275 = vadd.f32 %v954, %v1274
      %v1276 = vpop.f32.mrb[0].mxu0
      %1277 = vmatprep.mubr.f32.mxu0 0.0
      %1278 = vmatmul.mubr.f32.gmra.mrb[0].mxu0 %v1058
      %v1279 = vpop.f32.mrb[0].mxu0
      %v1280 = vadd.f32 %v959, %v1279
      %v1281 = vpop.f32.mrb[0].mxu0
      %1282 = vmatprep.mubr.f32.mxu0 0.0
      %1283 = vmatmul.mubr.f32.gmra.mrb[0].mxu0 %v1061
      %v1284 = vpop.f32.mrb[0].mxu0
      %v1285 = vadd.f32 %v964, %v1284
      %v1286 = vpop.f32.mrb[0].mxu0
      %1287 = vdwg.mxu0
      %v1288 = vld [vmem:[%s563] sm:$0xff]
      %v1289 = vld [vmem:[%s563 + $0x8] sm:$0xff]
      %v1290 = vld [vmem:[%s563 + $0x10] sm:$0xff]
      %v1291 = vld [vmem:[%s563 + $0x18] sm:$0xff]
      %v1292 = vld [vmem:[%s563 + $0x20] sm:$0xff]
      %v1293 = vld [vmem:[%s563 + $0x28] sm:$0xff]
      %v1294 = vld [vmem:[%s563 + $0x30] sm:$0xff]
      %v1295 = vld [vmem:[%s563 + $0x38] sm:$0xff]
      %v1296 = vld [vmem:[%s563 + $0x40] sm:$0xff]
      %v1297 = vld [vmem:[%s563 + $0x48] sm:$0xff]
      %v1298 = vld [vmem:[%s563 + $0x50] sm:$0xff]
      %v1299 = vld [vmem:[%s563 + $0x58] sm:$0xff]
      %v1300 = vld [vmem:[%s563 + $0x60] sm:$0xff]
      %v1301 = vld [vmem:[%s563 + $0x68] sm:$0xff]
      %v1302 = vld [vmem:[%s563 + $0x70] sm:$0xff]
      %v1303 = vld [vmem:[%s563 + $0x78] sm:$0xff]
      %v1304 = vld [vmem:[%s563 + $0x80] sm:$0xff]
      %v1305 = vld [vmem:[%s563 + $0x88] sm:$0xff]
      %v1306 = vld [vmem:[%s563 + $0x90] sm:$0xff]
      %v1307 = vld [vmem:[%s563 + $0x98] sm:$0xff]
      %v1308 = vld [vmem:[%s563 + $0xa0] sm:$0xff]
      %v1309 = vld [vmem:[%s563 + $0xa8] sm:$0xff]
      %v1310 = vld [vmem:[%s563 + $0xb0] sm:$0xff]
      %v1311 = vld [vmem:[%s563 + $0xb8] sm:$0xff]
      %v1312 = vld [vmem:[%s563 + $0xc0] sm:$0xff]
      %v1313 = vld [vmem:[%s563 + $0xc8] sm:$0xff]
      %v1314 = vld [vmem:[%s563 + $0xd0] sm:$0xff]
      %v1315 = vld [vmem:[%s563 + $0xd8] sm:$0xff]
      %v1316 = vld [vmem:[%s563 + $0xe0] sm:$0xff]
      %v1317 = vld [vmem:[%s563 + $0xe8] sm:$0xff]
      %v1318 = vld [vmem:[%s563 + $0xf0] sm:$0xff]
      %v1319 = vld [vmem:[%s563 + $0xf8] sm:$0xff]
      %s1320 = scalar_lea.vmem %s1, 48
      %v1321 = vld [vmem:[%s1320] sm:$0xff]
      %v1322 = vld [vmem:[%s1320 + $0x8] sm:$0xff]
      %v1323 = vld [vmem:[%s1320 + $0x10] sm:$0xff]
      %v1325 = vsel %vm566, %v1288, 0
      %v1328 = vsel %vm566, %v1289, 0
      %v1331 = vsel %vm566, %v1290, 0
      %v1334 = vsel %vm566, %v1291, 0
      %v1337 = vsel %vm566, %v1292, 0
      %v1340 = vsel %vm566, %v1293, 0
      %v1343 = vsel %vm566, %v1294, 0
      %v1346 = vsel %vm566, %v1295, 0
      %v1349 = vsel %vm566, %v1296, 0
      %v1352 = vsel %vm566, %v1297, 0
      %v1355 = vsel %vm566, %v1298, 0
      %v1358 = vsel %vm566, %v1299, 0
      %v1361 = vsel %vm566, %v1300, 0
      %v1364 = vsel %vm566, %v1301, 0
      %v1367 = vsel %vm566, %v1302, 0
      %v1370 = vsel %vm566, %v1303, 0
      %v1373 = vsel %vm566, %v1304, 0
      %v1376 = vsel %vm566, %v1305, 0
      %v1379 = vsel %vm566, %v1306, 0
      %v1382 = vsel %vm566, %v1307, 0
      %v1385 = vsel %vm566, %v1308, 0
      %v1388 = vsel %vm566, %v1309, 0
      %v1391 = vsel %vm566, %v1310, 0
      %v1394 = vsel %vm566, %v1311, 0
      %v1397 = vsel %vm566, %v1312, 0
      %v1400 = vsel %vm566, %v1313, 0
      %v1403 = vsel %vm566, %v1314, 0
      %v1406 = vsel %vm566, %v1315, 0
      %v1409 = vsel %vm566, %v1316, 0
      %v1412 = vsel %vm566, %v1317, 0
      %v1415 = vsel %vm566, %v1318, 0
      %v1418 = vsel %vm566, %v1319, 0
      %1420 = vmatprep.subr.mxu0 0.0
      %1421 = vmatpush1.msra.mxu0 %v1321
      %1422 = vmatprep.subr.mxu0 0.0
      %1423 = vmatpush1.msra.mxu0 %v1322
      %1424 = vmatprep.subr.mxu0 0.0
      %1425 = vmatpush1.msra.mxu0 %v1323
      %1426 = vmatprep.subr.mxu0 0.0
      %1427 = vmatpush1.msra.mxu0 0.0
      %1428 = vmatprep.subr.mxu0 0.0
      %1429 = vmatpush1.msra.mxu0 0.0
      %1430 = vmatprep.subr.mxu0 0.0
      %1431 = vmatpush1.msra.mxu0 0.0
      %1432 = vmatprep.subr.mxu0 0.0
      %1433 = vmatpush1.msra.mxu0 0.0
      %1434 = vmatprep.subr.mxu0 0.0
      %1435 = vmatpush1.msra.mxu0 0.0
      %1436 = vmatprep.subr.mxu0 0.0
      %1437 = vmatpush1.msra.mxu0 0.0
      %1438 = vmatprep.subr.mxu0 0.0
      %1439 = vmatpush1.msra.mxu0 0.0
      %1440 = vmatprep.subr.mxu0 0.0
      %1441 = vmatpush1.msra.mxu0 0.0
      %1442 = vmatprep.subr.mxu0 0.0
      %1443 = vmatpush1.msra.mxu0 0.0
      %1444 = vmatprep.subr.mxu0 0.0
      %1445 = vmatpush1.msra.mxu0 0.0
      %1446 = vmatprep.subr.mxu0 0.0
      %1447 = vmatpush1.msra.mxu0 0.0
      %1448 = vmatprep.subr.mxu0 0.0
      %1449 = vmatpush1.msra.mxu0 0.0
      %1450 = vmatprep.subr.mxu0 0.0
      %1451 = vmatpush1.msra.mxu0 0.0
      %1452 = vmatprep.subr.mxu0 0.0
      %1453 = vmatpush1.msra.mxu0 0.0
      %1454 = vmatprep.subr.mxu0 0.0
      %1455 = vmatpush1.msra.mxu0 0.0
      %1456 = vmatprep.subr.mxu0 0.0
      %1457 = vmatpush1.msra.mxu0 0.0
      %1458 = vmatprep.subr.mxu0 0.0
      %1459 = vmatpush1.msra.mxu0 0.0
      %1460 = vmatprep.subr.mxu0 0.0
      %1461 = vmatpush1.msra.mxu0 0.0
      %1462 = vmatprep.subr.mxu0 0.0
      %1463 = vmatpush1.msra.mxu0 0.0
      %1464 = vmatprep.subr.mxu0 0.0
      %1465 = vmatpush1.msra.mxu0 0.0
      %1466 = vmatprep.subr.mxu0 0.0
      %1467 = vmatpush1.msra.mxu0 0.0
      %1468 = vmatprep.subr.mxu0 0.0
      %1469 = vmatpush1.msra.mxu0 0.0
      %1470 = vmatprep.subr.mxu0 0.0
      %1471 = vmatpush1.msra.mxu0 0.0
      %1472 = vmatprep.subr.mxu0 0.0
      %1473 = vmatpush1.msra.mxu0 0.0
      %1474 = vmatprep.subr.mxu0 0.0
      %1475 = vmatpush1.msra.mxu0 0.0
      %1476 = vmatprep.subr.mxu0 0.0
      %1477 = vmatpush1.msra.mxu0 0.0
      %1478 = vmatprep.subr.mxu0 0.0
      %1479 = vmatpush1.msra.mxu0 0.0
      %1480 = vmatprep.subr.mxu0 0.0
      %1481 = vmatpush1.msra.mxu0 0.0
      %1482 = vmatprep.subr.mxu0 0.0
      %1483 = vmatpush1.msra.mxu0 0.0
      %1484 = vmatprep.mubr.f32.mxu0 0.0
      %1485 = vmatmul.mubr.f32.gmra.mrb[0].mxu0 %v1325
      %v1486 = vpop.f32.mrb[0].mxu0
      %v1487 = vadd.f32 0.0, %v1486
      %v1488 = vpop.f32.mrb[0].mxu0
      %1489 = vmatprep.mubr.f32.mxu0 0.0
      %1490 = vmatmul.mubr.f32.gmra.mrb[0].mxu0 %v1328
      %v1491 = vpop.f32.mrb[0].mxu0
      %v1492 = vadd.f32 0.0, %v1491
      %v1493 = vpop.f32.mrb[0].mxu0
      %1494 = vmatprep.mubr.f32.mxu0 0.0
      %1495 = vmatmul.mubr.f32.gmra.mrb[0].mxu0 %v1331
      %v1496 = vpop.f32.mrb[0].mxu0
      %v1497 = vadd.f32 0.0, %v1496
      %v1498 = vpop.f32.mrb[0].mxu0
      %1499 = vmatprep.mubr.f32.mxu0 0.0
      %1500 = vmatmul.mubr.f32.gmra.mrb[0].mxu0 %v1334
      %v1501 = vpop.f32.mrb[0].mxu0
      %v1502 = vadd.f32 0.0, %v1501
      %v1503 = vpop.f32.mrb[0].mxu0
      %1504 = vmatprep.mubr.f32.mxu0 0.0
      %1505 = vmatmul.mubr.f32.gmra.mrb[0].mxu0 %v1337
      %v1506 = vpop.f32.mrb[0].mxu0
      %v1507 = vadd.f32 0.0, %v1506
      %v1508 = vpop.f32.mrb[0].mxu0
      %1509 = vmatprep.mubr.f32.mxu0 0.0
      %1510 = vmatmul.mubr.f32.gmra.mrb[0].mxu0 %v1340
      %v1511 = vpop.f32.mrb[0].mxu0
      %v1512 = vadd.f32 0.0, %v1511
      %v1513 = vpop.f32.mrb[0].mxu0
      %1514 = vmatprep.mubr.f32.mxu0 0.0
      %1515 = vmatmul.mubr.f32.gmra.mrb[0].mxu0 %v1343
      %v1516 = vpop.f32.mrb[0].mxu0
      %v1517 = vadd.f32 0.0, %v1516
      %v1518 = vpop.f32.mrb[0].mxu0
      %1519 = vmatprep.mubr.f32.mxu0 0.0
      %1520 = vmatmul.mubr.f32.gmra.mrb[0].mxu0 %v1346
      %v1521 = vpop.f32.mrb[0].mxu0
      %v1522 = vadd.f32 0.0, %v1521
      %v1523 = vpop.f32.mrb[0].mxu0
      %1524 = vmatprep.mubr.f32.mxu0 0.0
      %1525 = vmatmul.mubr.f32.gmra.mrb[0].mxu0 %v1349
      %v1526 = vpop.f32.mrb[0].mxu0
      %v1527 = vadd.f32 0.0, %v1526
      %v1528 = vpop.f32.mrb[0].mxu0
      %1529 = vmatprep.mubr.f32.mxu0 0.0
      %1530 = vmatmul.mubr.f32.gmra.mrb[0].mxu0 %v1352
      %v1531 = vpop.f32.mrb[0].mxu0
      %v1532 = vadd.f32 0.0, %v1531
      %v1533 = vpop.f32.mrb[0].mxu0
      %1534 = vmatprep.mubr.f32.mxu0 0.0
      %1535 = vmatmul.mubr.f32.gmra.mrb[0].mxu0 %v1355
      %v1536 = vpop.f32.mrb[0].mxu0
      %v1537 = vadd.f32 0.0, %v1536
      %v1538 = vpop.f32.mrb[0].mxu0
      %1539 = vmatprep.mubr.f32.mxu0 0.0
      %1540 = vmatmul.mubr.f32.gmra.mrb[0].mxu0 %v1358
      %v1541 = vpop.f32.mrb[0].mxu0
      %v1542 = vadd.f32 0.0, %v1541
      %v1543 = vpop.f32.mrb[0].mxu0
      %1544 = vmatprep.mubr.f32.mxu0 0.0
      %1545 = vmatmul.mubr.f32.gmra.mrb[0].mxu0 %v1361
      %v1546 = vpop.f32.mrb[0].mxu0
      %v1547 = vadd.f32 0.0, %v1546
      %v1548 = vpop.f32.mrb[0].mxu0
      %1549 = vmatprep.mubr.f32.mxu0 0.0
      %1550 = vmatmul.mubr.f32.gmra.mrb[0].mxu0 %v1364
      %v1551 = vpop.f32.mrb[0].mxu0
      %v1552 = vadd.f32 0.0, %v1551
      %v1553 = vpop.f32.mrb[0].mxu0
      %1554 = vmatprep.mubr.f32.mxu0 0.0
      %1555 = vmatmul.mubr.f32.gmra.mrb[0].mxu0 %v1367
      %v1556 = vpop.f32.mrb[0].mxu0
      %v1557 = vadd.f32 0.0, %v1556
      %v1558 = vpop.f32.mrb[0].mxu0
      %1559 = vmatprep.mubr.f32.mxu0 0.0
      %1560 = vmatmul.mubr.f32.gmra.mrb[0].mxu0 %v1370
      %v1561 = vpop.f32.mrb[0].mxu0
      %v1562 = vadd.f32 0.0, %v1561
      %v1563 = vpop.f32.mrb[0].mxu0
      %1564 = vmatprep.mubr.f32.mxu0 0.0
      %1565 = vmatmul.mubr.f32.gmra.mrb[0].mxu0 %v1373
      %v1566 = vpop.f32.mrb[0].mxu0
      %v1567 = vadd.f32 0.0, %v1566
      %v1568 = vpop.f32.mrb[0].mxu0
      %1569 = vmatprep.mubr.f32.mxu0 0.0
      %1570 = vmatmul.mubr.f32.gmra.mrb[0].mxu0 %v1376
      %v1571 = vpop.f32.mrb[0].mxu0
      %v1572 = vadd.f32 0.0, %v1571
      %v1573 = vpop.f32.mrb[0].mxu0
      %1574 = vmatprep.mubr.f32.mxu0 0.0
      %1575 = vmatmul.mubr.f32.gmra.mrb[0].mxu0 %v1379
      %v1576 = vpop.f32.mrb[0].mxu0
      %v1577 = vadd.f32 0.0, %v1576
      %v1578 = vpop.f32.mrb[0].mxu0
      %1579 = vmatprep.mubr.f32.mxu0 0.0
      %1580 = vmatmul.mubr.f32.gmra.mrb[0].mxu0 %v1382
      %v1581 = vpop.f32.mrb[0].mxu0
      %v1582 = vadd.f32 0.0, %v1581
      %v1583 = vpop.f32.mrb[0].mxu0
      %1584 = vmatprep.mubr.f32.mxu0 0.0
      %1585 = vmatmul.mubr.f32.gmra.mrb[0].mxu0 %v1385
      %v1586 = vpop.f32.mrb[0].mxu0
      %v1587 = vadd.f32 0.0, %v1586
      %v1588 = vpop.f32.mrb[0].mxu0
      %1589 = vmatprep.mubr.f32.mxu0 0.0
      %1590 = vmatmul.mubr.f32.gmra.mrb[0].mxu0 %v1388
      %v1591 = vpop.f32.mrb[0].mxu0
      %v1592 = vadd.f32 0.0, %v1591
      %v1593 = vpop.f32.mrb[0].mxu0
      %1594 = vmatprep.mubr.f32.mxu0 0.0
      %1595 = vmatmul.mubr.f32.gmra.mrb[0].mxu0 %v1391
      %v1596 = vpop.f32.mrb[0].mxu0
      %v1597 = vadd.f32 0.0, %v1596
      %v1598 = vpop.f32.mrb[0].mxu0
      %1599 = vmatprep.mubr.f32.mxu0 0.0
      %1600 = vmatmul.mubr.f32.gmra.mrb[0].mxu0 %v1394
      %v1601 = vpop.f32.mrb[0].mxu0
      %v1602 = vadd.f32 0.0, %v1601
      %v1603 = vpop.f32.mrb[0].mxu0
      %1604 = vmatprep.mubr.f32.mxu0 0.0
      %1605 = vmatmul.mubr.f32.gmra.mrb[0].mxu0 %v1397
      %v1606 = vpop.f32.mrb[0].mxu0
      %v1607 = vadd.f32 0.0, %v1606
      %v1608 = vpop.f32.mrb[0].mxu0
      %1609 = vmatprep.mubr.f32.mxu0 0.0
      %1610 = vmatmul.mubr.f32.gmra.mrb[0].mxu0 %v1400
      %v1611 = vpop.f32.mrb[0].mxu0
      %v1612 = vadd.f32 0.0, %v1611
      %v1613 = vpop.f32.mrb[0].mxu0
      %1614 = vmatprep.mubr.f32.mxu0 0.0
      %1615 = vmatmul.mubr.f32.gmra.mrb[0].mxu0 %v1403
      %v1616 = vpop.f32.mrb[0].mxu0
      %v1617 = vadd.f32 0.0, %v1616
      %v1618 = vpop.f32.mrb[0].mxu0
      %1619 = vmatprep.mubr.f32.mxu0 0.0
      %1620 = vmatmul.mubr.f32.gmra.mrb[0].mxu0 %v1406
      %v1621 = vpop.f32.mrb[0].mxu0
      %v1622 = vadd.f32 0.0, %v1621
      %v1623 = vpop.f32.mrb[0].mxu0
      %1624 = vmatprep.mubr.f32.mxu0 0.0
      %1625 = vmatmul.mubr.f32.gmra.mrb[0].mxu0 %v1409
      %v1626 = vpop.f32.mrb[0].mxu0
      %v1627 = vadd.f32 0.0, %v1626
      %v1628 = vpop.f32.mrb[0].mxu0
      %1629 = vmatprep.mubr.f32.mxu0 0.0
      %1630 = vmatmul.mubr.f32.gmra.mrb[0].mxu0 %v1412
      %v1631 = vpop.f32.mrb[0].mxu0
      %v1632 = vadd.f32 0.0, %v1631
      %v1633 = vpop.f32.mrb[0].mxu0
      %1634 = vmatprep.mubr.f32.mxu0 0.0
      %1635 = vmatmul.mubr.f32.gmra.mrb[0].mxu0 %v1415
      %v1636 = vpop.f32.mrb[0].mxu0
      %v1637 = vadd.f32 0.0, %v1636
      %v1638 = vpop.f32.mrb[0].mxu0
      %1639 = vmatprep.mubr.f32.mxu0 0.0
      %1640 = vmatmul.mubr.f32.gmra.mrb[0].mxu0 %v1418
      %v1641 = vpop.f32.mrb[0].mxu0
      %v1642 = vadd.f32 0.0, %v1641
      %v1643 = vpop.f32.mrb[0].mxu0
      %1644 = vdwg.mxu0
      %v1645 = vadd.f32 %v1130, %v1487
      %v1646 = vadd.f32 %v1135, %v1492
      %v1647 = vadd.f32 %v1140, %v1497
      %v1648 = vadd.f32 %v1145, %v1502
      %v1649 = vadd.f32 %v1150, %v1507
      %v1650 = vadd.f32 %v1155, %v1512
      %v1651 = vadd.f32 %v1160, %v1517
      %v1652 = vadd.f32 %v1165, %v1522
      %v1653 = vadd.f32 %v1170, %v1527
      %v1654 = vadd.f32 %v1175, %v1532
      %v1655 = vadd.f32 %v1180, %v1537
      %v1656 = vadd.f32 %v1185, %v1542
      %v1657 = vadd.f32 %v1190, %v1547
      %v1658 = vadd.f32 %v1195, %v1552
      %v1659 = vadd.f32 %v1200, %v1557
      %v1660 = vadd.f32 %v1205, %v1562
      %v1661 = vadd.f32 %v1210, %v1567
      %v1662 = vadd.f32 %v1215, %v1572
      %v1663 = vadd.f32 %v1220, %v1577
      %v1664 = vadd.f32 %v1225, %v1582
      %v1665 = vadd.f32 %v1230, %v1587
      %v1666 = vadd.f32 %v1235, %v1592
      %v1667 = vadd.f32 %v1240, %v1597
      %v1668 = vadd.f32 %v1245, %v1602
      %v1669 = vadd.f32 %v1250, %v1607
      %v1670 = vadd.f32 %v1255, %v1612
      %v1671 = vadd.f32 %v1260, %v1617
      %v1672 = vadd.f32 %v1265, %v1622
      %v1673 = vadd.f32 %v1270, %v1627
      %v1674 = vadd.f32 %v1275, %v1632
      %v1675 = vadd.f32 %v1280, %v1637
      %v1676 = vadd.f32 %v1285, %v1642
      %v1677 = vsel %vm365, %v1645, 0.0
      %v1678 = vsel %vm365, %v1646, 0.0
      %v1679 = vadd.f32 %v1677, %v1678
      %v1680 = vsel %vm365, %v1647, 0.0
      %v1681 = vadd.f32 %v1679, %v1680
      %v1682 = vsel %vm365, %v1648, 0.0
      %v1683 = vadd.f32 %v1681, %v1682
      %v1684 = vsel %vm365, %v1649, 0.0
      %v1685 = vadd.f32 %v1683, %v1684
      %v1686 = vsel %vm365, %v1650, 0.0
      %v1687 = vadd.f32 %v1685, %v1686
      %v1688 = vsel %vm365, %v1651, 0.0
      %v1689 = vadd.f32 %v1687, %v1688
      %v1690 = vsel %vm365, %v1652, 0.0
      %v1691 = vadd.f32 %v1689, %v1690
      %v1692 = vsel %vm365, %v1653, 0.0
      %v1693 = vadd.f32 %v1691, %v1692
      %v1694 = vsel %vm365, %v1654, 0.0
      %v1695 = vadd.f32 %v1693, %v1694
      %v1696 = vsel %vm365, %v1655, 0.0
      %v1697 = vadd.f32 %v1695, %v1696
      %v1698 = vsel %vm365, %v1656, 0.0
      %v1699 = vadd.f32 %v1697, %v1698
      %v1700 = vsel %vm365, %v1657, 0.0
      %v1701 = vadd.f32 %v1699, %v1700
      %v1702 = vsel %vm365, %v1658, 0.0
      %v1703 = vadd.f32 %v1701, %v1702
      %v1704 = vsel %vm365, %v1659, 0.0
      %v1705 = vadd.f32 %v1703, %v1704
      %v1706 = vsel %vm365, %v1660, 0.0
      %v1707 = vadd.f32 %v1705, %v1706
      %v1708 = vsel %vm365, %v1661, 0.0
      %v1709 = vadd.f32 %v1707, %v1708
      %v1710 = vsel %vm365, %v1662, 0.0
      %v1711 = vadd.f32 %v1709, %v1710
      %v1712 = vsel %vm365, %v1663, 0.0
      %v1713 = vadd.f32 %v1711, %v1712
      %v1714 = vsel %vm365, %v1664, 0.0
      %v1715 = vadd.f32 %v1713, %v1714
      %v1716 = vsel %vm365, %v1665, 0.0
      %v1717 = vadd.f32 %v1715, %v1716
      %v1718 = vsel %vm365, %v1666, 0.0
      %v1719 = vadd.f32 %v1717, %v1718
      %v1720 = vsel %vm365, %v1667, 0.0
      %v1721 = vadd.f32 %v1719, %v1720
      %v1722 = vsel %vm365, %v1668, 0.0
      %v1723 = vadd.f32 %v1721, %v1722
      %v1724 = vsel %vm365, %v1669, 0.0
      %v1725 = vadd.f32 %v1723, %v1724
      %v1726 = vsel %vm365, %v1670, 0.0
      %v1727 = vadd.f32 %v1725, %v1726
      %v1728 = vsel %vm365, %v1671, 0.0
      %v1729 = vadd.f32 %v1727, %v1728
      %v1730 = vsel %vm365, %v1672, 0.0
      %v1731 = vadd.f32 %v1729, %v1730
      %v1732 = vsel %vm365, %v1673, 0.0
      %v1733 = vadd.f32 %v1731, %v1732
      %v1734 = vsel %vm365, %v1674, 0.0
      %v1735 = vadd.f32 %v1733, %v1734
      %v1736 = vsel %vm365, %v1675, 0.0
      %v1737 = vadd.f32 %v1735, %v1736
      %v1738 = vsel %vm365, %v1676, 0.0
      %v1739 = vadd.f32 %v1737, %v1738
      %v1740 = vrot.slane %v1739, 4
      %v1741 = vadd.f32 %v1739, %v1740
      %v1742 = vrot.slane %v1741, 2
      %v1743 = vadd.f32 %v1741, %v1742
      %v1744 = vrot.slane %v1743, 1
      %v1745 = vadd.f32 %v1743, %v1744
      %v1746 = vmul.f32 %v1745, 0.00390625
      %v1747 = vmul.f32 %v1645, %v1645
      %v1748 = vmul.f32 %v1646, %v1646
      %v1749 = vmul.f32 %v1647, %v1647
      %v1750 = vmul.f32 %v1648, %v1648
      %v1751 = vmul.f32 %v1649, %v1649
      %v1752 = vmul.f32 %v1650, %v1650
      %v1753 = vmul.f32 %v1651, %v1651
      %v1754 = vmul.f32 %v1652, %v1652
      %v1755 = vmul.f32 %v1653, %v1653
      %v1756 = vmul.f32 %v1654, %v1654
      %v1757 = vmul.f32 %v1655, %v1655
      %v1758 = vmul.f32 %v1656, %v1656
      %v1759 = vmul.f32 %v1657, %v1657
      %v1760 = vmul.f32 %v1658, %v1658
      %v1761 = vmul.f32 %v1659, %v1659
      %v1762 = vmul.f32 %v1660, %v1660
      %v1763 = vmul.f32 %v1661, %v1661
      %v1764 = vmul.f32 %v1662, %v1662
      %v1765 = vmul.f32 %v1663, %v1663
      %v1766 = vmul.f32 %v1664, %v1664
      %v1767 = vmul.f32 %v1665, %v1665
      %v1768 = vmul.f32 %v1666, %v1666
      %v1769 = vmul.f32 %v1667, %v1667
      %v1770 = vmul.f32 %v1668, %v1668
      %v1771 = vmul.f32 %v1669, %v1669
      %v1772 = vmul.f32 %v1670, %v1670
      %v1773 = vmul.f32 %v1671, %v1671
      %v1774 = vmul.f32 %v1672, %v1672
      %v1775 = vmul.f32 %v1673, %v1673
      %v1776 = vmul.f32 %v1674, %v1674
      %v1777 = vmul.f32 %v1675, %v1675
      %v1778 = vmul.f32 %v1676, %v1676
      %v1779 = vsel %vm365, %v1747, 0.0
      %v1780 = vsel %vm365, %v1748, 0.0
      %v1781 = vadd.f32 %v1779, %v1780
      %v1782 = vsel %vm365, %v1749, 0.0
      %v1783 = vadd.f32 %v1781, %v1782
      %v1784 = vsel %vm365, %v1750, 0.0
      %v1785 = vadd.f32 %v1783, %v1784
      %v1786 = vsel %vm365, %v1751, 0.0
      %v1787 = vadd.f32 %v1785, %v1786
      %v1788 = vsel %vm365, %v1752, 0.0
      %v1789 = vadd.f32 %v1787, %v1788
      %v1790 = vsel %vm365, %v1753, 0.0
      %v1791 = vadd.f32 %v1789, %v1790
      %v1792 = vsel %vm365, %v1754, 0.0
      %v1793 = vadd.f32 %v1791, %v1792
      %v1794 = vsel %vm365, %v1755, 0.0
      %v1795 = vadd.f32 %v1793, %v1794
      %v1796 = vsel %vm365, %v1756, 0.0
      %v1797 = vadd.f32 %v1795, %v1796
      %v1798 = vsel %vm365, %v1757, 0.0
      %v1799 = vadd.f32 %v1797, %v1798
      %v1800 = vsel %vm365, %v1758, 0.0
      %v1801 = vadd.f32 %v1799, %v1800
      %v1802 = vsel %vm365, %v1759, 0.0
      %v1803 = vadd.f32 %v1801, %v1802
      %v1804 = vsel %vm365, %v1760, 0.0
      %v1805 = vadd.f32 %v1803, %v1804
      %v1806 = vsel %vm365, %v1761, 0.0
      %v1807 = vadd.f32 %v1805, %v1806
      %v1808 = vsel %vm365, %v1762, 0.0
      %v1809 = vadd.f32 %v1807, %v1808
      %v1810 = vsel %vm365, %v1763, 0.0
      %v1811 = vadd.f32 %v1809, %v1810
      %v1812 = vsel %vm365, %v1764, 0.0
      %v1813 = vadd.f32 %v1811, %v1812
      %v1814 = vsel %vm365, %v1765, 0.0
      %v1815 = vadd.f32 %v1813, %v1814
      %v1816 = vsel %vm365, %v1766, 0.0
      %v1817 = vadd.f32 %v1815, %v1816
      %v1818 = vsel %vm365, %v1767, 0.0
      %v1819 = vadd.f32 %v1817, %v1818
      %v1820 = vsel %vm365, %v1768, 0.0
      %v1821 = vadd.f32 %v1819, %v1820
      %v1822 = vsel %vm365, %v1769, 0.0
      %v1823 = vadd.f32 %v1821, %v1822
      %v1824 = vsel %vm365, %v1770, 0.0
      %v1825 = vadd.f32 %v1823, %v1824
      %v1826 = vsel %vm365, %v1771, 0.0
      %v1827 = vadd.f32 %v1825, %v1826
      %v1828 = vsel %vm365, %v1772, 0.0
      %v1829 = vadd.f32 %v1827, %v1828
      %v1830 = vsel %vm365, %v1773, 0.0
      %v1831 = vadd.f32 %v1829, %v1830
      %v1832 = vsel %vm365, %v1774, 0.0
      %v1833 = vadd.f32 %v1831, %v1832
      %v1834 = vsel %vm365, %v1775, 0.0
      %v1835 = vadd.f32 %v1833, %v1834
      %v1836 = vsel %vm365, %v1776, 0.0
      %v1837 = vadd.f32 %v1835, %v1836
      %v1838 = vsel %vm365, %v1777, 0.0
      %v1839 = vadd.f32 %v1837, %v1838
      %v1840 = vsel %vm365, %v1778, 0.0
      %v1841 = vadd.f32 %v1839, %v1840
      %v1842 = vrot.slane %v1841, 4
      %v1843 = vadd.f32 %v1841, %v1842
      %v1844 = vrot.slane %v1843, 2
      %v1845 = vadd.f32 %v1843, %v1844
      %v1846 = vrot.slane %v1845, 1
      %v1847 = vadd.f32 %v1845, %v1846
      %v1848 = vmul.f32 %v1847, 0.00390625
      %v1849 = vmul.f32 %v1746, %v1746
      %v1850 = vsub.f32 %v1848, %v1849
      %v1851 = vmax.f32 %v1850, 0.0
      %v1852 = vsub.f32 %v1645, %v1746
      %v1853 = vsub.f32 %v1646, %v1746
      %v1854 = vsub.f32 %v1647, %v1746
      %v1855 = vsub.f32 %v1648, %v1746
      %v1856 = vsub.f32 %v1649, %v1746
      %v1857 = vsub.f32 %v1650, %v1746
      %v1858 = vsub.f32 %v1651, %v1746
      %v1859 = vsub.f32 %v1652, %v1746
      %v1860 = vsub.f32 %v1653, %v1746
      %v1861 = vsub.f32 %v1654, %v1746
      %v1862 = vsub.f32 %v1655, %v1746
      %v1863 = vsub.f32 %v1656, %v1746
      %v1864 = vsub.f32 %v1657, %v1746
      %v1865 = vsub.f32 %v1658, %v1746
      %v1866 = vsub.f32 %v1659, %v1746
      %v1867 = vsub.f32 %v1660, %v1746
      %v1868 = vsub.f32 %v1661, %v1746
      %v1869 = vsub.f32 %v1662, %v1746
      %v1870 = vsub.f32 %v1663, %v1746
      %v1871 = vsub.f32 %v1664, %v1746
      %v1872 = vsub.f32 %v1665, %v1746
      %v1873 = vsub.f32 %v1666, %v1746
      %v1874 = vsub.f32 %v1667, %v1746
      %v1875 = vsub.f32 %v1668, %v1746
      %v1876 = vsub.f32 %v1669, %v1746
      %v1877 = vsub.f32 %v1670, %v1746
      %v1878 = vsub.f32 %v1671, %v1746
      %v1879 = vsub.f32 %v1672, %v1746
      %v1880 = vsub.f32 %v1673, %v1746
      %v1881 = vsub.f32 %v1674, %v1746
      %v1882 = vsub.f32 %v1675, %v1746
      %v1883 = vsub.f32 %v1676, %v1746
      %v1884 = vadd.f32 %v1851, 1e-05
      %v1885 = vrsqrt.pop %v1884
      %v1886 = vmul.f32 %v1852, %v1885
      %v1887 = vmul.f32 %v1853, %v1885
      %v1888 = vmul.f32 %v1854, %v1885
      %v1889 = vmul.f32 %v1855, %v1885
      %v1890 = vmul.f32 %v1856, %v1885
      %v1891 = vmul.f32 %v1857, %v1885
      %v1892 = vmul.f32 %v1858, %v1885
      %v1893 = vmul.f32 %v1859, %v1885
      %v1894 = vmul.f32 %v1860, %v1885
      %v1895 = vmul.f32 %v1861, %v1885
      %v1896 = vmul.f32 %v1862, %v1885
      %v1897 = vmul.f32 %v1863, %v1885
      %v1898 = vmul.f32 %v1864, %v1885
      %v1899 = vmul.f32 %v1865, %v1885
      %v1900 = vmul.f32 %v1866, %v1885
      %v1901 = vmul.f32 %v1867, %v1885
      %v1902 = vmul.f32 %v1868, %v1885
      %v1903 = vmul.f32 %v1869, %v1885
      %v1904 = vmul.f32 %v1870, %v1885
      %v1905 = vmul.f32 %v1871, %v1885
      %v1906 = vmul.f32 %v1872, %v1885
      %v1907 = vmul.f32 %v1873, %v1885
      %v1908 = vmul.f32 %v1874, %v1885
      %v1909 = vmul.f32 %v1875, %v1885
      %v1910 = vmul.f32 %v1876, %v1885
      %v1911 = vmul.f32 %v1877, %v1885
      %v1912 = vmul.f32 %v1878, %v1885
      %v1913 = vmul.f32 %v1879, %v1885
      %v1914 = vmul.f32 %v1880, %v1885
      %v1915 = vmul.f32 %v1881, %v1885
      %v1916 = vmul.f32 %v1882, %v1885
      %v1917 = vmul.f32 %v1883, %v1885
      %v1918 = vmax.f32 %v1886, 0.0
      %v1919 = vmax.f32 %v1887, 0.0
      %v1920 = vmax.f32 %v1888, 0.0
      %v1921 = vmax.f32 %v1889, 0.0
      %v1922 = vmax.f32 %v1890, 0.0
      %v1923 = vmax.f32 %v1891, 0.0
      %v1924 = vmax.f32 %v1892, 0.0
      %v1925 = vmax.f32 %v1893, 0.0
      %v1926 = vmax.f32 %v1894, 0.0
      %v1927 = vmax.f32 %v1895, 0.0
      %v1928 = vmax.f32 %v1896, 0.0
      %v1929 = vmax.f32 %v1897, 0.0
      %v1930 = vmax.f32 %v1898, 0.0
      %v1931 = vmax.f32 %v1899, 0.0
      %v1932 = vmax.f32 %v1900, 0.0
      %v1933 = vmax.f32 %v1901, 0.0
      %v1934 = vmax.f32 %v1902, 0.0
      %v1935 = vmax.f32 %v1903, 0.0
      %v1936 = vmax.f32 %v1904, 0.0
      %v1937 = vmax.f32 %v1905, 0.0
      %v1938 = vmax.f32 %v1906, 0.0
      %v1939 = vmax.f32 %v1907, 0.0
      %v1940 = vmax.f32 %v1908, 0.0
      %v1941 = vmax.f32 %v1909, 0.0
      %v1942 = vmax.f32 %v1910, 0.0
      %v1943 = vmax.f32 %v1911, 0.0
      %v1944 = vmax.f32 %v1912, 0.0
      %v1945 = vmax.f32 %v1913, 0.0
      %v1946 = vmax.f32 %v1914, 0.0
      %v1947 = vmax.f32 %v1915, 0.0
      %v1948 = vmax.f32 %v1916, 0.0
      %v1949 = vmax.f32 %v1917, 0.0
      %1982 = vrot.lane.b32.xlu0 %v1918, 8
      %v1983 = vpop.permute.xlu0 %1982
      %1984 = vrot.lane.b32.xlu0 %v1919, 8
      %v1985 = vpop.permute.xlu0 %1984
      %1986 = vrot.lane.b32.xlu0 %v1920, 8
      %v1987 = vpop.permute.xlu0 %1986
      %1988 = vrot.lane.b32.xlu0 %v1921, 8
      %v1989 = vpop.permute.xlu0 %1988
      %1990 = vrot.lane.b32.xlu0 %v1922, 8
      %v1991 = vpop.permute.xlu0 %1990
      %1992 = vrot.lane.b32.xlu0 %v1923, 8
      %v1993 = vpop.permute.xlu0 %1992
      %1994 = vrot.lane.b32.xlu0 %v1924, 8
      %v1995 = vpop.permute.xlu0 %1994
      %1996 = vrot.lane.b32.xlu0 %v1925, 8
      %v1997 = vpop.permute.xlu0 %1996
      %1998 = vrot.lane.b32.xlu0 %v1926, 8
      %v1999 = vpop.permute.xlu0 %1998
      %2000 = vrot.lane.b32.xlu0 %v1927, 8
      %v2001 = vpop.permute.xlu0 %2000
      %2002 = vrot.lane.b32.xlu0 %v1928, 8
      %v2003 = vpop.permute.xlu0 %2002
      %2004 = vrot.lane.b32.xlu0 %v1929, 8
      %v2005 = vpop.permute.xlu0 %2004
      %2006 = vrot.lane.b32.xlu0 %v1930, 8
      %v2007 = vpop.permute.xlu0 %2006
      %2008 = vrot.lane.b32.xlu0 %v1931, 8
      %v2009 = vpop.permute.xlu0 %2008
      %2010 = vrot.lane.b32.xlu0 %v1932, 8
      %v2011 = vpop.permute.xlu0 %2010
      %2012 = vrot.lane.b32.xlu0 %v1933, 8
      %v2013 = vpop.permute.xlu0 %2012
      %2014 = vrot.lane.b32.xlu0 %v1934, 8
      %v2015 = vpop.permute.xlu0 %2014
      %2016 = vrot.lane.b32.xlu0 %v1935, 8
      %v2017 = vpop.permute.xlu0 %2016
      %2018 = vrot.lane.b32.xlu0 %v1936, 8
      %v2019 = vpop.permute.xlu0 %2018
      %2020 = vrot.lane.b32.xlu0 %v1937, 8
      %v2021 = vpop.permute.xlu0 %2020
      %2022 = vrot.lane.b32.xlu0 %v1938, 8
      %v2023 = vpop.permute.xlu0 %2022
      %2024 = vrot.lane.b32.xlu0 %v1939, 8
      %v2025 = vpop.permute.xlu0 %2024
      %2026 = vrot.lane.b32.xlu0 %v1940, 8
      %v2027 = vpop.permute.xlu0 %2026
      %2028 = vrot.lane.b32.xlu0 %v1941, 8
      %v2029 = vpop.permute.xlu0 %2028
      %2030 = vrot.lane.b32.xlu0 %v1942, 8
      %v2031 = vpop.permute.xlu0 %2030
      %2032 = vrot.lane.b32.xlu0 %v1943, 8
      %v2033 = vpop.permute.xlu0 %2032
      %2034 = vrot.lane.b32.xlu0 %v1944, 8
      %v2035 = vpop.permute.xlu0 %2034
      %2036 = vrot.lane.b32.xlu0 %v1945, 8
      %v2037 = vpop.permute.xlu0 %2036
      %2038 = vrot.lane.b32.xlu0 %v1946, 8
      %v2039 = vpop.permute.xlu0 %2038
      %2040 = vrot.lane.b32.xlu0 %v1947, 8
      %v2041 = vpop.permute.xlu0 %2040
      %2042 = vrot.lane.b32.xlu0 %v1948, 8
      %v2043 = vpop.permute.xlu0 %2042
      %2044 = vrot.lane.b32.xlu0 %v1949, 8
      %v2045 = vpop.permute.xlu0 %2044
      %2078 = vst.msk [vmem:[%s331] sm:$0xff] %vm332, %v1983
      %2079 = vst.msk [vmem:[%s331 + $0x8] sm:$0xff] %vm332, %v1985
      %2080 = vst.msk [vmem:[%s331 + $0x10] sm:$0xff] %vm332, %v1987
      %2081 = vst.msk [vmem:[%s331 + $0x18] sm:$0xff] %vm332, %v1989
      %2082 = vst.msk [vmem:[%s331 + $0x20] sm:$0xff] %vm332, %v1991
      %2083 = vst.msk [vmem:[%s331 + $0x28] sm:$0xff] %vm332, %v1993
      %2084 = vst.msk [vmem:[%s331 + $0x30] sm:$0xff] %vm332, %v1995
      %2085 = vst.msk [vmem:[%s331 + $0x38] sm:$0xff] %vm332, %v1997
      %2086 = vst.msk [vmem:[%s331 + $0x40] sm:$0xff] %vm332, %v1999
      %2087 = vst.msk [vmem:[%s331 + $0x48] sm:$0xff] %vm332, %v2001
      %2088 = vst.msk [vmem:[%s331 + $0x50] sm:$0xff] %vm332, %v2003
      %2089 = vst.msk [vmem:[%s331 + $0x58] sm:$0xff] %vm332, %v2005
      %2090 = vst.msk [vmem:[%s331 + $0x60] sm:$0xff] %vm332, %v2007
      %2091 = vst.msk [vmem:[%s331 + $0x68] sm:$0xff] %vm332, %v2009
      %2092 = vst.msk [vmem:[%s331 + $0x70] sm:$0xff] %vm332, %v2011
      %2093 = vst.msk [vmem:[%s331 + $0x78] sm:$0xff] %vm332, %v2013
      %2094 = vst.msk [vmem:[%s331 + $0x80] sm:$0xff] %vm332, %v2015
      %2095 = vst.msk [vmem:[%s331 + $0x88] sm:$0xff] %vm332, %v2017
      %2096 = vst.msk [vmem:[%s331 + $0x90] sm:$0xff] %vm332, %v2019
      %2097 = vst.msk [vmem:[%s331 + $0x98] sm:$0xff] %vm332, %v2021
      %2098 = vst.msk [vmem:[%s331 + $0xa0] sm:$0xff] %vm332, %v2023
      %2099 = vst.msk [vmem:[%s331 + $0xa8] sm:$0xff] %vm332, %v2025
      %2100 = vst.msk [vmem:[%s331 + $0xb0] sm:$0xff] %vm332, %v2027
      %2101 = vst.msk [vmem:[%s331 + $0xb8] sm:$0xff] %vm332, %v2029
      %2102 = vst.msk [vmem:[%s331 + $0xc0] sm:$0xff] %vm332, %v2031
      %2103 = vst.msk [vmem:[%s331 + $0xc8] sm:$0xff] %vm332, %v2033
      %2104 = vst.msk [vmem:[%s331 + $0xd0] sm:$0xff] %vm332, %v2035
      %2105 = vst.msk [vmem:[%s331 + $0xd8] sm:$0xff] %vm332, %v2037
      %2106 = vst.msk [vmem:[%s331 + $0xe0] sm:$0xff] %vm332, %v2039
      %2107 = vst.msk [vmem:[%s331 + $0xe8] sm:$0xff] %vm332, %v2041
      %2108 = vst.msk [vmem:[%s331 + $0xf0] sm:$0xff] %vm332, %v2043
      %2109 = vst.msk [vmem:[%s331 + $0xf8] sm:$0xff] %vm332, %v2045
      %2110 = vst.msk [vmem:[%s331 + $0x1] sm:$0xff] %vm365, %v1918
      %2111 = vst.msk [vmem:[%s331 + $0x9] sm:$0x7f] %vm367, %v1919
      %2112 = vst.msk [vmem:[%s331 + $0x11] sm:$0xff] %vm365, %v1920
      %2113 = vst.msk [vmem:[%s331 + $0x19] sm:$0x7f] %vm367, %v1921
      %2114 = vst.msk [vmem:[%s331 + $0x21] sm:$0xff] %vm365, %v1922
      %2115 = vst.msk [vmem:[%s331 + $0x29] sm:$0x7f] %vm367, %v1923
      %2116 = vst.msk [vmem:[%s331 + $0x31] sm:$0xff] %vm365, %v1924
      %2117 = vst.msk [vmem:[%s331 + $0x39] sm:$0x7f] %vm367, %v1925
      %2118 = vst.msk [vmem:[%s331 + $0x41] sm:$0xff] %vm365, %v1926
      %2119 = vst.msk [vmem:[%s331 + $0x49] sm:$0x7f] %vm367, %v1927
      %2120 = vst.msk [vmem:[%s331 + $0x51] sm:$0xff] %vm365, %v1928
      %2121 = vst.msk [vmem:[%s331 + $0x59] sm:$0x7f] %vm367, %v1929
      %2122 = vst.msk [vmem:[%s331 + $0x61] sm:$0xff] %vm365, %v1930
      %2123 = vst.msk [vmem:[%s331 + $0x69] sm:$0x7f] %vm367, %v1931
      %2124 = vst.msk [vmem:[%s331 + $0x71] sm:$0xff] %vm365, %v1932
      %2125 = vst.msk [vmem:[%s331 + $0x79] sm:$0x7f] %vm367, %v1933
      %2126 = vst.msk [vmem:[%s331 + $0x81] sm:$0xff] %vm365, %v1934
      %2127 = vst.msk [vmem:[%s331 + $0x89] sm:$0x7f] %vm367, %v1935
      %2128 = vst.msk [vmem:[%s331 + $0x91] sm:$0xff] %vm365, %v1936
      %2129 = vst.msk [vmem:[%s331 + $0x99] sm:$0x7f] %vm367, %v1937
      %2130 = vst.msk [vmem:[%s331 + $0xa1] sm:$0xff] %vm365, %v1938
      %2131 = vst.msk [vmem:[%s331 + $0xa9] sm:$0x7f] %vm367, %v1939
      %2132 = vst.msk [vmem:[%s331 + $0xb1] sm:$0xff] %vm365, %v1940
      %2133 = vst.msk [vmem:[%s331 + $0xb9] sm:$0x7f] %vm367, %v1941
      %2134 = vst.msk [vmem:[%s331 + $0xc1] sm:$0xff] %vm365, %v1942
      %2135 = vst.msk [vmem:[%s331 + $0xc9] sm:$0x7f] %vm367, %v1943
      %2136 = vst.msk [vmem:[%s331 + $0xd1] sm:$0xff] %vm365, %v1944
      %2137 = vst.msk [vmem:[%s331 + $0xd9] sm:$0x7f] %vm367, %v1945
      %2138 = vst.msk [vmem:[%s331 + $0xe1] sm:$0xff] %vm365, %v1946
      %2139 = vst.msk [vmem:[%s331 + $0xe9] sm:$0x7f] %vm367, %v1947
      %2140 = vst.msk [vmem:[%s331 + $0xf1] sm:$0xff] %vm365, %v1948
      %2141 = vst.msk [vmem:[%s331 + $0xf9] sm:$0x7f] %vm367, %v1949
      %2142 = vst.msk [vmem:[%s331 - $0x1] sm:$0x2] %vm399, %v1918
      %2143 = vst.msk [vmem:[%s331 + $0xf] sm:$0x2] %vm399, %v1920
      %2144 = vst.msk [vmem:[%s331 + $0x1f] sm:$0x2] %vm399, %v1922
      %2145 = vst.msk [vmem:[%s331 + $0x2f] sm:$0x2] %vm399, %v1924
      %2146 = vst.msk [vmem:[%s331 + $0x3f] sm:$0x2] %vm399, %v1926
      %2147 = vst.msk [vmem:[%s331 + $0x4f] sm:$0x2] %vm399, %v1928
      %2148 = vst.msk [vmem:[%s331 + $0x5f] sm:$0x2] %vm399, %v1930
      %2149 = vst.msk [vmem:[%s331 + $0x6f] sm:$0x2] %vm399, %v1932
      %2150 = vst.msk [vmem:[%s331 + $0x7f] sm:$0x2] %vm399, %v1934
      %2151 = vst.msk [vmem:[%s331 + $0x8f] sm:$0x2] %vm399, %v1936
      %2152 = vst.msk [vmem:[%s331 + $0x9f] sm:$0x2] %vm399, %v1938
      %2153 = vst.msk [vmem:[%s331 + $0xaf] sm:$0x2] %vm399, %v1940
      %2154 = vst.msk [vmem:[%s331 + $0xbf] sm:$0x2] %vm399, %v1942
      %2155 = vst.msk [vmem:[%s331 + $0xcf] sm:$0x2] %vm399, %v1944
      %2156 = vst.msk [vmem:[%s331 + $0xdf] sm:$0x2] %vm399, %v1946
      %2157 = vst.msk [vmem:[%s331 + $0xef] sm:$0x2] %vm399, %v1948
      %2158 = vrot.lane.b32.xlu0 %v1918, 16
      %v2159 = vpop.permute.xlu0 %2158
      %2160 = vrot.lane.b32.xlu0 %v1919, 16
      %v2161 = vpop.permute.xlu0 %2160
      %2162 = vrot.lane.b32.xlu0 %v1920, 16
      %v2163 = vpop.permute.xlu0 %2162
      %2164 = vrot.lane.b32.xlu0 %v1921, 16
      %v2165 = vpop.permute.xlu0 %2164
      %2166 = vrot.lane.b32.xlu0 %v1922, 16
      %v2167 = vpop.permute.xlu0 %2166
      %2168 = vrot.lane.b32.xlu0 %v1923, 16
      %v2169 = vpop.permute.xlu0 %2168
      %2170 = vrot.lane.b32.xlu0 %v1924, 16
      %v2171 = vpop.permute.xlu0 %2170
      %2172 = vrot.lane.b32.xlu0 %v1925, 16
      %v2173 = vpop.permute.xlu0 %2172
      %2174 = vrot.lane.b32.xlu0 %v1926, 16
      %v2175 = vpop.permute.xlu0 %2174
      %2176 = vrot.lane.b32.xlu0 %v1927, 16
      %v2177 = vpop.permute.xlu0 %2176
      %2178 = vrot.lane.b32.xlu0 %v1928, 16
      %v2179 = vpop.permute.xlu0 %2178
      %2180 = vrot.lane.b32.xlu0 %v1929, 16
      %v2181 = vpop.permute.xlu0 %2180
      %2182 = vrot.lane.b32.xlu0 %v1930, 16
      %v2183 = vpop.permute.xlu0 %2182
      %2184 = vrot.lane.b32.xlu0 %v1931, 16
      %v2185 = vpop.permute.xlu0 %2184
      %2186 = vrot.lane.b32.xlu0 %v1932, 16
      %v2187 = vpop.permute.xlu0 %2186
      %2188 = vrot.lane.b32.xlu0 %v1933, 16
      %v2189 = vpop.permute.xlu0 %2188
      %2190 = vrot.lane.b32.xlu0 %v1934, 16
      %v2191 = vpop.permute.xlu0 %2190
      %2192 = vrot.lane.b32.xlu0 %v1935, 16
      %v2193 = vpop.permute.xlu0 %2192
      %2194 = vrot.lane.b32.xlu0 %v1936, 16
      %v2195 = vpop.permute.xlu0 %2194
      %2196 = vrot.lane.b32.xlu0 %v1937, 16
      %v2197 = vpop.permute.xlu0 %2196
      %2198 = vrot.lane.b32.xlu0 %v1938, 16
      %v2199 = vpop.permute.xlu0 %2198
      %2200 = vrot.lane.b32.xlu0 %v1939, 16
      %v2201 = vpop.permute.xlu0 %2200
      %2202 = vrot.lane.b32.xlu0 %v1940, 16
      %v2203 = vpop.permute.xlu0 %2202
      %2204 = vrot.lane.b32.xlu0 %v1941, 16
      %v2205 = vpop.permute.xlu0 %2204
      %2206 = vrot.lane.b32.xlu0 %v1942, 16
      %v2207 = vpop.permute.xlu0 %2206
      %2208 = vrot.lane.b32.xlu0 %v1943, 16
      %v2209 = vpop.permute.xlu0 %2208
      %2210 = vrot.lane.b32.xlu0 %v1944, 16
      %v2211 = vpop.permute.xlu0 %2210
      %2212 = vrot.lane.b32.xlu0 %v1945, 16
      %v2213 = vpop.permute.xlu0 %2212
      %2214 = vrot.lane.b32.xlu0 %v1946, 16
      %v2215 = vpop.permute.xlu0 %2214
      %2216 = vrot.lane.b32.xlu0 %v1947, 16
      %v2217 = vpop.permute.xlu0 %2216
      %2218 = vrot.lane.b32.xlu0 %v1948, 16
      %v2219 = vpop.permute.xlu0 %2218
      %2220 = vrot.lane.b32.xlu0 %v1949, 16
      %v2221 = vpop.permute.xlu0 %2220
      %2254 = vst.msk [vmem:[%s331 - $0x1] sm:$0xfe] %vm512, %v2159
      %2255 = vst.msk [vmem:[%s331 + $0x7] sm:$0xff] %vm514, %v2161
      %2256 = vst.msk [vmem:[%s331 + $0xf] sm:$0xfe] %vm512, %v2163
      %2257 = vst.msk [vmem:[%s331 + $0x17] sm:$0xff] %vm514, %v2165
      %2258 = vst.msk [vmem:[%s331 + $0x1f] sm:$0xfe] %vm512, %v2167
      %2259 = vst.msk [vmem:[%s331 + $0x27] sm:$0xff] %vm514, %v2169
      %2260 = vst.msk [vmem:[%s331 + $0x2f] sm:$0xfe] %vm512, %v2171
      %2261 = vst.msk [vmem:[%s331 + $0x37] sm:$0xff] %vm514, %v2173
      %2262 = vst.msk [vmem:[%s331 + $0x3f] sm:$0xfe] %vm512, %v2175
      %2263 = vst.msk [vmem:[%s331 + $0x47] sm:$0xff] %vm514, %v2177
      %2264 = vst.msk [vmem:[%s331 + $0x4f] sm:$0xfe] %vm512, %v2179
      %2265 = vst.msk [vmem:[%s331 + $0x57] sm:$0xff] %vm514, %v2181
      %2266 = vst.msk [vmem:[%s331 + $0x5f] sm:$0xfe] %vm512, %v2183
      %2267 = vst.msk [vmem:[%s331 + $0x67] sm:$0xff] %vm514, %v2185
      %2268 = vst.msk [vmem:[%s331 + $0x6f] sm:$0xfe] %vm512, %v2187
      %2269 = vst.msk [vmem:[%s331 + $0x77] sm:$0xff] %vm514, %v2189
      %2270 = vst.msk [vmem:[%s331 + $0x7f] sm:$0xfe] %vm512, %v2191
      %2271 = vst.msk [vmem:[%s331 + $0x87] sm:$0xff] %vm514, %v2193
      %2272 = vst.msk [vmem:[%s331 + $0x8f] sm:$0xfe] %vm512, %v2195
      %2273 = vst.msk [vmem:[%s331 + $0x97] sm:$0xff] %vm514, %v2197
      %2274 = vst.msk [vmem:[%s331 + $0x9f] sm:$0xfe] %vm512, %v2199
      %2275 = vst.msk [vmem:[%s331 + $0xa7] sm:$0xff] %vm514, %v2201
      %2276 = vst.msk [vmem:[%s331 + $0xaf] sm:$0xfe] %vm512, %v2203
      %2277 = vst.msk [vmem:[%s331 + $0xb7] sm:$0xff] %vm514, %v2205
      %2278 = vst.msk [vmem:[%s331 + $0xbf] sm:$0xfe] %vm512, %v2207
      %2279 = vst.msk [vmem:[%s331 + $0xc7] sm:$0xff] %vm514, %v2209
      %2280 = vst.msk [vmem:[%s331 + $0xcf] sm:$0xfe] %vm512, %v2211
      %2281 = vst.msk [vmem:[%s331 + $0xd7] sm:$0xff] %vm514, %v2213
      %2282 = vst.msk [vmem:[%s331 + $0xdf] sm:$0xfe] %vm512, %v2215
      %2283 = vst.msk [vmem:[%s331 + $0xe7] sm:$0xff] %vm514, %v2217
      %2284 = vst.msk [vmem:[%s331 + $0xef] sm:$0xfe] %vm512, %v2219
      %2285 = vst.msk [vmem:[%s331 + $0xf7] sm:$0xff] %vm514, %v2221
      %2286 = vst.msk [vmem:[%s331 + $0x9] sm:$0x40] %vm546, %v2161
      %2287 = vst.msk [vmem:[%s331 + $0x19] sm:$0x40] %vm546, %v2165
      %2288 = vst.msk [vmem:[%s331 + $0x29] sm:$0x40] %vm546, %v2169
      %2289 = vst.msk [vmem:[%s331 + $0x39] sm:$0x40] %vm546, %v2173
      %2290 = vst.msk [vmem:[%s331 + $0x49] sm:$0x40] %vm546, %v2177
      %2291 = vst.msk [vmem:[%s331 + $0x59] sm:$0x40] %vm546, %v2181
      %2292 = vst.msk [vmem:[%s331 + $0x69] sm:$0x40] %vm546, %v2185
      %2293 = vst.msk [vmem:[%s331 + $0x79] sm:$0x40] %vm546, %v2189
      %2294 = vst.msk [vmem:[%s331 + $0x89] sm:$0x40] %vm546, %v2193
      %2295 = vst.msk [vmem:[%s331 + $0x99] sm:$0x40] %vm546, %v2197
      %2296 = vst.msk [vmem:[%s331 + $0xa9] sm:$0x40] %vm546, %v2201
      %2297 = vst.msk [vmem:[%s331 + $0xb9] sm:$0x40] %vm546, %v2205
      %2298 = vst.msk [vmem:[%s331 + $0xc9] sm:$0x40] %vm546, %v2209
      %2299 = vst.msk [vmem:[%s331 + $0xd9] sm:$0x40] %vm546, %v2213
      %2300 = vst.msk [vmem:[%s331 + $0xe9] sm:$0x40] %vm546, %v2217
      %2301 = vst.msk [vmem:[%s331 + $0xf9] sm:$0x40] %vm546, %v2221
      %v2302 = vld [vmem:[%s563] sm:$0xff]
      %v2303 = vld [vmem:[%s563 + $0x8] sm:$0xff]
      %2304 = vst.msk [vmem:[#allocation2] sm:$0xff] %vm566, %v2302
      %2305 = vst.msk [vmem:[#allocation2 + $0x8] sm:$0xff] %vm566, %v2303
      %v2306 = vld [vmem:[%s569] sm:$0xff]
      %v2307 = vld [vmem:[%s569 + $0x8] sm:$0xff]
      %2308 = vst.msk [vmem:[%s572] sm:$0xff] %vm566, %v2306
      %2309 = vst.msk [vmem:[%s572 + $0x8] sm:$0xff] %vm566, %v2307
      %v2310 = vld [vmem:[#allocation2] sm:$0xff]
      %v2311 = vld [vmem:[#allocation2 + $0x8] sm:$0xff]
      %v2312 = vld [vmem:[#allocation2 + $0x10] sm:$0xff]
      %v2313 = vld [vmem:[#allocation2 + $0x18] sm:$0xff]
      %v2314 = vld [vmem:[#allocation2 + $0x20] sm:$0xff]
      %v2315 = vld [vmem:[#allocation2 + $0x28] sm:$0xff]
      %v2316 = vld [vmem:[#allocation2 + $0x30] sm:$0xff]
      %v2317 = vld [vmem:[#allocation2 + $0x38] sm:$0xff]
      %v2318 = vld [vmem:[#allocation2 + $0x40] sm:$0xff]
      %v2319 = vld [vmem:[#allocation2 + $0x48] sm:$0xff]
      %v2320 = vld [vmem:[#allocation2 + $0x50] sm:$0xff]
      %v2321 = vld [vmem:[#allocation2 + $0x58] sm:$0xff]
      %v2322 = vld [vmem:[#allocation2 + $0x60] sm:$0xff]
      %v2323 = vld [vmem:[#allocation2 + $0x68] sm:$0xff]
      %v2324 = vld [vmem:[#allocation2 + $0x70] sm:$0xff]
      %v2325 = vld [vmem:[#allocation2 + $0x78] sm:$0xff]
      %v2326 = vld [vmem:[#allocation2 + $0x80] sm:$0xff]
      %v2327 = vld [vmem:[#allocation2 + $0x88] sm:$0xff]
      %v2328 = vld [vmem:[#allocation2 + $0x90] sm:$0xff]
      %v2329 = vld [vmem:[#allocation2 + $0x98] sm:$0xff]
      %v2330 = vld [vmem:[#allocation2 + $0xa0] sm:$0xff]
      %v2331 = vld [vmem:[#allocation2 + $0xa8] sm:$0xff]
      %v2332 = vld [vmem:[#allocation2 + $0xb0] sm:$0xff]
      %v2333 = vld [vmem:[#allocation2 + $0xb8] sm:$0xff]
      %v2334 = vld [vmem:[#allocation2 + $0xc0] sm:$0xff]
      %v2335 = vld [vmem:[#allocation2 + $0xc8] sm:$0xff]
      %v2336 = vld [vmem:[#allocation2 + $0xd0] sm:$0xff]
      %v2337 = vld [vmem:[#allocation2 + $0xd8] sm:$0xff]
      %v2338 = vld [vmem:[#allocation2 + $0xe0] sm:$0xff]
      %v2339 = vld [vmem:[#allocation2 + $0xe8] sm:$0xff]
      %v2340 = vld [vmem:[#allocation2 + $0xf0] sm:$0xff]
      %v2341 = vld [vmem:[#allocation2 + $0xf8] sm:$0xff]
      %v2342 = vld [vmem:[%s2] sm:$0xff]
      %v2343 = vld [vmem:[%s2 + $0x8] sm:$0xff]
      %v2344 = vld [vmem:[%s2 + $0x10] sm:$0xff]
      %v2345 = vld [vmem:[%s331] sm:$0xff]
      %v2346 = vld [vmem:[%s331 + $0x8] sm:$0xff]
      %v2347 = vld [vmem:[%s331 + $0x10] sm:$0xff]
      %v2348 = vld [vmem:[%s331 + $0x18] sm:$0xff]
      %v2349 = vld [vmem:[%s331 + $0x20] sm:$0xff]
      %v2350 = vld [vmem:[%s331 + $0x28] sm:$0xff]
      %v2351 = vld [vmem:[%s331 + $0x30] sm:$0xff]
      %v2352 = vld [vmem:[%s331 + $0x38] sm:$0xff]
      %v2353 = vld [vmem:[%s331 + $0x40] sm:$0xff]
      %v2354 = vld [vmem:[%s331 + $0x48] sm:$0xff]
      %v2355 = vld [vmem:[%s331 + $0x50] sm:$0xff]
      %v2356 = vld [vmem:[%s331 + $0x58] sm:$0xff]
      %v2357 = vld [vmem:[%s331 + $0x60] sm:$0xff]
      %v2358 = vld [vmem:[%s331 + $0x68] sm:$0xff]
      %v2359 = vld [vmem:[%s331 + $0x70] sm:$0xff]
      %v2360 = vld [vmem:[%s331 + $0x78] sm:$0xff]
      %v2361 = vld [vmem:[%s331 + $0x80] sm:$0xff]
      %v2362 = vld [vmem:[%s331 + $0x88] sm:$0xff]
      %v2363 = vld [vmem:[%s331 + $0x90] sm:$0xff]
      %v2364 = vld [vmem:[%s331 + $0x98] sm:$0xff]
      %v2365 = vld [vmem:[%s331 + $0xa0] sm:$0xff]
      %v2366 = vld [vmem:[%s331 + $0xa8] sm:$0xff]
      %v2367 = vld [vmem:[%s331 + $0xb0] sm:$0xff]
      %v2368 = vld [vmem:[%s331 + $0xb8] sm:$0xff]
      %v2369 = vld [vmem:[%s331 + $0xc0] sm:$0xff]
      %v2370 = vld [vmem:[%s331 + $0xc8] sm:$0xff]
      %v2371 = vld [vmem:[%s331 + $0xd0] sm:$0xff]
      %v2372 = vld [vmem:[%s331 + $0xd8] sm:$0xff]
      %v2373 = vld [vmem:[%s331 + $0xe0] sm:$0xff]
      %v2374 = vld [vmem:[%s331 + $0xe8] sm:$0xff]
      %v2375 = vld [vmem:[%s331 + $0xf0] sm:$0xff]
      %v2376 = vld [vmem:[%s331 + $0xf8] sm:$0xff]
      %s2377 = scalar_lea.vmem %s2, 24
      %v2378 = vld [vmem:[%s2377] sm:$0xff]
      %v2379 = vld [vmem:[%s2377 + $0x8] sm:$0xff]
      %v2380 = vld [vmem:[%s2377 + $0x10] sm:$0xff]
      %v2382 = vsel %vm566, %v2345, 0
      %v2385 = vsel %vm566, %v2346, 0
      %v2388 = vsel %vm566, %v2347, 0
      %v2391 = vsel %vm566, %v2348, 0
      %v2394 = vsel %vm566, %v2349, 0
      %v2397 = vsel %vm566, %v2350, 0
      %v2400 = vsel %vm566, %v2351, 0
      %v2403 = vsel %vm566, %v2352, 0
      %v2406 = vsel %vm566, %v2353, 0
      %v2409 = vsel %vm566, %v2354, 0
      %v2412 = vsel %vm566, %v2355, 0
      %v2415 = vsel %vm566, %v2356, 0
      %v2418 = vsel %vm566, %v2357, 0
      %v2421 = vsel %vm566, %v2358, 0
      %v2424 = vsel %vm566, %v2359, 0
      %v2427 = vsel %vm566, %v2360, 0
      %v2430 = vsel %vm566, %v2361, 0
      %v2433 = vsel %vm566, %v2362, 0
      %v2436 = vsel %vm566, %v2363, 0
      %v2439 = vsel %vm566, %v2364, 0
      %v2442 = vsel %vm566, %v2365, 0
      %v2445 = vsel %vm566, %v2366, 0
      %v2448 = vsel %vm566, %v2367, 0
      %v2451 = vsel %vm566, %v2368, 0
      %v2454 = vsel %vm566, %v2369, 0
      %v2457 = vsel %vm566, %v2370, 0
      %v2460 = vsel %vm566, %v2371, 0
      %v2463 = vsel %vm566, %v2372, 0
      %v2466 = vsel %vm566, %v2373, 0
      %v2469 = vsel %vm566, %v2374, 0
      %v2472 = vsel %vm566, %v2375, 0
      %v2475 = vsel %vm566, %v2376, 0
      %2477 = vmatprep.subr.mxu0 0.0
      %2478 = vmatpush1.msra.mxu0 %v2378
      %2479 = vmatprep.subr.mxu0 0.0
      %2480 = vmatpush1.msra.mxu0 %v2379
      %2481 = vmatprep.subr.mxu0 0.0
      %2482 = vmatpush1.msra.mxu0 %v2380
      %2483 = vmatprep.subr.mxu0 0.0
      %2484 = vmatpush1.msra.mxu0 0.0
      %2485 = vmatprep.subr.mxu0 0.0
      %2486 = vmatpush1.msra.mxu0 0.0
      %2487 = vmatprep.subr.mxu0 0.0
      %2488 = vmatpush1.msra.mxu0 0.0
      %2489 = vmatprep.subr.mxu0 0.0
      %2490 = vmatpush1.msra.mxu0 0.0
      %2491 = vmatprep.subr.mxu0 0.0
      %2492 = vmatpush1.msra.mxu0 0.0
      %2493 = vmatprep.subr.mxu0 0.0
      %2494 = vmatpush1.msra.mxu0 0.0
      %2495 = vmatprep.subr.mxu0 0.0
      %2496 = vmatpush1.msra.mxu0 0.0
      %2497 = vmatprep.subr.mxu0 0.0
      %2498 = vmatpush1.msra.mxu0 0.0
      %2499 = vmatprep.subr.mxu0 0.0
      %2500 = vmatpush1.msra.mxu0 0.0
      %2501 = vmatprep.subr.mxu0 0.0
      %2502 = vmatpush1.msra.mxu0 0.0
      %2503 = vmatprep.subr.mxu0 0.0
      %2504 = vmatpush1.msra.mxu0 0.0
      %2505 = vmatprep.subr.mxu0 0.0
      %2506 = vmatpush1.msra.mxu0 0.0
      %2507 = vmatprep.subr.mxu0 0.0
      %2508 = vmatpush1.msra.mxu0 0.0
      %2509 = vmatprep.subr.mxu0 0.0
      %2510 = vmatpush1.msra.mxu0 0.0
      %2511 = vmatprep.subr.mxu0 0.0
      %2512 = vmatpush1.msra.mxu0 0.0
      %2513 = vmatprep.subr.mxu0 0.0
      %2514 = vmatpush1.msra.mxu0 0.0
      %2515 = vmatprep.subr.mxu0 0.0
      %2516 = vmatpush1.msra.mxu0 0.0
      %2517 = vmatprep.subr.mxu0 0.0
      %2518 = vmatpush1.msra.mxu0 0.0
      %2519 = vmatprep.subr.mxu0 0.0
      %2520 = vmatpush1.msra.mxu0 0.0
      %2521 = vmatprep.subr.mxu0 0.0
      %2522 = vmatpush1.msra.mxu0 0.0
      %2523 = vmatprep.subr.mxu0 0.0
      %2524 = vmatpush1.msra.mxu0 0.0
      %2525 = vmatprep.subr.mxu0 0.0
      %2526 = vmatpush1.msra.mxu0 0.0
      %2527 = vmatprep.subr.mxu0 0.0
      %2528 = vmatpush1.msra.mxu0 0.0
      %2529 = vmatprep.subr.mxu0 0.0
      %2530 = vmatpush1.msra.mxu0 0.0
      %2531 = vmatprep.subr.mxu0 0.0
      %2532 = vmatpush1.msra.mxu0 0.0
      %2533 = vmatprep.subr.mxu0 0.0
      %2534 = vmatpush1.msra.mxu0 0.0
      %2535 = vmatprep.subr.mxu0 0.0
      %2536 = vmatpush1.msra.mxu0 0.0
      %2537 = vmatprep.subr.mxu0 0.0
      %2538 = vmatpush1.msra.mxu0 0.0
      %2539 = vmatprep.subr.mxu0 0.0
      %2540 = vmatpush1.msra.mxu0 0.0
      %2541 = vmatprep.mubr.f32.mxu0 0.0
      %2542 = vmatmul.mubr.f32.gmra.mrb[0].mxu0 %v2382
      %v2543 = vpop.f32.mrb[0].mxu0
      %v2544 = vadd.f32 0.0, %v2543
      %v2545 = vpop.f32.mrb[0].mxu0
      %2546 = vmatprep.mubr.f32.mxu0 0.0
      %2547 = vmatmul.mubr.f32.gmra.mrb[0].mxu0 %v2385
      %v2548 = vpop.f32.mrb[0].mxu0
      %v2549 = vadd.f32 0.0, %v2548
      %v2550 = vpop.f32.mrb[0].mxu0
      %2551 = vmatprep.mubr.f32.mxu0 0.0
      %2552 = vmatmul.mubr.f32.gmra.mrb[0].mxu0 %v2388
      %v2553 = vpop.f32.mrb[0].mxu0
      %v2554 = vadd.f32 0.0, %v2553
      %v2555 = vpop.f32.mrb[0].mxu0
      %2556 = vmatprep.mubr.f32.mxu0 0.0
      %2557 = vmatmul.mubr.f32.gmra.mrb[0].mxu0 %v2391
      %v2558 = vpop.f32.mrb[0].mxu0
      %v2559 = vadd.f32 0.0, %v2558
      %v2560 = vpop.f32.mrb[0].mxu0
      %2561 = vmatprep.mubr.f32.mxu0 0.0
      %2562 = vmatmul.mubr.f32.gmra.mrb[0].mxu0 %v2394
      %v2563 = vpop.f32.mrb[0].mxu0
      %v2564 = vadd.f32 0.0, %v2563
      %v2565 = vpop.f32.mrb[0].mxu0
      %2566 = vmatprep.mubr.f32.mxu0 0.0
      %2567 = vmatmul.mubr.f32.gmra.mrb[0].mxu0 %v2397
      %v2568 = vpop.f32.mrb[0].mxu0
      %v2569 = vadd.f32 0.0, %v2568
      %v2570 = vpop.f32.mrb[0].mxu0
      %2571 = vmatprep.mubr.f32.mxu0 0.0
      %2572 = vmatmul.mubr.f32.gmra.mrb[0].mxu0 %v2400
      %v2573 = vpop.f32.mrb[0].mxu0
      %v2574 = vadd.f32 0.0, %v2573
      %v2575 = vpop.f32.mrb[0].mxu0
      %2576 = vmatprep.mubr.f32.mxu0 0.0
      %2577 = vmatmul.mubr.f32.gmra.mrb[0].mxu0 %v2403
      %v2578 = vpop.f32.mrb[0].mxu0
      %v2579 = vadd.f32 0.0, %v2578
      %v2580 = vpop.f32.mrb[0].mxu0
      %2581 = vmatprep.mubr.f32.mxu0 0.0
      %2582 = vmatmul.mubr.f32.gmra.mrb[0].mxu0 %v2406
      %v2583 = vpop.f32.mrb[0].mxu0
      %v2584 = vadd.f32 0.0, %v2583
      %v2585 = vpop.f32.mrb[0].mxu0
      %2586 = vmatprep.mubr.f32.mxu0 0.0
      %2587 = vmatmul.mubr.f32.gmra.mrb[0].mxu0 %v2409
      %v2588 = vpop.f32.mrb[0].mxu0
      %v2589 = vadd.f32 0.0, %v2588
      %v2590 = vpop.f32.mrb[0].mxu0
      %2591 = vmatprep.mubr.f32.mxu0 0.0
      %2592 = vmatmul.mubr.f32.gmra.mrb[0].mxu0 %v2412
      %v2593 = vpop.f32.mrb[0].mxu0
      %v2594 = vadd.f32 0.0, %v2593
      %v2595 = vpop.f32.mrb[0].mxu0
      %2596 = vmatprep.mubr.f32.mxu0 0.0
      %2597 = vmatmul.mubr.f32.gmra.mrb[0].mxu0 %v2415
      %v2598 = vpop.f32.mrb[0].mxu0
      %v2599 = vadd.f32 0.0, %v2598
      %v2600 = vpop.f32.mrb[0].mxu0
      %2601 = vmatprep.mubr.f32.mxu0 0.0
      %2602 = vmatmul.mubr.f32.gmra.mrb[0].mxu0 %v2418
      %v2603 = vpop.f32.mrb[0].mxu0
      %v2604 = vadd.f32 0.0, %v2603
      %v2605 = vpop.f32.mrb[0].mxu0
      %2606 = vmatprep.mubr.f32.mxu0 0.0
      %2607 = vmatmul.mubr.f32.gmra.mrb[0].mxu0 %v2421
      %v2608 = vpop.f32.mrb[0].mxu0
      %v2609 = vadd.f32 0.0, %v2608
      %v2610 = vpop.f32.mrb[0].mxu0
      %2611 = vmatprep.mubr.f32.mxu0 0.0
      %2612 = vmatmul.mubr.f32.gmra.mrb[0].mxu0 %v2424
      %v2613 = vpop.f32.mrb[0].mxu0
      %v2614 = vadd.f32 0.0, %v2613
      %v2615 = vpop.f32.mrb[0].mxu0
      %2616 = vmatprep.mubr.f32.mxu0 0.0
      %2617 = vmatmul.mubr.f32.gmra.mrb[0].mxu0 %v2427
      %v2618 = vpop.f32.mrb[0].mxu0
      %v2619 = vadd.f32 0.0, %v2618
      %v2620 = vpop.f32.mrb[0].mxu0
      %2621 = vmatprep.mubr.f32.mxu0 0.0
      %2622 = vmatmul.mubr.f32.gmra.mrb[0].mxu0 %v2430
      %v2623 = vpop.f32.mrb[0].mxu0
      %v2624 = vadd.f32 0.0, %v2623
      %v2625 = vpop.f32.mrb[0].mxu0
      %2626 = vmatprep.mubr.f32.mxu0 0.0
      %2627 = vmatmul.mubr.f32.gmra.mrb[0].mxu0 %v2433
      %v2628 = vpop.f32.mrb[0].mxu0
      %v2629 = vadd.f32 0.0, %v2628
      %v2630 = vpop.f32.mrb[0].mxu0
      %2631 = vmatprep.mubr.f32.mxu0 0.0
      %2632 = vmatmul.mubr.f32.gmra.mrb[0].mxu0 %v2436
      %v2633 = vpop.f32.mrb[0].mxu0
      %v2634 = vadd.f32 0.0, %v2633
      %v2635 = vpop.f32.mrb[0].mxu0
      %2636 = vmatprep.mubr.f32.mxu0 0.0
      %2637 = vmatmul.mubr.f32.gmra.mrb[0].mxu0 %v2439
      %v2638 = vpop.f32.mrb[0].mxu0
      %v2639 = vadd.f32 0.0, %v2638
      %v2640 = vpop.f32.mrb[0].mxu0
      %2641 = vmatprep.mubr.f32.mxu0 0.0
      %2642 = vmatmul.mubr.f32.gmra.mrb[0].mxu0 %v2442
      %v2643 = vpop.f32.mrb[0].mxu0
      %v2644 = vadd.f32 0.0, %v2643
      %v2645 = vpop.f32.mrb[0].mxu0
      %2646 = vmatprep.mubr.f32.mxu0 0.0
      %2647 = vmatmul.mubr.f32.gmra.mrb[0].mxu0 %v2445
      %v2648 = vpop.f32.mrb[0].mxu0
      %v2649 = vadd.f32 0.0, %v2648
      %v2650 = vpop.f32.mrb[0].mxu0
      %2651 = vmatprep.mubr.f32.mxu0 0.0
      %2652 = vmatmul.mubr.f32.gmra.mrb[0].mxu0 %v2448
      %v2653 = vpop.f32.mrb[0].mxu0
      %v2654 = vadd.f32 0.0, %v2653
      %v2655 = vpop.f32.mrb[0].mxu0
      %2656 = vmatprep.mubr.f32.mxu0 0.0
      %2657 = vmatmul.mubr.f32.gmra.mrb[0].mxu0 %v2451
      %v2658 = vpop.f32.mrb[0].mxu0
      %v2659 = vadd.f32 0.0, %v2658
      %v2660 = vpop.f32.mrb[0].mxu0
      %2661 = vmatprep.mubr.f32.mxu0 0.0
      %2662 = vmatmul.mubr.f32.gmra.mrb[0].mxu0 %v2454
      %v2663 = vpop.f32.mrb[0].mxu0
      %v2664 = vadd.f32 0.0, %v2663
      %v2665 = vpop.f32.mrb[0].mxu0
      %2666 = vmatprep.mubr.f32.mxu0 0.0
      %2667 = vmatmul.mubr.f32.gmra.mrb[0].mxu0 %v2457
      %v2668 = vpop.f32.mrb[0].mxu0
      %v2669 = vadd.f32 0.0, %v2668
      %v2670 = vpop.f32.mrb[0].mxu0
      %2671 = vmatprep.mubr.f32.mxu0 0.0
      %2672 = vmatmul.mubr.f32.gmra.mrb[0].mxu0 %v2460
      %v2673 = vpop.f32.mrb[0].mxu0
      %v2674 = vadd.f32 0.0, %v2673
      %v2675 = vpop.f32.mrb[0].mxu0
      %2676 = vmatprep.mubr.f32.mxu0 0.0
      %2677 = vmatmul.mubr.f32.gmra.mrb[0].mxu0 %v2463
      %v2678 = vpop.f32.mrb[0].mxu0
      %v2679 = vadd.f32 0.0, %v2678
      %v2680 = vpop.f32.mrb[0].mxu0
      %2681 = vmatprep.mubr.f32.mxu0 0.0
      %2682 = vmatmul.mubr.f32.gmra.mrb[0].mxu0 %v2466
      %v2683 = vpop.f32.mrb[0].mxu0
      %v2684 = vadd.f32 0.0, %v2683
      %v2685 = vpop.f32.mrb[0].mxu0
      %2686 = vmatprep.mubr.f32.mxu0 0.0
      %2687 = vmatmul.mubr.f32.gmra.mrb[0].mxu0 %v2469
      %v2688 = vpop.f32.mrb[0].mxu0
      %v2689 = vadd.f32 0.0, %v2688
      %v2690 = vpop.f32.mrb[0].mxu0
      %2691 = vmatprep.mubr.f32.mxu0 0.0
      %2692 = vmatmul.mubr.f32.gmra.mrb[0].mxu0 %v2472
      %v2693 = vpop.f32.mrb[0].mxu0
      %v2694 = vadd.f32 0.0, %v2693
      %v2695 = vpop.f32.mrb[0].mxu0
      %2696 = vmatprep.mubr.f32.mxu0 0.0
      %2697 = vmatmul.mubr.f32.gmra.mrb[0].mxu0 %v2475
      %v2698 = vpop.f32.mrb[0].mxu0
      %v2699 = vadd.f32 0.0, %v2698
      %v2700 = vpop.f32.mrb[0].mxu0
      %2701 = vdwg.mxu0
      %v2703 = vsel %vm566, %v2310, 0
      %v2706 = vsel %vm566, %v2311, 0
      %v2709 = vsel %vm566, %v2312, 0
      %v2712 = vsel %vm566, %v2313, 0
      %v2715 = vsel %vm566, %v2314, 0
      %v2718 = vsel %vm566, %v2315, 0
      %v2721 = vsel %vm566, %v2316, 0
      %v2724 = vsel %vm566, %v2317, 0
      %v2727 = vsel %vm566, %v2318, 0
      %v2730 = vsel %vm566, %v2319, 0
      %v2733 = vsel %vm566, %v2320, 0
      %v2736 = vsel %vm566, %v2321, 0
      %v2739 = vsel %vm566, %v2322, 0
      %v2742 = vsel %vm566, %v2323, 0
      %v2745 = vsel %vm566, %v2324, 0
      %v2748 = vsel %vm566, %v2325, 0
      %v2751 = vsel %vm566, %v2326, 0
      %v2754 = vsel %vm566, %v2327, 0
      %v2757 = vsel %vm566, %v2328, 0
      %v2760 = vsel %vm566, %v2329, 0
      %v2763 = vsel %vm566, %v2330, 0
      %v2766 = vsel %vm566, %v2331, 0
      %v2769 = vsel %vm566, %v2332, 0
      %v2772 = vsel %vm566, %v2333, 0
      %v2775 = vsel %vm566, %v2334, 0
      %v2778 = vsel %vm566, %v2335, 0
      %v2781 = vsel %vm566, %v2336, 0
      %v2784 = vsel %vm566, %v2337, 0
      %v2787 = vsel %vm566, %v2338, 0
      %v2790 = vsel %vm566, %v2339, 0
      %v2793 = vsel %vm566, %v2340, 0
      %v2796 = vsel %vm566, %v2341, 0
      %2798 = vmatprep.subr.mxu0 0.0
      %2799 = vmatpush1.msra.mxu0 %v2342
      %2800 = vmatprep.subr.mxu0 0.0
      %2801 = vmatpush1.msra.mxu0 %v2343
      %2802 = vmatprep.subr.mxu0 0.0
      %2803 = vmatpush1.msra.mxu0 %v2344
      %2804 = vmatprep.subr.mxu0 0.0
      %2805 = vmatpush1.msra.mxu0 0.0
      %2806 = vmatprep.subr.mxu0 0.0
      %2807 = vmatpush1.msra.mxu0 0.0
      %2808 = vmatprep.subr.mxu0 0.0
      %2809 = vmatpush1.msra.mxu0 0.0
      %2810 = vmatprep.subr.mxu0 0.0
      %2811 = vmatpush1.msra.mxu0 0.0
      %2812 = vmatprep.subr.mxu0 0.0
      %2813 = vmatpush1.msra.mxu0 0.0
      %2814 = vmatprep.subr.mxu0 0.0
      %2815 = vmatpush1.msra.mxu0 0.0
      %2816 = vmatprep.subr.mxu0 0.0
      %2817 = vmatpush1.msra.mxu0 0.0
      %2818 = vmatprep.subr.mxu0 0.0
      %2819 = vmatpush1.msra.mxu0 0.0
      %2820 = vmatprep.subr.mxu0 0.0
      %2821 = vmatpush1.msra.mxu0 0.0
      %2822 = vmatprep.subr.mxu0 0.0
      %2823 = vmatpush1.msra.mxu0 0.0
      %2824 = vmatprep.subr.mxu0 0.0
      %2825 = vmatpush1.msra.mxu0 0.0
      %2826 = vmatprep.subr.mxu0 0.0
      %2827 = vmatpush1.msra.mxu0 0.0
      %2828 = vmatprep.subr.mxu0 0.0
      %2829 = vmatpush1.msra.mxu0 0.0
      %2830 = vmatprep.subr.mxu0 0.0
      %2831 = vmatpush1.msra.mxu0 0.0
      %2832 = vmatprep.subr.mxu0 0.0
      %2833 = vmatpush1.msra.mxu0 0.0
      %2834 = vmatprep.subr.mxu0 0.0
      %2835 = vmatpush1.msra.mxu0 0.0
      %2836 = vmatprep.subr.mxu0 0.0
      %2837 = vmatpush1.msra.mxu0 0.0
      %2838 = vmatprep.subr.mxu0 0.0
      %2839 = vmatpush1.msra.mxu0 0.0
      %2840 = vmatprep.subr.mxu0 0.0
      %2841 = vmatpush1.msra.mxu0 0.0
      %2842 = vmatprep.subr.mxu0 0.0
      %2843 = vmatpush1.msra.mxu0 0.0
      %2844 = vmatprep.subr.mxu0 0.0
      %2845 = vmatpush1.msra.mxu0 0.0
      %2846 = vmatprep.subr.mxu0 0.0
      %2847 = vmatpush1.msra.mxu0 0.0
      %2848 = vmatprep.subr.mxu0 0.0
      %2849 = vmatpush1.msra.mxu0 0.0
      %2850 = vmatprep.subr.mxu0 0.0
      %2851 = vmatpush1.msra.mxu0 0.0
      %2852 = vmatprep.subr.mxu0 0.0
      %2853 = vmatpush1.msra.mxu0 0.0
      %2854 = vmatprep.subr.mxu0 0.0
      %2855 = vmatpush1.msra.mxu0 0.0
      %2856 = vmatprep.subr.mxu0 0.0
      %2857 = vmatpush1.msra.mxu0 0.0
      %2858 = vmatprep.subr.mxu0 0.0
      %2859 = vmatpush1.msra.mxu0 0.0
      %2860 = vmatprep.subr.mxu0 0.0
      %2861 = vmatpush1.msra.mxu0 0.0
      %2862 = vmatprep.mubr.f32.mxu0 0.0
      %2863 = vmatmul.mubr.f32.gmra.mrb[0].mxu0 %v2703
      %v2864 = vpop.f32.mrb[0].mxu0
      %v2865 = vadd.f32 %v2544, %v2864
      %v2866 = vpop.f32.mrb[0].mxu0
      %2867 = vmatprep.mubr.f32.mxu0 0.0
      %2868 = vmatmul.mubr.f32.gmra.mrb[0].mxu0 %v2706
      %v2869 = vpop.f32.mrb[0].mxu0
      %v2870 = vadd.f32 %v2549, %v2869
      %v2871 = vpop.f32.mrb[0].mxu0
      %2872 = vmatprep.mubr.f32.mxu0 0.0
      %2873 = vmatmul.mubr.f32.gmra.mrb[0].mxu0 %v2709
      %v2874 = vpop.f32.mrb[0].mxu0
      %v2875 = vadd.f32 %v2554, %v2874
      %v2876 = vpop.f32.mrb[0].mxu0
      %2877 = vmatprep.mubr.f32.mxu0 0.0
      %2878 = vmatmul.mubr.f32.gmra.mrb[0].mxu0 %v2712
      %v2879 = vpop.f32.mrb[0].mxu0
      %v2880 = vadd.f32 %v2559, %v2879
      %v2881 = vpop.f32.mrb[0].mxu0
      %2882 = vmatprep.mubr.f32.mxu0 0.0
      %2883 = vmatmul.mubr.f32.gmra.mrb[0].mxu0 %v2715
      %v2884 = vpop.f32.mrb[0].mxu0
      %v2885 = vadd.f32 %v2564, %v2884
      %v2886 = vpop.f32.mrb[0].mxu0
      %2887 = vmatprep.mubr.f32.mxu0 0.0
      %2888 = vmatmul.mubr.f32.gmra.mrb[0].mxu0 %v2718
      %v2889 = vpop.f32.mrb[0].mxu0
      %v2890 = vadd.f32 %v2569, %v2889
      %v2891 = vpop.f32.mrb[0].mxu0
      %2892 = vmatprep.mubr.f32.mxu0 0.0
      %2893 = vmatmul.mubr.f32.gmra.mrb[0].mxu0 %v2721
      %v2894 = vpop.f32.mrb[0].mxu0
      %v2895 = vadd.f32 %v2574, %v2894
      %v2896 = vpop.f32.mrb[0].mxu0
      %2897 = vmatprep.mubr.f32.mxu0 0.0
      %2898 = vmatmul.mubr.f32.gmra.mrb[0].mxu0 %v2724
      %v2899 = vpop.f32.mrb[0].mxu0
      %v2900 = vadd.f32 %v2579, %v2899
      %v2901 = vpop.f32.mrb[0].mxu0
      %2902 = vmatprep.mubr.f32.mxu0 0.0
      %2903 = vmatmul.mubr.f32.gmra.mrb[0].mxu0 %v2727
      %v2904 = vpop.f32.mrb[0].mxu0
      %v2905 = vadd.f32 %v2584, %v2904
      %v2906 = vpop.f32.mrb[0].mxu0
      %2907 = vmatprep.mubr.f32.mxu0 0.0
      %2908 = vmatmul.mubr.f32.gmra.mrb[0].mxu0 %v2730
      %v2909 = vpop.f32.mrb[0].mxu0
      %v2910 = vadd.f32 %v2589, %v2909
      %v2911 = vpop.f32.mrb[0].mxu0
      %2912 = vmatprep.mubr.f32.mxu0 0.0
      %2913 = vmatmul.mubr.f32.gmra.mrb[0].mxu0 %v2733
      %v2914 = vpop.f32.mrb[0].mxu0
      %v2915 = vadd.f32 %v2594, %v2914
      %v2916 = vpop.f32.mrb[0].mxu0
      %2917 = vmatprep.mubr.f32.mxu0 0.0
      %2918 = vmatmul.mubr.f32.gmra.mrb[0].mxu0 %v2736
      %v2919 = vpop.f32.mrb[0].mxu0
      %v2920 = vadd.f32 %v2599, %v2919
      %v2921 = vpop.f32.mrb[0].mxu0
      %2922 = vmatprep.mubr.f32.mxu0 0.0
      %2923 = vmatmul.mubr.f32.gmra.mrb[0].mxu0 %v2739
      %v2924 = vpop.f32.mrb[0].mxu0
      %v2925 = vadd.f32 %v2604, %v2924
      %v2926 = vpop.f32.mrb[0].mxu0
      %2927 = vmatprep.mubr.f32.mxu0 0.0
      %2928 = vmatmul.mubr.f32.gmra.mrb[0].mxu0 %v2742
      %v2929 = vpop.f32.mrb[0].mxu0
      %v2930 = vadd.f32 %v2609, %v2929
      %v2931 = vpop.f32.mrb[0].mxu0
      %2932 = vmatprep.mubr.f32.mxu0 0.0
      %2933 = vmatmul.mubr.f32.gmra.mrb[0].mxu0 %v2745
      %v2934 = vpop.f32.mrb[0].mxu0
      %v2935 = vadd.f32 %v2614, %v2934
      %v2936 = vpop.f32.mrb[0].mxu0
      %2937 = vmatprep.mubr.f32.mxu0 0.0
      %2938 = vmatmul.mubr.f32.gmra.mrb[0].mxu0 %v2748
      %v2939 = vpop.f32.mrb[0].mxu0
      %v2940 = vadd.f32 %v2619, %v2939
      %v2941 = vpop.f32.mrb[0].mxu0
      %2942 = vmatprep.mubr.f32.mxu0 0.0
      %2943 = vmatmul.mubr.f32.gmra.mrb[0].mxu0 %v2751
      %v2944 = vpop.f32.mrb[0].mxu0
      %v2945 = vadd.f32 %v2624, %v2944
      %v2946 = vpop.f32.mrb[0].mxu0
      %2947 = vmatprep.mubr.f32.mxu0 0.0
      %2948 = vmatmul.mubr.f32.gmra.mrb[0].mxu0 %v2754
      %v2949 = vpop.f32.mrb[0].mxu0
      %v2950 = vadd.f32 %v2629, %v2949
      %v2951 = vpop.f32.mrb[0].mxu0
      %2952 = vmatprep.mubr.f32.mxu0 0.0
      %2953 = vmatmul.mubr.f32.gmra.mrb[0].mxu0 %v2757
      %v2954 = vpop.f32.mrb[0].mxu0
      %v2955 = vadd.f32 %v2634, %v2954
      %v2956 = vpop.f32.mrb[0].mxu0
      %2957 = vmatprep.mubr.f32.mxu0 0.0
      %2958 = vmatmul.mubr.f32.gmra.mrb[0].mxu0 %v2760
      %v2959 = vpop.f32.mrb[0].mxu0
      %v2960 = vadd.f32 %v2639, %v2959
      %v2961 = vpop.f32.mrb[0].mxu0
      %2962 = vmatprep.mubr.f32.mxu0 0.0
      %2963 = vmatmul.mubr.f32.gmra.mrb[0].mxu0 %v2763
      %v2964 = vpop.f32.mrb[0].mxu0
      %v2965 = vadd.f32 %v2644, %v2964
      %v2966 = vpop.f32.mrb[0].mxu0
      %2967 = vmatprep.mubr.f32.mxu0 0.0
      %2968 = vmatmul.mubr.f32.gmra.mrb[0].mxu0 %v2766
      %v2969 = vpop.f32.mrb[0].mxu0
      %v2970 = vadd.f32 %v2649, %v2969
      %v2971 = vpop.f32.mrb[0].mxu0
      %2972 = vmatprep.mubr.f32.mxu0 0.0
      %2973 = vmatmul.mubr.f32.gmra.mrb[0].mxu0 %v2769
      %v2974 = vpop.f32.mrb[0].mxu0
      %v2975 = vadd.f32 %v2654, %v2974
      %v2976 = vpop.f32.mrb[0].mxu0
      %2977 = vmatprep.mubr.f32.mxu0 0.0
      %2978 = vmatmul.mubr.f32.gmra.mrb[0].mxu0 %v2772
      %v2979 = vpop.f32.mrb[0].mxu0
      %v2980 = vadd.f32 %v2659, %v2979
      %v2981 = vpop.f32.mrb[0].mxu0
      %2982 = vmatprep.mubr.f32.mxu0 0.0
      %2983 = vmatmul.mubr.f32.gmra.mrb[0].mxu0 %v2775
      %v2984 = vpop.f32.mrb[0].mxu0
      %v2985 = vadd.f32 %v2664, %v2984
      %v2986 = vpop.f32.mrb[0].mxu0
      %2987 = vmatprep.mubr.f32.mxu0 0.0
      %2988 = vmatmul.mubr.f32.gmra.mrb[0].mxu0 %v2778
      %v2989 = vpop.f32.mrb[0].mxu0
      %v2990 = vadd.f32 %v2669, %v2989
      %v2991 = vpop.f32.mrb[0].mxu0
      %2992 = vmatprep.mubr.f32.mxu0 0.0
      %2993 = vmatmul.mubr.f32.gmra.mrb[0].mxu0 %v2781
      %v2994 = vpop.f32.mrb[0].mxu0
      %v2995 = vadd.f32 %v2674, %v2994
      %v2996 = vpop.f32.mrb[0].mxu0
      %2997 = vmatprep.mubr.f32.mxu0 0.0
      %2998 = vmatmul.mubr.f32.gmra.mrb[0].mxu0 %v2784
      %v2999 = vpop.f32.mrb[0].mxu0
      %v3000 = vadd.f32 %v2679, %v2999
      %v3001 = vpop.f32.mrb[0].mxu0
      %3002 = vmatprep.mubr.f32.mxu0 0.0
      %3003 = vmatmul.mubr.f32.gmra.mrb[0].mxu0 %v2787
      %v3004 = vpop.f32.mrb[0].mxu0
      %v3005 = vadd.f32 %v2684, %v3004
      %v3006 = vpop.f32.mrb[0].mxu0
      %3007 = vmatprep.mubr.f32.mxu0 0.0
      %3008 = vmatmul.mubr.f32.gmra.mrb[0].mxu0 %v2790
      %v3009 = vpop.f32.mrb[0].mxu0
      %v3010 = vadd.f32 %v2689, %v3009
      %v3011 = vpop.f32.mrb[0].mxu0
      %3012 = vmatprep.mubr.f32.mxu0 0.0
      %3013 = vmatmul.mubr.f32.gmra.mrb[0].mxu0 %v2793
      %v3014 = vpop.f32.mrb[0].mxu0
      %v3015 = vadd.f32 %v2694, %v3014
      %v3016 = vpop.f32.mrb[0].mxu0
      %3017 = vmatprep.mubr.f32.mxu0 0.0
      %3018 = vmatmul.mubr.f32.gmra.mrb[0].mxu0 %v2796
      %v3019 = vpop.f32.mrb[0].mxu0
      %v3020 = vadd.f32 %v2699, %v3019
      %v3021 = vpop.f32.mrb[0].mxu0
      %3022 = vdwg.mxu0
      %v3023 = vld [vmem:[%s563] sm:$0xff]
      %v3024 = vld [vmem:[%s563 + $0x8] sm:$0xff]
      %v3025 = vld [vmem:[%s563 + $0x10] sm:$0xff]
      %v3026 = vld [vmem:[%s563 + $0x18] sm:$0xff]
      %v3027 = vld [vmem:[%s563 + $0x20] sm:$0xff]
      %v3028 = vld [vmem:[%s563 + $0x28] sm:$0xff]
      %v3029 = vld [vmem:[%s563 + $0x30] sm:$0xff]
      %v3030 = vld [vmem:[%s563 + $0x38] sm:$0xff]
      %v3031 = vld [vmem:[%s563 + $0x40] sm:$0xff]
      %v3032 = vld [vmem:[%s563 + $0x48] sm:$0xff]
      %v3033 = vld [vmem:[%s563 + $0x50] sm:$0xff]
      %v3034 = vld [vmem:[%s563 + $0x58] sm:$0xff]
      %v3035 = vld [vmem:[%s563 + $0x60] sm:$0xff]
      %v3036 = vld [vmem:[%s563 + $0x68] sm:$0xff]
      %v3037 = vld [vmem:[%s563 + $0x70] sm:$0xff]
      %v3038 = vld [vmem:[%s563 + $0x78] sm:$0xff]
      %v3039 = vld [vmem:[%s563 + $0x80] sm:$0xff]
      %v3040 = vld [vmem:[%s563 + $0x88] sm:$0xff]
      %v3041 = vld [vmem:[%s563 + $0x90] sm:$0xff]
      %v3042 = vld [vmem:[%s563 + $0x98] sm:$0xff]
      %v3043 = vld [vmem:[%s563 + $0xa0] sm:$0xff]
      %v3044 = vld [vmem:[%s563 + $0xa8] sm:$0xff]
      %v3045 = vld [vmem:[%s563 + $0xb0] sm:$0xff]
      %v3046 = vld [vmem:[%s563 + $0xb8] sm:$0xff]
      %v3047 = vld [vmem:[%s563 + $0xc0] sm:$0xff]
      %v3048 = vld [vmem:[%s563 + $0xc8] sm:$0xff]
      %v3049 = vld [vmem:[%s563 + $0xd0] sm:$0xff]
      %v3050 = vld [vmem:[%s563 + $0xd8] sm:$0xff]
      %v3051 = vld [vmem:[%s563 + $0xe0] sm:$0xff]
      %v3052 = vld [vmem:[%s563 + $0xe8] sm:$0xff]
      %v3053 = vld [vmem:[%s563 + $0xf0] sm:$0xff]
      %v3054 = vld [vmem:[%s563 + $0xf8] sm:$0xff]
      %s3055 = scalar_lea.vmem %s2, 48
      %v3056 = vld [vmem:[%s3055] sm:$0xff]
      %v3057 = vld [vmem:[%s3055 + $0x8] sm:$0xff]
      %v3058 = vld [vmem:[%s3055 + $0x10] sm:$0xff]
      %v3060 = vsel %vm566, %v3023, 0
      %v3063 = vsel %vm566, %v3024, 0
      %v3066 = vsel %vm566, %v3025, 0
      %v3069 = vsel %vm566, %v3026, 0
      %v3072 = vsel %vm566, %v3027, 0
      %v3075 = vsel %vm566, %v3028, 0
      %v3078 = vsel %vm566, %v3029, 0
      %v3081 = vsel %vm566, %v3030, 0
      %v3084 = vsel %vm566, %v3031, 0
      %v3087 = vsel %vm566, %v3032, 0
      %v3090 = vsel %vm566, %v3033, 0
      %v3093 = vsel %vm566, %v3034, 0
      %v3096 = vsel %vm566, %v3035, 0
      %v3099 = vsel %vm566, %v3036, 0
      %v3102 = vsel %vm566, %v3037, 0
      %v3105 = vsel %vm566, %v3038, 0
      %v3108 = vsel %vm566, %v3039, 0
      %v3111 = vsel %vm566, %v3040, 0
      %v3114 = vsel %vm566, %v3041, 0
      %v3117 = vsel %vm566, %v3042, 0
      %v3120 = vsel %vm566, %v3043, 0
      %v3123 = vsel %vm566, %v3044, 0
      %v3126 = vsel %vm566, %v3045, 0
      %v3129 = vsel %vm566, %v3046, 0
      %v3132 = vsel %vm566, %v3047, 0
      %v3135 = vsel %vm566, %v3048, 0
      %v3138 = vsel %vm566, %v3049, 0
      %v3141 = vsel %vm566, %v3050, 0
      %v3144 = vsel %vm566, %v3051, 0
      %v3147 = vsel %vm566, %v3052, 0
      %v3150 = vsel %vm566, %v3053, 0
      %v3153 = vsel %vm566, %v3054, 0
      %3155 = vmatprep.subr.mxu0 0.0
      %3156 = vmatpush1.msra.mxu0 %v3056
      %3157 = vmatprep.subr.mxu0 0.0
      %3158 = vmatpush1.msra.mxu0 %v3057
      %3159 = vmatprep.subr.mxu0 0.0
      %3160 = vmatpush1.msra.mxu0 %v3058
      %3161 = vmatprep.subr.mxu0 0.0
      %3162 = vmatpush1.msra.mxu0 0.0
      %3163 = vmatprep.subr.mxu0 0.0
      %3164 = vmatpush1.msra.mxu0 0.0
      %3165 = vmatprep.subr.mxu0 0.0
      %3166 = vmatpush1.msra.mxu0 0.0
      %3167 = vmatprep.subr.mxu0 0.0
      %3168 = vmatpush1.msra.mxu0 0.0
      %3169 = vmatprep.subr.mxu0 0.0
      %3170 = vmatpush1.msra.mxu0 0.0
      %3171 = vmatprep.subr.mxu0 0.0
      %3172 = vmatpush1.msra.mxu0 0.0
      %3173 = vmatprep.subr.mxu0 0.0
      %3174 = vmatpush1.msra.mxu0 0.0
      %3175 = vmatprep.subr.mxu0 0.0
      %3176 = vmatpush1.msra.mxu0 0.0
      %3177 = vmatprep.subr.mxu0 0.0
      %3178 = vmatpush1.msra.mxu0 0.0
      %3179 = vmatprep.subr.mxu0 0.0
      %3180 = vmatpush1.msra.mxu0 0.0
      %3181 = vmatprep.subr.mxu0 0.0
      %3182 = vmatpush1.msra.mxu0 0.0
      %3183 = vmatprep.subr.mxu0 0.0
      %3184 = vmatpush1.msra.mxu0 0.0
      %3185 = vmatprep.subr.mxu0 0.0
      %3186 = vmatpush1.msra.mxu0 0.0
      %3187 = vmatprep.subr.mxu0 0.0
      %3188 = vmatpush1.msra.mxu0 0.0
      %3189 = vmatprep.subr.mxu0 0.0
      %3190 = vmatpush1.msra.mxu0 0.0
      %3191 = vmatprep.subr.mxu0 0.0
      %3192 = vmatpush1.msra.mxu0 0.0
      %3193 = vmatprep.subr.mxu0 0.0
      %3194 = vmatpush1.msra.mxu0 0.0
      %3195 = vmatprep.subr.mxu0 0.0
      %3196 = vmatpush1.msra.mxu0 0.0
      %3197 = vmatprep.subr.mxu0 0.0
      %3198 = vmatpush1.msra.mxu0 0.0
      %3199 = vmatprep.subr.mxu0 0.0
      %3200 = vmatpush1.msra.mxu0 0.0
      %3201 = vmatprep.subr.mxu0 0.0
      %3202 = vmatpush1.msra.mxu0 0.0
      %3203 = vmatprep.subr.mxu0 0.0
      %3204 = vmatpush1.msra.mxu0 0.0
      %3205 = vmatprep.subr.mxu0 0.0
      %3206 = vmatpush1.msra.mxu0 0.0
      %3207 = vmatprep.subr.mxu0 0.0
      %3208 = vmatpush1.msra.mxu0 0.0
      %3209 = vmatprep.subr.mxu0 0.0
      %3210 = vmatpush1.msra.mxu0 0.0
      %3211 = vmatprep.subr.mxu0 0.0
      %3212 = vmatpush1.msra.mxu0 0.0
      %3213 = vmatprep.subr.mxu0 0.0
      %3214 = vmatpush1.msra.mxu0 0.0
      %3215 = vmatprep.subr.mxu0 0.0
      %3216 = vmatpush1.msra.mxu0 0.0
      %3217 = vmatprep.subr.mxu0 0.0
      %3218 = vmatpush1.msra.mxu0 0.0
      %3219 = vmatprep.mubr.f32.mxu0 0.0
      %3220 = vmatmul.mubr.f32.gmra.mrb[0].mxu0 %v3060
      %v3221 = vpop.f32.mrb[0].mxu0
      %v3222 = vadd.f32 0.0, %v3221
      %v3223 = vpop.f32.mrb[0].mxu0
      %3224 = vmatprep.mubr.f32.mxu0 0.0
      %3225 = vmatmul.mubr.f32.gmra.mrb[0].mxu0 %v3063
      %v3226 = vpop.f32.mrb[0].mxu0
      %v3227 = vadd.f32 0.0, %v3226
      %v3228 = vpop.f32.mrb[0].mxu0
      %3229 = vmatprep.mubr.f32.mxu0 0.0
      %3230 = vmatmul.mubr.f32.gmra.mrb[0].mxu0 %v3066
      %v3231 = vpop.f32.mrb[0].mxu0
      %v3232 = vadd.f32 0.0, %v3231
      %v3233 = vpop.f32.mrb[0].mxu0
      %3234 = vmatprep.mubr.f32.mxu0 0.0
      %3235 = vmatmul.mubr.f32.gmra.mrb[0].mxu0 %v3069
      %v3236 = vpop.f32.mrb[0].mxu0
      %v3237 = vadd.f32 0.0, %v3236
      %v3238 = vpop.f32.mrb[0].mxu0
      %3239 = vmatprep.mubr.f32.mxu0 0.0
      %3240 = vmatmul.mubr.f32.gmra.mrb[0].mxu0 %v3072
      %v3241 = vpop.f32.mrb[0].mxu0
      %v3242 = vadd.f32 0.0, %v3241
      %v3243 = vpop.f32.mrb[0].mxu0
      %3244 = vmatprep.mubr.f32.mxu0 0.0
      %3245 = vmatmul.mubr.f32.gmra.mrb[0].mxu0 %v3075
      %v3246 = vpop.f32.mrb[0].mxu0
      %v3247 = vadd.f32 0.0, %v3246
      %v3248 = vpop.f32.mrb[0].mxu0
      %3249 = vmatprep.mubr.f32.mxu0 0.0
      %3250 = vmatmul.mubr.f32.gmra.mrb[0].mxu0 %v3078
      %v3251 = vpop.f32.mrb[0].mxu0
      %v3252 = vadd.f32 0.0, %v3251
      %v3253 = vpop.f32.mrb[0].mxu0
      %3254 = vmatprep.mubr.f32.mxu0 0.0
      %3255 = vmatmul.mubr.f32.gmra.mrb[0].mxu0 %v3081
      %v3256 = vpop.f32.mrb[0].mxu0
      %v3257 = vadd.f32 0.0, %v3256
      %v3258 = vpop.f32.mrb[0].mxu0
      %3259 = vmatprep.mubr.f32.mxu0 0.0
      %3260 = vmatmul.mubr.f32.gmra.mrb[0].mxu0 %v3084
      %v3261 = vpop.f32.mrb[0].mxu0
      %v3262 = vadd.f32 0.0, %v3261
      %v3263 = vpop.f32.mrb[0].mxu0
      %3264 = vmatprep.mubr.f32.mxu0 0.0
      %3265 = vmatmul.mubr.f32.gmra.mrb[0].mxu0 %v3087
      %v3266 = vpop.f32.mrb[0].mxu0
      %v3267 = vadd.f32 0.0, %v3266
      %v3268 = vpop.f32.mrb[0].mxu0
      %3269 = vmatprep.mubr.f32.mxu0 0.0
      %3270 = vmatmul.mubr.f32.gmra.mrb[0].mxu0 %v3090
      %v3271 = vpop.f32.mrb[0].mxu0
      %v3272 = vadd.f32 0.0, %v3271
      %v3273 = vpop.f32.mrb[0].mxu0
      %3274 = vmatprep.mubr.f32.mxu0 0.0
      %3275 = vmatmul.mubr.f32.gmra.mrb[0].mxu0 %v3093
      %v3276 = vpop.f32.mrb[0].mxu0
      %v3277 = vadd.f32 0.0, %v3276
      %v3278 = vpop.f32.mrb[0].mxu0
      %3279 = vmatprep.mubr.f32.mxu0 0.0
      %3280 = vmatmul.mubr.f32.gmra.mrb[0].mxu0 %v3096
      %v3281 = vpop.f32.mrb[0].mxu0
      %v3282 = vadd.f32 0.0, %v3281
      %v3283 = vpop.f32.mrb[0].mxu0
      %3284 = vmatprep.mubr.f32.mxu0 0.0
      %3285 = vmatmul.mubr.f32.gmra.mrb[0].mxu0 %v3099
      %v3286 = vpop.f32.mrb[0].mxu0
      %v3287 = vadd.f32 0.0, %v3286
      %v3288 = vpop.f32.mrb[0].mxu0
      %3289 = vmatprep.mubr.f32.mxu0 0.0
      %3290 = vmatmul.mubr.f32.gmra.mrb[0].mxu0 %v3102
      %v3291 = vpop.f32.mrb[0].mxu0
      %v3292 = vadd.f32 0.0, %v3291
      %v3293 = vpop.f32.mrb[0].mxu0
      %3294 = vmatprep.mubr.f32.mxu0 0.0
      %3295 = vmatmul.mubr.f32.gmra.mrb[0].mxu0 %v3105
      %v3296 = vpop.f32.mrb[0].mxu0
      %v3297 = vadd.f32 0.0, %v3296
      %v3298 = vpop.f32.mrb[0].mxu0
      %3299 = vmatprep.mubr.f32.mxu0 0.0
      %3300 = vmatmul.mubr.f32.gmra.mrb[0].mxu0 %v3108
      %v3301 = vpop.f32.mrb[0].mxu0
      %v3302 = vadd.f32 0.0, %v3301
      %v3303 = vpop.f32.mrb[0].mxu0
      %3304 = vmatprep.mubr.f32.mxu0 0.0
      %3305 = vmatmul.mubr.f32.gmra.mrb[0].mxu0 %v3111
      %v3306 = vpop.f32.mrb[0].mxu0
      %v3307 = vadd.f32 0.0, %v3306
      %v3308 = vpop.f32.mrb[0].mxu0
      %3309 = vmatprep.mubr.f32.mxu0 0.0
      %3310 = vmatmul.mubr.f32.gmra.mrb[0].mxu0 %v3114
      %v3311 = vpop.f32.mrb[0].mxu0
      %v3312 = vadd.f32 0.0, %v3311
      %v3313 = vpop.f32.mrb[0].mxu0
      %3314 = vmatprep.mubr.f32.mxu0 0.0
      %3315 = vmatmul.mubr.f32.gmra.mrb[0].mxu0 %v3117
      %v3316 = vpop.f32.mrb[0].mxu0
      %v3317 = vadd.f32 0.0, %v3316
      %v3318 = vpop.f32.mrb[0].mxu0
      %3319 = vmatprep.mubr.f32.mxu0 0.0
      %3320 = vmatmul.mubr.f32.gmra.mrb[0].mxu0 %v3120
      %v3321 = vpop.f32.mrb[0].mxu0
      %v3322 = vadd.f32 0.0, %v3321
      %v3323 = vpop.f32.mrb[0].mxu0
      %3324 = vmatprep.mubr.f32.mxu0 0.0
      %3325 = vmatmul.mubr.f32.gmra.mrb[0].mxu0 %v3123
      %v3326 = vpop.f32.mrb[0].mxu0
      %v3327 = vadd.f32 0.0, %v3326
      %v3328 = vpop.f32.mrb[0].mxu0
      %3329 = vmatprep.mubr.f32.mxu0 0.0
      %3330 = vmatmul.mubr.f32.gmra.mrb[0].mxu0 %v3126
      %v3331 = vpop.f32.mrb[0].mxu0
      %v3332 = vadd.f32 0.0, %v3331
      %v3333 = vpop.f32.mrb[0].mxu0
      %3334 = vmatprep.mubr.f32.mxu0 0.0
      %3335 = vmatmul.mubr.f32.gmra.mrb[0].mxu0 %v3129
      %v3336 = vpop.f32.mrb[0].mxu0
      %v3337 = vadd.f32 0.0, %v3336
      %v3338 = vpop.f32.mrb[0].mxu0
      %3339 = vmatprep.mubr.f32.mxu0 0.0
      %3340 = vmatmul.mubr.f32.gmra.mrb[0].mxu0 %v3132
      %v3341 = vpop.f32.mrb[0].mxu0
      %v3342 = vadd.f32 0.0, %v3341
      %v3343 = vpop.f32.mrb[0].mxu0
      %3344 = vmatprep.mubr.f32.mxu0 0.0
      %3345 = vmatmul.mubr.f32.gmra.mrb[0].mxu0 %v3135
      %v3346 = vpop.f32.mrb[0].mxu0
      %v3347 = vadd.f32 0.0, %v3346
      %v3348 = vpop.f32.mrb[0].mxu0
      %3349 = vmatprep.mubr.f32.mxu0 0.0
      %3350 = vmatmul.mubr.f32.gmra.mrb[0].mxu0 %v3138
      %v3351 = vpop.f32.mrb[0].mxu0
      %v3352 = vadd.f32 0.0, %v3351
      %v3353 = vpop.f32.mrb[0].mxu0
      %3354 = vmatprep.mubr.f32.mxu0 0.0
      %3355 = vmatmul.mubr.f32.gmra.mrb[0].mxu0 %v3141
      %v3356 = vpop.f32.mrb[0].mxu0
      %v3357 = vadd.f32 0.0, %v3356
      %v3358 = vpop.f32.mrb[0].mxu0
      %3359 = vmatprep.mubr.f32.mxu0 0.0
      %3360 = vmatmul.mubr.f32.gmra.mrb[0].mxu0 %v3144
      %v3361 = vpop.f32.mrb[0].mxu0
      %v3362 = vadd.f32 0.0, %v3361
      %v3363 = vpop.f32.mrb[0].mxu0
      %3364 = vmatprep.mubr.f32.mxu0 0.0
      %3365 = vmatmul.mubr.f32.gmra.mrb[0].mxu0 %v3147
      %v3366 = vpop.f32.mrb[0].mxu0
      %v3367 = vadd.f32 0.0, %v3366
      %v3368 = vpop.f32.mrb[0].mxu0
      %3369 = vmatprep.mubr.f32.mxu0 0.0
      %3370 = vmatmul.mubr.f32.gmra.mrb[0].mxu0 %v3150
      %v3371 = vpop.f32.mrb[0].mxu0
      %v3372 = vadd.f32 0.0, %v3371
      %v3373 = vpop.f32.mrb[0].mxu0
      %3374 = vmatprep.mubr.f32.mxu0 0.0
      %3375 = vmatmul.mubr.f32.gmra.mrb[0].mxu0 %v3153
      %v3376 = vpop.f32.mrb[0].mxu0
      %v3377 = vadd.f32 0.0, %v3376
      %v3378 = vpop.f32.mrb[0].mxu0
      %3379 = vdwg.mxu0
      %v3380 = vadd.f32 %v2865, %v3222
      %v3381 = vadd.f32 %v2870, %v3227
      %v3382 = vadd.f32 %v2875, %v3232
      %v3383 = vadd.f32 %v2880, %v3237
      %v3384 = vadd.f32 %v2885, %v3242
      %v3385 = vadd.f32 %v2890, %v3247
      %v3386 = vadd.f32 %v2895, %v3252
      %v3387 = vadd.f32 %v2900, %v3257
      %v3388 = vadd.f32 %v2905, %v3262
      %v3389 = vadd.f32 %v2910, %v3267
      %v3390 = vadd.f32 %v2915, %v3272
      %v3391 = vadd.f32 %v2920, %v3277
      %v3392 = vadd.f32 %v2925, %v3282
      %v3393 = vadd.f32 %v2930, %v3287
      %v3394 = vadd.f32 %v2935, %v3292
      %v3395 = vadd.f32 %v2940, %v3297
      %v3396 = vadd.f32 %v2945, %v3302
      %v3397 = vadd.f32 %v2950, %v3307
      %v3398 = vadd.f32 %v2955, %v3312
      %v3399 = vadd.f32 %v2960, %v3317
      %v3400 = vadd.f32 %v2965, %v3322
      %v3401 = vadd.f32 %v2970, %v3327
      %v3402 = vadd.f32 %v2975, %v3332
      %v3403 = vadd.f32 %v2980, %v3337
      %v3404 = vadd.f32 %v2985, %v3342
      %v3405 = vadd.f32 %v2990, %v3347
      %v3406 = vadd.f32 %v2995, %v3352
      %v3407 = vadd.f32 %v3000, %v3357
      %v3408 = vadd.f32 %v3005, %v3362
      %v3409 = vadd.f32 %v3010, %v3367
      %v3410 = vadd.f32 %v3015, %v3372
      %v3411 = vadd.f32 %v3020, %v3377
      %v3412 = vsel %vm365, %v3380, 0.0
      %v3413 = vsel %vm365, %v3381, 0.0
      %v3414 = vadd.f32 %v3412, %v3413
      %v3415 = vsel %vm365, %v3382, 0.0
      %v3416 = vadd.f32 %v3414, %v3415
      %v3417 = vsel %vm365, %v3383, 0.0
      %v3418 = vadd.f32 %v3416, %v3417
      %v3419 = vsel %vm365, %v3384, 0.0
      %v3420 = vadd.f32 %v3418, %v3419
      %v3421 = vsel %vm365, %v3385, 0.0
      %v3422 = vadd.f32 %v3420, %v3421
      %v3423 = vsel %vm365, %v3386, 0.0
      %v3424 = vadd.f32 %v3422, %v3423
      %v3425 = vsel %vm365, %v3387, 0.0
      %v3426 = vadd.f32 %v3424, %v3425
      %v3427 = vsel %vm365, %v3388, 0.0
      %v3428 = vadd.f32 %v3426, %v3427
      %v3429 = vsel %vm365, %v3389, 0.0
      %v3430 = vadd.f32 %v3428, %v3429
      %v3431 = vsel %vm365, %v3390, 0.0
      %v3432 = vadd.f32 %v3430, %v3431
      %v3433 = vsel %vm365, %v3391, 0.0
      %v3434 = vadd.f32 %v3432, %v3433
      %v3435 = vsel %vm365, %v3392, 0.0
      %v3436 = vadd.f32 %v3434, %v3435
      %v3437 = vsel %vm365, %v3393, 0.0
      %v3438 = vadd.f32 %v3436, %v3437
      %v3439 = vsel %vm365, %v3394, 0.0
      %v3440 = vadd.f32 %v3438, %v3439
      %v3441 = vsel %vm365, %v3395, 0.0
      %v3442 = vadd.f32 %v3440, %v3441
      %v3443 = vsel %vm365, %v3396, 0.0
      %v3444 = vadd.f32 %v3442, %v3443
      %v3445 = vsel %vm365, %v3397, 0.0
      %v3446 = vadd.f32 %v3444, %v3445
      %v3447 = vsel %vm365, %v3398, 0.0
      %v3448 = vadd.f32 %v3446, %v3447
      %v3449 = vsel %vm365, %v3399, 0.0
      %v3450 = vadd.f32 %v3448, %v3449
      %v3451 = vsel %vm365, %v3400, 0.0
      %v3452 = vadd.f32 %v3450, %v3451
      %v3453 = vsel %vm365, %v3401, 0.0
      %v3454 = vadd.f32 %v3452, %v3453
      %v3455 = vsel %vm365, %v3402, 0.0
      %v3456 = vadd.f32 %v3454, %v3455
      %v3457 = vsel %vm365, %v3403, 0.0
      %v3458 = vadd.f32 %v3456, %v3457
      %v3459 = vsel %vm365, %v3404, 0.0
      %v3460 = vadd.f32 %v3458, %v3459
      %v3461 = vsel %vm365, %v3405, 0.0
      %v3462 = vadd.f32 %v3460, %v3461
      %v3463 = vsel %vm365, %v3406, 0.0
      %v3464 = vadd.f32 %v3462, %v3463
      %v3465 = vsel %vm365, %v3407, 0.0
      %v3466 = vadd.f32 %v3464, %v3465
      %v3467 = vsel %vm365, %v3408, 0.0
      %v3468 = vadd.f32 %v3466, %v3467
      %v3469 = vsel %vm365, %v3409, 0.0
      %v3470 = vadd.f32 %v3468, %v3469
      %v3471 = vsel %vm365, %v3410, 0.0
      %v3472 = vadd.f32 %v3470, %v3471
      %v3473 = vsel %vm365, %v3411, 0.0
      %v3474 = vadd.f32 %v3472, %v3473
      %v3475 = vrot.slane %v3474, 4
      %v3476 = vadd.f32 %v3474, %v3475
      %v3477 = vrot.slane %v3476, 2
      %v3478 = vadd.f32 %v3476, %v3477
      %v3479 = vrot.slane %v3478, 1
      %v3480 = vadd.f32 %v3478, %v3479
      %v3481 = vmul.f32 %v3480, 0.00390625
      %v3482 = vmul.f32 %v3380, %v3380
      %v3483 = vmul.f32 %v3381, %v3381
      %v3484 = vmul.f32 %v3382, %v3382
      %v3485 = vmul.f32 %v3383, %v3383
      %v3486 = vmul.f32 %v3384, %v3384
      %v3487 = vmul.f32 %v3385, %v3385
      %v3488 = vmul.f32 %v3386, %v3386
      %v3489 = vmul.f32 %v3387, %v3387
      %v3490 = vmul.f32 %v3388, %v3388
      %v3491 = vmul.f32 %v3389, %v3389
      %v3492 = vmul.f32 %v3390, %v3390
      %v3493 = vmul.f32 %v3391, %v3391
      %v3494 = vmul.f32 %v3392, %v3392
      %v3495 = vmul.f32 %v3393, %v3393
      %v3496 = vmul.f32 %v3394, %v3394
      %v3497 = vmul.f32 %v3395, %v3395
      %v3498 = vmul.f32 %v3396, %v3396
      %v3499 = vmul.f32 %v3397, %v3397
      %v3500 = vmul.f32 %v3398, %v3398
      %v3501 = vmul.f32 %v3399, %v3399
      %v3502 = vmul.f32 %v3400, %v3400
      %v3503 = vmul.f32 %v3401, %v3401
      %v3504 = vmul.f32 %v3402, %v3402
      %v3505 = vmul.f32 %v3403, %v3403
      %v3506 = vmul.f32 %v3404, %v3404
      %v3507 = vmul.f32 %v3405, %v3405
      %v3508 = vmul.f32 %v3406, %v3406
      %v3509 = vmul.f32 %v3407, %v3407
      %v3510 = vmul.f32 %v3408, %v3408
      %v3511 = vmul.f32 %v3409, %v3409
      %v3512 = vmul.f32 %v3410, %v3410
      %v3513 = vmul.f32 %v3411, %v3411
      %v3514 = vsel %vm365, %v3482, 0.0
      %v3515 = vsel %vm365, %v3483, 0.0
      %v3516 = vadd.f32 %v3514, %v3515
      %v3517 = vsel %vm365, %v3484, 0.0
      %v3518 = vadd.f32 %v3516, %v3517
      %v3519 = vsel %vm365, %v3485, 0.0
      %v3520 = vadd.f32 %v3518, %v3519
      %v3521 = vsel %vm365, %v3486, 0.0
      %v3522 = vadd.f32 %v3520, %v3521
      %v3523 = vsel %vm365, %v3487, 0.0
      %v3524 = vadd.f32 %v3522, %v3523
      %v3525 = vsel %vm365, %v3488, 0.0
      %v3526 = vadd.f32 %v3524, %v3525
      %v3527 = vsel %vm365, %v3489, 0.0
      %v3528 = vadd.f32 %v3526, %v3527
      %v3529 = vsel %vm365, %v3490, 0.0
      %v3530 = vadd.f32 %v3528, %v3529
      %v3531 = vsel %vm365, %v3491, 0.0
      %v3532 = vadd.f32 %v3530, %v3531
      %v3533 = vsel %vm365, %v3492, 0.0
      %v3534 = vadd.f32 %v3532, %v3533
      %v3535 = vsel %vm365, %v3493, 0.0
      %v3536 = vadd.f32 %v3534, %v3535
      %v3537 = vsel %vm365, %v3494, 0.0
      %v3538 = vadd.f32 %v3536, %v3537
      %v3539 = vsel %vm365, %v3495, 0.0
      %v3540 = vadd.f32 %v3538, %v3539
      %v3541 = vsel %vm365, %v3496, 0.0
      %v3542 = vadd.f32 %v3540, %v3541
      %v3543 = vsel %vm365, %v3497, 0.0
      %v3544 = vadd.f32 %v3542, %v3543
      %v3545 = vsel %vm365, %v3498, 0.0
      %v3546 = vadd.f32 %v3544, %v3545
      %v3547 = vsel %vm365, %v3499, 0.0
      %v3548 = vadd.f32 %v3546, %v3547
      %v3549 = vsel %vm365, %v3500, 0.0
      %v3550 = vadd.f32 %v3548, %v3549
      %v3551 = vsel %vm365, %v3501, 0.0
      %v3552 = vadd.f32 %v3550, %v3551
      %v3553 = vsel %vm365, %v3502, 0.0
      %v3554 = vadd.f32 %v3552, %v3553
      %v3555 = vsel %vm365, %v3503, 0.0
      %v3556 = vadd.f32 %v3554, %v3555
      %v3557 = vsel %vm365, %v3504, 0.0
      %v3558 = vadd.f32 %v3556, %v3557
      %v3559 = vsel %vm365, %v3505, 0.0
      %v3560 = vadd.f32 %v3558, %v3559
      %v3561 = vsel %vm365, %v3506, 0.0
      %v3562 = vadd.f32 %v3560, %v3561
      %v3563 = vsel %vm365, %v3507, 0.0
      %v3564 = vadd.f32 %v3562, %v3563
      %v3565 = vsel %vm365, %v3508, 0.0
      %v3566 = vadd.f32 %v3564, %v3565
      %v3567 = vsel %vm365, %v3509, 0.0
      %v3568 = vadd.f32 %v3566, %v3567
      %v3569 = vsel %vm365, %v3510, 0.0
      %v3570 = vadd.f32 %v3568, %v3569
      %v3571 = vsel %vm365, %v3511, 0.0
      %v3572 = vadd.f32 %v3570, %v3571
      %v3573 = vsel %vm365, %v3512, 0.0
      %v3574 = vadd.f32 %v3572, %v3573
      %v3575 = vsel %vm365, %v3513, 0.0
      %v3576 = vadd.f32 %v3574, %v3575
      %v3577 = vrot.slane %v3576, 4
      %v3578 = vadd.f32 %v3576, %v3577
      %v3579 = vrot.slane %v3578, 2
      %v3580 = vadd.f32 %v3578, %v3579
      %v3581 = vrot.slane %v3580, 1
      %v3582 = vadd.f32 %v3580, %v3581
      %v3583 = vmul.f32 %v3582, 0.00390625
      %v3584 = vmul.f32 %v3481, %v3481
      %v3585 = vsub.f32 %v3583, %v3584
      %v3586 = vmax.f32 %v3585, 0.0
      %v3587 = vsub.f32 %v3380, %v3481
      %v3588 = vsub.f32 %v3381, %v3481
      %v3589 = vsub.f32 %v3382, %v3481
      %v3590 = vsub.f32 %v3383, %v3481
      %v3591 = vsub.f32 %v3384, %v3481
      %v3592 = vsub.f32 %v3385, %v3481
      %v3593 = vsub.f32 %v3386, %v3481
      %v3594 = vsub.f32 %v3387, %v3481
      %v3595 = vsub.f32 %v3388, %v3481
      %v3596 = vsub.f32 %v3389, %v3481
      %v3597 = vsub.f32 %v3390, %v3481
      %v3598 = vsub.f32 %v3391, %v3481
      %v3599 = vsub.f32 %v3392, %v3481
      %v3600 = vsub.f32 %v3393, %v3481
      %v3601 = vsub.f32 %v3394, %v3481
      %v3602 = vsub.f32 %v3395, %v3481
      %v3603 = vsub.f32 %v3396, %v3481
      %v3604 = vsub.f32 %v3397, %v3481
      %v3605 = vsub.f32 %v3398, %v3481
      %v3606 = vsub.f32 %v3399, %v3481
      %v3607 = vsub.f32 %v3400, %v3481
      %v3608 = vsub.f32 %v3401, %v3481
      %v3609 = vsub.f32 %v3402, %v3481
      %v3610 = vsub.f32 %v3403, %v3481
      %v3611 = vsub.f32 %v3404, %v3481
      %v3612 = vsub.f32 %v3405, %v3481
      %v3613 = vsub.f32 %v3406, %v3481
      %v3614 = vsub.f32 %v3407, %v3481
      %v3615 = vsub.f32 %v3408, %v3481
      %v3616 = vsub.f32 %v3409, %v3481
      %v3617 = vsub.f32 %v3410, %v3481
      %v3618 = vsub.f32 %v3411, %v3481
      %v3619 = vadd.f32 %v3586, 1e-05
      %v3620 = vrsqrt.pop %v3619
      %v3621 = vmul.f32 %v3587, %v3620
      %v3622 = vmul.f32 %v3588, %v3620
      %v3623 = vmul.f32 %v3589, %v3620
      %v3624 = vmul.f32 %v3590, %v3620
      %v3625 = vmul.f32 %v3591, %v3620
      %v3626 = vmul.f32 %v3592, %v3620
      %v3627 = vmul.f32 %v3593, %v3620
      %v3628 = vmul.f32 %v3594, %v3620
      %v3629 = vmul.f32 %v3595, %v3620
      %v3630 = vmul.f32 %v3596, %v3620
      %v3631 = vmul.f32 %v3597, %v3620
      %v3632 = vmul.f32 %v3598, %v3620
      %v3633 = vmul.f32 %v3599, %v3620
      %v3634 = vmul.f32 %v3600, %v3620
      %v3635 = vmul.f32 %v3601, %v3620
      %v3636 = vmul.f32 %v3602, %v3620
      %v3637 = vmul.f32 %v3603, %v3620
      %v3638 = vmul.f32 %v3604, %v3620
      %v3639 = vmul.f32 %v3605, %v3620
      %v3640 = vmul.f32 %v3606, %v3620
      %v3641 = vmul.f32 %v3607, %v3620
      %v3642 = vmul.f32 %v3608, %v3620
      %v3643 = vmul.f32 %v3609, %v3620
      %v3644 = vmul.f32 %v3610, %v3620
      %v3645 = vmul.f32 %v3611, %v3620
      %v3646 = vmul.f32 %v3612, %v3620
      %v3647 = vmul.f32 %v3613, %v3620
      %v3648 = vmul.f32 %v3614, %v3620
      %v3649 = vmul.f32 %v3615, %v3620
      %v3650 = vmul.f32 %v3616, %v3620
      %v3651 = vmul.f32 %v3617, %v3620
      %v3652 = vmul.f32 %v3618, %v3620
      %v3653 = vld [vmem:[%s165] sm:$0xff]
      %v3654 = vld [vmem:[%s165 + $0x8] sm:$0xff]
      %v3655 = vld [vmem:[%s165 + $0x10] sm:$0xff]
      %v3656 = vld [vmem:[%s165 + $0x18] sm:$0xff]
      %v3657 = vld [vmem:[%s165 + $0x20] sm:$0xff]
      %v3658 = vld [vmem:[%s165 + $0x28] sm:$0xff]
      %v3659 = vld [vmem:[%s165 + $0x30] sm:$0xff]
      %v3660 = vld [vmem:[%s165 + $0x38] sm:$0xff]
      %v3661 = vld [vmem:[%s165 + $0x40] sm:$0xff]
      %v3662 = vld [vmem:[%s165 + $0x48] sm:$0xff]
      %v3663 = vld [vmem:[%s165 + $0x50] sm:$0xff]
      %v3664 = vld [vmem:[%s165 + $0x58] sm:$0xff]
      %v3665 = vld [vmem:[%s165 + $0x60] sm:$0xff]
      %v3666 = vld [vmem:[%s165 + $0x68] sm:$0xff]
      %v3667 = vld [vmem:[%s165 + $0x70] sm:$0xff]
      %v3668 = vld [vmem:[%s165 + $0x78] sm:$0xff]
      %v3669 = vld [vmem:[%s165 + $0x80] sm:$0xff]
      %v3670 = vld [vmem:[%s165 + $0x88] sm:$0xff]
      %v3671 = vld [vmem:[%s165 + $0x90] sm:$0xff]
      %v3672 = vld [vmem:[%s165 + $0x98] sm:$0xff]
      %v3673 = vld [vmem:[%s165 + $0xa0] sm:$0xff]
      %v3674 = vld [vmem:[%s165 + $0xa8] sm:$0xff]
      %v3675 = vld [vmem:[%s165 + $0xb0] sm:$0xff]
      %v3676 = vld [vmem:[%s165 + $0xb8] sm:$0xff]
      %v3677 = vld [vmem:[%s165 + $0xc0] sm:$0xff]
      %v3678 = vld [vmem:[%s165 + $0xc8] sm:$0xff]
      %v3679 = vld [vmem:[%s165 + $0xd0] sm:$0xff]
      %v3680 = vld [vmem:[%s165 + $0xd8] sm:$0xff]
      %v3681 = vld [vmem:[%s165 + $0xe0] sm:$0xff]
      %v3682 = vld [vmem:[%s165 + $0xe8] sm:$0xff]
      %v3683 = vld [vmem:[%s165 + $0xf0] sm:$0xff]
      %v3684 = vld [vmem:[%s165 + $0xf8] sm:$0xff]
      %v3685 = vadd.f32 %v3653, %v3621
      %v3686 = vadd.f32 %v3654, %v3622
      %v3687 = vadd.f32 %v3655, %v3623
      %v3688 = vadd.f32 %v3656, %v3624
      %v3689 = vadd.f32 %v3657, %v3625
      %v3690 = vadd.f32 %v3658, %v3626
      %v3691 = vadd.f32 %v3659, %v3627
      %v3692 = vadd.f32 %v3660, %v3628
      %v3693 = vadd.f32 %v3661, %v3629
      %v3694 = vadd.f32 %v3662, %v3630
      %v3695 = vadd.f32 %v3663, %v3631
      %v3696 = vadd.f32 %v3664, %v3632
      %v3697 = vadd.f32 %v3665, %v3633
      %v3698 = vadd.f32 %v3666, %v3634
      %v3699 = vadd.f32 %v3667, %v3635
      %v3700 = vadd.f32 %v3668, %v3636
      %v3701 = vadd.f32 %v3669, %v3637
      %v3702 = vadd.f32 %v3670, %v3638
      %v3703 = vadd.f32 %v3671, %v3639
      %v3704 = vadd.f32 %v3672, %v3640
      %v3705 = vadd.f32 %v3673, %v3641
      %v3706 = vadd.f32 %v3674, %v3642
      %v3707 = vadd.f32 %v3675, %v3643
      %v3708 = vadd.f32 %v3676, %v3644
      %v3709 = vadd.f32 %v3677, %v3645
      %v3710 = vadd.f32 %v3678, %v3646
      %v3711 = vadd.f32 %v3679, %v3647
      %v3712 = vadd.f32 %v3680, %v3648
      %v3713 = vadd.f32 %v3681, %v3649
      %v3714 = vadd.f32 %v3682, %v3650
      %v3715 = vadd.f32 %v3683, %v3651
      %v3716 = vadd.f32 %v3684, %v3652
      %3717 = vst.msk [vmem:[%s170] sm:$0xff] %vm365, %v3685
      %3718 = vst.msk [vmem:[%s170 + $0x8] sm:$0xff] %vm365, %v3686
      %3719 = vst.msk [vmem:[%s170 + $0x10] sm:$0xff] %vm365, %v3687
      %3720 = vst.msk [vmem:[%s170 + $0x18] sm:$0xff] %vm365, %v3688
      %3721 = vst.msk [vmem:[%s170 + $0x20] sm:$0xff] %vm365, %v3689
      %3722 = vst.msk [vmem:[%s170 + $0x28] sm:$0xff] %vm365, %v3690
      %3723 = vst.msk [vmem:[%s170 + $0x30] sm:$0xff] %vm365, %v3691
      %3724 = vst.msk [vmem:[%s170 + $0x38] sm:$0xff] %vm365, %v3692
      %3725 = vst.msk [vmem:[%s170 + $0x40] sm:$0xff] %vm365, %v3693
      %3726 = vst.msk [vmem:[%s170 + $0x48] sm:$0xff] %vm365, %v3694
      %3727 = vst.msk [vmem:[%s170 + $0x50] sm:$0xff] %vm365, %v3695
      %3728 = vst.msk [vmem:[%s170 + $0x58] sm:$0xff] %vm365, %v3696
      %3729 = vst.msk [vmem:[%s170 + $0x60] sm:$0xff] %vm365, %v3697
      %3730 = vst.msk [vmem:[%s170 + $0x68] sm:$0xff] %vm365, %v3698
      %3731 = vst.msk [vmem:[%s170 + $0x70] sm:$0xff] %vm365, %v3699
      %3732 = vst.msk [vmem:[%s170 + $0x78] sm:$0xff] %vm365, %v3700
      %3733 = vst.msk [vmem:[%s170 + $0x80] sm:$0xff] %vm365, %v3701
      %3734 = vst.msk [vmem:[%s170 + $0x88] sm:$0xff] %vm365, %v3702
      %3735 = vst.msk [vmem:[%s170 + $0x90] sm:$0xff] %vm365, %v3703
      %3736 = vst.msk [vmem:[%s170 + $0x98] sm:$0xff] %vm365, %v3704
      %3737 = vst.msk [vmem:[%s170 + $0xa0] sm:$0xff] %vm365, %v3705
      %3738 = vst.msk [vmem:[%s170 + $0xa8] sm:$0xff] %vm365, %v3706
      %3739 = vst.msk [vmem:[%s170 + $0xb0] sm:$0xff] %vm365, %v3707
      %3740 = vst.msk [vmem:[%s170 + $0xb8] sm:$0xff] %vm365, %v3708
      %3741 = vst.msk [vmem:[%s170 + $0xc0] sm:$0xff] %vm365, %v3709
      %3742 = vst.msk [vmem:[%s170 + $0xc8] sm:$0xff] %vm365, %v3710
      %3743 = vst.msk [vmem:[%s170 + $0xd0] sm:$0xff] %vm365, %v3711
      %3744 = vst.msk [vmem:[%s170 + $0xd8] sm:$0xff] %vm365, %v3712
      %3745 = vst.msk [vmem:[%s170 + $0xe0] sm:$0xff] %vm365, %v3713
      %3746 = vst.msk [vmem:[%s170 + $0xe8] sm:$0xff] %vm365, %v3714
      %3747 = vst.msk [vmem:[%s170 + $0xf0] sm:$0xff] %vm365, %v3715
      %3748 = vst.msk [vmem:[%s170 + $0xf8] sm:$0xff] %vm365, %v3716
      %p3749 = scmp.lt.s32.totalorder %s14, 1
      %s3750 = scalar_select %p3749, %s14, 1
      %s3751 = smul.addr %s3750, 32
      %s3752 = smul.addr %s3751, 8
      %s3753 = scalar_lea.vmem %s3, %s3752
      // Predicated region
      $region33: #{tpu_custom_call.1} parent=31 // pred_check
        %p3754 = pneg %p100
      $region34: #{tpu_custom_call.1} parent=31 // pred_check_branch
        %3756 = sbr.rel (%p3754) target = $region36
      $region35: #{tpu_custom_call.1} parent=31 // pred_region
        _
      $region36: #{tpu_custom_call.1} parent=31 // pred_fallthru
        _
    $region32: #{tpu_custom_call.1} parent=5 // pred_fallthru
      _
    %p3757 = scmp.le.s32.totalorder 2, %s9
    // Predicated region
    $region37: #{tpu_custom_call.1} parent=5 // pred_check
      %p3758 = pneg %p3757
    $region38: #{tpu_custom_call.1} parent=5 // pred_check_branch
      %3760 = sbr.rel (%p3758) target = $region40
    $region39: #{tpu_custom_call.1} parent=5 // pred_region
      %s3761 = ssub.s32 %s9, 2
      // Predicated region
      $region41: #{tpu_custom_call.1} parent=39 // pred_check
        %p3762 = pneg %p106
      $region42: #{tpu_custom_call.1} parent=39 // pred_check_branch
        %3764 = sbr.rel (%p3762) target = $region44
      $region43: #{tpu_custom_call.1} parent=39 // pred_region
        %p3765 = scmp.lt.s32.totalorder %s15, 1
        %s3766 = scalar_select %p3765, %s15, 1
        %s3767 = smul.addr %s3766, 32
        %s3768 = smul.addr %s3767, 8
        %s3769 = scalar_lea.vmem %s3, %s3768
      $region44: #{tpu_custom_call.1} parent=39 // pred_fallthru
        _
    $region40: #{tpu_custom_call.1} parent=5 // pred_fallthru
      _
  $region6: #{tpu_custom_call.1} parent=0 // loop_footer
    %s13 = sadd.s32 1, %s9
  $region7: #{tpu_custom_call.1} parent=0 // loop_footer_branch
    %8 = sbr.rel target = $region3
  $region8: #{tpu_custom_call.1} parent=0 // loop_exit
    _

</llo_original>
